<compile_context>
chip_gen: v7x
topology: tpu7x:2x2x1
jax: 0.10.0
libtpu: 0.0.40
codegen_flags: <defaults>
</compile_context>

<pallas_src>
import numpy as np
import jax
import jax.numpy as jnp
from jax import lax
from jax.experimental import pallas as pl
from jax.experimental.pallas import tpu as pltpu

EPS = 1e-5          # nn.InstanceNorm2d default eps
BF16 = jnp.bfloat16


def _inorm_relu(h):
    """InstanceNorm2d (affine=False, biased var, eps=1e-5) + ReLU.

    h: (N, C) float32, per-channel statistics over axis 0.  Single pass:
    sum and sum-of-squares, var = E[x^2] - mean^2 (monitor at production scale;
    less stable than two-pass when mean^2 >> var)."""
    inv_n = np.float32(1.0 / h.shape[0])
    s = jnp.sum(h, axis=0, keepdims=True)
    ss = jnp.sum(h * h, axis=0, keepdims=True)
    mean = s * inv_n
    var = jnp.maximum(ss * inv_n - mean * mean, 0.0)
    return jnp.maximum((h - mean) * lax.rsqrt(var + EPS), 0.0)


def _vmem_limit_bytes():
    """Scoped-VMEM limit: ~90% of physical, capped at 100 MiB.

    v5e/v6e have 128 MiB physical (default scoped limit 16/32 MiB is far too
    small for this kernel); v7x has 64 MiB physical."""
    cap = 64 * 1024 * 1024
    try:
        cap = int(pltpu.get_tpu_info().vmem_capacity_bytes)
    except Exception:
        pass
    return min(100 * 1024 * 1024, int(cap * 0.9))


# --------------------------- fused head kernel -------------------------------
def sec_struct_head(x, wa, wb, b_in, w1s, w2cat, w3s, w_out, b_out):
    """outer_concat + linear_in -> NB ResNet2D blocks -> conv_out + triu(1).

    One pallas_call, grid = (batch, num_blocks); the (L, L, C) plane lives in a
    VMEM scratch for the whole block stack."""
    B, L, E = x.shape
    C = wa.shape[1]
    NB, K = w2cat.shape[0], w2cat.shape[1]
    P = (K - 1) // 2
    KC = K * C
    CST = ((P + 7) // 8) * 8          # f32 sublane-aligned column halo
    OFF = CST - P
    Wp = L + 2 * CST                  # padded column count (sublane axis)
    RP = L + 2 * P                    # padded row count (leading axis)

    assert K % 2 == 1 and L % 8 == 0 and NB >= 1

    # Row-chunk size for the KxK conv: largest of (32, 16, 8) dividing L whose
    # per-dy (TR*Wp, K*C) f32 intermediate stays under ~12 MiB.
    TR = 8
    for cand in (32, 16, 8):
        if L % cand == 0 and cand * Wp * KC * 4 <= 12 * 1024 * 1024:
            TR = cand
            break
    NC = L // TR
    assert NC * TR == L

    def kernel(x_ref, wa_ref, wb_ref, bin_ref, w1_ref, w2c_ref, w3_ref,
               wout_ref, bout_ref, o_ref, y_ref, acc_ref, pad_ref):
        n = pl.program_id(1)

        # ---------------- once per batch element ----------------
        @pl.when(n == 0)
        def _init():
            # Zero the whole padded conv scratch (interior is fully rewritten
            # before every read; the halo ring must stay zero).
            pad_ref[...] = jnp.zeros((RP, Wp, C), pad_ref.dtype)
            # Fused _outer_concat(x, x) + linear_in:
            #   y[i, j, :] = x[i] @ Wa + x[j] @ Wb + bias
            xb = x_ref[0].astype(BF16)                                    # (L, E)
            a = jnp.dot(xb, wa_ref[...], preferred_element_type=jnp.float32)
            c = jnp.dot(xb, wb_ref[...], preferred_element_type=jnp.float32)
            y_ref[...] = a[:, None, :] + c[None, :, :] + bin_ref[...][None]

        # ---------------- one ResNet2DBlock per step along axis 1 ----------------
        # conv1x1 (bias=False) -> IN -> ReLU
        h = jnp.dot(y_ref[...].reshape(L * L, C).astype(BF16), w1_ref[0],
                    preferred_element_type=jnp.float32)
        h = _inorm_relu(h)

        # KxK 'same' conv (bias=False), row-tiled: per TR-row chunk and per dy,
        # ONE matmul against the dx-concatenated (C, K*C) weight; the K shifted
        # dx-slices are folded into the chunk accumulator in one fused sum.
        pad_ref[P:P + L, CST:CST + L, :] = h.reshape(L, L, C)

        def _conv_chunk(ci, carry):
            r0 = pl.multiple_of(ci * TR, TR)
            acc_c = None
            for dy in range(K):
                blk_in = pad_ref[pl.ds(dy + r0, TR), :, :]                # (TR, Wp, C) f32
                t = jnp.dot(blk_in.reshape(TR * Wp, C).astype(BF16),
                            w2c_ref[0, dy],
                            preferred_element_type=jnp.float32)
                t = t.reshape(TR, Wp, KC)
                part = t[:, OFF:OFF + L, 0:C]
                for dx in range(1, K):
                    part = part + t[:, OFF + dx:OFF + dx + L, dx * C:(dx + 1) * C]
                acc_c = part if acc_c is None else acc_c + part
            acc_ref[pl.ds(r0, TR), :, :] = acc_c
            return carry

        lax.fori_loop(0, NC, _conv_chunk, 0)

        h = _inorm_relu(acc_ref[...].reshape(L * L, C))

        # conv1x1 (bias=False) -> IN -> ReLU, then residual add
        h = jnp.dot(h.astype(BF16), w3_ref[0], preferred_element_type=jnp.float32)
        h = _inorm_relu(h)
        y_ref[...] = y_ref[...] + h.reshape(L, L, C)

        # ------------- after the last block: conv_out + bias + triu(1) -------------
        @pl.when(n == pl.num_programs(1) - 1)
        def _finish():
            pad_ref[P:P + L, CST:CST + L, :] = y_ref[...]
            # Lane-dense conv_out: per-(dy,dx) broadcast-FMA (w_out row
            # broadcasts along the lane/C axis) accumulated into acc_ref, then
            # ONE lane reduce over C.  No (RP*Wp, K*K) slab, no single-lane ops.
            for dy in range(K):
                term = None
                for dx in range(K):
                    w_tap = wout_ref[dy:dy + 1, dx:dx + 1, :]             # (1, 1, C)
                    tap = pad_ref[dy:dy + L, OFF + dx:OFF + dx + L, :] * w_tap
                    term = tap if term is None else term + tap
                if dy == 0:
                    acc_ref[...] = term
                else:
                    acc_ref[...] = acc_ref[...] + term
            o = jnp.sum(acc_ref[...], axis=-1) + bout_ref[...]           # (L, L)
            row = lax.broadcasted_iota(jnp.int32, (L, L), 0)
            col = lax.broadcasted_iota(jnp.int32, (L, L), 1)
            o_ref[0] = jnp.where(col > row, o, 0.0)                      # torch.triu(., 1)

    grid_spec = pltpu.PrefetchScalarGridSpec(
        num_scalar_prefetch=0,
        grid=(B, NB),
        in_specs=[
            pl.BlockSpec((1, L, E), lambda b, n: (b, 0, 0)),            # x (per batch element)
            pl.BlockSpec((E, C), lambda b, n: (0, 0)),                  # Wa   (constant)
            pl.BlockSpec((E, C), lambda b, n: (0, 0)),                  # Wb   (constant)
            pl.BlockSpec((1, C), lambda b, n: (0, 0)),                  # linear_in bias
            pl.BlockSpec((1, C, C), lambda b, n: (n, 0, 0)),            # per-block w1
            pl.BlockSpec((1, K, C, KC), lambda b, n: (n, 0, 0, 0)),     # per-block w2 (dx-concat)
            pl.BlockSpec((1, C, C), lambda b, n: (n, 0, 0)),            # per-block w3
            pl.BlockSpec((K, K, C), lambda b, n: (0, 0, 0)),            # conv_out weight (f32)
            pl.BlockSpec((1, 1), lambda b, n: (0, 0)),                  # conv_out bias
        ],
        out_specs=pl.BlockSpec((1, L, L), lambda b, n: (b, 0, 0)),
        scratch_shapes=[
            pltpu.VMEM((L, L, C), jnp.float32),     # resident pair plane (residual stream)
            pltpu.VMEM((L, L, C), jnp.float32),     # KxK-conv / conv_out accumulator
            pltpu.VMEM((RP, Wp, C), jnp.float32),   # zero-padded conv input scratch
        ],
    )
    return pl.pallas_call(
        kernel,
        out_shape=jax.ShapeDtypeStruct((B, L, L), jnp.float32),
        grid_spec=grid_spec,
        compiler_params=pltpu.CompilerParams(
            dimension_semantics=("parallel", "arbitrary"),
            vmem_limit_bytes=_vmem_limit_bytes()),
    )(x, wa, wb, b_in, w1s, w2cat, w3s, w_out, b_out)


# ------------------------------- forward --------------------------------------
def forward(features, params):
    # x[..., 1:-1, :] — drop BOS/EOS token positions; Dropout is eval-mode identity.
    x = features[:, 1:-1, :]
    C = params["w_in_a"].shape[1]
    K = params["w_out"].shape[0]
    blocks = params["blocks"]

    # Weight repacking for the kernel (bf16 matmul operands).
    wa = params["w_in_a"].astype(BF16)
    wb = params["w_in_b"].astype(BF16)
    w1s = jnp.stack([blk["w1"] for blk in blocks]).astype(BF16)              # (NB, C, C)
    # (K, K, Ci, Co)[dy, dx, ci, co] -> (K, Ci, K*Co)[dy, ci, dx*C + co]
    w2cat = jnp.stack(
        [jnp.transpose(blk["w2"], (0, 2, 1, 3)).reshape(K, C, K * C)
         for blk in blocks]).astype(BF16)                                    # (NB, K, C, K*C)
    w3s = jnp.stack([blk["w3"] for blk in blocks]).astype(BF16)

    up = sec_struct_head(x, wa, wb, params["b_in"], w1s, w2cat, w3s,
                         params["w_out"], params["b_out"])
    # x = x + x.transpose(-1, -2); the final .squeeze(-1) is a no-op for L > 1
    return up + jnp.swapaxes(up, -1, -2)


# --------------------------- pure-JAX reference --------------------------------
def ref_forward(features, params):
    """Reference mirroring the PyTorch module with the kernel's mixed-precision
    recipe (bf16 matmul operands, f32 accumulation, f32 norm/elementwise;
    conv_out in f32)."""
    x = features[:, 1:-1, :]
    _, L, _ = x.shape

    a = jnp.dot(x.astype(BF16), params["w_in_a"].astype(BF16),
                preferred_element_type=jnp.float32)
    c = jnp.dot(x.astype(BF16), params["w_in_b"].astype(BF16),
                preferred_element_type=jnp.float32)
    y = a[:, :, None, :] + c[:, None, :, :] + params["b_in"][0]

    def inorm_relu(h):  # (B, L, L, C): stats over spatial dims per channel
        mean = jnp.mean(h, axis=(1, 2), keepdims=True)
        var = jnp.mean((h - mean) ** 2, axis=(1, 2), keepdims=True)
        return jnp.maximum((h - mean) * lax.rsqrt(var + EPS), 0.0)

    def conv_same(h, w):  # h: (B, L, L, Ci) f32, w: (K, K, Ci, Co) f32
        Kk = w.shape[0]
        Pp = (Kk - 1) // 2
        hp = jnp.pad(h, ((0, 0), (Pp, Pp), (Pp, Pp), (0, 0)))
        out = jnp.zeros(h.shape[:3] + (w.shape[-1],), jnp.float32)
        for dy in range(Kk):
            for dx in range(Kk):
                out = out + jnp.einsum(
                    "bijc,cd->bijd",
                    hp[:, dy:dy + L, dx:dx + L, :].astype(BF16),
                    w[dy, dx].astype(BF16),
                    preferred_element_type=jnp.float32)
        return out

    for blk in params["blocks"]:
        r = y
        h = inorm_relu(jnp.einsum("bijc,cd->bijd", y.astype(BF16),
                                  blk["w1"].astype(BF16),
                                  preferred_element_type=jnp.float32))
        h = inorm_relu(conv_same(h, blk["w2"]))
        h = inorm_relu(jnp.einsum("bijc,cd->bijd", h.astype(BF16),
                                  blk["w3"].astype(BF16),
                                  preferred_element_type=jnp.float32))
        y = h + r

    # conv_out (Cout=1) in f32, matching the kernel's lane-dense VPU epilogue.
    Kk = params["w_out"].shape[0]
    Pp = (Kk - 1) // 2
    yp = jnp.pad(y, ((0, 0), (Pp, Pp), (Pp, Pp), (0, 0)))
    o = jnp.zeros(y.shape[:3], jnp.float32)
    for dy in range(Kk):
        for dx in range(Kk):
            o = o + jnp.einsum("bijc,c->bij", yp[:, dy:dy + L, dx:dx + L, :],
                               params["w_out"][dy, dx])
    o = o + params["b_out"][0, 0]
    o = jnp.triu(o, k=1)
    return o + jnp.swapaxes(o, -1, -2)


# ------------------------------- parameters ------------------------------------
def init_params(key, E, C, K, num_blocks):
    n = 3 + 3 * num_blocks + 2
    ks = list(jax.random.split(key, n))

    def nrm(shape, fan_in):
        k = ks.pop(0)
        return (jax.random.normal(k, shape, jnp.float32)
                / np.float32(np.sqrt(fan_in))).astype(jnp.float32)

    params = {
        "w_in_a": nrm((E, C), 2 * E),       # linear_in weight, first half (row token)
        "w_in_b": nrm((E, C), 2 * E),       # linear_in weight, second half (col token)
        "b_in": nrm((1, C), 2 * E),         # linear_in bias
        "blocks": [],
    }
    for _ in range(num_blocks):
        params["blocks"].append({
            "w1": nrm((C, C), C),                   # conv1x1 (bias=False)
            "w2": nrm((K, K, C, C), C * K * K),     # convKxK 'same' (bias=False)
            "w3": nrm((C, C), C),                   # conv1x1 (bias=False)
        })
    params["w_out"] = nrm((K, K, C), C * K * K)     # conv_out weight (Cout=1)
    params["b_out"] = nrm((1, 1), 1)                # conv_out bias
    return params


if __name__ == "__main__":
    # Small shapes consistent with the module (module defaults are
    # embed_dim=1024, conv_dim=128, num_blocks=12, kernel_size=7).
    B, L_FULL, E = 2, 10, 32        # batch, token length (incl. BOS/EOS), embed dim
    C, K, NUM_BLOCKS = 32, 7, 2     # conv_dim, conv kernel size, resnet blocks

    key = jax.random.PRNGKey(0)
    k_feat, k_par = jax.random.split(key)

    # TODO(synk): stands in for models[0].encoder(src_tokens, features_only=True)[0]
    features = jax.random.normal(k_feat, (B, L_FULL, E), jnp.float32)
    params = init_params(k_par, E, C, K, NUM_BLOCKS)

    logits = jax.jit(forward)(features, params)
    logits = jax.block_until_ready(logits)
    assert logits.shape == (B, L_FULL - 2, L_FULL - 2)

    ref = ref_forward(features, params)
    np.testing.assert_allclose(np.asarray(logits), np.asarray(ref),
                               rtol=2e-2, atol=2e-2)
    print("KERNEL_OK")
</pallas_src>

<mosaic_0001>
module attributes {stable_mosaic.version = 11 : i64} {
  func.func @kernel(%arg0: i32, %arg1: i32, %arg2: memref<1x8x32xf32, #tpu.memory_space<vmem>>, %arg3: memref<32x32xbf16, #tpu.memory_space<vmem>>, %arg4: memref<32x32xbf16, #tpu.memory_space<vmem>>, %arg5: memref<1x32xf32, #tpu.memory_space<vmem>>, %arg6: memref<1x32x32xbf16, #tpu.memory_space<vmem>>, %arg7: memref<1x7x32x224xbf16, #tpu.memory_space<vmem>>, %arg8: memref<1x32x32xbf16, #tpu.memory_space<vmem>>, %arg9: memref<7x7x32xf32, #tpu.memory_space<vmem>>, %arg10: memref<1x1xf32, #tpu.memory_space<vmem>>, %arg11: memref<1x8x8xf32, #tpu.memory_space<vmem>>, %arg12: memref<8x8x32xf32, #tpu.memory_space<vmem>>, %arg13: memref<8x8x32xf32, #tpu.memory_space<vmem>>, %arg14: memref<14x24x32xf32, #tpu.memory_space<vmem>>) attributes {dimension_semantics = [#tpu.dimension_semantics<parallel>, #tpu.dimension_semantics<arbitrary>], iteration_bounds = array<i64: 2, 2>, scalar_prefetch = 0 : i64, scratch_operands = 3 : i64, tpu.core_type = #tpu.core_type<tc>, window_params = [{transform_indices = @transform_0, window_bounds = array<i64: 1, 8, 32>}, {pipeline_mode = #tpu.pipeline_mode<synchronous>, transform_indices = @transform_1, window_bounds = array<i64: 32, 32>}, {pipeline_mode = #tpu.pipeline_mode<synchronous>, transform_indices = @transform_2, window_bounds = array<i64: 32, 32>}, {pipeline_mode = #tpu.pipeline_mode<synchronous>, transform_indices = @transform_3, window_bounds = array<i64: 1, 32>}, {transform_indices = @transform_4, window_bounds = array<i64: 1, 32, 32>}, {transform_indices = @transform_5, window_bounds = array<i64: 1, 7, 32, 224>}, {transform_indices = @transform_6, window_bounds = array<i64: 1, 32, 32>}, {pipeline_mode = #tpu.pipeline_mode<synchronous>, transform_indices = @transform_7, window_bounds = array<i64: 7, 7, 32>}, {pipeline_mode = #tpu.pipeline_mode<synchronous>, transform_indices = @transform_8, window_bounds = array<i64: 1, 1>}, {transform_indices = @transform_9, window_bounds = array<i64: 1, 8, 8>}]} {
    %c0_i32 = arith.constant 0 : i32
    %0 = arith.cmpi eq, %arg1, %c0_i32 : i32
    %1 = arith.extui %0 : i1 to i32
    %c0_i32_0 = arith.constant 0 : i32
    %2 = arith.cmpi ne, %1, %c0_i32_0 : i32
    scf.if %2 {
      %cst_92 = arith.constant 0.000000e+00 : f32
      %254 = vector.broadcast %cst_92 : f32 to vector<14x24x32xf32>
      %c0_93 = arith.constant 0 : index
      %c0_94 = arith.constant 0 : index
      %c0_95 = arith.constant 0 : index
      %255 = vector.load %arg14[%c0_93, %c0_94, %c0_95] : memref<14x24x32xf32, #tpu.memory_space<vmem>>, vector<14x24x32xf32>
      tpu.vector_store %arg14[%c0_93, %c0_94, %c0_95], %254 {strides = array<i32>} : memref<14x24x32xf32, #tpu.memory_space<vmem>>, vector<14x24x32xf32>,
      %c0_96 = arith.constant 0 : index
      %c0_97 = arith.constant 0 : index
      %c0_98 = arith.constant 0 : index
      %256 = vector.load %arg2[%c0_96, %c0_97, %c0_98] : memref<1x8x32xf32, #tpu.memory_space<vmem>>, vector<1x8x32xf32>
      %257 = vector.shape_cast %256 : vector<1x8x32xf32> to vector<8x32xf32>
      %258 = arith.truncf %257 : vector<8x32xf32> to vector<8x32xbf16>
      %c0_99 = arith.constant 0 : index
      %c0_100 = arith.constant 0 : index
      %259 = vector.load %arg3[%c0_99, %c0_100] : memref<32x32xbf16, #tpu.memory_space<vmem>>, vector<32x32xbf16>
      %cst_101 = arith.constant dense<0.000000e+00> : vector<8x32xf32>
      %260 = tpu.matmul %258, %259, %cst_101 {dimension_numbers = #tpu.dot_dimension_numbers<[1], [0], [0], [1], [0, 0, 1, 1], [], []>} : vector<8x32xbf16>, vector<32x32xbf16>, vector<8x32xf32> -> vector<8x32xf32>
      %c0_102 = arith.constant 0 : index
      %c0_103 = arith.constant 0 : index
      %261 = vector.load %arg4[%c0_102, %c0_103] : memref<32x32xbf16, #tpu.memory_space<vmem>>, vector<32x32xbf16>
      %cst_104 = arith.constant dense<0.000000e+00> : vector<8x32xf32>
      %262 = tpu.matmul %258, %261, %cst_104 {dimension_numbers = #tpu.dot_dimension_numbers<[1], [0], [0], [1], [0, 0, 1, 1], [], []>} : vector<8x32xbf16>, vector<32x32xbf16>, vector<8x32xf32> -> vector<8x32xf32>
      %263 = vector.shape_cast %260 : vector<8x32xf32> to vector<8x1x32xf32>
      %264 = vector.shape_cast %262 : vector<8x32xf32> to vector<1x8x32xf32>
      %265 = vector.broadcast %263 : vector<8x1x32xf32> to vector<8x8x32xf32>
      %266 = vector.broadcast %264 : vector<1x8x32xf32> to vector<8x8x32xf32>
      %267 = arith.addf %265, %266 : vector<8x8x32xf32>
      %c0_105 = arith.constant 0 : index
      %c0_106 = arith.constant 0 : index
      %268 = vector.load %arg5[%c0_105, %c0_106] : memref<1x32xf32, #tpu.memory_space<vmem>>, vector<1x32xf32>
      %269 = vector.shape_cast %268 : vector<1x32xf32> to vector<1x1x32xf32>
      %270 = vector.broadcast %269 : vector<1x1x32xf32> to vector<8x8x32xf32>
      %271 = arith.addf %267, %270 : vector<8x8x32xf32>
      %c0_107 = arith.constant 0 : index
      %c0_108 = arith.constant 0 : index
      %c0_109 = arith.constant 0 : index
      %272 = vector.load %arg12[%c0_107, %c0_108, %c0_109] : memref<8x8x32xf32, #tpu.memory_space<vmem>>, vector<8x8x32xf32>
      tpu.vector_store %arg12[%c0_107, %c0_108, %c0_109], %271 {strides = array<i32>} : memref<8x8x32xf32, #tpu.memory_space<vmem>>, vector<8x8x32xf32>,
    } else {
    }
    %c0 = arith.constant 0 : index
    %c0_1 = arith.constant 0 : index
    %c0_2 = arith.constant 0 : index
    %3 = vector.load %arg12[%c0, %c0_1, %c0_2] : memref<8x8x32xf32, #tpu.memory_space<vmem>>, vector<8x8x32xf32>
    %4 = vector.shape_cast %3 : vector<8x8x32xf32> to vector<64x32xf32>
    %5 = arith.truncf %4 : vector<64x32xf32> to vector<64x32xbf16>
    %c0_3 = arith.constant 0 : index
    %c0_4 = arith.constant 0 : index
    %c0_5 = arith.constant 0 : index
    %6 = vector.load %arg6[%c0_3, %c0_4, %c0_5] : memref<1x32x32xbf16, #tpu.memory_space<vmem>>, vector<1x32x32xbf16>
    %7 = vector.shape_cast %6 : vector<1x32x32xbf16> to vector<32x32xbf16>
    %cst = arith.constant dense<0.000000e+00> : vector<64x32xf32>
    %8 = tpu.matmul %5, %7, %cst {dimension_numbers = #tpu.dot_dimension_numbers<[1], [0], [0], [1], [0, 0, 1, 1], [], []>} : vector<64x32xbf16>, vector<32x32xbf16>, vector<64x32xf32> -> vector<64x32xf32>
    %cst_6 = arith.constant dense<0.000000e+00> : vector<32xf32>
    %9 = vector.multi_reduction <add>, %8, %cst_6 [0] : vector<64x32xf32> to vector<32xf32>
    %10 = vector.shape_cast %9 : vector<32xf32> to vector<1x32xf32>
    %11 = arith.mulf %8, %8 : vector<64x32xf32>
    %cst_7 = arith.constant dense<0.000000e+00> : vector<32xf32>
    %12 = vector.multi_reduction <add>, %11, %cst_7 [0] : vector<64x32xf32> to vector<32xf32>
    %13 = vector.shape_cast %12 : vector<32xf32> to vector<1x32xf32>
    %cst_8 = arith.constant 1.562500e-02 : f32
    %14 = vector.broadcast %cst_8 : f32 to vector<1x32xf32>
    %15 = arith.mulf %10, %14 : vector<1x32xf32>
    %cst_9 = arith.constant 1.562500e-02 : f32
    %16 = vector.broadcast %cst_9 : f32 to vector<1x32xf32>
    %17 = arith.mulf %13, %16 : vector<1x32xf32>
    %18 = arith.mulf %15, %15 : vector<1x32xf32>
    %19 = arith.subf %17, %18 : vector<1x32xf32>
    %cst_10 = arith.constant 0.000000e+00 : f32
    %20 = vector.broadcast %cst_10 : f32 to vector<1x32xf32>
    %21 = arith.maximumf %19, %20 : vector<1x32xf32>
    %22 = vector.broadcast %15 : vector<1x32xf32> to vector<64x32xf32>
    %23 = arith.subf %8, %22 : vector<64x32xf32>
    %cst_11 = arith.constant 9.99999974E-6 : f32
    %24 = vector.broadcast %cst_11 : f32 to vector<1x32xf32>
    %25 = arith.addf %21, %24 : vector<1x32xf32>
    %26 = math.rsqrt %25 : vector<1x32xf32>
    %27 = vector.broadcast %26 : vector<1x32xf32> to vector<64x32xf32>
    %28 = arith.mulf %23, %27 : vector<64x32xf32>
    %cst_12 = arith.constant 0.000000e+00 : f32
    %29 = vector.broadcast %cst_12 : f32 to vector<64x32xf32>
    %30 = arith.maximumf %28, %29 : vector<64x32xf32>
    %31 = vector.shape_cast %30 : vector<64x32xf32> to vector<8x8x32xf32>
    %c3 = arith.constant 3 : index
    %c8 = arith.constant 8 : index
    %c0_13 = arith.constant 0 : index
    %32 = vector.load %arg14[%c3, %c8, %c0_13] : memref<14x24x32xf32, #tpu.memory_space<vmem>>, vector<8x8x32xf32>
    tpu.vector_store %arg14[%c3, %c8, %c0_13], %31 {strides = array<i32>} : memref<14x24x32xf32, #tpu.memory_space<vmem>>, vector<8x8x32xf32>,
    %c0_i32_14 = arith.constant 0 : i32
    %c8_i32 = arith.constant 8 : i32
    %33 = arith.muli %c0_i32_14, %c8_i32 : i32
    %34 = tpu.assume_multiple %33, 8 : i32
    %c0_i32_15 = arith.constant 0 : i32
    %35 = arith.addi %c0_i32_15, %34 : i32
    %36 = arith.index_cast %35 : i32 to index
    %c0_16 = arith.constant 0 : index
    %c0_17 = arith.constant 0 : index
    %37 = vector.load %arg14[%36, %c0_16, %c0_17] : memref<14x24x32xf32, #tpu.memory_space<vmem>>, vector<8x24x32xf32>
    %38 = vector.shape_cast %37 : vector<8x24x32xf32> to vector<192x32xf32>
    %39 = arith.truncf %38 : vector<192x32xf32> to vector<192x32xbf16>
    %c0_18 = arith.constant 0 : index
    %c0_19 = arith.constant 0 : index
    %c0_20 = arith.constant 0 : index
    %c0_21 = arith.constant 0 : index
    %40 = vector.load %arg7[%c0_18, %c0_19, %c0_20, %c0_21] : memref<1x7x32x224xbf16, #tpu.memory_space<vmem>>, vector<1x1x32x224xbf16>
    %41 = vector.shape_cast %40 : vector<1x1x32x224xbf16> to vector<32x224xbf16>
    %cst_22 = arith.constant dense<0.000000e+00> : vector<192x224xf32>
    %42 = tpu.matmul %39, %41, %cst_22 {dimension_numbers = #tpu.dot_dimension_numbers<[1], [0], [0], [1], [0, 0, 1, 1], [], []>} : vector<192x32xbf16>, vector<32x224xbf16>, vector<192x224xf32> -> vector<192x224xf32>
    %43 = vector.shape_cast %42 : vector<192x224xf32> to vector<8x24x224xf32>
    %44 = vector.extract_strided_slice %43 {offsets = [0, 5, 0], sizes = [8, 8, 32], strides = [1, 1, 1]} : vector<8x24x224xf32> to vector<8x8x32xf32>
    %45 = vector.extract_strided_slice %43 {offsets = [0, 6, 32], sizes = [8, 8, 32], strides = [1, 1, 1]} : vector<8x24x224xf32> to vector<8x8x32xf32>
    %46 = arith.addf %44, %45 : vector<8x8x32xf32>
    %47 = vector.extract_strided_slice %43 {offsets = [0, 7, 64], sizes = [8, 8, 32], strides = [1, 1, 1]} : vector<8x24x224xf32> to vector<8x8x32xf32>
    %48 = arith.addf %46, %47 : vector<8x8x32xf32>
    %49 = vector.extract_strided_slice %43 {offsets = [0, 8, 96], sizes = [8, 8, 32], strides = [1, 1, 1]} : vector<8x24x224xf32> to vector<8x8x32xf32>
    %50 = arith.addf %48, %49 : vector<8x8x32xf32>
    %51 = vector.extract_strided_slice %43 {offsets = [0, 9, 128], sizes = [8, 8, 32], strides = [1, 1, 1]} : vector<8x24x224xf32> to vector<8x8x32xf32>
    %52 = arith.addf %50, %51 : vector<8x8x32xf32>
    %53 = vector.extract_strided_slice %43 {offsets = [0, 10, 160], sizes = [8, 8, 32], strides = [1, 1, 1]} : vector<8x24x224xf32> to vector<8x8x32xf32>
    %54 = arith.addf %52, %53 : vector<8x8x32xf32>
    %55 = vector.extract_strided_slice %43 {offsets = [0, 11, 192], sizes = [8, 8, 32], strides = [1, 1, 1]} : vector<8x24x224xf32> to vector<8x8x32xf32>
    %56 = arith.addf %54, %55 : vector<8x8x32xf32>
    %c1_i32 = arith.constant 1 : i32
    %57 = arith.addi %c1_i32, %34 : i32
    %58 = arith.index_cast %57 : i32 to index
    %c0_23 = arith.constant 0 : index
    %c0_24 = arith.constant 0 : index
    %59 = vector.load %arg14[%58, %c0_23, %c0_24] : memref<14x24x32xf32, #tpu.memory_space<vmem>>, vector<8x24x32xf32>
    %60 = vector.shape_cast %59 : vector<8x24x32xf32> to vector<192x32xf32>
    %61 = arith.truncf %60 : vector<192x32xf32> to vector<192x32xbf16>
    %c0_25 = arith.constant 0 : index
    %c1 = arith.constant 1 : index
    %c0_26 = arith.constant 0 : index
    %c0_27 = arith.constant 0 : index
    %62 = vector.load %arg7[%c0_25, %c1, %c0_26, %c0_27] : memref<1x7x32x224xbf16, #tpu.memory_space<vmem>>, vector<1x1x32x224xbf16>
    %63 = vector.shape_cast %62 : vector<1x1x32x224xbf16> to vector<32x224xbf16>
    %cst_28 = arith.constant dense<0.000000e+00> : vector<192x224xf32>
    %64 = tpu.matmul %61, %63, %cst_28 {dimension_numbers = #tpu.dot_dimension_numbers<[1], [0], [0], [1], [0, 0, 1, 1], [], []>} : vector<192x32xbf16>, vector<32x224xbf16>, vector<192x224xf32> -> vector<192x224xf32>
    %65 = vector.shape_cast %64 : vector<192x224xf32> to vector<8x24x224xf32>
    %66 = vector.extract_strided_slice %65 {offsets = [0, 5, 0], sizes = [8, 8, 32], strides = [1, 1, 1]} : vector<8x24x224xf32> to vector<8x8x32xf32>
    %67 = vector.extract_strided_slice %65 {offsets = [0, 6, 32], sizes = [8, 8, 32], strides = [1, 1, 1]} : vector<8x24x224xf32> to vector<8x8x32xf32>
    %68 = arith.addf %66, %67 : vector<8x8x32xf32>
    %69 = vector.extract_strided_slice %65 {offsets = [0, 7, 64], sizes = [8, 8, 32], strides = [1, 1, 1]} : vector<8x24x224xf32> to vector<8x8x32xf32>
    %70 = arith.addf %68, %69 : vector<8x8x32xf32>
    %71 = vector.extract_strided_slice %65 {offsets = [0, 8, 96], sizes = [8, 8, 32], strides = [1, 1, 1]} : vector<8x24x224xf32> to vector<8x8x32xf32>
    %72 = arith.addf %70, %71 : vector<8x8x32xf32>
    %73 = vector.extract_strided_slice %65 {offsets = [0, 9, 128], sizes = [8, 8, 32], strides = [1, 1, 1]} : vector<8x24x224xf32> to vector<8x8x32xf32>
    %74 = arith.addf %72, %73 : vector<8x8x32xf32>
    %75 = vector.extract_strided_slice %65 {offsets = [0, 10, 160], sizes = [8, 8, 32], strides = [1, 1, 1]} : vector<8x24x224xf32> to vector<8x8x32xf32>
    %76 = arith.addf %74, %75 : vector<8x8x32xf32>
    %77 = vector.extract_strided_slice %65 {offsets = [0, 11, 192], sizes = [8, 8, 32], strides = [1, 1, 1]} : vector<8x24x224xf32> to vector<8x8x32xf32>
    %78 = arith.addf %76, %77 : vector<8x8x32xf32>
    %79 = arith.addf %56, %78 : vector<8x8x32xf32>
    %c2_i32 = arith.constant 2 : i32
    %80 = arith.addi %c2_i32, %34 : i32
    %81 = arith.index_cast %80 : i32 to index
    %c0_29 = arith.constant 0 : index
    %c0_30 = arith.constant 0 : index
    %82 = vector.load %arg14[%81, %c0_29, %c0_30] : memref<14x24x32xf32, #tpu.memory_space<vmem>>, vector<8x24x32xf32>
    %83 = vector.shape_cast %82 : vector<8x24x32xf32> to vector<192x32xf32>
    %84 = arith.truncf %83 : vector<192x32xf32> to vector<192x32xbf16>
    %c0_31 = arith.constant 0 : index
    %c2 = arith.constant 2 : index
    %c0_32 = arith.constant 0 : index
    %c0_33 = arith.constant 0 : index
    %85 = vector.load %arg7[%c0_31, %c2, %c0_32, %c0_33] : memref<1x7x32x224xbf16, #tpu.memory_space<vmem>>, vector<1x1x32x224xbf16>
    %86 = vector.shape_cast %85 : vector<1x1x32x224xbf16> to vector<32x224xbf16>
    %cst_34 = arith.constant dense<0.000000e+00> : vector<192x224xf32>
    %87 = tpu.matmul %84, %86, %cst_34 {dimension_numbers = #tpu.dot_dimension_numbers<[1], [0], [0], [1], [0, 0, 1, 1], [], []>} : vector<192x32xbf16>, vector<32x224xbf16>, vector<192x224xf32> -> vector<192x224xf32>
    %88 = vector.shape_cast %87 : vector<192x224xf32> to vector<8x24x224xf32>
    %89 = vector.extract_strided_slice %88 {offsets = [0, 5, 0], sizes = [8, 8, 32], strides = [1, 1, 1]} : vector<8x24x224xf32> to vector<8x8x32xf32>
    %90 = vector.extract_strided_slice %88 {offsets = [0, 6, 32], sizes = [8, 8, 32], strides = [1, 1, 1]} : vector<8x24x224xf32> to vector<8x8x32xf32>
    %91 = arith.addf %89, %90 : vector<8x8x32xf32>
    %92 = vector.extract_strided_slice %88 {offsets = [0, 7, 64], sizes = [8, 8, 32], strides = [1, 1, 1]} : vector<8x24x224xf32> to vector<8x8x32xf32>
    %93 = arith.addf %91, %92 : vector<8x8x32xf32>
    %94 = vector.extract_strided_slice %88 {offsets = [0, 8, 96], sizes = [8, 8, 32], strides = [1, 1, 1]} : vector<8x24x224xf32> to vector<8x8x32xf32>
    %95 = arith.addf %93, %94 : vector<8x8x32xf32>
    %96 = vector.extract_strided_slice %88 {offsets = [0, 9, 128], sizes = [8, 8, 32], strides = [1, 1, 1]} : vector<8x24x224xf32> to vector<8x8x32xf32>
    %97 = arith.addf %95, %96 : vector<8x8x32xf32>
    %98 = vector.extract_strided_slice %88 {offsets = [0, 10, 160], sizes = [8, 8, 32], strides = [1, 1, 1]} : vector<8x24x224xf32> to vector<8x8x32xf32>
    %99 = arith.addf %97, %98 : vector<8x8x32xf32>
    %100 = vector.extract_strided_slice %88 {offsets = [0, 11, 192], sizes = [8, 8, 32], strides = [1, 1, 1]} : vector<8x24x224xf32> to vector<8x8x32xf32>
    %101 = arith.addf %99, %100 : vector<8x8x32xf32>
    %102 = arith.addf %79, %101 : vector<8x8x32xf32>
    %c3_i32 = arith.constant 3 : i32
    %103 = arith.addi %c3_i32, %34 : i32
    %104 = arith.index_cast %103 : i32 to index
    %c0_35 = arith.constant 0 : index
    %c0_36 = arith.constant 0 : index
    %105 = vector.load %arg14[%104, %c0_35, %c0_36] : memref<14x24x32xf32, #tpu.memory_space<vmem>>, vector<8x24x32xf32>
    %106 = vector.shape_cast %105 : vector<8x24x32xf32> to vector<192x32xf32>
    %107 = arith.truncf %106 : vector<192x32xf32> to vector<192x32xbf16>
    %c0_37 = arith.constant 0 : index
    %c3_38 = arith.constant 3 : index
    %c0_39 = arith.constant 0 : index
    %c0_40 = arith.constant 0 : index
    %108 = vector.load %arg7[%c0_37, %c3_38, %c0_39, %c0_40] : memref<1x7x32x224xbf16, #tpu.memory_space<vmem>>, vector<1x1x32x224xbf16>
    %109 = vector.shape_cast %108 : vector<1x1x32x224xbf16> to vector<32x224xbf16>
    %cst_41 = arith.constant dense<0.000000e+00> : vector<192x224xf32>
    %110 = tpu.matmul %107, %109, %cst_41 {dimension_numbers = #tpu.dot_dimension_numbers<[1], [0], [0], [1], [0, 0, 1, 1], [], []>} : vector<192x32xbf16>, vector<32x224xbf16>, vector<192x224xf32> -> vector<192x224xf32>
    %111 = vector.shape_cast %110 : vector<192x224xf32> to vector<8x24x224xf32>
    %112 = vector.extract_strided_slice %111 {offsets = [0, 5, 0], sizes = [8, 8, 32], strides = [1, 1, 1]} : vector<8x24x224xf32> to vector<8x8x32xf32>
    %113 = vector.extract_strided_slice %111 {offsets = [0, 6, 32], sizes = [8, 8, 32], strides = [1, 1, 1]} : vector<8x24x224xf32> to vector<8x8x32xf32>
    %114 = arith.addf %112, %113 : vector<8x8x32xf32>
    %115 = vector.extract_strided_slice %111 {offsets = [0, 7, 64], sizes = [8, 8, 32], strides = [1, 1, 1]} : vector<8x24x224xf32> to vector<8x8x32xf32>
    %116 = arith.addf %114, %115 : vector<8x8x32xf32>
    %117 = vector.extract_strided_slice %111 {offsets = [0, 8, 96], sizes = [8, 8, 32], strides = [1, 1, 1]} : vector<8x24x224xf32> to vector<8x8x32xf32>
    %118 = arith.addf %116, %117 : vector<8x8x32xf32>
    %119 = vector.extract_strided_slice %111 {offsets = [0, 9, 128], sizes = [8, 8, 32], strides = [1, 1, 1]} : vector<8x24x224xf32> to vector<8x8x32xf32>
    %120 = arith.addf %118, %119 : vector<8x8x32xf32>
    %121 = vector.extract_strided_slice %111 {offsets = [0, 10, 160], sizes = [8, 8, 32], strides = [1, 1, 1]} : vector<8x24x224xf32> to vector<8x8x32xf32>
    %122 = arith.addf %120, %121 : vector<8x8x32xf32>
    %123 = vector.extract_strided_slice %111 {offsets = [0, 11, 192], sizes = [8, 8, 32], strides = [1, 1, 1]} : vector<8x24x224xf32> to vector<8x8x32xf32>
    %124 = arith.addf %122, %123 : vector<8x8x32xf32>
    %125 = arith.addf %102, %124 : vector<8x8x32xf32>
    %c4_i32 = arith.constant 4 : i32
    %126 = arith.addi %c4_i32, %34 : i32
    %127 = arith.index_cast %126 : i32 to index
    %c0_42 = arith.constant 0 : index
    %c0_43 = arith.constant 0 : index
    %128 = vector.load %arg14[%127, %c0_42, %c0_43] : memref<14x24x32xf32, #tpu.memory_space<vmem>>, vector<8x24x32xf32>
    %129 = vector.shape_cast %128 : vector<8x24x32xf32> to vector<192x32xf32>
    %130 = arith.truncf %129 : vector<192x32xf32> to vector<192x32xbf16>
    %c0_44 = arith.constant 0 : index
    %c4 = arith.constant 4 : index
    %c0_45 = arith.constant 0 : index
    %c0_46 = arith.constant 0 : index
    %131 = vector.load %arg7[%c0_44, %c4, %c0_45, %c0_46] : memref<1x7x32x224xbf16, #tpu.memory_space<vmem>>, vector<1x1x32x224xbf16>
    %132 = vector.shape_cast %131 : vector<1x1x32x224xbf16> to vector<32x224xbf16>
    %cst_47 = arith.constant dense<0.000000e+00> : vector<192x224xf32>
    %133 = tpu.matmul %130, %132, %cst_47 {dimension_numbers = #tpu.dot_dimension_numbers<[1], [0], [0], [1], [0, 0, 1, 1], [], []>} : vector<192x32xbf16>, vector<32x224xbf16>, vector<192x224xf32> -> vector<192x224xf32>
    %134 = vector.shape_cast %133 : vector<192x224xf32> to vector<8x24x224xf32>
    %135 = vector.extract_strided_slice %134 {offsets = [0, 5, 0], sizes = [8, 8, 32], strides = [1, 1, 1]} : vector<8x24x224xf32> to vector<8x8x32xf32>
    %136 = vector.extract_strided_slice %134 {offsets = [0, 6, 32], sizes = [8, 8, 32], strides = [1, 1, 1]} : vector<8x24x224xf32> to vector<8x8x32xf32>
    %137 = arith.addf %135, %136 : vector<8x8x32xf32>
    %138 = vector.extract_strided_slice %134 {offsets = [0, 7, 64], sizes = [8, 8, 32], strides = [1, 1, 1]} : vector<8x24x224xf32> to vector<8x8x32xf32>
    %139 = arith.addf %137, %138 : vector<8x8x32xf32>
    %140 = vector.extract_strided_slice %134 {offsets = [0, 8, 96], sizes = [8, 8, 32], strides = [1, 1, 1]} : vector<8x24x224xf32> to vector<8x8x32xf32>
    %141 = arith.addf %139, %140 : vector<8x8x32xf32>
    %142 = vector.extract_strided_slice %134 {offsets = [0, 9, 128], sizes = [8, 8, 32], strides = [1, 1, 1]} : vector<8x24x224xf32> to vector<8x8x32xf32>
    %143 = arith.addf %141, %142 : vector<8x8x32xf32>
    %144 = vector.extract_strided_slice %134 {offsets = [0, 10, 160], sizes = [8, 8, 32], strides = [1, 1, 1]} : vector<8x24x224xf32> to vector<8x8x32xf32>
    %145 = arith.addf %143, %144 : vector<8x8x32xf32>
    %146 = vector.extract_strided_slice %134 {offsets = [0, 11, 192], sizes = [8, 8, 32], strides = [1, 1, 1]} : vector<8x24x224xf32> to vector<8x8x32xf32>
    %147 = arith.addf %145, %146 : vector<8x8x32xf32>
    %148 = arith.addf %125, %147 : vector<8x8x32xf32>
    %c5_i32 = arith.constant 5 : i32
    %149 = arith.addi %c5_i32, %34 : i32
    %150 = arith.index_cast %149 : i32 to index
    %c0_48 = arith.constant 0 : index
    %c0_49 = arith.constant 0 : index
    %151 = vector.load %arg14[%150, %c0_48, %c0_49] : memref<14x24x32xf32, #tpu.memory_space<vmem>>, vector<8x24x32xf32>
    %152 = vector.shape_cast %151 : vector<8x24x32xf32> to vector<192x32xf32>
    %153 = arith.truncf %152 : vector<192x32xf32> to vector<192x32xbf16>
    %c0_50 = arith.constant 0 : index
    %c5 = arith.constant 5 : index
    %c0_51 = arith.constant 0 : index
    %c0_52 = arith.constant 0 : index
    %154 = vector.load %arg7[%c0_50, %c5, %c0_51, %c0_52] : memref<1x7x32x224xbf16, #tpu.memory_space<vmem>>, vector<1x1x32x224xbf16>
    %155 = vector.shape_cast %154 : vector<1x1x32x224xbf16> to vector<32x224xbf16>
    %cst_53 = arith.constant dense<0.000000e+00> : vector<192x224xf32>
    %156 = tpu.matmul %153, %155, %cst_53 {dimension_numbers = #tpu.dot_dimension_numbers<[1], [0], [0], [1], [0, 0, 1, 1], [], []>} : vector<192x32xbf16>, vector<32x224xbf16>, vector<192x224xf32> -> vector<192x224xf32>
    %157 = vector.shape_cast %156 : vector<192x224xf32> to vector<8x24x224xf32>
    %158 = vector.extract_strided_slice %157 {offsets = [0, 5, 0], sizes = [8, 8, 32], strides = [1, 1, 1]} : vector<8x24x224xf32> to vector<8x8x32xf32>
    %159 = vector.extract_strided_slice %157 {offsets = [0, 6, 32], sizes = [8, 8, 32], strides = [1, 1, 1]} : vector<8x24x224xf32> to vector<8x8x32xf32>
    %160 = arith.addf %158, %159 : vector<8x8x32xf32>
    %161 = vector.extract_strided_slice %157 {offsets = [0, 7, 64], sizes = [8, 8, 32], strides = [1, 1, 1]} : vector<8x24x224xf32> to vector<8x8x32xf32>
    %162 = arith.addf %160, %161 : vector<8x8x32xf32>
    %163 = vector.extract_strided_slice %157 {offsets = [0, 8, 96], sizes = [8, 8, 32], strides = [1, 1, 1]} : vector<8x24x224xf32> to vector<8x8x32xf32>
    %164 = arith.addf %162, %163 : vector<8x8x32xf32>
    %165 = vector.extract_strided_slice %157 {offsets = [0, 9, 128], sizes = [8, 8, 32], strides = [1, 1, 1]} : vector<8x24x224xf32> to vector<8x8x32xf32>
    %166 = arith.addf %164, %165 : vector<8x8x32xf32>
    %167 = vector.extract_strided_slice %157 {offsets = [0, 10, 160], sizes = [8, 8, 32], strides = [1, 1, 1]} : vector<8x24x224xf32> to vector<8x8x32xf32>
    %168 = arith.addf %166, %167 : vector<8x8x32xf32>
    %169 = vector.extract_strided_slice %157 {offsets = [0, 11, 192], sizes = [8, 8, 32], strides = [1, 1, 1]} : vector<8x24x224xf32> to vector<8x8x32xf32>
    %170 = arith.addf %168, %169 : vector<8x8x32xf32>
    %171 = arith.addf %148, %170 : vector<8x8x32xf32>
    %c6_i32 = arith.constant 6 : i32
    %172 = arith.addi %c6_i32, %34 : i32
    %173 = arith.index_cast %172 : i32 to index
    %c0_54 = arith.constant 0 : index
    %c0_55 = arith.constant 0 : index
    %174 = vector.load %arg14[%173, %c0_54, %c0_55] : memref<14x24x32xf32, #tpu.memory_space<vmem>>, vector<8x24x32xf32>
    %175 = vector.shape_cast %174 : vector<8x24x32xf32> to vector<192x32xf32>
    %176 = arith.truncf %175 : vector<192x32xf32> to vector<192x32xbf16>
    %c0_56 = arith.constant 0 : index
    %c6 = arith.constant 6 : index
    %c0_57 = arith.constant 0 : index
    %c0_58 = arith.constant 0 : index
    %177 = vector.load %arg7[%c0_56, %c6, %c0_57, %c0_58] : memref<1x7x32x224xbf16, #tpu.memory_space<vmem>>, vector<1x1x32x224xbf16>
    %178 = vector.shape_cast %177 : vector<1x1x32x224xbf16> to vector<32x224xbf16>
    %cst_59 = arith.constant dense<0.000000e+00> : vector<192x224xf32>
    %179 = tpu.matmul %176, %178, %cst_59 {dimension_numbers = #tpu.dot_dimension_numbers<[1], [0], [0], [1], [0, 0, 1, 1], [], []>} : vector<192x32xbf16>, vector<32x224xbf16>, vector<192x224xf32> -> vector<192x224xf32>
    %180 = vector.shape_cast %179 : vector<192x224xf32> to vector<8x24x224xf32>
    %181 = vector.extract_strided_slice %180 {offsets = [0, 5, 0], sizes = [8, 8, 32], strides = [1, 1, 1]} : vector<8x24x224xf32> to vector<8x8x32xf32>
    %182 = vector.extract_strided_slice %180 {offsets = [0, 6, 32], sizes = [8, 8, 32], strides = [1, 1, 1]} : vector<8x24x224xf32> to vector<8x8x32xf32>
    %183 = arith.addf %181, %182 : vector<8x8x32xf32>
    %184 = vector.extract_strided_slice %180 {offsets = [0, 7, 64], sizes = [8, 8, 32], strides = [1, 1, 1]} : vector<8x24x224xf32> to vector<8x8x32xf32>
    %185 = arith.addf %183, %184 : vector<8x8x32xf32>
    %186 = vector.extract_strided_slice %180 {offsets = [0, 8, 96], sizes = [8, 8, 32], strides = [1, 1, 1]} : vector<8x24x224xf32> to vector<8x8x32xf32>
    %187 = arith.addf %185, %186 : vector<8x8x32xf32>
    %188 = vector.extract_strided_slice %180 {offsets = [0, 9, 128], sizes = [8, 8, 32], strides = [1, 1, 1]} : vector<8x24x224xf32> to vector<8x8x32xf32>
    %189 = arith.addf %187, %188 : vector<8x8x32xf32>
    %190 = vector.extract_strided_slice %180 {offsets = [0, 10, 160], sizes = [8, 8, 32], strides = [1, 1, 1]} : vector<8x24x224xf32> to vector<8x8x32xf32>
    %191 = arith.addf %189, %190 : vector<8x8x32xf32>
    %192 = vector.extract_strided_slice %180 {offsets = [0, 11, 192], sizes = [8, 8, 32], strides = [1, 1, 1]} : vector<8x24x224xf32> to vector<8x8x32xf32>
    %193 = arith.addf %191, %192 : vector<8x8x32xf32>
    %194 = arith.addf %171, %193 : vector<8x8x32xf32>
    %195 = arith.index_cast %34 : i32 to index
    %c0_60 = arith.constant 0 : index
    %c0_61 = arith.constant 0 : index
    %196 = vector.load %arg13[%195, %c0_60, %c0_61] : memref<8x8x32xf32, #tpu.memory_space<vmem>>, vector<8x8x32xf32>
    tpu.vector_store %arg13[%195, %c0_60, %c0_61], %194 {strides = array<i32>} : memref<8x8x32xf32, #tpu.memory_space<vmem>>, vector<8x8x32xf32>,
    %c1_i32_62 = arith.constant 1 : i32
    %c0_63 = arith.constant 0 : index
    %c0_64 = arith.constant 0 : index
    %c0_65 = arith.constant 0 : index
    %197 = vector.load %arg13[%c0_63, %c0_64, %c0_65] : memref<8x8x32xf32, #tpu.memory_space<vmem>>, vector<8x8x32xf32>
    %198 = vector.shape_cast %197 : vector<8x8x32xf32> to vector<64x32xf32>
    %cst_66 = arith.constant dense<0.000000e+00> : vector<32xf32>
    %199 = vector.multi_reduction <add>, %198, %cst_66 [0] : vector<64x32xf32> to vector<32xf32>
    %200 = vector.shape_cast %199 : vector<32xf32> to vector<1x32xf32>
    %201 = arith.mulf %198, %198 : vector<64x32xf32>
    %cst_67 = arith.constant dense<0.000000e+00> : vector<32xf32>
    %202 = vector.multi_reduction <add>, %201, %cst_67 [0] : vector<64x32xf32> to vector<32xf32>
    %203 = vector.shape_cast %202 : vector<32xf32> to vector<1x32xf32>
    %cst_68 = arith.constant 1.562500e-02 : f32
    %204 = vector.broadcast %cst_68 : f32 to vector<1x32xf32>
    %205 = arith.mulf %200, %204 : vector<1x32xf32>
    %cst_69 = arith.constant 1.562500e-02 : f32
    %206 = vector.broadcast %cst_69 : f32 to vector<1x32xf32>
    %207 = arith.mulf %203, %206 : vector<1x32xf32>
    %208 = arith.mulf %205, %205 : vector<1x32xf32>
    %209 = arith.subf %207, %208 : vector<1x32xf32>
    %cst_70 = arith.constant 0.000000e+00 : f32
    %210 = vector.broadcast %cst_70 : f32 to vector<1x32xf32>
    %211 = arith.maximumf %209, %210 : vector<1x32xf32>
    %212 = vector.broadcast %205 : vector<1x32xf32> to vector<64x32xf32>
    %213 = arith.subf %198, %212 : vector<64x32xf32>
    %cst_71 = arith.constant 9.99999974E-6 : f32
    %214 = vector.broadcast %cst_71 : f32 to vector<1x32xf32>
    %215 = arith.addf %211, %214 : vector<1x32xf32>
    %216 = math.rsqrt %215 : vector<1x32xf32>
    %217 = vector.broadcast %216 : vector<1x32xf32> to vector<64x32xf32>
    %218 = arith.mulf %213, %217 : vector<64x32xf32>
    %cst_72 = arith.constant 0.000000e+00 : f32
    %219 = vector.broadcast %cst_72 : f32 to vector<64x32xf32>
    %220 = arith.maximumf %218, %219 : vector<64x32xf32>
    %221 = arith.truncf %220 : vector<64x32xf32> to vector<64x32xbf16>
    %c0_73 = arith.constant 0 : index
    %c0_74 = arith.constant 0 : index
    %c0_75 = arith.constant 0 : index
    %222 = vector.load %arg8[%c0_73, %c0_74, %c0_75] : memref<1x32x32xbf16, #tpu.memory_space<vmem>>, vector<1x32x32xbf16>
    %223 = vector.shape_cast %222 : vector<1x32x32xbf16> to vector<32x32xbf16>
    %cst_76 = arith.constant dense<0.000000e+00> : vector<64x32xf32>
    %224 = tpu.matmul %221, %223, %cst_76 {dimension_numbers = #tpu.dot_dimension_numbers<[1], [0], [0], [1], [0, 0, 1, 1], [], []>} : vector<64x32xbf16>, vector<32x32xbf16>, vector<64x32xf32> -> vector<64x32xf32>
    %cst_77 = arith.constant dense<0.000000e+00> : vector<32xf32>
    %225 = vector.multi_reduction <add>, %224, %cst_77 [0] : vector<64x32xf32> to vector<32xf32>
    %226 = vector.shape_cast %225 : vector<32xf32> to vector<1x32xf32>
    %227 = arith.mulf %224, %224 : vector<64x32xf32>
    %cst_78 = arith.constant dense<0.000000e+00> : vector<32xf32>
    %228 = vector.multi_reduction <add>, %227, %cst_78 [0] : vector<64x32xf32> to vector<32xf32>
    %229 = vector.shape_cast %228 : vector<32xf32> to vector<1x32xf32>
    %cst_79 = arith.constant 1.562500e-02 : f32
    %230 = vector.broadcast %cst_79 : f32 to vector<1x32xf32>
    %231 = arith.mulf %226, %230 : vector<1x32xf32>
    %cst_80 = arith.constant 1.562500e-02 : f32
    %232 = vector.broadcast %cst_80 : f32 to vector<1x32xf32>
    %233 = arith.mulf %229, %232 : vector<1x32xf32>
    %234 = arith.mulf %231, %231 : vector<1x32xf32>
    %235 = arith.subf %233, %234 : vector<1x32xf32>
    %cst_81 = arith.constant 0.000000e+00 : f32
    %236 = vector.broadcast %cst_81 : f32 to vector<1x32xf32>
    %237 = arith.maximumf %235, %236 : vector<1x32xf32>
    %238 = vector.broadcast %231 : vector<1x32xf32> to vector<64x32xf32>
    %239 = arith.subf %224, %238 : vector<64x32xf32>
    %cst_82 = arith.constant 9.99999974E-6 : f32
    %240 = vector.broadcast %cst_82 : f32 to vector<1x32xf32>
    %241 = arith.addf %237, %240 : vector<1x32xf32>
    %242 = math.rsqrt %241 : vector<1x32xf32>
    %243 = vector.broadcast %242 : vector<1x32xf32> to vector<64x32xf32>
    %244 = arith.mulf %239, %243 : vector<64x32xf32>
    %cst_83 = arith.constant 0.000000e+00 : f32
    %245 = vector.broadcast %cst_83 : f32 to vector<64x32xf32>
    %246 = arith.maximumf %244, %245 : vector<64x32xf32>
    %c0_84 = arith.constant 0 : index
    %c0_85 = arith.constant 0 : index
    %c0_86 = arith.constant 0 : index
    %247 = vector.load %arg12[%c0_84, %c0_85, %c0_86] : memref<8x8x32xf32, #tpu.memory_space<vmem>>, vector<8x8x32xf32>
    %248 = vector.shape_cast %246 : vector<64x32xf32> to vector<8x8x32xf32>
    %249 = arith.addf %247, %248 : vector<8x8x32xf32>
    %c0_87 = arith.constant 0 : index
    %c0_88 = arith.constant 0 : index
    %c0_89 = arith.constant 0 : index
    %250 = vector.load %arg12[%c0_87, %c0_88, %c0_89] : memref<8x8x32xf32, #tpu.memory_space<vmem>>, vector<8x8x32xf32>
    tpu.vector_store %arg12[%c0_87, %c0_88, %c0_89], %249 {strides = array<i32>} : memref<8x8x32xf32, #tpu.memory_space<vmem>>, vector<8x8x32xf32>,
    %c1_i32_90 = arith.constant 1 : i32
    %251 = arith.cmpi eq, %arg1, %c1_i32_90 : i32
    %252 = arith.extui %251 : i1 to i32
    %c0_i32_91 = arith.constant 0 : i32
    %253 = arith.cmpi ne, %252, %c0_i32_91 : i32
    scf.if %253 {
      %c0_92 = arith.constant 0 : index
      %c0_93 = arith.constant 0 : index
      %c0_94 = arith.constant 0 : index
      %254 = vector.load %arg12[%c0_92, %c0_93, %c0_94] : memref<8x8x32xf32, #tpu.memory_space<vmem>>, vector<8x8x32xf32>
      %c3_95 = arith.constant 3 : index
      %c8_96 = arith.constant 8 : index
      %c0_97 = arith.constant 0 : index
      %255 = vector.load %arg14[%c3_95, %c8_96, %c0_97] : memref<14x24x32xf32, #tpu.memory_space<vmem>>, vector<8x8x32xf32>
      tpu.vector_store %arg14[%c3_95, %c8_96, %c0_97], %254 {strides = array<i32>} : memref<14x24x32xf32, #tpu.memory_space<vmem>>, vector<8x8x32xf32>,
      %c0_98 = arith.constant 0 : index
      %c0_99 = arith.constant 0 : index
      %c0_100 = arith.constant 0 : index
      %256 = vector.load %arg9[%c0_98, %c0_99, %c0_100] : memref<7x7x32xf32, #tpu.memory_space<vmem>>, vector<1x1x32xf32>
      %c0_101 = arith.constant 0 : index
      %c5_102 = arith.constant 5 : index
      %c0_103 = arith.constant 0 : index
      %257 = vector.load %arg14[%c0_101, %c5_102, %c0_103] : memref<14x24x32xf32, #tpu.memory_space<vmem>>, vector<8x8x32xf32>
      %258 = vector.broadcast %256 : vector<1x1x32xf32> to vector<8x8x32xf32>
      %259 = arith.mulf %257, %258 : vector<8x8x32xf32>
      %c0_104 = arith.constant 0 : index
      %c1_105 = arith.constant 1 : index
      %c0_106 = arith.constant 0 : index
      %260 = vector.load %arg9[%c0_104, %c1_105, %c0_106] : memref<7x7x32xf32, #tpu.memory_space<vmem>>, vector<1x1x32xf32>
      %c0_107 = arith.constant 0 : index
      %c6_108 = arith.constant 6 : index
      %c0_109 = arith.constant 0 : index
      %261 = vector.load %arg14[%c0_107, %c6_108, %c0_109] : memref<14x24x32xf32, #tpu.memory_space<vmem>>, vector<8x8x32xf32>
      %262 = vector.broadcast %260 : vector<1x1x32xf32> to vector<8x8x32xf32>
      %263 = arith.mulf %261, %262 : vector<8x8x32xf32>
      %264 = arith.addf %259, %263 : vector<8x8x32xf32>
      %c0_110 = arith.constant 0 : index
      %c2_111 = arith.constant 2 : index
      %c0_112 = arith.constant 0 : index
      %265 = vector.load %arg9[%c0_110, %c2_111, %c0_112] : memref<7x7x32xf32, #tpu.memory_space<vmem>>, vector<1x1x32xf32>
      %c0_113 = arith.constant 0 : index
      %c7 = arith.constant 7 : index
      %c0_114 = arith.constant 0 : index
      %266 = vector.load %arg14[%c0_113, %c7, %c0_114] : memref<14x24x32xf32, #tpu.memory_space<vmem>>, vector<8x8x32xf32>
      %267 = vector.broadcast %265 : vector<1x1x32xf32> to vector<8x8x32xf32>
      %268 = arith.mulf %266, %267 : vector<8x8x32xf32>
      %269 = arith.addf %264, %268 : vector<8x8x32xf32>
      %c0_115 = arith.constant 0 : index
      %c3_116 = arith.constant 3 : index
      %c0_117 = arith.constant 0 : index
      %270 = vector.load %arg9[%c0_115, %c3_116, %c0_117] : memref<7x7x32xf32, #tpu.memory_space<vmem>>, vector<1x1x32xf32>
      %c0_118 = arith.constant 0 : index
      %c8_119 = arith.constant 8 : index
      %c0_120 = arith.constant 0 : index
      %271 = vector.load %arg14[%c0_118, %c8_119, %c0_120] : memref<14x24x32xf32, #tpu.memory_space<vmem>>, vector<8x8x32xf32>
      %272 = vector.broadcast %270 : vector<1x1x32xf32> to vector<8x8x32xf32>
      %273 = arith.mulf %271, %272 : vector<8x8x32xf32>
      %274 = arith.addf %269, %273 : vector<8x8x32xf32>
      %c0_121 = arith.constant 0 : index
      %c4_122 = arith.constant 4 : index
      %c0_123 = arith.constant 0 : index
      %275 = vector.load %arg9[%c0_121, %c4_122, %c0_123] : memref<7x7x32xf32, #tpu.memory_space<vmem>>, vector<1x1x32xf32>
      %c0_124 = arith.constant 0 : index
      %c9 = arith.constant 9 : index
      %c0_125 = arith.constant 0 : index
      %276 = vector.load %arg14[%c0_124, %c9, %c0_125] : memref<14x24x32xf32, #tpu.memory_space<vmem>>, vector<8x8x32xf32>
      %277 = vector.broadcast %275 : vector<1x1x32xf32> to vector<8x8x32xf32>
      %278 = arith.mulf %276, %277 : vector<8x8x32xf32>
      %279 = arith.addf %274, %278 : vector<8x8x32xf32>
      %c0_126 = arith.constant 0 : index
      %c5_127 = arith.constant 5 : index
      %c0_128 = arith.constant 0 : index
      %280 = vector.load %arg9[%c0_126, %c5_127, %c0_128] : memref<7x7x32xf32, #tpu.memory_space<vmem>>, vector<1x1x32xf32>
      %c0_129 = arith.constant 0 : index
      %c10 = arith.constant 10 : index
      %c0_130 = arith.constant 0 : index
      %281 = vector.load %arg14[%c0_129, %c10, %c0_130] : memref<14x24x32xf32, #tpu.memory_space<vmem>>, vector<8x8x32xf32>
      %282 = vector.broadcast %280 : vector<1x1x32xf32> to vector<8x8x32xf32>
      %283 = arith.mulf %281, %282 : vector<8x8x32xf32>
      %284 = arith.addf %279, %283 : vector<8x8x32xf32>
      %c0_131 = arith.constant 0 : index
      %c6_132 = arith.constant 6 : index
      %c0_133 = arith.constant 0 : index
      %285 = vector.load %arg9[%c0_131, %c6_132, %c0_133] : memref<7x7x32xf32, #tpu.memory_space<vmem>>, vector<1x1x32xf32>
      %c0_134 = arith.constant 0 : index
      %c11 = arith.constant 11 : index
      %c0_135 = arith.constant 0 : index
      %286 = vector.load %arg14[%c0_134, %c11, %c0_135] : memref<14x24x32xf32, #tpu.memory_space<vmem>>, vector<8x8x32xf32>
      %287 = vector.broadcast %285 : vector<1x1x32xf32> to vector<8x8x32xf32>
      %288 = arith.mulf %286, %287 : vector<8x8x32xf32>
      %289 = arith.addf %284, %288 : vector<8x8x32xf32>
      %c0_136 = arith.constant 0 : index
      %c0_137 = arith.constant 0 : index
      %c0_138 = arith.constant 0 : index
      %290 = vector.load %arg13[%c0_136, %c0_137, %c0_138] : memref<8x8x32xf32, #tpu.memory_space<vmem>>, vector<8x8x32xf32>
      tpu.vector_store %arg13[%c0_136, %c0_137, %c0_138], %289 {strides = array<i32>} : memref<8x8x32xf32, #tpu.memory_space<vmem>>, vector<8x8x32xf32>,
      %c1_139 = arith.constant 1 : index
      %c0_140 = arith.constant 0 : index
      %c0_141 = arith.constant 0 : index
      %291 = vector.load %arg9[%c1_139, %c0_140, %c0_141] : memref<7x7x32xf32, #tpu.memory_space<vmem>>, vector<1x1x32xf32>
      %c1_142 = arith.constant 1 : index
      %c5_143 = arith.constant 5 : index
      %c0_144 = arith.constant 0 : index
      %292 = vector.load %arg14[%c1_142, %c5_143, %c0_144] : memref<14x24x32xf32, #tpu.memory_space<vmem>>, vector<8x8x32xf32>
      %293 = vector.broadcast %291 : vector<1x1x32xf32> to vector<8x8x32xf32>
      %294 = arith.mulf %292, %293 : vector<8x8x32xf32>
      %c1_145 = arith.constant 1 : index
      %c1_146 = arith.constant 1 : index
      %c0_147 = arith.constant 0 : index
      %295 = vector.load %arg9[%c1_145, %c1_146, %c0_147] : memref<7x7x32xf32, #tpu.memory_space<vmem>>, vector<1x1x32xf32>
      %c1_148 = arith.constant 1 : index
      %c6_149 = arith.constant 6 : index
      %c0_150 = arith.constant 0 : index
      %296 = vector.load %arg14[%c1_148, %c6_149, %c0_150] : memref<14x24x32xf32, #tpu.memory_space<vmem>>, vector<8x8x32xf32>
      %297 = vector.broadcast %295 : vector<1x1x32xf32> to vector<8x8x32xf32>
      %298 = arith.mulf %296, %297 : vector<8x8x32xf32>
      %299 = arith.addf %294, %298 : vector<8x8x32xf32>
      %c1_151 = arith.constant 1 : index
      %c2_152 = arith.constant 2 : index
      %c0_153 = arith.constant 0 : index
      %300 = vector.load %arg9[%c1_151, %c2_152, %c0_153] : memref<7x7x32xf32, #tpu.memory_space<vmem>>, vector<1x1x32xf32>
      %c1_154 = arith.constant 1 : index
      %c7_155 = arith.constant 7 : index
      %c0_156 = arith.constant 0 : index
      %301 = vector.load %arg14[%c1_154, %c7_155, %c0_156] : memref<14x24x32xf32, #tpu.memory_space<vmem>>, vector<8x8x32xf32>
      %302 = vector.broadcast %300 : vector<1x1x32xf32> to vector<8x8x32xf32>
      %303 = arith.mulf %301, %302 : vector<8x8x32xf32>
      %304 = arith.addf %299, %303 : vector<8x8x32xf32>
      %c1_157 = arith.constant 1 : index
      %c3_158 = arith.constant 3 : index
      %c0_159 = arith.constant 0 : index
      %305 = vector.load %arg9[%c1_157, %c3_158, %c0_159] : memref<7x7x32xf32, #tpu.memory_space<vmem>>, vector<1x1x32xf32>
      %c1_160 = arith.constant 1 : index
      %c8_161 = arith.constant 8 : index
      %c0_162 = arith.constant 0 : index
      %306 = vector.load %arg14[%c1_160, %c8_161, %c0_162] : memref<14x24x32xf32, #tpu.memory_space<vmem>>, vector<8x8x32xf32>
      %307 = vector.broadcast %305 : vector<1x1x32xf32> to vector<8x8x32xf32>
      %308 = arith.mulf %306, %307 : vector<8x8x32xf32>
      %309 = arith.addf %304, %308 : vector<8x8x32xf32>
      %c1_163 = arith.constant 1 : index
      %c4_164 = arith.constant 4 : index
      %c0_165 = arith.constant 0 : index
      %310 = vector.load %arg9[%c1_163, %c4_164, %c0_165] : memref<7x7x32xf32, #tpu.memory_space<vmem>>, vector<1x1x32xf32>
      %c1_166 = arith.constant 1 : index
      %c9_167 = arith.constant 9 : index
      %c0_168 = arith.constant 0 : index
      %311 = vector.load %arg14[%c1_166, %c9_167, %c0_168] : memref<14x24x32xf32, #tpu.memory_space<vmem>>, vector<8x8x32xf32>
      %312 = vector.broadcast %310 : vector<1x1x32xf32> to vector<8x8x32xf32>
      %313 = arith.mulf %311, %312 : vector<8x8x32xf32>
      %314 = arith.addf %309, %313 : vector<8x8x32xf32>
      %c1_169 = arith.constant 1 : index
      %c5_170 = arith.constant 5 : index
      %c0_171 = arith.constant 0 : index
      %315 = vector.load %arg9[%c1_169, %c5_170, %c0_171] : memref<7x7x32xf32, #tpu.memory_space<vmem>>, vector<1x1x32xf32>
      %c1_172 = arith.constant 1 : index
      %c10_173 = arith.constant 10 : index
      %c0_174 = arith.constant 0 : index
      %316 = vector.load %arg14[%c1_172, %c10_173, %c0_174] : memref<14x24x32xf32, #tpu.memory_space<vmem>>, vector<8x8x32xf32>
      %317 = vector.broadcast %315 : vector<1x1x32xf32> to vector<8x8x32xf32>
      %318 = arith.mulf %316, %317 : vector<8x8x32xf32>
      %319 = arith.addf %314, %318 : vector<8x8x32xf32>
      %c1_175 = arith.constant 1 : index
      %c6_176 = arith.constant 6 : index
      %c0_177 = arith.constant 0 : index
      %320 = vector.load %arg9[%c1_175, %c6_176, %c0_177] : memref<7x7x32xf32, #tpu.memory_space<vmem>>, vector<1x1x32xf32>
      %c1_178 = arith.constant 1 : index
      %c11_179 = arith.constant 11 : index
      %c0_180 = arith.constant 0 : index
      %321 = vector.load %arg14[%c1_178, %c11_179, %c0_180] : memref<14x24x32xf32, #tpu.memory_space<vmem>>, vector<8x8x32xf32>
      %322 = vector.broadcast %320 : vector<1x1x32xf32> to vector<8x8x32xf32>
      %323 = arith.mulf %321, %322 : vector<8x8x32xf32>
      %324 = arith.addf %319, %323 : vector<8x8x32xf32>
      %c0_181 = arith.constant 0 : index
      %c0_182 = arith.constant 0 : index
      %c0_183 = arith.constant 0 : index
      %325 = vector.load %arg13[%c0_181, %c0_182, %c0_183] : memref<8x8x32xf32, #tpu.memory_space<vmem>>, vector<8x8x32xf32>
      %326 = arith.addf %325, %324 : vector<8x8x32xf32>
      %c0_184 = arith.constant 0 : index
      %c0_185 = arith.constant 0 : index
      %c0_186 = arith.constant 0 : index
      %327 = vector.load %arg13[%c0_184, %c0_185, %c0_186] : memref<8x8x32xf32, #tpu.memory_space<vmem>>, vector<8x8x32xf32>
      tpu.vector_store %arg13[%c0_184, %c0_185, %c0_186], %326 {strides = array<i32>} : memref<8x8x32xf32, #tpu.memory_space<vmem>>, vector<8x8x32xf32>,
      %c2_187 = arith.constant 2 : index
      %c0_188 = arith.constant 0 : index
      %c0_189 = arith.constant 0 : index
      %328 = vector.load %arg9[%c2_187, %c0_188, %c0_189] : memref<7x7x32xf32, #tpu.memory_space<vmem>>, vector<1x1x32xf32>
      %c2_190 = arith.constant 2 : index
      %c5_191 = arith.constant 5 : index
      %c0_192 = arith.constant 0 : index
      %329 = vector.load %arg14[%c2_190, %c5_191, %c0_192] : memref<14x24x32xf32, #tpu.memory_space<vmem>>, vector<8x8x32xf32>
      %330 = vector.broadcast %328 : vector<1x1x32xf32> to vector<8x8x32xf32>
      %331 = arith.mulf %329, %330 : vector<8x8x32xf32>
      %c2_193 = arith.constant 2 : index
      %c1_194 = arith.constant 1 : index
      %c0_195 = arith.constant 0 : index
      %332 = vector.load %arg9[%c2_193, %c1_194, %c0_195] : memref<7x7x32xf32, #tpu.memory_space<vmem>>, vector<1x1x32xf32>
      %c2_196 = arith.constant 2 : index
      %c6_197 = arith.constant 6 : index
      %c0_198 = arith.constant 0 : index
      %333 = vector.load %arg14[%c2_196, %c6_197, %c0_198] : memref<14x24x32xf32, #tpu.memory_space<vmem>>, vector<8x8x32xf32>
      %334 = vector.broadcast %332 : vector<1x1x32xf32> to vector<8x8x32xf32>
      %335 = arith.mulf %333, %334 : vector<8x8x32xf32>
      %336 = arith.addf %331, %335 : vector<8x8x32xf32>
      %c2_199 = arith.constant 2 : index
      %c2_200 = arith.constant 2 : index
      %c0_201 = arith.constant 0 : index
      %337 = vector.load %arg9[%c2_199, %c2_200, %c0_201] : memref<7x7x32xf32, #tpu.memory_space<vmem>>, vector<1x1x32xf32>
      %c2_202 = arith.constant 2 : index
      %c7_203 = arith.constant 7 : index
      %c0_204 = arith.constant 0 : index
      %338 = vector.load %arg14[%c2_202, %c7_203, %c0_204] : memref<14x24x32xf32, #tpu.memory_space<vmem>>, vector<8x8x32xf32>
      %339 = vector.broadcast %337 : vector<1x1x32xf32> to vector<8x8x32xf32>
      %340 = arith.mulf %338, %339 : vector<8x8x32xf32>
      %341 = arith.addf %336, %340 : vector<8x8x32xf32>
      %c2_205 = arith.constant 2 : index
      %c3_206 = arith.constant 3 : index
      %c0_207 = arith.constant 0 : index
      %342 = vector.load %arg9[%c2_205, %c3_206, %c0_207] : memref<7x7x32xf32, #tpu.memory_space<vmem>>, vector<1x1x32xf32>
      %c2_208 = arith.constant 2 : index
      %c8_209 = arith.constant 8 : index
      %c0_210 = arith.constant 0 : index
      %343 = vector.load %arg14[%c2_208, %c8_209, %c0_210] : memref<14x24x32xf32, #tpu.memory_space<vmem>>, vector<8x8x32xf32>
      %344 = vector.broadcast %342 : vector<1x1x32xf32> to vector<8x8x32xf32>
      %345 = arith.mulf %343, %344 : vector<8x8x32xf32>
      %346 = arith.addf %341, %345 : vector<8x8x32xf32>
      %c2_211 = arith.constant 2 : index
      %c4_212 = arith.constant 4 : index
      %c0_213 = arith.constant 0 : index
      %347 = vector.load %arg9[%c2_211, %c4_212, %c0_213] : memref<7x7x32xf32, #tpu.memory_space<vmem>>, vector<1x1x32xf32>
      %c2_214 = arith.constant 2 : index
      %c9_215 = arith.constant 9 : index
      %c0_216 = arith.constant 0 : index
      %348 = vector.load %arg14[%c2_214, %c9_215, %c0_216] : memref<14x24x32xf32, #tpu.memory_space<vmem>>, vector<8x8x32xf32>
      %349 = vector.broadcast %347 : vector<1x1x32xf32> to vector<8x8x32xf32>
      %350 = arith.mulf %348, %349 : vector<8x8x32xf32>
      %351 = arith.addf %346, %350 : vector<8x8x32xf32>
      %c2_217 = arith.constant 2 : index
      %c5_218 = arith.constant 5 : index
      %c0_219 = arith.constant 0 : index
      %352 = vector.load %arg9[%c2_217, %c5_218, %c0_219] : memref<7x7x32xf32, #tpu.memory_space<vmem>>, vector<1x1x32xf32>
      %c2_220 = arith.constant 2 : index
      %c10_221 = arith.constant 10 : index
      %c0_222 = arith.constant 0 : index
      %353 = vector.load %arg14[%c2_220, %c10_221, %c0_222] : memref<14x24x32xf32, #tpu.memory_space<vmem>>, vector<8x8x32xf32>
      %354 = vector.broadcast %352 : vector<1x1x32xf32> to vector<8x8x32xf32>
      %355 = arith.mulf %353, %354 : vector<8x8x32xf32>
      %356 = arith.addf %351, %355 : vector<8x8x32xf32>
      %c2_223 = arith.constant 2 : index
      %c6_224 = arith.constant 6 : index
      %c0_225 = arith.constant 0 : index
      %357 = vector.load %arg9[%c2_223, %c6_224, %c0_225] : memref<7x7x32xf32, #tpu.memory_space<vmem>>, vector<1x1x32xf32>
      %c2_226 = arith.constant 2 : index
      %c11_227 = arith.constant 11 : index
      %c0_228 = arith.constant 0 : index
      %358 = vector.load %arg14[%c2_226, %c11_227, %c0_228] : memref<14x24x32xf32, #tpu.memory_space<vmem>>, vector<8x8x32xf32>
      %359 = vector.broadcast %357 : vector<1x1x32xf32> to vector<8x8x32xf32>
      %360 = arith.mulf %358, %359 : vector<8x8x32xf32>
      %361 = arith.addf %356, %360 : vector<8x8x32xf32>
      %c0_229 = arith.constant 0 : index
      %c0_230 = arith.constant 0 : index
      %c0_231 = arith.constant 0 : index
      %362 = vector.load %arg13[%c0_229, %c0_230, %c0_231] : memref<8x8x32xf32, #tpu.memory_space<vmem>>, vector<8x8x32xf32>
      %363 = arith.addf %362, %361 : vector<8x8x32xf32>
      %c0_232 = arith.constant 0 : index
      %c0_233 = arith.constant 0 : index
      %c0_234 = arith.constant 0 : index
      %364 = vector.load %arg13[%c0_232, %c0_233, %c0_234] : memref<8x8x32xf32, #tpu.memory_space<vmem>>, vector<8x8x32xf32>
      tpu.vector_store %arg13[%c0_232, %c0_233, %c0_234], %363 {strides = array<i32>} : memref<8x8x32xf32, #tpu.memory_space<vmem>>, vector<8x8x32xf32>,
      %c3_235 = arith.constant 3 : index
      %c0_236 = arith.constant 0 : index
      %c0_237 = arith.constant 0 : index
      %365 = vector.load %arg9[%c3_235, %c0_236, %c0_237] : memref<7x7x32xf32, #tpu.memory_space<vmem>>, vector<1x1x32xf32>
      %c3_238 = arith.constant 3 : index
      %c5_239 = arith.constant 5 : index
      %c0_240 = arith.constant 0 : index
      %366 = vector.load %arg14[%c3_238, %c5_239, %c0_240] : memref<14x24x32xf32, #tpu.memory_space<vmem>>, vector<8x8x32xf32>
      %367 = vector.broadcast %365 : vector<1x1x32xf32> to vector<8x8x32xf32>
      %368 = arith.mulf %366, %367 : vector<8x8x32xf32>
      %c3_241 = arith.constant 3 : index
      %c1_242 = arith.constant 1 : index
      %c0_243 = arith.constant 0 : index
      %369 = vector.load %arg9[%c3_241, %c1_242, %c0_243] : memref<7x7x32xf32, #tpu.memory_space<vmem>>, vector<1x1x32xf32>
      %c3_244 = arith.constant 3 : index
      %c6_245 = arith.constant 6 : index
      %c0_246 = arith.constant 0 : index
      %370 = vector.load %arg14[%c3_244, %c6_245, %c0_246] : memref<14x24x32xf32, #tpu.memory_space<vmem>>, vector<8x8x32xf32>
      %371 = vector.broadcast %369 : vector<1x1x32xf32> to vector<8x8x32xf32>
      %372 = arith.mulf %370, %371 : vector<8x8x32xf32>
      %373 = arith.addf %368, %372 : vector<8x8x32xf32>
      %c3_247 = arith.constant 3 : index
      %c2_248 = arith.constant 2 : index
      %c0_249 = arith.constant 0 : index
      %374 = vector.load %arg9[%c3_247, %c2_248, %c0_249] : memref<7x7x32xf32, #tpu.memory_space<vmem>>, vector<1x1x32xf32>
      %c3_250 = arith.constant 3 : index
      %c7_251 = arith.constant 7 : index
      %c0_252 = arith.constant 0 : index
      %375 = vector.load %arg14[%c3_250, %c7_251, %c0_252] : memref<14x24x32xf32, #tpu.memory_space<vmem>>, vector<8x8x32xf32>
      %376 = vector.broadcast %374 : vector<1x1x32xf32> to vector<8x8x32xf32>
      %377 = arith.mulf %375, %376 : vector<8x8x32xf32>
      %378 = arith.addf %373, %377 : vector<8x8x32xf32>
      %c3_253 = arith.constant 3 : index
      %c3_254 = arith.constant 3 : index
      %c0_255 = arith.constant 0 : index
      %379 = vector.load %arg9[%c3_253, %c3_254, %c0_255] : memref<7x7x32xf32, #tpu.memory_space<vmem>>, vector<1x1x32xf32>
      %c3_256 = arith.constant 3 : index
      %c8_257 = arith.constant 8 : index
      %c0_258 = arith.constant 0 : index
      %380 = vector.load %arg14[%c3_256, %c8_257, %c0_258] : memref<14x24x32xf32, #tpu.memory_space<vmem>>, vector<8x8x32xf32>
      %381 = vector.broadcast %379 : vector<1x1x32xf32> to vector<8x8x32xf32>
      %382 = arith.mulf %380, %381 : vector<8x8x32xf32>
      %383 = arith.addf %378, %382 : vector<8x8x32xf32>
      %c3_259 = arith.constant 3 : index
      %c4_260 = arith.constant 4 : index
      %c0_261 = arith.constant 0 : index
      %384 = vector.load %arg9[%c3_259, %c4_260, %c0_261] : memref<7x7x32xf32, #tpu.memory_space<vmem>>, vector<1x1x32xf32>
      %c3_262 = arith.constant 3 : index
      %c9_263 = arith.constant 9 : index
      %c0_264 = arith.constant 0 : index
      %385 = vector.load %arg14[%c3_262, %c9_263, %c0_264] : memref<14x24x32xf32, #tpu.memory_space<vmem>>, vector<8x8x32xf32>
      %386 = vector.broadcast %384 : vector<1x1x32xf32> to vector<8x8x32xf32>
      %387 = arith.mulf %385, %386 : vector<8x8x32xf32>
      %388 = arith.addf %383, %387 : vector<8x8x32xf32>
      %c3_265 = arith.constant 3 : index
      %c5_266 = arith.constant 5 : index
      %c0_267 = arith.constant 0 : index
      %389 = vector.load %arg9[%c3_265, %c5_266, %c0_267] : memref<7x7x32xf32, #tpu.memory_space<vmem>>, vector<1x1x32xf32>
      %c3_268 = arith.constant 3 : index
      %c10_269 = arith.constant 10 : index
      %c0_270 = arith.constant 0 : index
      %390 = vector.load %arg14[%c3_268, %c10_269, %c0_270] : memref<14x24x32xf32, #tpu.memory_space<vmem>>, vector<8x8x32xf32>
      %391 = vector.broadcast %389 : vector<1x1x32xf32> to vector<8x8x32xf32>
      %392 = arith.mulf %390, %391 : vector<8x8x32xf32>
      %393 = arith.addf %388, %392 : vector<8x8x32xf32>
      %c3_271 = arith.constant 3 : index
      %c6_272 = arith.constant 6 : index
      %c0_273 = arith.constant 0 : index
      %394 = vector.load %arg9[%c3_271, %c6_272, %c0_273] : memref<7x7x32xf32, #tpu.memory_space<vmem>>, vector<1x1x32xf32>
      %c3_274 = arith.constant 3 : index
      %c11_275 = arith.constant 11 : index
      %c0_276 = arith.constant 0 : index
      %395 = vector.load %arg14[%c3_274, %c11_275, %c0_276] : memref<14x24x32xf32, #tpu.memory_space<vmem>>, vector<8x8x32xf32>
      %396 = vector.broadcast %394 : vector<1x1x32xf32> to vector<8x8x32xf32>
      %397 = arith.mulf %395, %396 : vector<8x8x32xf32>
      %398 = arith.addf %393, %397 : vector<8x8x32xf32>
      %c0_277 = arith.constant 0 : index
      %c0_278 = arith.constant 0 : index
      %c0_279 = arith.constant 0 : index
      %399 = vector.load %arg13[%c0_277, %c0_278, %c0_279] : memref<8x8x32xf32, #tpu.memory_space<vmem>>, vector<8x8x32xf32>
      %400 = arith.addf %399, %398 : vector<8x8x32xf32>
      %c0_280 = arith.constant 0 : index
      %c0_281 = arith.constant 0 : index
      %c0_282 = arith.constant 0 : index
      %401 = vector.load %arg13[%c0_280, %c0_281, %c0_282] : memref<8x8x32xf32, #tpu.memory_space<vmem>>, vector<8x8x32xf32>
      tpu.vector_store %arg13[%c0_280, %c0_281, %c0_282], %400 {strides = array<i32>} : memref<8x8x32xf32, #tpu.memory_space<vmem>>, vector<8x8x32xf32>,
      %c4_283 = arith.constant 4 : index
      %c0_284 = arith.constant 0 : index
      %c0_285 = arith.constant 0 : index
      %402 = vector.load %arg9[%c4_283, %c0_284, %c0_285] : memref<7x7x32xf32, #tpu.memory_space<vmem>>, vector<1x1x32xf32>
      %c4_286 = arith.constant 4 : index
      %c5_287 = arith.constant 5 : index
      %c0_288 = arith.constant 0 : index
      %403 = vector.load %arg14[%c4_286, %c5_287, %c0_288] : memref<14x24x32xf32, #tpu.memory_space<vmem>>, vector<8x8x32xf32>
      %404 = vector.broadcast %402 : vector<1x1x32xf32> to vector<8x8x32xf32>
      %405 = arith.mulf %403, %404 : vector<8x8x32xf32>
      %c4_289 = arith.constant 4 : index
      %c1_290 = arith.constant 1 : index
      %c0_291 = arith.constant 0 : index
      %406 = vector.load %arg9[%c4_289, %c1_290, %c0_291] : memref<7x7x32xf32, #tpu.memory_space<vmem>>, vector<1x1x32xf32>
      %c4_292 = arith.constant 4 : index
      %c6_293 = arith.constant 6 : index
      %c0_294 = arith.constant 0 : index
      %407 = vector.load %arg14[%c4_292, %c6_293, %c0_294] : memref<14x24x32xf32, #tpu.memory_space<vmem>>, vector<8x8x32xf32>
      %408 = vector.broadcast %406 : vector<1x1x32xf32> to vector<8x8x32xf32>
      %409 = arith.mulf %407, %408 : vector<8x8x32xf32>
      %410 = arith.addf %405, %409 : vector<8x8x32xf32>
      %c4_295 = arith.constant 4 : index
      %c2_296 = arith.constant 2 : index
      %c0_297 = arith.constant 0 : index
      %411 = vector.load %arg9[%c4_295, %c2_296, %c0_297] : memref<7x7x32xf32, #tpu.memory_space<vmem>>, vector<1x1x32xf32>
      %c4_298 = arith.constant 4 : index
      %c7_299 = arith.constant 7 : index
      %c0_300 = arith.constant 0 : index
      %412 = vector.load %arg14[%c4_298, %c7_299, %c0_300] : memref<14x24x32xf32, #tpu.memory_space<vmem>>, vector<8x8x32xf32>
      %413 = vector.broadcast %411 : vector<1x1x32xf32> to vector<8x8x32xf32>
      %414 = arith.mulf %412, %413 : vector<8x8x32xf32>
      %415 = arith.addf %410, %414 : vector<8x8x32xf32>
      %c4_301 = arith.constant 4 : index
      %c3_302 = arith.constant 3 : index
      %c0_303 = arith.constant 0 : index
      %416 = vector.load %arg9[%c4_301, %c3_302, %c0_303] : memref<7x7x32xf32, #tpu.memory_space<vmem>>, vector<1x1x32xf32>
      %c4_304 = arith.constant 4 : index
      %c8_305 = arith.constant 8 : index
      %c0_306 = arith.constant 0 : index
      %417 = vector.load %arg14[%c4_304, %c8_305, %c0_306] : memref<14x24x32xf32, #tpu.memory_space<vmem>>, vector<8x8x32xf32>
      %418 = vector.broadcast %416 : vector<1x1x32xf32> to vector<8x8x32xf32>
      %419 = arith.mulf %417, %418 : vector<8x8x32xf32>
      %420 = arith.addf %415, %419 : vector<8x8x32xf32>
      %c4_307 = arith.constant 4 : index
      %c4_308 = arith.constant 4 : index
      %c0_309 = arith.constant 0 : index
      %421 = vector.load %arg9[%c4_307, %c4_308, %c0_309] : memref<7x7x32xf32, #tpu.memory_space<vmem>>, vector<1x1x32xf32>
      %c4_310 = arith.constant 4 : index
      %c9_311 = arith.constant 9 : index
      %c0_312 = arith.constant 0 : index
      %422 = vector.load %arg14[%c4_310, %c9_311, %c0_312] : memref<14x24x32xf32, #tpu.memory_space<vmem>>, vector<8x8x32xf32>
      %423 = vector.broadcast %421 : vector<1x1x32xf32> to vector<8x8x32xf32>
      %424 = arith.mulf %422, %423 : vector<8x8x32xf32>
      %425 = arith.addf %420, %424 : vector<8x8x32xf32>
      %c4_313 = arith.constant 4 : index
      %c5_314 = arith.constant 5 : index
      %c0_315 = arith.constant 0 : index
      %426 = vector.load %arg9[%c4_313, %c5_314, %c0_315] : memref<7x7x32xf32, #tpu.memory_space<vmem>>, vector<1x1x32xf32>
      %c4_316 = arith.constant 4 : index
      %c10_317 = arith.constant 10 : index
      %c0_318 = arith.constant 0 : index
      %427 = vector.load %arg14[%c4_316, %c10_317, %c0_318] : memref<14x24x32xf32, #tpu.memory_space<vmem>>, vector<8x8x32xf32>
      %428 = vector.broadcast %426 : vector<1x1x32xf32> to vector<8x8x32xf32>
      %429 = arith.mulf %427, %428 : vector<8x8x32xf32>
      %430 = arith.addf %425, %429 : vector<8x8x32xf32>
      %c4_319 = arith.constant 4 : index
      %c6_320 = arith.constant 6 : index
      %c0_321 = arith.constant 0 : index
      %431 = vector.load %arg9[%c4_319, %c6_320, %c0_321] : memref<7x7x32xf32, #tpu.memory_space<vmem>>, vector<1x1x32xf32>
      %c4_322 = arith.constant 4 : index
      %c11_323 = arith.constant 11 : index
      %c0_324 = arith.constant 0 : index
      %432 = vector.load %arg14[%c4_322, %c11_323, %c0_324] : memref<14x24x32xf32, #tpu.memory_space<vmem>>, vector<8x8x32xf32>
      %433 = vector.broadcast %431 : vector<1x1x32xf32> to vector<8x8x32xf32>
      %434 = arith.mulf %432, %433 : vector<8x8x32xf32>
      %435 = arith.addf %430, %434 : vector<8x8x32xf32>
      %c0_325 = arith.constant 0 : index
      %c0_326 = arith.constant 0 : index
      %c0_327 = arith.constant 0 : index
      %436 = vector.load %arg13[%c0_325, %c0_326, %c0_327] : memref<8x8x32xf32, #tpu.memory_space<vmem>>, vector<8x8x32xf32>
      %437 = arith.addf %436, %435 : vector<8x8x32xf32>
      %c0_328 = arith.constant 0 : index
      %c0_329 = arith.constant 0 : index
      %c0_330 = arith.constant 0 : index
      %438 = vector.load %arg13[%c0_328, %c0_329, %c0_330] : memref<8x8x32xf32, #tpu.memory_space<vmem>>, vector<8x8x32xf32>
      tpu.vector_store %arg13[%c0_328, %c0_329, %c0_330], %437 {strides = array<i32>} : memref<8x8x32xf32, #tpu.memory_space<vmem>>, vector<8x8x32xf32>,
      %c5_331 = arith.constant 5 : index
      %c0_332 = arith.constant 0 : index
      %c0_333 = arith.constant 0 : index
      %439 = vector.load %arg9[%c5_331, %c0_332, %c0_333] : memref<7x7x32xf32, #tpu.memory_space<vmem>>, vector<1x1x32xf32>
      %c5_334 = arith.constant 5 : index
      %c5_335 = arith.constant 5 : index
      %c0_336 = arith.constant 0 : index
      %440 = vector.load %arg14[%c5_334, %c5_335, %c0_336] : memref<14x24x32xf32, #tpu.memory_space<vmem>>, vector<8x8x32xf32>
      %441 = vector.broadcast %439 : vector<1x1x32xf32> to vector<8x8x32xf32>
      %442 = arith.mulf %440, %441 : vector<8x8x32xf32>
      %c5_337 = arith.constant 5 : index
      %c1_338 = arith.constant 1 : index
      %c0_339 = arith.constant 0 : index
      %443 = vector.load %arg9[%c5_337, %c1_338, %c0_339] : memref<7x7x32xf32, #tpu.memory_space<vmem>>, vector<1x1x32xf32>
      %c5_340 = arith.constant 5 : index
      %c6_341 = arith.constant 6 : index
      %c0_342 = arith.constant 0 : index
      %444 = vector.load %arg14[%c5_340, %c6_341, %c0_342] : memref<14x24x32xf32, #tpu.memory_space<vmem>>, vector<8x8x32xf32>
      %445 = vector.broadcast %443 : vector<1x1x32xf32> to vector<8x8x32xf32>
      %446 = arith.mulf %444, %445 : vector<8x8x32xf32>
      %447 = arith.addf %442, %446 : vector<8x8x32xf32>
      %c5_343 = arith.constant 5 : index
      %c2_344 = arith.constant 2 : index
      %c0_345 = arith.constant 0 : index
      %448 = vector.load %arg9[%c5_343, %c2_344, %c0_345] : memref<7x7x32xf32, #tpu.memory_space<vmem>>, vector<1x1x32xf32>
      %c5_346 = arith.constant 5 : index
      %c7_347 = arith.constant 7 : index
      %c0_348 = arith.constant 0 : index
      %449 = vector.load %arg14[%c5_346, %c7_347, %c0_348] : memref<14x24x32xf32, #tpu.memory_space<vmem>>, vector<8x8x32xf32>
      %450 = vector.broadcast %448 : vector<1x1x32xf32> to vector<8x8x32xf32>
      %451 = arith.mulf %449, %450 : vector<8x8x32xf32>
      %452 = arith.addf %447, %451 : vector<8x8x32xf32>
      %c5_349 = arith.constant 5 : index
      %c3_350 = arith.constant 3 : index
      %c0_351 = arith.constant 0 : index
      %453 = vector.load %arg9[%c5_349, %c3_350, %c0_351] : memref<7x7x32xf32, #tpu.memory_space<vmem>>, vector<1x1x32xf32>
      %c5_352 = arith.constant 5 : index
      %c8_353 = arith.constant 8 : index
      %c0_354 = arith.constant 0 : index
      %454 = vector.load %arg14[%c5_352, %c8_353, %c0_354] : memref<14x24x32xf32, #tpu.memory_space<vmem>>, vector<8x8x32xf32>
      %455 = vector.broadcast %453 : vector<1x1x32xf32> to vector<8x8x32xf32>
      %456 = arith.mulf %454, %455 : vector<8x8x32xf32>
      %457 = arith.addf %452, %456 : vector<8x8x32xf32>
      %c5_355 = arith.constant 5 : index
      %c4_356 = arith.constant 4 : index
      %c0_357 = arith.constant 0 : index
      %458 = vector.load %arg9[%c5_355, %c4_356, %c0_357] : memref<7x7x32xf32, #tpu.memory_space<vmem>>, vector<1x1x32xf32>
      %c5_358 = arith.constant 5 : index
      %c9_359 = arith.constant 9 : index
      %c0_360 = arith.constant 0 : index
      %459 = vector.load %arg14[%c5_358, %c9_359, %c0_360] : memref<14x24x32xf32, #tpu.memory_space<vmem>>, vector<8x8x32xf32>
      %460 = vector.broadcast %458 : vector<1x1x32xf32> to vector<8x8x32xf32>
      %461 = arith.mulf %459, %460 : vector<8x8x32xf32>
      %462 = arith.addf %457, %461 : vector<8x8x32xf32>
      %c5_361 = arith.constant 5 : index
      %c5_362 = arith.constant 5 : index
      %c0_363 = arith.constant 0 : index
      %463 = vector.load %arg9[%c5_361, %c5_362, %c0_363] : memref<7x7x32xf32, #tpu.memory_space<vmem>>, vector<1x1x32xf32>
      %c5_364 = arith.constant 5 : index
      %c10_365 = arith.constant 10 : index
      %c0_366 = arith.constant 0 : index
      %464 = vector.load %arg14[%c5_364, %c10_365, %c0_366] : memref<14x24x32xf32, #tpu.memory_space<vmem>>, vector<8x8x32xf32>
      %465 = vector.broadcast %463 : vector<1x1x32xf32> to vector<8x8x32xf32>
      %466 = arith.mulf %464, %465 : vector<8x8x32xf32>
      %467 = arith.addf %462, %466 : vector<8x8x32xf32>
      %c5_367 = arith.constant 5 : index
      %c6_368 = arith.constant 6 : index
      %c0_369 = arith.constant 0 : index
      %468 = vector.load %arg9[%c5_367, %c6_368, %c0_369] : memref<7x7x32xf32, #tpu.memory_space<vmem>>, vector<1x1x32xf32>
      %c5_370 = arith.constant 5 : index
      %c11_371 = arith.constant 11 : index
      %c0_372 = arith.constant 0 : index
      %469 = vector.load %arg14[%c5_370, %c11_371, %c0_372] : memref<14x24x32xf32, #tpu.memory_space<vmem>>, vector<8x8x32xf32>
      %470 = vector.broadcast %468 : vector<1x1x32xf32> to vector<8x8x32xf32>
      %471 = arith.mulf %469, %470 : vector<8x8x32xf32>
      %472 = arith.addf %467, %471 : vector<8x8x32xf32>
      %c0_373 = arith.constant 0 : index
      %c0_374 = arith.constant 0 : index
      %c0_375 = arith.constant 0 : index
      %473 = vector.load %arg13[%c0_373, %c0_374, %c0_375] : memref<8x8x32xf32, #tpu.memory_space<vmem>>, vector<8x8x32xf32>
      %474 = arith.addf %473, %472 : vector<8x8x32xf32>
      %c0_376 = arith.constant 0 : index
      %c0_377 = arith.constant 0 : index
      %c0_378 = arith.constant 0 : index
      %475 = vector.load %arg13[%c0_376, %c0_377, %c0_378] : memref<8x8x32xf32, #tpu.memory_space<vmem>>, vector<8x8x32xf32>
      tpu.vector_store %arg13[%c0_376, %c0_377, %c0_378], %474 {strides = array<i32>} : memref<8x8x32xf32, #tpu.memory_space<vmem>>, vector<8x8x32xf32>,
      %c6_379 = arith.constant 6 : index
      %c0_380 = arith.constant 0 : index
      %c0_381 = arith.constant 0 : index
      %476 = vector.load %arg9[%c6_379, %c0_380, %c0_381] : memref<7x7x32xf32, #tpu.memory_space<vmem>>, vector<1x1x32xf32>
      %c6_382 = arith.constant 6 : index
      %c5_383 = arith.constant 5 : index
      %c0_384 = arith.constant 0 : index
      %477 = vector.load %arg14[%c6_382, %c5_383, %c0_384] : memref<14x24x32xf32, #tpu.memory_space<vmem>>, vector<8x8x32xf32>
      %478 = vector.broadcast %476 : vector<1x1x32xf32> to vector<8x8x32xf32>
      %479 = arith.mulf %477, %478 : vector<8x8x32xf32>
      %c6_385 = arith.constant 6 : index
      %c1_386 = arith.constant 1 : index
      %c0_387 = arith.constant 0 : index
      %480 = vector.load %arg9[%c6_385, %c1_386, %c0_387] : memref<7x7x32xf32, #tpu.memory_space<vmem>>, vector<1x1x32xf32>
      %c6_388 = arith.constant 6 : index
      %c6_389 = arith.constant 6 : index
      %c0_390 = arith.constant 0 : index
      %481 = vector.load %arg14[%c6_388, %c6_389, %c0_390] : memref<14x24x32xf32, #tpu.memory_space<vmem>>, vector<8x8x32xf32>
      %482 = vector.broadcast %480 : vector<1x1x32xf32> to vector<8x8x32xf32>
      %483 = arith.mulf %481, %482 : vector<8x8x32xf32>
      %484 = arith.addf %479, %483 : vector<8x8x32xf32>
      %c6_391 = arith.constant 6 : index
      %c2_392 = arith.constant 2 : index
      %c0_393 = arith.constant 0 : index
      %485 = vector.load %arg9[%c6_391, %c2_392, %c0_393] : memref<7x7x32xf32, #tpu.memory_space<vmem>>, vector<1x1x32xf32>
      %c6_394 = arith.constant 6 : index
      %c7_395 = arith.constant 7 : index
      %c0_396 = arith.constant 0 : index
      %486 = vector.load %arg14[%c6_394, %c7_395, %c0_396] : memref<14x24x32xf32, #tpu.memory_space<vmem>>, vector<8x8x32xf32>
      %487 = vector.broadcast %485 : vector<1x1x32xf32> to vector<8x8x32xf32>
      %488 = arith.mulf %486, %487 : vector<8x8x32xf32>
      %489 = arith.addf %484, %488 : vector<8x8x32xf32>
      %c6_397 = arith.constant 6 : index
      %c3_398 = arith.constant 3 : index
      %c0_399 = arith.constant 0 : index
      %490 = vector.load %arg9[%c6_397, %c3_398, %c0_399] : memref<7x7x32xf32, #tpu.memory_space<vmem>>, vector<1x1x32xf32>
      %c6_400 = arith.constant 6 : index
      %c8_401 = arith.constant 8 : index
      %c0_402 = arith.constant 0 : index
      %491 = vector.load %arg14[%c6_400, %c8_401, %c0_402] : memref<14x24x32xf32, #tpu.memory_space<vmem>>, vector<8x8x32xf32>
      %492 = vector.broadcast %490 : vector<1x1x32xf32> to vector<8x8x32xf32>
      %493 = arith.mulf %491, %492 : vector<8x8x32xf32>
      %494 = arith.addf %489, %493 : vector<8x8x32xf32>
      %c6_403 = arith.constant 6 : index
      %c4_404 = arith.constant 4 : index
      %c0_405 = arith.constant 0 : index
      %495 = vector.load %arg9[%c6_403, %c4_404, %c0_405] : memref<7x7x32xf32, #tpu.memory_space<vmem>>, vector<1x1x32xf32>
      %c6_406 = arith.constant 6 : index
      %c9_407 = arith.constant 9 : index
      %c0_408 = arith.constant 0 : index
      %496 = vector.load %arg14[%c6_406, %c9_407, %c0_408] : memref<14x24x32xf32, #tpu.memory_space<vmem>>, vector<8x8x32xf32>
      %497 = vector.broadcast %495 : vector<1x1x32xf32> to vector<8x8x32xf32>
      %498 = arith.mulf %496, %497 : vector<8x8x32xf32>
      %499 = arith.addf %494, %498 : vector<8x8x32xf32>
      %c6_409 = arith.constant 6 : index
      %c5_410 = arith.constant 5 : index
      %c0_411 = arith.constant 0 : index
      %500 = vector.load %arg9[%c6_409, %c5_410, %c0_411] : memref<7x7x32xf32, #tpu.memory_space<vmem>>, vector<1x1x32xf32>
      %c6_412 = arith.constant 6 : index
      %c10_413 = arith.constant 10 : index
      %c0_414 = arith.constant 0 : index
      %501 = vector.load %arg14[%c6_412, %c10_413, %c0_414] : memref<14x24x32xf32, #tpu.memory_space<vmem>>, vector<8x8x32xf32>
      %502 = vector.broadcast %500 : vector<1x1x32xf32> to vector<8x8x32xf32>
      %503 = arith.mulf %501, %502 : vector<8x8x32xf32>
      %504 = arith.addf %499, %503 : vector<8x8x32xf32>
      %c6_415 = arith.constant 6 : index
      %c6_416 = arith.constant 6 : index
      %c0_417 = arith.constant 0 : index
      %505 = vector.load %arg9[%c6_415, %c6_416, %c0_417] : memref<7x7x32xf32, #tpu.memory_space<vmem>>, vector<1x1x32xf32>
      %c6_418 = arith.constant 6 : index
      %c11_419 = arith.constant 11 : index
      %c0_420 = arith.constant 0 : index
      %506 = vector.load %arg14[%c6_418, %c11_419, %c0_420] : memref<14x24x32xf32, #tpu.memory_space<vmem>>, vector<8x8x32xf32>
      %507 = vector.broadcast %505 : vector<1x1x32xf32> to vector<8x8x32xf32>
      %508 = arith.mulf %506, %507 : vector<8x8x32xf32>
      %509 = arith.addf %504, %508 : vector<8x8x32xf32>
      %c0_421 = arith.constant 0 : index
      %c0_422 = arith.constant 0 : index
      %c0_423 = arith.constant 0 : index
      %510 = vector.load %arg13[%c0_421, %c0_422, %c0_423] : memref<8x8x32xf32, #tpu.memory_space<vmem>>, vector<8x8x32xf32>
      %511 = arith.addf %510, %509 : vector<8x8x32xf32>
      %c0_424 = arith.constant 0 : index
      %c0_425 = arith.constant 0 : index
      %c0_426 = arith.constant 0 : index
      %512 = vector.load %arg13[%c0_424, %c0_425, %c0_426] : memref<8x8x32xf32, #tpu.memory_space<vmem>>, vector<8x8x32xf32>
      tpu.vector_store %arg13[%c0_424, %c0_425, %c0_426], %511 {strides = array<i32>} : memref<8x8x32xf32, #tpu.memory_space<vmem>>, vector<8x8x32xf32>,
      %c0_427 = arith.constant 0 : index
      %c0_428 = arith.constant 0 : index
      %c0_429 = arith.constant 0 : index
      %513 = vector.load %arg13[%c0_427, %c0_428, %c0_429] : memref<8x8x32xf32, #tpu.memory_space<vmem>>, vector<8x8x32xf32>
      %cst_430 = arith.constant dense<0.000000e+00> : vector<8x8xf32>
      %514 = vector.multi_reduction <add>, %513, %cst_430 [2] : vector<8x8x32xf32> to vector<8x8xf32>
      %c0_431 = arith.constant 0 : index
      %c0_432 = arith.constant 0 : index
      %515 = vector.load %arg10[%c0_431, %c0_432] : memref<1x1xf32, #tpu.memory_space<vmem>>, vector<1x1xf32>
      %516 = vector.broadcast %515 : vector<1x1xf32> to vector<8x8xf32>
      %517 = arith.addf %514, %516 : vector<8x8xf32>
      %518 = tpu.iota {dimensions = array<i32: 0>} : vector<8x8xi32>
      %519 = tpu.iota {dimensions = array<i32: 1>} : vector<8x8xi32>
      %520 = arith.cmpi sgt, %519, %518 : vector<8x8xi32>
      %cst_433 = arith.constant 0.000000e+00 : f32
      %521 = vector.broadcast %cst_433 : f32 to vector<8x8xf32>
      %522 = arith.select %520, %517, %521 : vector<8x8xi1>, vector<8x8xf32>
      %c0_434 = arith.constant 0 : index
      %c0_435 = arith.constant 0 : index
      %c0_436 = arith.constant 0 : index
      %523 = vector.load %arg11[%c0_434, %c0_435, %c0_436] : memref<1x8x8xf32, #tpu.memory_space<vmem>>, vector<1x8x8xf32>
      %524 = vector.shape_cast %523 : vector<1x8x8xf32> to vector<8x8xf32>
      %525 = vector.shape_cast %522 : vector<8x8xf32> to vector<1x8x8xf32>
      tpu.vector_store %arg11[%c0_434, %c0_435, %c0_436], %525 {strides = array<i32>} : memref<1x8x8xf32, #tpu.memory_space<vmem>>, vector<1x8x8xf32>,
    } else {
    }
    return
  }
  func.func @transform_0(%arg0: i32, %arg1: i32) -> (i32, i32, i32) {
    %c0_i32 = arith.constant 0 : i32
    %c0_i32_0 = arith.constant 0 : i32
    %c0_i32_1 = arith.constant 0 : i32
    return %arg0, %c0_i32, %c0_i32_0 : i32, i32, i32
  }
  func.func @transform_1(%arg0: i32, %arg1: i32) -> (i32, i32) {
    %c0_i32 = arith.constant 0 : i32
    %c0_i32_0 = arith.constant 0 : i32
    %c0_i32_1 = arith.constant 0 : i32
    return %c0_i32, %c0_i32_0 : i32, i32
  }
  func.func @transform_2(%arg0: i32, %arg1: i32) -> (i32, i32) {
    %c0_i32 = arith.constant 0 : i32
    %c0_i32_0 = arith.constant 0 : i32
    %c0_i32_1 = arith.constant 0 : i32
    return %c0_i32, %c0_i32_0 : i32, i32
  }
  func.func @transform_3(%arg0: i32, %arg1: i32) -> (i32, i32) {
    %c0_i32 = arith.constant 0 : i32
    %c0_i32_0 = arith.constant 0 : i32
    %c0_i32_1 = arith.constant 0 : i32
    return %c0_i32, %c0_i32_0 : i32, i32
  }
  func.func @transform_4(%arg0: i32, %arg1: i32) -> (i32, i32, i32) {
    %c0_i32 = arith.constant 0 : i32
    %c0_i32_0 = arith.constant 0 : i32
    %c0_i32_1 = arith.constant 0 : i32
    return %arg1, %c0_i32, %c0_i32_0 : i32, i32, i32
  }
  func.func @transform_5(%arg0: i32, %arg1: i32) -> (i32, i32, i32, i32) {
    %c0_i32 = arith.constant 0 : i32
    %c0_i32_0 = arith.constant 0 : i32
    %c0_i32_1 = arith.constant 0 : i32
    %c0_i32_2 = arith.constant 0 : i32
    return %arg1, %c0_i32, %c0_i32_0, %c0_i32_1 : i32, i32, i32, i32
  }
  func.func @transform_6(%arg0: i32, %arg1: i32) -> (i32, i32, i32) {
    %c0_i32 = arith.constant 0 : i32
    %c0_i32_0 = arith.constant 0 : i32
    %c0_i32_1 = arith.constant 0 : i32
    return %arg1, %c0_i32, %c0_i32_0 : i32, i32, i32
  }
  func.func @transform_7(%arg0: i32, %arg1: i32) -> (i32, i32, i32) {
    %c0_i32 = arith.constant 0 : i32
    %c0_i32_0 = arith.constant 0 : i32
    %c0_i32_1 = arith.constant 0 : i32
    %c0_i32_2 = arith.constant 0 : i32
    return %c0_i32, %c0_i32_0, %c0_i32_1 : i32, i32, i32
  }
  func.func @transform_8(%arg0: i32, %arg1: i32) -> (i32, i32) {
    %c0_i32 = arith.constant 0 : i32
    %c0_i32_0 = arith.constant 0 : i32
    %c0_i32_1 = arith.constant 0 : i32
    return %c0_i32, %c0_i32_0 : i32, i32
  }
  func.func @transform_9(%arg0: i32, %arg1: i32) -> (i32, i32, i32) {
    %c0_i32 = arith.constant 0 : i32
    %c0_i32_0 = arith.constant 0 : i32
    %c0_i32_1 = arith.constant 0 : i32
    return %arg0, %c0_i32, %c0_i32_0 : i32, i32, i32
  }
}

</mosaic_0001>

<llo_original>
// kernel: forward.1
$region0: #{forward.1}
  #allocation0 [shape = 'u32[]', space=smem, size = 0x4, offset = 0x4, fixed_abs, tag = 'smem constant byte address 0x4 - core index']
  #allocation1 [shape = 'u32[144,128]{1,0:T(1,128)}', space=vmem, size = 0x12000, scoped, tag = 'internal scratch']
  #allocation2 [shape = 'f32[8,8,32]{2,1,0:T(8,128)}', space=vmem, size = 0x8000, scoped, tag = 'scratch operand']
  #allocation3 [shape = 'f32[8,8,32]{2,1,0:T(8,128)}', space=vmem, size = 0x8000, scoped, tag = 'scratch operand']
  #allocation4 [shape = 'f32[14,24,32]{2,1,0:T(8,128)}', space=vmem, size = 0x2a000, scoped, tag = 'scratch operand']
  #allocation5 [shape = 'f32[1,1]{1,0:T(1,128)S(1)}', space=vmem, size = 0x200, scoped, tag = 'scoped memory for forward.1']
  %s0 = inlined_call_operand.vmem [shape: f32[2,8,32], index: 0, kind: input, shape index: {}]
  %s1 = inlined_call_operand.vmem [shape: bf16[32,32], index: 1, kind: input, shape index: {}]
  %s2 = inlined_call_operand.vmem [shape: bf16[32,32], index: 2, kind: input, shape index: {}]
  %s3 = inlined_call_operand.vmem [shape: f32[1,32], index: 3, kind: input, shape index: {}]
  %s4 = inlined_call_operand.vmem [shape: bf16[2,32,32], index: 4, kind: input, shape index: {}]
  %s5 = inlined_call_operand.vmem [shape: bf16[2,7,32,224], index: 5, kind: input, shape index: {}]
  %s6 = inlined_call_operand.vmem [shape: bf16[2,32,32], index: 6, kind: input, shape index: {}]
  %s7 = inlined_call_operand.vmem [shape: f32[7,7,32], index: 7, kind: input, shape index: {}]
  %s8 = inlined_call_operand.<no memory space> [shape: f32[1,1], index: 8, kind: input, shape index: {}]
  %s9 = inlined_call_operand.vmem [shape: f32[2,8,8], index: 9, kind: output, shape index: {}]
  %s10 = sld [smem:[#allocation0]]
  $region77: #{forward.1} parent=0
    _
  %s12 = ssub.s32 1, %s10
  %s13 = scalar_select 0, %s12, %s10
  %v14 = vstv %s8
  %15 = vst [vmem:[#allocation5] sm:$0x1] %v14
  loop: start=0, step=1, limit=6
  $region2: #{forward.1} parent=0 // loop_pre_header
    _
  $region3: #{forward.1} parent=0 // loop_header
    %s17 = sphi 0, %s21
    %p18 = scmp.ge.s32.totalorder %s17, 6
    %s24 = sphi 0, %s36
    %s25 = sphi 0, %s32
    %s26 = sphi 0, %s24
    %s27 = sphi 0, %s25
    %s28 = sphi 0, %s26
    %s29 = sphi 0, %s27
    %s39 = sphi 0, %s41
    %s42 = sphi 0, %s39
    %s43 = sphi 0, %s42
    %s59 = sphi 0, %s43
    %s63 = sphi 0, %s63
    %s65 = sphi 0, %s63
    %s66 = sphi 0, %s65
    %s80 = sphi 0, %s66
    %s84 = sphi 0, %s84
    %s86 = sphi 0, %s84
    %s87 = sphi 0, %s86
    %s101 = sphi 0, %s87
    %s105 = sphi 0, %s105
    %s107 = sphi 0, %s105
    %s108 = sphi 0, %s107
    %s122 = sphi 0, %s108
    %s128 = sphi 0, %s130
    %s131 = sphi 0, %s128
    %s132 = sphi 0, %s131
    %s148 = sphi 0, %s132
    %s154 = sphi 0, %s156
    %s157 = sphi 0, %s154
    %s158 = sphi 0, %s157
    %s174 = sphi 0, %s158
    %s180 = sphi 0, %s182
    %s183 = sphi 0, %s180
    %s184 = sphi 0, %s183
    %s200 = sphi 0, %s184
    %s204 = sphi 0, %s204
    %s206 = sphi 0, %s204
    %s207 = sphi 0, %s206
    %s221 = sphi 0, %s207
    %s225 = sphi 0, %s225
    %s227 = sphi 0, %s225
    %s228 = sphi 0, %s227
    %s242 = sphi 0, %s228
    %s248 = sphi 0, %s250
    %s251 = sphi 0, %s248
    %s252 = sphi 0, %s251
    %s268 = sphi 0, %s252
  $region4: #{forward.1} parent=0 // loop_header_branch
    %20 = sbr.rel (%p18) target = $region8
  $region5: #{forward.1} parent=0 // loop_body
    %s22 = ssub.s32 %s17, 1
    %s23 = ssub.s32 %s17, 2
    %s30 = sadd.s32 1, %s25
    %p31 = scmp.ge.s32.totalorder %s30, 2
    %s32 = scalar_select %p31, 0, %s30
    %s33 = sadd.s32 1, %s24
    %s34 = scalar_select %p31, %s33, %s24
    %p35 = scmp.ge.s32.totalorder %s34, 2
    %s36 = scalar_select %p35, 0, %s34
    %s37 = ssub.s32 %s24, %s36
    %p38 = scmp.eq.s32.totalorder %s37, 0
    %s40 = sadd.s32 %s39, 1
    %s41 = scalar_select %p38, %s39, %s40
    %p44 = pneg %p38
    %p45 = scmp.eq.s32.totalorder %s17, 3
    %p46 = por %p44, %p45
    %p47 = scmp.ne.s32.totalorder %s39, %s42
    %p48 = scmp.eq.s32.totalorder %s17, 0
    %p49 = por %p47, %p48
    %p50 = scmp.ne.s32.totalorder %s39, %s42
    %p51 = scmp.eq.s32.totalorder %s22, 3
    %p52 = por %p50, %p51
    %p53 = scmp.ne.s32.totalorder %s42, %s43
    %p54 = scmp.eq.s32.totalorder %s22, 0
    %p55 = por %p53, %p54
    %p56 = scmp.ne.s32.totalorder %s42, %s43
    %p57 = scmp.eq.s32.totalorder %s23, 3
    %p58 = por %p56, %p57
    %p60 = scmp.ne.s32.totalorder %s43, %s59
    %p61 = scmp.eq.s32.totalorder %s23, 0
    %p62 = por %p60, %p61
    %s64 = sadd.s32 %s63, 1
    %p67 = scmp.eq.s32.totalorder %s17, 3
    %p68 = scmp.ne.s32.totalorder %s63, %s65
    %p69 = scmp.eq.s32.totalorder %s17, 0
    %p70 = por %p68, %p69
    %p71 = scmp.ne.s32.totalorder %s63, %s65
    %p72 = scmp.eq.s32.totalorder %s22, 3
    %p73 = por %p71, %p72
    %p74 = scmp.ne.s32.totalorder %s65, %s66
    %p75 = scmp.eq.s32.totalorder %s22, 0
    %p76 = por %p74, %p75
    %p77 = scmp.ne.s32.totalorder %s65, %s66
    %p78 = scmp.eq.s32.totalorder %s23, 3
    %p79 = por %p77, %p78
    %p81 = scmp.ne.s32.totalorder %s66, %s80
    %p82 = scmp.eq.s32.totalorder %s23, 0
    %p83 = por %p81, %p82
    %s85 = sadd.s32 %s84, 1
    %p88 = scmp.eq.s32.totalorder %s17, 3
    %p89 = scmp.ne.s32.totalorder %s84, %s86
    %p90 = scmp.eq.s32.totalorder %s17, 0
    %p91 = por %p89, %p90
    %p92 = scmp.ne.s32.totalorder %s84, %s86
    %p93 = scmp.eq.s32.totalorder %s22, 3
    %p94 = por %p92, %p93
    %p95 = scmp.ne.s32.totalorder %s86, %s87
    %p96 = scmp.eq.s32.totalorder %s22, 0
    %p97 = por %p95, %p96
    %p98 = scmp.ne.s32.totalorder %s86, %s87
    %p99 = scmp.eq.s32.totalorder %s23, 3
    %p100 = por %p98, %p99
    %p102 = scmp.ne.s32.totalorder %s87, %s101
    %p103 = scmp.eq.s32.totalorder %s23, 0
    %p104 = por %p102, %p103
    %s106 = sadd.s32 %s105, 1
    %p109 = scmp.eq.s32.totalorder %s17, 3
    %p110 = scmp.ne.s32.totalorder %s105, %s107
    %p111 = scmp.eq.s32.totalorder %s17, 0
    %p112 = por %p110, %p111
    %p113 = scmp.ne.s32.totalorder %s105, %s107
    %p114 = scmp.eq.s32.totalorder %s22, 3
    %p115 = por %p113, %p114
    %p116 = scmp.ne.s32.totalorder %s107, %s108
    %p117 = scmp.eq.s32.totalorder %s22, 0
    %p118 = por %p116, %p117
    %p119 = scmp.ne.s32.totalorder %s107, %s108
    %p120 = scmp.eq.s32.totalorder %s23, 3
    %p121 = por %p119, %p120
    %p123 = scmp.ne.s32.totalorder %s108, %s122
    %p124 = scmp.eq.s32.totalorder %s23, 0
    %p125 = por %p123, %p124
    %s126 = ssub.s32 %s25, %s32
    %p127 = scmp.eq.s32.totalorder %s126, 0
    %s129 = sadd.s32 %s128, 1
    %s130 = scalar_select %p127, %s128, %s129
    %p133 = pneg %p127
    %p134 = scmp.eq.s32.totalorder %s17, 3
    %p135 = por %p133, %p134
    %p136 = scmp.ne.s32.totalorder %s128, %s131
    %p137 = scmp.eq.s32.totalorder %s17, 0
    %p138 = por %p136, %p137
    %p139 = scmp.ne.s32.totalorder %s128, %s131
    %p140 = scmp.eq.s32.totalorder %s22, 3
    %p141 = por %p139, %p140
    %p142 = scmp.ne.s32.totalorder %s131, %s132
    %p143 = scmp.eq.s32.totalorder %s22, 0
    %p144 = por %p142, %p143
    %p145 = scmp.ne.s32.totalorder %s131, %s132
    %p146 = scmp.eq.s32.totalorder %s23, 3
    %p147 = por %p145, %p146
    %p149 = scmp.ne.s32.totalorder %s132, %s148
    %p150 = scmp.eq.s32.totalorder %s23, 0
    %p151 = por %p149, %p150
    %s152 = ssub.s32 %s25, %s32
    %p153 = scmp.eq.s32.totalorder %s152, 0
    %s155 = sadd.s32 %s154, 1
    %s156 = scalar_select %p153, %s154, %s155
    %p159 = pneg %p153
    %p160 = scmp.eq.s32.totalorder %s17, 3
    %p161 = por %p159, %p160
    %p162 = scmp.ne.s32.totalorder %s154, %s157
    %p163 = scmp.eq.s32.totalorder %s17, 0
    %p164 = por %p162, %p163
    %p165 = scmp.ne.s32.totalorder %s154, %s157
    %p166 = scmp.eq.s32.totalorder %s22, 3
    %p167 = por %p165, %p166
    %p168 = scmp.ne.s32.totalorder %s157, %s158
    %p169 = scmp.eq.s32.totalorder %s22, 0
    %p170 = por %p168, %p169
    %p171 = scmp.ne.s32.totalorder %s157, %s158
    %p172 = scmp.eq.s32.totalorder %s23, 3
    %p173 = por %p171, %p172
    %p175 = scmp.ne.s32.totalorder %s158, %s174
    %p176 = scmp.eq.s32.totalorder %s23, 0
    %p177 = por %p175, %p176
    %s178 = ssub.s32 %s25, %s32
    %p179 = scmp.eq.s32.totalorder %s178, 0
    %s181 = sadd.s32 %s180, 1
    %s182 = scalar_select %p179, %s180, %s181
    %p185 = pneg %p179
    %p186 = scmp.eq.s32.totalorder %s17, 3
    %p187 = por %p185, %p186
    %p188 = scmp.ne.s32.totalorder %s180, %s183
    %p189 = scmp.eq.s32.totalorder %s17, 0
    %p190 = por %p188, %p189
    %p191 = scmp.ne.s32.totalorder %s180, %s183
    %p192 = scmp.eq.s32.totalorder %s22, 3
    %p193 = por %p191, %p192
    %p194 = scmp.ne.s32.totalorder %s183, %s184
    %p195 = scmp.eq.s32.totalorder %s22, 0
    %p196 = por %p194, %p195
    %p197 = scmp.ne.s32.totalorder %s183, %s184
    %p198 = scmp.eq.s32.totalorder %s23, 3
    %p199 = por %p197, %p198
    %p201 = scmp.ne.s32.totalorder %s184, %s200
    %p202 = scmp.eq.s32.totalorder %s23, 0
    %p203 = por %p201, %p202
    %s205 = sadd.s32 %s204, 1
    %p208 = scmp.eq.s32.totalorder %s17, 3
    %p209 = scmp.ne.s32.totalorder %s204, %s206
    %p210 = scmp.eq.s32.totalorder %s17, 0
    %p211 = por %p209, %p210
    %p212 = scmp.ne.s32.totalorder %s204, %s206
    %p213 = scmp.eq.s32.totalorder %s22, 3
    %p214 = por %p212, %p213
    %p215 = scmp.ne.s32.totalorder %s206, %s207
    %p216 = scmp.eq.s32.totalorder %s22, 0
    %p217 = por %p215, %p216
    %p218 = scmp.ne.s32.totalorder %s206, %s207
    %p219 = scmp.eq.s32.totalorder %s23, 3
    %p220 = por %p218, %p219
    %p222 = scmp.ne.s32.totalorder %s207, %s221
    %p223 = scmp.eq.s32.totalorder %s23, 0
    %p224 = por %p222, %p223
    %s226 = sadd.s32 %s225, 1
    %p229 = scmp.eq.s32.totalorder %s17, 3
    %p230 = scmp.ne.s32.totalorder %s225, %s227
    %p231 = scmp.eq.s32.totalorder %s17, 0
    %p232 = por %p230, %p231
    %p233 = scmp.ne.s32.totalorder %s225, %s227
    %p234 = scmp.eq.s32.totalorder %s22, 3
    %p235 = por %p233, %p234
    %p236 = scmp.ne.s32.totalorder %s227, %s228
    %p237 = scmp.eq.s32.totalorder %s22, 0
    %p238 = por %p236, %p237
    %p239 = scmp.ne.s32.totalorder %s227, %s228
    %p240 = scmp.eq.s32.totalorder %s23, 3
    %p241 = por %p239, %p240
    %p243 = scmp.ne.s32.totalorder %s228, %s242
    %p244 = scmp.eq.s32.totalorder %s23, 0
    %p245 = por %p243, %p244
    %s246 = ssub.s32 %s24, %s36
    %p247 = scmp.eq.s32.totalorder %s246, 0
    %s249 = sadd.s32 %s248, 1
    %s250 = scalar_select %p247, %s248, %s249
    %p253 = pneg %p247
    %p254 = scmp.eq.s32.totalorder %s17, 3
    %p255 = por %p253, %p254
    %p256 = scmp.ne.s32.totalorder %s248, %s251
    %p257 = scmp.eq.s32.totalorder %s17, 0
    %p258 = por %p256, %p257
    %p259 = scmp.ne.s32.totalorder %s248, %s251
    %p260 = scmp.eq.s32.totalorder %s22, 3
    %p261 = por %p259, %p260
    %p262 = scmp.ne.s32.totalorder %s251, %s252
    %p263 = scmp.eq.s32.totalorder %s22, 0
    %p264 = por %p262, %p263
    %p265 = scmp.ne.s32.totalorder %s251, %s252
    %p266 = scmp.eq.s32.totalorder %s23, 3
    %p267 = por %p265, %p266
    %p269 = scmp.ne.s32.totalorder %s252, %s268
    %p270 = scmp.eq.s32.totalorder %s23, 0
    %p271 = por %p269, %p270
    %p272 = scmp.le.s32.totalorder 1, %s17
    %p273 = scmp.lt.s32.totalorder %s17, 5
    %p274 = pnand %p272, %p273
    %p275 = pneg %p274
    // Predicated region
    $region9: #{forward.1} parent=5 // pred_check
      _
    $region10: #{forward.1} parent=5 // pred_check_branch
      %277 = sbr.rel (%p274) target = $region12
    $region11: #{forward.1} parent=5 // pred_region
      %s278 = ssub.s32 %s17, 1
      // Predicated region
      $region13: #{forward.1} parent=11 // pred_check
        %p279 = pneg %p76
      $region14: #{forward.1} parent=11 // pred_check_branch
        %281 = sbr.rel (%p279) target = $region16
      $region15: #{forward.1} parent=11 // pred_region
        _
      $region16: #{forward.1} parent=11 // pred_fallthru
        _
      // Predicated region
      $region17: #{forward.1} parent=11 // pred_check
        %p282 = pneg %p97
      $region18: #{forward.1} parent=11 // pred_check_branch
        %284 = sbr.rel (%p282) target = $region20
      $region19: #{forward.1} parent=11 // pred_region
        _
      $region20: #{forward.1} parent=11 // pred_fallthru
        _
      // Predicated region
      $region21: #{forward.1} parent=11 // pred_check
        %p285 = pneg %p118
      $region22: #{forward.1} parent=11 // pred_check_branch
        %287 = sbr.rel (%p285) target = $region24
      $region23: #{forward.1} parent=11 // pred_region
        _
      $region24: #{forward.1} parent=11 // pred_fallthru
        _
      // Predicated region
      $region25: #{forward.1} parent=11 // pred_check
        %p288 = pneg %p217
      $region26: #{forward.1} parent=11 // pred_check_branch
        %290 = sbr.rel (%p288) target = $region28
      $region27: #{forward.1} parent=11 // pred_region
        _
      $region28: #{forward.1} parent=11 // pred_fallthru
        _
      // Predicated region
      $region29: #{forward.1} parent=11 // pred_check
        %p291 = pneg %p238
      $region30: #{forward.1} parent=11 // pred_check_branch
        %293 = sbr.rel (%p291) target = $region32
      $region31: #{forward.1} parent=11 // pred_region
        _
      $region32: #{forward.1} parent=11 // pred_fallthru
        _
    $region12: #{forward.1} parent=5 // pred_fallthru
      _
    %p294 = scmp.lt.s32.totalorder %s17, 4
    // Predicated region
    $region33: #{forward.1} parent=5 // pred_check
      %p295 = pneg %p294
    $region34: #{forward.1} parent=5 // pred_check_branch
      %297 = sbr.rel (%p295) target = $region36
    $region35: #{forward.1} parent=5 // pred_region
      // Predicated region
      $region37: #{forward.1} parent=35 // pred_check
        %p298 = pneg %p49
      $region38: #{forward.1} parent=35 // pred_check_branch
        %300 = sbr.rel (%p298) target = $region40
      $region39: #{forward.1} parent=35 // pred_region
        %p301 = scmp.lt.s32.totalorder %s24, 1
        %s302 = scalar_select %p301, %s24, 1
        %s303 = smul.addr %s302, 8
        %s304 = scalar_lea.vmem %s0, %s303
      $region40: #{forward.1} parent=35 // pred_fallthru
        _
      // Predicated region
      $region41: #{forward.1} parent=35 // pred_check
        %p305 = pneg %p138
      $region42: #{forward.1} parent=35 // pred_check_branch
        %307 = sbr.rel (%p305) target = $region44
      $region43: #{forward.1} parent=35 // pred_region
        %p308 = scmp.lt.s32.totalorder %s25, 1
        %s309 = scalar_select %p308, %s25, 1
        %s310 = smul.addr %s309, 4
        %s311 = smul.addr %s310, 4
        %s312 = scalar_lea.vmem %s4, %s311
      $region44: #{forward.1} parent=35 // pred_fallthru
        _
      // Predicated region
      $region45: #{forward.1} parent=35 // pred_check
        %p313 = pneg %p164
      $region46: #{forward.1} parent=35 // pred_check_branch
        %315 = sbr.rel (%p313) target = $region48
      $region47: #{forward.1} parent=35 // pred_region
        %p316 = scmp.lt.s32.totalorder %s25, 1
        %s317 = scalar_select %p316, %s25, 1
        %s318 = smul.addr %s317, 56
        %s319 = smul.addr %s318, 4
        %s320 = scalar_lea.vmem %s5, %s319
      $region48: #{forward.1} parent=35 // pred_fallthru
        _
      // Predicated region
      $region49: #{forward.1} parent=35 // pred_check
        %p321 = pneg %p190
      $region50: #{forward.1} parent=35 // pred_check_branch
        %323 = sbr.rel (%p321) target = $region52
      $region51: #{forward.1} parent=35 // pred_region
        %p324 = scmp.lt.s32.totalorder %s25, 1
        %s325 = scalar_select %p324, %s25, 1
        %s326 = smul.addr %s325, 4
        %s327 = smul.addr %s326, 4
        %s328 = scalar_lea.vmem %s6, %s327
      $region52: #{forward.1} parent=35 // pred_fallthru
        _
    $region36: #{forward.1} parent=5 // pred_fallthru
      _
    %p329 = scmp.le.s32.totalorder 1, %s17
    %p330 = scmp.lt.s32.totalorder %s17, 5
    %p331 = pnand %p329, %p330
    %p332 = pneg %p331
    // Predicated region
    $region53: #{forward.1} parent=5 // pred_check
      _
    $region54: #{forward.1} parent=5 // pred_check_branch
      %334 = sbr.rel (%p331) target = $region56
    $region55: #{forward.1} parent=5 // pred_region
      %s335 = ssub.s32 %s17, 1
      %p336 = scmp.lt.s32.totalorder %s26, 1
      %s337 = scalar_select %p336, %s26, 1
      %s338 = smul.addr %s337, 8
      %s339 = scalar_lea.vmem %s0, %s338
      %p340 = pneg %p55
      %p341 = pneg %p52
      %p342 = pneg %p76
      %p343 = pneg %p73
      %p344 = pneg %p97
      %p345 = pneg %p94
      %p346 = pneg %p118
      %p347 = pneg %p115
      %p348 = scmp.lt.s32.totalorder %s27, 1
      %s349 = scalar_select %p348, %s27, 1
      %s350 = smul.addr %s349, 4
      %s351 = smul.addr %s350, 4
      %s352 = scalar_lea.vmem %s4, %s351
      %p353 = pneg %p144
      %p354 = pneg %p141
      %p355 = scmp.lt.s32.totalorder %s27, 1
      %s356 = scalar_select %p355, %s27, 1
      %s357 = smul.addr %s356, 56
      %s358 = smul.addr %s357, 4
      %s359 = scalar_lea.vmem %s5, %s358
      %p360 = pneg %p170
      %p361 = pneg %p167
      %p362 = scmp.lt.s32.totalorder %s27, 1
      %s363 = scalar_select %p362, %s27, 1
      %s364 = smul.addr %s363, 4
      %s365 = smul.addr %s364, 4
      %s366 = scalar_lea.vmem %s6, %s365
      %p367 = pneg %p196
      %p368 = pneg %p193
      %p369 = pneg %p217
      %p370 = pneg %p214
      %p371 = pneg %p238
      %p372 = pneg %p235
      %p373 = pneg %p264
      %p374 = pneg %p261
      %p375 = scmp.lt.s32.totalorder %s26, 1
      %s376 = scalar_select %p375, %s26, 1
      %s377 = smul.addr %s376, 8
      %s378 = scalar_lea.vmem %s9, %s377
      %p379 = scmp.lt.s32.totalorder %s26, 1
      %s380 = scalar_select %p379, %s26, 1
      %s381 = smul.addr %s380, 8
      %s382 = scalar_lea.vmem %s0, %s381
      %p383 = scmp.lt.s32.totalorder %s27, 1
      %s384 = scalar_select %p383, %s27, 1
      %s385 = smul.addr %s384, 4
      %s386 = smul.addr %s385, 4
      %s387 = scalar_lea.vmem %s4, %s386
      %p388 = scmp.lt.s32.totalorder %s27, 1
      %s389 = scalar_select %p388, %s27, 1
      %s390 = smul.addr %s389, 56
      %s391 = smul.addr %s390, 4
      %s392 = scalar_lea.vmem %s5, %s391
      %p393 = scmp.lt.s32.totalorder %s27, 1
      %s394 = scalar_select %p393, %s27, 1
      %s395 = smul.addr %s394, 4
      %s396 = smul.addr %s395, 4
      %s397 = scalar_lea.vmem %s6, %s396
      %p398 = scmp.lt.s32.totalorder %s26, 1
      %s399 = scalar_select %p398, %s26, 1
      %s400 = smul.addr %s399, 8
      %s401 = scalar_lea.vmem %s9, %s400
      %p403 = scmp.eq.s32.totalorder %s27, 0
      // Predicated region
      $region57: #{forward.1} parent=55 // pred_check
        %p404 = pneg %p403
      $region58: #{forward.1} parent=55 // pred_check_branch
        %406 = sbr.rel (%p404) target = $region60
      $region59: #{forward.1} parent=55 // pred_region
        %vm407 = vcmask 261120
        %408 = vst.msk [vmem:[#allocation4] sm:$0xff] %vm407, 0.0
        %409 = vst.msk [vmem:[#allocation4 + $0x8] sm:$0xff] %vm407, 0.0
        %410 = vst.msk [vmem:[#allocation4 + $0x10] sm:$0xff] %vm407, 0.0
        %411 = vst.msk [vmem:[#allocation4 + $0x18] sm:$0xff] %vm407, 0.0
        %412 = vst.msk [vmem:[#allocation4 + $0x20] sm:$0xff] %vm407, 0.0
        %413 = vst.msk [vmem:[#allocation4 + $0x28] sm:$0xff] %vm407, 0.0
        %414 = vst.msk [vmem:[#allocation4 + $0x30] sm:$0xff] %vm407, 0.0
        %415 = vst.msk [vmem:[#allocation4 + $0x38] sm:$0xff] %vm407, 0.0
        %416 = vst.msk [vmem:[#allocation4 + $0x40] sm:$0xff] %vm407, 0.0
        %417 = vst.msk [vmem:[#allocation4 + $0x48] sm:$0xff] %vm407, 0.0
        %418 = vst.msk [vmem:[#allocation4 + $0x50] sm:$0xff] %vm407, 0.0
        %419 = vst.msk [vmem:[#allocation4 + $0x58] sm:$0xff] %vm407, 0.0
        %420 = vst.msk [vmem:[#allocation4 + $0x60] sm:$0xff] %vm407, 0.0
        %421 = vst.msk [vmem:[#allocation4 + $0x68] sm:$0xff] %vm407, 0.0
        %422 = vst.msk [vmem:[#allocation4 + $0x70] sm:$0xff] %vm407, 0.0
        %423 = vst.msk [vmem:[#allocation4 + $0x78] sm:$0xff] %vm407, 0.0
        %424 = vst.msk [vmem:[#allocation4 + $0x80] sm:$0xff] %vm407, 0.0
        %425 = vst.msk [vmem:[#allocation4 + $0x88] sm:$0xff] %vm407, 0.0
        %426 = vst.msk [vmem:[#allocation4 + $0x90] sm:$0xff] %vm407, 0.0
        %427 = vst.msk [vmem:[#allocation4 + $0x98] sm:$0xff] %vm407, 0.0
        %428 = vst.msk [vmem:[#allocation4 + $0xa0] sm:$0xff] %vm407, 0.0
        %429 = vst.msk [vmem:[#allocation4 + $0xa8] sm:$0xff] %vm407, 0.0
        %430 = vst.msk [vmem:[#allocation4 + $0xb0] sm:$0xff] %vm407, 0.0
        %431 = vst.msk [vmem:[#allocation4 + $0xb8] sm:$0xff] %vm407, 0.0
        %432 = vst.msk [vmem:[#allocation4 + $0xc0] sm:$0xff] %vm407, 0.0
        %433 = vst.msk [vmem:[#allocation4 + $0xc8] sm:$0xff] %vm407, 0.0
        %434 = vst.msk [vmem:[#allocation4 + $0xd0] sm:$0xff] %vm407, 0.0
        %435 = vst.msk [vmem:[#allocation4 + $0xd8] sm:$0xff] %vm407, 0.0
        %436 = vst.msk [vmem:[#allocation4 + $0xe0] sm:$0xff] %vm407, 0.0
        %437 = vst.msk [vmem:[#allocation4 + $0xe8] sm:$0xff] %vm407, 0.0
        %438 = vst.msk [vmem:[#allocation4 + $0xf0] sm:$0xff] %vm407, 0.0
        %439 = vst.msk [vmem:[#allocation4 + $0xf8] sm:$0xff] %vm407, 0.0
        %440 = vst.msk [vmem:[#allocation4 + $0x100] sm:$0xff] %vm407, 0.0
        %441 = vst.msk [vmem:[#allocation4 + $0x108] sm:$0xff] %vm407, 0.0
        %442 = vst.msk [vmem:[#allocation4 + $0x110] sm:$0xff] %vm407, 0.0
        %443 = vst.msk [vmem:[#allocation4 + $0x118] sm:$0xff] %vm407, 0.0
        %444 = vst.msk [vmem:[#allocation4 + $0x120] sm:$0xff] %vm407, 0.0
        %445 = vst.msk [vmem:[#allocation4 + $0x128] sm:$0xff] %vm407, 0.0
        %446 = vst.msk [vmem:[#allocation4 + $0x130] sm:$0xff] %vm407, 0.0
        %447 = vst.msk [vmem:[#allocation4 + $0x138] sm:$0xff] %vm407, 0.0
        %448 = vst.msk [vmem:[#allocation4 + $0x140] sm:$0xff] %vm407, 0.0
        %449 = vst.msk [vmem:[#allocation4 + $0x148] sm:$0xff] %vm407, 0.0
        %v450 = vld [vmem:[%s382] sm:$0xff]
        %v451 = vpack.c.bf16 %v450, %v450
        %v452 = vld [vmem:[%s1] sm:$0xf]
        %v453 = vld [vmem:[%s1 + $0x4] sm:$0xf]
        %v454 = vld [vmem:[%s1 + $0x8] sm:$0xf]
        %v455 = vld [vmem:[%s1 + $0xc] sm:$0xf]
        %v460 = vunpack.c.l.b16 %v452
        %v461 = vunpack.c.l.b16 %v453
        %v462 = vunpack.c.l.b16 %v454
        %v463 = vunpack.c.l.b16 %v455
        %v464 = vpack.c.b16 %v461, %v460
        %v465 = vpack.c.b16 %v463, %v462
        %v469 = vsel %vm407, %v451, 0
        %471 = vmatprep.subr.bf16.mxu0 0
        %472 = vmatpush1.bf16.msra.mxu0 %v464
        %473 = vmatprep.subr.bf16.mxu0 0
        %474 = vmatpush1.bf16.msra.mxu0 %v465
        %475 = vmatprep.subr.bf16.mxu0 0
        %476 = vmatpush1.bf16.msra.mxu0 0
        %477 = vmatprep.subr.bf16.mxu0 0
        %478 = vmatpush1.bf16.msra.mxu0 0
        %479 = vmatprep.subr.bf16.mxu0 0
        %480 = vmatpush1.bf16.msra.mxu0 0
        %481 = vmatprep.subr.bf16.mxu0 0
        %482 = vmatpush1.bf16.msra.mxu0 0
        %483 = vmatprep.subr.bf16.mxu0 0
        %484 = vmatpush1.bf16.msra.mxu0 0
        %485 = vmatprep.subr.bf16.mxu0 0
        %486 = vmatpush1.bf16.msra.mxu0 0
        %487 = vmatprep.subr.bf16.mxu0 0
        %488 = vmatpush1.bf16.msra.mxu0 0
        %489 = vmatprep.subr.bf16.mxu0 0
        %490 = vmatpush1.bf16.msra.mxu0 0
        %491 = vmatprep.subr.bf16.mxu0 0
        %492 = vmatpush1.bf16.msra.mxu0 0
        %493 = vmatprep.subr.bf16.mxu0 0
        %494 = vmatpush1.bf16.msra.mxu0 0
        %495 = vmatprep.subr.bf16.mxu0 0
        %496 = vmatpush1.bf16.msra.mxu0 0
        %497 = vmatprep.subr.bf16.mxu0 0
        %498 = vmatpush1.bf16.msra.mxu0 0
        %499 = vmatprep.subr.bf16.mxu0 0
        %500 = vmatpush1.bf16.msra.mxu0 0
        %501 = vmatprep.subr.bf16.mxu0 0
        %502 = vmatpush1.bf16.msra.mxu0 0
        %503 = vmatprep.mubr.bf16.mxu0 0
        %504 = vmatmul.mubr.bf16.gmra.mrb[0].mxu0 %v469
        %v505 = vpop.f32.mrb[0].mxu0
        %v506 = vadd.f32 0.0, %v505
        %v507 = vpop.f32.mrb[0].mxu0
        %v508 = vpop.f32.mrb[0].mxu0
        %v509 = vpop.f32.mrb[0].mxu0
        %510 = vdwg.mxu0
        %v511 = vld [vmem:[%s2] sm:$0xf]
        %v512 = vld [vmem:[%s2 + $0x4] sm:$0xf]
        %v513 = vld [vmem:[%s2 + $0x8] sm:$0xf]
        %v514 = vld [vmem:[%s2 + $0xc] sm:$0xf]
        %v519 = vunpack.c.l.b16 %v511
        %v520 = vunpack.c.l.b16 %v512
        %v521 = vunpack.c.l.b16 %v513
        %v522 = vunpack.c.l.b16 %v514
        %v523 = vpack.c.b16 %v520, %v519
        %v524 = vpack.c.b16 %v522, %v521
        %527 = vmatprep.subr.bf16.mxu0 0
        %528 = vmatpush1.bf16.msra.mxu0 %v523
        %529 = vmatprep.subr.bf16.mxu0 0
        %530 = vmatpush1.bf16.msra.mxu0 %v524
        %531 = vmatprep.subr.bf16.mxu0 0
        %532 = vmatpush1.bf16.msra.mxu0 0
        %533 = vmatprep.subr.bf16.mxu0 0
        %534 = vmatpush1.bf16.msra.mxu0 0
        %535 = vmatprep.subr.bf16.mxu0 0
        %536 = vmatpush1.bf16.msra.mxu0 0
        %537 = vmatprep.subr.bf16.mxu0 0
        %538 = vmatpush1.bf16.msra.mxu0 0
        %539 = vmatprep.subr.bf16.mxu0 0
        %540 = vmatpush1.bf16.msra.mxu0 0
        %541 = vmatprep.subr.bf16.mxu0 0
        %542 = vmatpush1.bf16.msra.mxu0 0
        %543 = vmatprep.subr.bf16.mxu0 0
        %544 = vmatpush1.bf16.msra.mxu0 0
        %545 = vmatprep.subr.bf16.mxu0 0
        %546 = vmatpush1.bf16.msra.mxu0 0
        %547 = vmatprep.subr.bf16.mxu0 0
        %548 = vmatpush1.bf16.msra.mxu0 0
        %549 = vmatprep.subr.bf16.mxu0 0
        %550 = vmatpush1.bf16.msra.mxu0 0
        %551 = vmatprep.subr.bf16.mxu0 0
        %552 = vmatpush1.bf16.msra.mxu0 0
        %553 = vmatprep.subr.bf16.mxu0 0
        %554 = vmatpush1.bf16.msra.mxu0 0
        %555 = vmatprep.subr.bf16.mxu0 0
        %556 = vmatpush1.bf16.msra.mxu0 0
        %557 = vmatprep.subr.bf16.mxu0 0
        %558 = vmatpush1.bf16.msra.mxu0 0
        %559 = vmatprep.mubr.bf16.mxu0 0
        %560 = vmatmul.mubr.bf16.gmra.mrb[0].mxu0 %v469
        %v561 = vpop.f32.mrb[0].mxu0
        %v562 = vadd.f32 0.0, %v561
        %v563 = vpop.f32.mrb[0].mxu0
        %v564 = vpop.f32.mrb[0].mxu0
        %v565 = vpop.f32.mrb[0].mxu0
        %566 = vdwg.mxu0
        %v568 = vcombine.high %v506, %v506
        %v570 = vunpack.c.l.s4 1966171168
        %v571 = vunpack.c.0.s8 %v570
        %v572 = vlaneseq
        %v573 = vshrl.u32 %v572, 7
        %v574 = vsub.s32 %v571, %v573
        %v575 = vrot.slane %v506, %v574
        %v577 = vunpack.c.l.s4 1966171168
        %v578 = vunpack.c.0.s8 %v577
        %v579 = vlaneseq
        %v580 = vshrl.u32 %v579, 7
        %v581 = vsub.s32 %v578, %v580
        %v582 = vrot.slane %v568, %v581
        %v583 = vcombine.high %v575, %v575
        %v584 = vcombine.high %v582, %v582
        %v586 = vunpack.c.l.s4 1966171168
        %v587 = vunpack.c.0.s8 %v586
        %v588 = vlaneseq
        %v589 = vshrl.u32 %v588, 7
        %v590 = vsub.s32 %v587, %v589
        %v591 = vrot.slane %v575, %v590
        %v593 = vunpack.c.l.s4 1966171168
        %v594 = vunpack.c.0.s8 %v593
        %v595 = vlaneseq
        %v596 = vshrl.u32 %v595, 7
        %v597 = vsub.s32 %v594, %v596
        %v598 = vrot.slane %v582, %v597
        %v600 = vunpack.c.l.s4 1966171168
        %v601 = vunpack.c.0.s8 %v600
        %v602 = vlaneseq
        %v603 = vshrl.u32 %v602, 7
        %v604 = vsub.s32 %v601, %v603
        %v605 = vrot.slane %v583, %v604
        %v607 = vunpack.c.l.s4 1966171168
        %v608 = vunpack.c.0.s8 %v607
        %v609 = vlaneseq
        %v610 = vshrl.u32 %v609, 7
        %v611 = vsub.s32 %v608, %v610
        %v612 = vrot.slane %v584, %v611
        %v613 = vcombine.high %v591, %v591
        %v614 = vcombine.high %v598, %v598
        %v615 = vcombine.high %v605, %v605
        %v616 = vcombine.high %v612, %v612
        %v617 = vlaneseq
        %v618 = vshrl.u32 %v617, 7
        %v619 = vsub.s32 0, %v618
        %v620 = vrot.slane %v591, %v619
        %v621 = vlaneseq
        %v622 = vshrl.u32 %v621, 7
        %v623 = vsub.s32 0, %v622
        %v624 = vrot.slane %v605, %v623
        %v625 = vlaneseq
        %v626 = vshrl.u32 %v625, 7
        %v627 = vsub.s32 0, %v626
        %v628 = vrot.slane %v613, %v627
        %v629 = vlaneseq
        %v630 = vshrl.u32 %v629, 7
        %v631 = vsub.s32 0, %v630
        %v632 = vrot.slane %v615, %v631
        %v633 = vlaneseq
        %v634 = vshrl.u32 %v633, 7
        %v635 = vsub.s32 0, %v634
        %v636 = vrot.slane %v598, %v635
        %v637 = vlaneseq
        %v638 = vshrl.u32 %v637, 7
        %v639 = vsub.s32 0, %v638
        %v640 = vrot.slane %v612, %v639
        %v641 = vlaneseq
        %v642 = vshrl.u32 %v641, 7
        %v643 = vsub.s32 0, %v642
        %v644 = vrot.slane %v614, %v643
        %v645 = vlaneseq
        %v646 = vshrl.u32 %v645, 7
        %v647 = vsub.s32 0, %v646
        %v648 = vrot.slane %v616, %v647
        %v657 = vadd.f32 %v620, %v562
        %v658 = vadd.f32 %v624, %v562
        %v659 = vadd.f32 %v628, %v562
        %v660 = vadd.f32 %v632, %v562
        %v661 = vadd.f32 %v636, %v562
        %v662 = vadd.f32 %v640, %v562
        %v663 = vadd.f32 %v644, %v562
        %v664 = vadd.f32 %v648, %v562
        %v665 = vld [vmem:[%s3] sm:$0x1]
        %v667 = vlaneseq
        %v668 = vshrl.u32 %v667, 7
        %v669 = vsub.s32 0, %v668
        %v670 = vrot.slane %v665, %v669
        %v672 = vadd.f32 %v657, %v670
        %v673 = vadd.f32 %v658, %v670
        %v674 = vadd.f32 %v659, %v670
        %v675 = vadd.f32 %v660, %v670
        %v676 = vadd.f32 %v661, %v670
        %v677 = vadd.f32 %v662, %v670
        %v678 = vadd.f32 %v663, %v670
        %v679 = vadd.f32 %v664, %v670
        %680 = vst.msk [vmem:[#allocation2] sm:$0xff] %vm407, %v672
        %681 = vst.msk [vmem:[#allocation2 + $0x8] sm:$0xff] %vm407, %v673
        %682 = vst.msk [vmem:[#allocation2 + $0x10] sm:$0xff] %vm407, %v674
        %683 = vst.msk [vmem:[#allocation2 + $0x18] sm:$0xff] %vm407, %v675
        %684 = vst.msk [vmem:[#allocation2 + $0x20] sm:$0xff] %vm407, %v676
        %685 = vst.msk [vmem:[#allocation2 + $0x28] sm:$0xff] %vm407, %v677
        %686 = vst.msk [vmem:[#allocation2 + $0x30] sm:$0xff] %vm407, %v678
        %687 = vst.msk [vmem:[#allocation2 + $0x38] sm:$0xff] %vm407, %v679
      $region60: #{forward.1} parent=55 // pred_fallthru
        _
      %v688 = vld [vmem:[#allocation2] sm:$0xff]
      %v689 = vld [vmem:[#allocation2 + $0x8] sm:$0xff]
      %v690 = vld [vmem:[#allocation2 + $0x10] sm:$0xff]
      %v691 = vld [vmem:[#allocation2 + $0x18] sm:$0xff]
      %v692 = vld [vmem:[#allocation2 + $0x20] sm:$0xff]
      %v693 = vld [vmem:[#allocation2 + $0x28] sm:$0xff]
      %v694 = vld [vmem:[#allocation2 + $0x30] sm:$0xff]
      %v695 = vld [vmem:[#allocation2 + $0x38] sm:$0xff]
      %v696 = vpack.c.bf16 %v689, %v688
      %v697 = vpack.c.bf16 %v691, %v690
      %v698 = vpack.c.bf16 %v693, %v692
      %v699 = vpack.c.bf16 %v695, %v694
      %v700 = vld [vmem:[%s387] sm:$0xf]
      %v701 = vld [vmem:[%s387 + $0x4] sm:$0xf]
      %v702 = vld [vmem:[%s387 + $0x8] sm:$0xf]
      %v703 = vld [vmem:[%s387 + $0xc] sm:$0xf]
      %v708 = vunpack.c.l.b16 %v700
      %v709 = vunpack.c.l.b16 %v701
      %v710 = vunpack.c.l.b16 %v702
      %v711 = vunpack.c.l.b16 %v703
      %v712 = vpack.c.b16 %v709, %v708
      %v713 = vpack.c.b16 %v711, %v710
      %vm716 = vcmask 261120
      %v718 = vsel %vm716, %v696, 0
      %v721 = vsel %vm716, %v697, 0
      %v724 = vsel %vm716, %v698, 0
      %v727 = vsel %vm716, %v699, 0
      %729 = vmatprep.subr.bf16.mxu0 0
      %730 = vmatpush1.bf16.msra.mxu0 %v712
      %731 = vmatprep.subr.bf16.mxu0 0
      %732 = vmatpush1.bf16.msra.mxu0 %v713
      %733 = vmatprep.subr.bf16.mxu0 0
      %734 = vmatpush1.bf16.msra.mxu0 0
      %735 = vmatprep.subr.bf16.mxu0 0
      %736 = vmatpush1.bf16.msra.mxu0 0
      %737 = vmatprep.subr.bf16.mxu0 0
      %738 = vmatpush1.bf16.msra.mxu0 0
      %739 = vmatprep.subr.bf16.mxu0 0
      %740 = vmatpush1.bf16.msra.mxu0 0
      %741 = vmatprep.subr.bf16.mxu0 0
      %742 = vmatpush1.bf16.msra.mxu0 0
      %743 = vmatprep.subr.bf16.mxu0 0
      %744 = vmatpush1.bf16.msra.mxu0 0
      %745 = vmatprep.subr.bf16.mxu0 0
      %746 = vmatpush1.bf16.msra.mxu0 0
      %747 = vmatprep.subr.bf16.mxu0 0
      %748 = vmatpush1.bf16.msra.mxu0 0
      %749 = vmatprep.subr.bf16.mxu0 0
      %750 = vmatpush1.bf16.msra.mxu0 0
      %751 = vmatprep.subr.bf16.mxu0 0
      %752 = vmatpush1.bf16.msra.mxu0 0
      %753 = vmatprep.subr.bf16.mxu0 0
      %754 = vmatpush1.bf16.msra.mxu0 0
      %755 = vmatprep.subr.bf16.mxu0 0
      %756 = vmatpush1.bf16.msra.mxu0 0
      %757 = vmatprep.subr.bf16.mxu0 0
      %758 = vmatpush1.bf16.msra.mxu0 0
      %759 = vmatprep.subr.bf16.mxu0 0
      %760 = vmatpush1.bf16.msra.mxu0 0
      %761 = vmatprep.mubr.bf16.mxu0 0
      %762 = vmatmul.mubr.bf16.gmra.mrb[0].mxu0 %v718
      %v763 = vpop.f32.mrb[0].mxu0
      %v764 = vadd.f32 0.0, %v763
      %v765 = vpop.f32.mrb[0].mxu0
      %v766 = vpop.f32.mrb[0].mxu0
      %v767 = vadd.f32 0.0, %v766
      %v768 = vpop.f32.mrb[0].mxu0
      %769 = vmatprep.mubr.bf16.mxu0 0
      %770 = vmatmul.mubr.bf16.gmra.mrb[0].mxu0 %v721
      %v771 = vpop.f32.mrb[0].mxu0
      %v772 = vadd.f32 0.0, %v771
      %v773 = vpop.f32.mrb[0].mxu0
      %v774 = vpop.f32.mrb[0].mxu0
      %v775 = vadd.f32 0.0, %v774
      %v776 = vpop.f32.mrb[0].mxu0
      %777 = vmatprep.mubr.bf16.mxu0 0
      %778 = vmatmul.mubr.bf16.gmra.mrb[0].mxu0 %v724
      %v779 = vpop.f32.mrb[0].mxu0
      %v780 = vadd.f32 0.0, %v779
      %v781 = vpop.f32.mrb[0].mxu0
      %v782 = vpop.f32.mrb[0].mxu0
      %v783 = vadd.f32 0.0, %v782
      %v784 = vpop.f32.mrb[0].mxu0
      %785 = vmatprep.mubr.bf16.mxu0 0
      %786 = vmatmul.mubr.bf16.gmra.mrb[0].mxu0 %v727
      %v787 = vpop.f32.mrb[0].mxu0
      %v788 = vadd.f32 0.0, %v787
      %v789 = vpop.f32.mrb[0].mxu0
      %v790 = vpop.f32.mrb[0].mxu0
      %v791 = vadd.f32 0.0, %v790
      %v792 = vpop.f32.mrb[0].mxu0
      %793 = vdwg.mxu0
      %v794 = vsel %vm716, %v764, 0.0
      %v795 = vsel %vm716, %v767, 0.0
      %v796 = vadd.f32 %v794, %v795
      %v797 = vsel %vm716, %v772, 0.0
      %v798 = vadd.f32 %v796, %v797
      %v799 = vsel %vm716, %v775, 0.0
      %v800 = vadd.f32 %v798, %v799
      %v801 = vsel %vm716, %v780, 0.0
      %v802 = vadd.f32 %v800, %v801
      %v803 = vsel %vm716, %v783, 0.0
      %v804 = vadd.f32 %v802, %v803
      %v805 = vsel %vm716, %v788, 0.0
      %v806 = vadd.f32 %v804, %v805
      %v807 = vsel %vm716, %v791, 0.0
      %v808 = vadd.f32 %v806, %v807
      %v809 = vrot.slane %v808, 4
      %v810 = vadd.f32 %v808, %v809
      %v811 = vrot.slane %v810, 2
      %v812 = vadd.f32 %v810, %v811
      %v813 = vrot.slane %v812, 1
      %v814 = vadd.f32 %v812, %v813
      %v815 = vmul.f32 %v764, %v764
      %v816 = vmul.f32 %v767, %v767
      %v817 = vmul.f32 %v772, %v772
      %v818 = vmul.f32 %v775, %v775
      %v819 = vmul.f32 %v780, %v780
      %v820 = vmul.f32 %v783, %v783
      %v821 = vmul.f32 %v788, %v788
      %v822 = vmul.f32 %v791, %v791
      %v823 = vsel %vm716, %v815, 0.0
      %v824 = vsel %vm716, %v816, 0.0
      %v825 = vadd.f32 %v823, %v824
      %v826 = vsel %vm716, %v817, 0.0
      %v827 = vadd.f32 %v825, %v826
      %v828 = vsel %vm716, %v818, 0.0
      %v829 = vadd.f32 %v827, %v828
      %v830 = vsel %vm716, %v819, 0.0
      %v831 = vadd.f32 %v829, %v830
      %v832 = vsel %vm716, %v820, 0.0
      %v833 = vadd.f32 %v831, %v832
      %v834 = vsel %vm716, %v821, 0.0
      %v835 = vadd.f32 %v833, %v834
      %v836 = vsel %vm716, %v822, 0.0
      %v837 = vadd.f32 %v835, %v836
      %v838 = vrot.slane %v837, 4
      %v839 = vadd.f32 %v837, %v838
      %v840 = vrot.slane %v839, 2
      %v841 = vadd.f32 %v839, %v840
      %v842 = vrot.slane %v841, 1
      %v843 = vadd.f32 %v841, %v842
      %v844 = vmul.f32 %v814, 0.015625
      %v845 = vmul.f32 %v843, 0.015625
      %v846 = vmul.f32 %v844, %v844
      %v847 = vsub.f32 %v845, %v846
      %v848 = vmax.f32 %v847, 0.0
      %v849 = vsub.f32 %v764, %v844
      %v850 = vsub.f32 %v767, %v844
      %v851 = vsub.f32 %v772, %v844
      %v852 = vsub.f32 %v775, %v844
      %v853 = vsub.f32 %v780, %v844
      %v854 = vsub.f32 %v783, %v844
      %v855 = vsub.f32 %v788, %v844
      %v856 = vsub.f32 %v791, %v844
      %v857 = vadd.f32 %v848, 1e-05
      %v858 = vrsqrt.pop %v857
      %v859 = vmul.f32 %v849, %v858
      %v860 = vmul.f32 %v850, %v858
      %v861 = vmul.f32 %v851, %v858
      %v862 = vmul.f32 %v852, %v858
      %v863 = vmul.f32 %v853, %v858
      %v864 = vmul.f32 %v854, %v858
      %v865 = vmul.f32 %v855, %v858
      %v866 = vmul.f32 %v856, %v858
      %v867 = vmax.f32 %v859, 0.0
      %v868 = vmax.f32 %v860, 0.0
      %v869 = vmax.f32 %v861, 0.0
      %v870 = vmax.f32 %v862, 0.0
      %v871 = vmax.f32 %v863, 0.0
      %v872 = vmax.f32 %v864, 0.0
      %v873 = vmax.f32 %v865, 0.0
      %v874 = vmax.f32 %v866, 0.0
      %s875 = scalar_lea.vmem [#allocation4], 72
      %876 = vst.msk [vmem:[%s875 + $0x8] sm:$0xff] %vm716, %v867
      %877 = vst.msk [vmem:[%s875 + $0x20] sm:$0xff] %vm716, %v868
      %878 = vst.msk [vmem:[%s875 + $0x38] sm:$0xff] %vm716, %v869
      %879 = vst.msk [vmem:[%s875 + $0x50] sm:$0xff] %vm716, %v870
      %880 = vst.msk [vmem:[%s875 + $0x68] sm:$0xff] %vm716, %v871
      %881 = vst.msk [vmem:[%s875 + $0x80] sm:$0xff] %vm716, %v872
      %882 = vst.msk [vmem:[%s875 + $0x98] sm:$0xff] %vm716, %v873
      %883 = vst.msk [vmem:[%s875 + $0xb0] sm:$0xff] %vm716, %v874
      %s884 = smul.u32 0, 24
      %s885 = scalar_lea.vmem [#allocation4], %s884
      %v886 = vld [vmem:[%s885] sm:$0xff]
      %v887 = vld [vmem:[%s885 + $0x8] sm:$0xff]
      %v888 = vld [vmem:[%s885 + $0x10] sm:$0xff]
      %v889 = vld [vmem:[%s885 + $0x18] sm:$0xff]
      %v890 = vld [vmem:[%s885 + $0x20] sm:$0xff]
      %v891 = vld [vmem:[%s885 + $0x28] sm:$0xff]
      %v892 = vld [vmem:[%s885 + $0x30] sm:$0xff]
      %v893 = vld [vmem:[%s885 + $0x38] sm:$0xff]
      %v894 = vld [vmem:[%s885 + $0x40] sm:$0xff]
      %v895 = vld [vmem:[%s885 + $0x48] sm:$0xff]
      %v896 = vld [vmem:[%s885 + $0x50] sm:$0xff]
      %v897 = vld [vmem:[%s885 + $0x58] sm:$0xff]
      %v898 = vld [vmem:[%s885 + $0x60] sm:$0xff]
      %v899 = vld [vmem:[%s885 + $0x68] sm:$0xff]
      %v900 = vld [vmem:[%s885 + $0x70] sm:$0xff]
      %v901 = vld [vmem:[%s885 + $0x78] sm:$0xff]
      %v902 = vld [vmem:[%s885 + $0x80] sm:$0xff]
      %v903 = vld [vmem:[%s885 + $0x88] sm:$0xff]
      %v904 = vld [vmem:[%s885 + $0x90] sm:$0xff]
      %v905 = vld [vmem:[%s885 + $0x98] sm:$0xff]
      %v906 = vld [vmem:[%s885 + $0xa0] sm:$0xff]
      %v907 = vld [vmem:[%s885 + $0xa8] sm:$0xff]
      %v908 = vld [vmem:[%s885 + $0xb0] sm:$0xff]
      %v909 = vld [vmem:[%s885 + $0xb8] sm:$0xff]
      %v910 = vpack.c.bf16 %v887, %v886
      %v911 = vpack.c.bf16 %v889, %v888
      %v912 = vpack.c.bf16 %v891, %v890
      %v913 = vpack.c.bf16 %v893, %v892
      %v914 = vpack.c.bf16 %v895, %v894
      %v915 = vpack.c.bf16 %v897, %v896
      %v916 = vpack.c.bf16 %v899, %v898
      %v917 = vpack.c.bf16 %v901, %v900
      %v918 = vpack.c.bf16 %v903, %v902
      %v919 = vpack.c.bf16 %v905, %v904
      %v920 = vpack.c.bf16 %v907, %v906
      %v921 = vpack.c.bf16 %v909, %v908
      %v922 = vld [vmem:[%s392] sm:$0xff]
      %v923 = vld [vmem:[%s392 + $0x8] sm:$0xff]
      %v924 = vld [vmem:[%s392 + $0x10] sm:$0xff]
      %v925 = vld [vmem:[%s392 + $0x18] sm:$0xff]
      %v930 = vunpack.c.l.b16 %v922
      %v931 = vunpack.c.h.b16 %v922
      %v932 = vunpack.c.l.b16 %v923
      %v933 = vunpack.c.h.b16 %v923
      %v934 = vunpack.c.l.b16 %v924
      %v935 = vunpack.c.h.b16 %v924
      %v936 = vunpack.c.l.b16 %v925
      %v937 = vunpack.c.h.b16 %v925
      %v938 = vpack.c.b16 %v932, %v930
      %v939 = vpack.c.b16 %v933, %v931
      %v940 = vpack.c.b16 %v936, %v934
      %v941 = vpack.c.b16 %v937, %v935
      %v947 = vsel %vm716, %v910, 0
      %v950 = vsel %vm716, %v911, 0
      %v953 = vsel %vm716, %v912, 0
      %v956 = vsel %vm716, %v913, 0
      %v959 = vsel %vm716, %v914, 0
      %v962 = vsel %vm716, %v915, 0
      %v965 = vsel %vm716, %v916, 0
      %v968 = vsel %vm716, %v917, 0
      %v971 = vsel %vm716, %v918, 0
      %v974 = vsel %vm716, %v919, 0
      %v977 = vsel %vm716, %v920, 0
      %v980 = vsel %vm716, %v921, 0
      %982 = vmatprep.subr.bf16.mxu0 %v939
      %983 = vmatpush1.bf16.msra.mxu0 %v938
      %984 = vmatprep.subr.bf16.mxu0 %v941
      %985 = vmatpush1.bf16.msra.mxu0 %v940
      %986 = vmatprep.subr.bf16.mxu0 0
      %987 = vmatpush1.bf16.msra.mxu0 0
      %988 = vmatprep.subr.bf16.mxu0 0
      %989 = vmatpush1.bf16.msra.mxu0 0
      %990 = vmatprep.subr.bf16.mxu0 0
      %991 = vmatpush1.bf16.msra.mxu0 0
      %992 = vmatprep.subr.bf16.mxu0 0
      %993 = vmatpush1.bf16.msra.mxu0 0
      %994 = vmatprep.subr.bf16.mxu0 0
      %995 = vmatpush1.bf16.msra.mxu0 0
      %996 = vmatprep.subr.bf16.mxu0 0
      %997 = vmatpush1.bf16.msra.mxu0 0
      %998 = vmatprep.subr.bf16.mxu0 0
      %999 = vmatpush1.bf16.msra.mxu0 0
      %1000 = vmatprep.subr.bf16.mxu0 0
      %1001 = vmatpush1.bf16.msra.mxu0 0
      %1002 = vmatprep.subr.bf16.mxu0 0
      %1003 = vmatpush1.bf16.msra.mxu0 0
      %1004 = vmatprep.subr.bf16.mxu0 0
      %1005 = vmatpush1.bf16.msra.mxu0 0
      %1006 = vmatprep.subr.bf16.mxu0 0
      %1007 = vmatpush1.bf16.msra.mxu0 0
      %1008 = vmatprep.subr.bf16.mxu0 0
      %1009 = vmatpush1.bf16.msra.mxu0 0
      %1010 = vmatprep.subr.bf16.mxu0 0
      %1011 = vmatpush1.bf16.msra.mxu0 0
      %1012 = vmatprep.subr.bf16.mxu0 0
      %1013 = vmatpush1.bf16.msra.mxu0 0
      %1014 = vmatprep.mubr.bf16.mxu0 0
      %1015 = vmatmul.mubr.bf16.gmra.mrb[0].mxu0 %v947
      %v1016 = vpop.f32.mrb[0].mxu0
      %v1017 = vadd.f32 0.0, %v1016
      %v1018 = vpop.f32.mrb[0].mxu0
      %v1019 = vpop.f32.mrb[0].mxu0
      %v1020 = vadd.f32 0.0, %v1019
      %v1021 = vpop.f32.mrb[0].mxu0
      %v1022 = vadd.f32 0.0, %v1021
      %1023 = vmatprep.mubr.bf16.mxu0 0
      %1024 = vmatmul.mubr.bf16.gmra.mrb[0].mxu0 %v950
      %v1025 = vpop.f32.mrb[0].mxu0
      %v1026 = vpop.f32.mrb[0].mxu0
      %v1027 = vadd.f32 0.0, %v1026
      %v1028 = vpop.f32.mrb[0].mxu0
      %v1029 = vadd.f32 0.0, %v1028
      %v1030 = vpop.f32.mrb[0].mxu0
      %1031 = vmatprep.mubr.bf16.mxu0 0
      %1032 = vmatmul.mubr.bf16.gmra.mrb[0].mxu0 %v953
      %v1033 = vpop.f32.mrb[0].mxu0
      %v1034 = vadd.f32 0.0, %v1033
      %v1035 = vpop.f32.mrb[0].mxu0
      %v1036 = vadd.f32 0.0, %v1035
      %v1037 = vpop.f32.mrb[0].mxu0
      %v1038 = vpop.f32.mrb[0].mxu0
      %v1039 = vadd.f32 0.0, %v1038
      %1040 = vmatprep.mubr.bf16.mxu0 0
      %1041 = vmatmul.mubr.bf16.gmra.mrb[0].mxu0 %v956
      %v1042 = vpop.f32.mrb[0].mxu0
      %v1043 = vadd.f32 0.0, %v1042
      %v1044 = vpop.f32.mrb[0].mxu0
      %v1045 = vpop.f32.mrb[0].mxu0
      %v1046 = vadd.f32 0.0, %v1045
      %v1047 = vpop.f32.mrb[0].mxu0
      %v1048 = vadd.f32 0.0, %v1047
      %1049 = vmatprep.mubr.bf16.mxu0 0
      %1050 = vmatmul.mubr.bf16.gmra.mrb[0].mxu0 %v959
      %v1051 = vpop.f32.mrb[0].mxu0
      %v1052 = vpop.f32.mrb[0].mxu0
      %v1053 = vadd.f32 0.0, %v1052
      %v1054 = vpop.f32.mrb[0].mxu0
      %v1055 = vadd.f32 0.0, %v1054
      %v1056 = vpop.f32.mrb[0].mxu0
      %1057 = vmatprep.mubr.bf16.mxu0 0
      %1058 = vmatmul.mubr.bf16.gmra.mrb[0].mxu0 %v962
      %v1059 = vpop.f32.mrb[0].mxu0
      %v1060 = vadd.f32 0.0, %v1059
      %v1061 = vpop.f32.mrb[0].mxu0
      %v1062 = vadd.f32 0.0, %v1061
      %v1063 = vpop.f32.mrb[0].mxu0
      %v1064 = vpop.f32.mrb[0].mxu0
      %v1065 = vadd.f32 0.0, %v1064
      %1066 = vmatprep.mubr.bf16.mxu0 0
      %1067 = vmatmul.mubr.bf16.gmra.mrb[0].mxu0 %v965
      %v1068 = vpop.f32.mrb[0].mxu0
      %v1069 = vadd.f32 0.0, %v1068
      %v1070 = vpop.f32.mrb[0].mxu0
      %v1071 = vpop.f32.mrb[0].mxu0
      %v1072 = vadd.f32 0.0, %v1071
      %v1073 = vpop.f32.mrb[0].mxu0
      %v1074 = vadd.f32 0.0, %v1073
      %1075 = vmatprep.mubr.bf16.mxu0 0
      %1076 = vmatmul.mubr.bf16.gmra.mrb[0].mxu0 %v968
      %v1077 = vpop.f32.mrb[0].mxu0
      %v1078 = vpop.f32.mrb[0].mxu0
      %v1079 = vadd.f32 0.0, %v1078
      %v1080 = vpop.f32.mrb[0].mxu0
      %v1081 = vadd.f32 0.0, %v1080
      %v1082 = vpop.f32.mrb[0].mxu0
      %1083 = vmatprep.mubr.bf16.mxu0 0
      %1084 = vmatmul.mubr.bf16.gmra.mrb[0].mxu0 %v971
      %v1085 = vpop.f32.mrb[0].mxu0
      %v1086 = vadd.f32 0.0, %v1085
      %v1087 = vpop.f32.mrb[0].mxu0
      %v1088 = vadd.f32 0.0, %v1087
      %v1089 = vpop.f32.mrb[0].mxu0
      %v1090 = vpop.f32.mrb[0].mxu0
      %v1091 = vadd.f32 0.0, %v1090
      %1092 = vmatprep.mubr.bf16.mxu0 0
      %1093 = vmatmul.mubr.bf16.gmra.mrb[0].mxu0 %v974
      %v1094 = vpop.f32.mrb[0].mxu0
      %v1095 = vadd.f32 0.0, %v1094
      %v1096 = vpop.f32.mrb[0].mxu0
      %v1097 = vpop.f32.mrb[0].mxu0
      %v1098 = vadd.f32 0.0, %v1097
      %v1099 = vpop.f32.mrb[0].mxu0
      %v1100 = vadd.f32 0.0, %v1099
      %1101 = vmatprep.mubr.bf16.mxu0 0
      %1102 = vmatmul.mubr.bf16.gmra.mrb[0].mxu0 %v977
      %v1103 = vpop.f32.mrb[0].mxu0
      %v1104 = vpop.f32.mrb[0].mxu0
      %v1105 = vadd.f32 0.0, %v1104
      %v1106 = vpop.f32.mrb[0].mxu0
      %v1107 = vadd.f32 0.0, %v1106
      %v1108 = vpop.f32.mrb[0].mxu0
      %1109 = vmatprep.mubr.bf16.mxu0 0
      %1110 = vmatmul.mubr.bf16.gmra.mrb[0].mxu0 %v980
      %v1111 = vpop.f32.mrb[0].mxu0
      %v1112 = vadd.f32 0.0, %v1111
      %v1113 = vpop.f32.mrb[0].mxu0
      %v1114 = vadd.f32 0.0, %v1113
      %v1115 = vpop.f32.mrb[0].mxu0
      %v1116 = vpop.f32.mrb[0].mxu0
      %v1117 = vadd.f32 0.0, %v1116
      %1118 = vdwg.mxu0
      %vm1135 = vcmask 1046528
      %v1136 = vrot.slane %v1017, 1
      %v1137 = vrot.slane %v1020, 1
      %v1138 = vsel %vm1135, %v1136, %v1137
      %v1139 = vrot.slane %v1029, 1
      %v1140 = vrot.slane %v1034, 1
      %v1141 = vsel %vm1135, %v1139, %v1140
      %v1142 = vrot.slane %v1043, 1
      %v1143 = vrot.slane %v1046, 1
      %v1144 = vsel %vm1135, %v1142, %v1143
      %v1145 = vrot.slane %v1055, 1
      %v1146 = vrot.slane %v1060, 1
      %v1147 = vsel %vm1135, %v1145, %v1146
      %v1148 = vrot.slane %v1069, 1
      %v1149 = vrot.slane %v1072, 1
      %v1150 = vsel %vm1135, %v1148, %v1149
      %v1151 = vrot.slane %v1081, 1
      %v1152 = vrot.slane %v1086, 1
      %v1153 = vsel %vm1135, %v1151, %v1152
      %v1154 = vrot.slane %v1095, 1
      %v1155 = vrot.slane %v1098, 1
      %v1156 = vsel %vm1135, %v1154, %v1155
      %v1157 = vrot.slane %v1107, 1
      %v1158 = vrot.slane %v1112, 1
      %v1159 = vsel %vm1135, %v1157, %v1158
      %1160 = vrot.lane.b32.xlu0 %v1138, 96
      %v1161 = vpop.permute.xlu0 %1160
      %1162 = vrot.lane.b32.xlu0 %v1137, 96
      %v1163 = vpop.permute.xlu0 %1162
      %1164 = vrot.lane.b32.xlu0 %v1141, 96
      %v1165 = vpop.permute.xlu0 %1164
      %1166 = vrot.lane.b32.xlu0 %v1140, 96
      %v1167 = vpop.permute.xlu0 %1166
      %1168 = vrot.lane.b32.xlu0 %v1144, 96
      %v1169 = vpop.permute.xlu0 %1168
      %1170 = vrot.lane.b32.xlu0 %v1143, 96
      %v1171 = vpop.permute.xlu0 %1170
      %1172 = vrot.lane.b32.xlu0 %v1147, 96
      %v1173 = vpop.permute.xlu0 %1172
      %1174 = vrot.lane.b32.xlu0 %v1146, 96
      %v1175 = vpop.permute.xlu0 %1174
      %1176 = vrot.lane.b32.xlu0 %v1150, 96
      %v1177 = vpop.permute.xlu0 %1176
      %1178 = vrot.lane.b32.xlu0 %v1149, 96
      %v1179 = vpop.permute.xlu0 %1178
      %1180 = vrot.lane.b32.xlu0 %v1153, 96
      %v1181 = vpop.permute.xlu0 %1180
      %1182 = vrot.lane.b32.xlu0 %v1152, 96
      %v1183 = vpop.permute.xlu0 %1182
      %1184 = vrot.lane.b32.xlu0 %v1156, 96
      %v1185 = vpop.permute.xlu0 %1184
      %1186 = vrot.lane.b32.xlu0 %v1155, 96
      %v1187 = vpop.permute.xlu0 %1186
      %1188 = vrot.lane.b32.xlu0 %v1159, 96
      %v1189 = vpop.permute.xlu0 %1188
      %1190 = vrot.lane.b32.xlu0 %v1158, 96
      %v1191 = vpop.permute.xlu0 %1190
      %v1208 = vadd.f32 %v1017, %v1161
      %v1209 = vadd.f32 %v1020, %v1163
      %v1210 = vadd.f32 %v1029, %v1165
      %v1211 = vadd.f32 %v1034, %v1167
      %v1212 = vadd.f32 %v1043, %v1169
      %v1213 = vadd.f32 %v1046, %v1171
      %v1214 = vadd.f32 %v1055, %v1173
      %v1215 = vadd.f32 %v1060, %v1175
      %v1216 = vadd.f32 %v1069, %v1177
      %v1217 = vadd.f32 %v1072, %v1179
      %v1218 = vadd.f32 %v1081, %v1181
      %v1219 = vadd.f32 %v1086, %v1183
      %v1220 = vadd.f32 %v1095, %v1185
      %v1221 = vadd.f32 %v1098, %v1187
      %v1222 = vadd.f32 %v1107, %v1189
      %v1223 = vadd.f32 %v1112, %v1191
      %vm1224 = vcmask 1045504
      %v1225 = vrot.slane %v1017, 2
      %v1226 = vrot.slane %v1020, 2
      %v1227 = vsel %vm1224, %v1225, %v1226
      %v1228 = vrot.slane %v1029, 2
      %v1229 = vrot.slane %v1034, 2
      %v1230 = vsel %vm1224, %v1228, %v1229
      %v1231 = vrot.slane %v1043, 2
      %v1232 = vrot.slane %v1046, 2
      %v1233 = vsel %vm1224, %v1231, %v1232
      %v1234 = vrot.slane %v1055, 2
      %v1235 = vrot.slane %v1060, 2
      %v1236 = vsel %vm1224, %v1234, %v1235
      %v1237 = vrot.slane %v1069, 2
      %v1238 = vrot.slane %v1072, 2
      %v1239 = vsel %vm1224, %v1237, %v1238
      %v1240 = vrot.slane %v1081, 2
      %v1241 = vrot.slane %v1086, 2
      %v1242 = vsel %vm1224, %v1240, %v1241
      %v1243 = vrot.slane %v1095, 2
      %v1244 = vrot.slane %v1098, 2
      %v1245 = vsel %vm1224, %v1243, %v1244
      %v1246 = vrot.slane %v1107, 2
      %v1247 = vrot.slane %v1112, 2
      %v1248 = vsel %vm1224, %v1246, %v1247
      %1249 = vrot.lane.b32.xlu0 %v1227, 64
      %v1250 = vpop.permute.xlu0 %1249
      %1251 = vrot.lane.b32.xlu0 %v1226, 64
      %v1252 = vpop.permute.xlu0 %1251
      %1253 = vrot.lane.b32.xlu0 %v1230, 64
      %v1254 = vpop.permute.xlu0 %1253
      %1255 = vrot.lane.b32.xlu0 %v1229, 64
      %v1256 = vpop.permute.xlu0 %1255
      %1257 = vrot.lane.b32.xlu0 %v1233, 64
      %v1258 = vpop.permute.xlu0 %1257
      %1259 = vrot.lane.b32.xlu0 %v1232, 64
      %v1260 = vpop.permute.xlu0 %1259
      %1261 = vrot.lane.b32.xlu0 %v1236, 64
      %v1262 = vpop.permute.xlu0 %1261
      %1263 = vrot.lane.b32.xlu0 %v1235, 64
      %v1264 = vpop.permute.xlu0 %1263
      %1265 = vrot.lane.b32.xlu0 %v1239, 64
      %v1266 = vpop.permute.xlu0 %1265
      %1267 = vrot.lane.b32.xlu0 %v1238, 64
      %v1268 = vpop.permute.xlu0 %1267
      %1269 = vrot.lane.b32.xlu0 %v1242, 64
      %v1270 = vpop.permute.xlu0 %1269
      %1271 = vrot.lane.b32.xlu0 %v1241, 64
      %v1272 = vpop.permute.xlu0 %1271
      %1273 = vrot.lane.b32.xlu0 %v1245, 64
      %v1274 = vpop.permute.xlu0 %1273
      %1275 = vrot.lane.b32.xlu0 %v1244, 64
      %v1276 = vpop.permute.xlu0 %1275
      %1277 = vrot.lane.b32.xlu0 %v1248, 64
      %v1278 = vpop.permute.xlu0 %1277
      %1279 = vrot.lane.b32.xlu0 %v1247, 64
      %v1280 = vpop.permute.xlu0 %1279
      %v1297 = vadd.f32 %v1208, %v1250
      %v1298 = vadd.f32 %v1209, %v1252
      %v1299 = vadd.f32 %v1210, %v1254
      %v1300 = vadd.f32 %v1211, %v1256
      %v1301 = vadd.f32 %v1212, %v1258
      %v1302 = vadd.f32 %v1213, %v1260
      %v1303 = vadd.f32 %v1214, %v1262
      %v1304 = vadd.f32 %v1215, %v1264
      %v1305 = vadd.f32 %v1216, %v1266
      %v1306 = vadd.f32 %v1217, %v1268
      %v1307 = vadd.f32 %v1218, %v1270
      %v1308 = vadd.f32 %v1219, %v1272
      %v1309 = vadd.f32 %v1220, %v1274
      %v1310 = vadd.f32 %v1221, %v1276
      %v1311 = vadd.f32 %v1222, %v1278
      %v1312 = vadd.f32 %v1223, %v1280
      %v1313 = vrot.slane %v1020, 3
      %v1314 = vrot.slane %v1034, 3
      %v1315 = vrot.slane %v1046, 3
      %v1316 = vrot.slane %v1060, 3
      %v1317 = vrot.slane %v1072, 3
      %v1318 = vrot.slane %v1086, 3
      %v1319 = vrot.slane %v1098, 3
      %v1320 = vrot.slane %v1112, 3
      %1321 = vrot.lane.b32.xlu0 %v1313, 32
      %v1322 = vpop.permute.xlu0 %1321
      %1323 = vrot.lane.b32.xlu0 %v1314, 32
      %v1324 = vpop.permute.xlu0 %1323
      %1325 = vrot.lane.b32.xlu0 %v1315, 32
      %v1326 = vpop.permute.xlu0 %1325
      %1327 = vrot.lane.b32.xlu0 %v1316, 32
      %v1328 = vpop.permute.xlu0 %1327
      %1329 = vrot.lane.b32.xlu0 %v1317, 32
      %v1330 = vpop.permute.xlu0 %1329
      %1331 = vrot.lane.b32.xlu0 %v1318, 32
      %v1332 = vpop.permute.xlu0 %1331
      %1333 = vrot.lane.b32.xlu0 %v1319, 32
      %v1334 = vpop.permute.xlu0 %1333
      %1335 = vrot.lane.b32.xlu0 %v1320, 32
      %v1336 = vpop.permute.xlu0 %1335
      %v1345 = vadd.f32 %v1297, %v1322
      %v1346 = vadd.f32 %v1298, %v1322
      %v1347 = vadd.f32 %v1299, %v1324
      %v1348 = vadd.f32 %v1300, %v1324
      %v1349 = vadd.f32 %v1301, %v1326
      %v1350 = vadd.f32 %v1302, %v1326
      %v1351 = vadd.f32 %v1303, %v1328
      %v1352 = vadd.f32 %v1304, %v1328
      %v1353 = vadd.f32 %v1305, %v1330
      %v1354 = vadd.f32 %v1306, %v1330
      %v1355 = vadd.f32 %v1307, %v1332
      %v1356 = vadd.f32 %v1308, %v1332
      %v1357 = vadd.f32 %v1309, %v1334
      %v1358 = vadd.f32 %v1310, %v1334
      %v1359 = vadd.f32 %v1311, %v1336
      %v1360 = vadd.f32 %v1312, %v1336
      %vm1377 = vcmask 1043456
      %v1378 = vrot.slane %v1022, 4
      %v1379 = vrot.slane %v1027, 4
      %v1380 = vsel %vm1377, %v1378, %v1379
      %v1381 = vrot.slane %v1036, 4
      %v1382 = vrot.slane %v1039, 4
      %v1383 = vsel %vm1377, %v1381, %v1382
      %v1384 = vrot.slane %v1048, 4
      %v1385 = vrot.slane %v1053, 4
      %v1386 = vsel %vm1377, %v1384, %v1385
      %v1387 = vrot.slane %v1062, 4
      %v1388 = vrot.slane %v1065, 4
      %v1389 = vsel %vm1377, %v1387, %v1388
      %v1390 = vrot.slane %v1074, 4
      %v1391 = vrot.slane %v1079, 4
      %v1392 = vsel %vm1377, %v1390, %v1391
      %v1393 = vrot.slane %v1088, 4
      %v1394 = vrot.slane %v1091, 4
      %v1395 = vsel %vm1377, %v1393, %v1394
      %v1396 = vrot.slane %v1100, 4
      %v1397 = vrot.slane %v1105, 4
      %v1398 = vsel %vm1377, %v1396, %v1397
      %v1399 = vrot.slane %v1114, 4
      %v1400 = vrot.slane %v1117, 4
      %v1401 = vsel %vm1377, %v1399, %v1400
      %v1418 = vadd.f32 %v1345, %v1378
      %v1419 = vadd.f32 %v1346, %v1380
      %v1420 = vadd.f32 %v1347, %v1381
      %v1421 = vadd.f32 %v1348, %v1383
      %v1422 = vadd.f32 %v1349, %v1384
      %v1423 = vadd.f32 %v1350, %v1386
      %v1424 = vadd.f32 %v1351, %v1387
      %v1425 = vadd.f32 %v1352, %v1389
      %v1426 = vadd.f32 %v1353, %v1390
      %v1427 = vadd.f32 %v1354, %v1392
      %v1428 = vadd.f32 %v1355, %v1393
      %v1429 = vadd.f32 %v1356, %v1395
      %v1430 = vadd.f32 %v1357, %v1396
      %v1431 = vadd.f32 %v1358, %v1398
      %v1432 = vadd.f32 %v1359, %v1399
      %v1433 = vadd.f32 %v1360, %v1401
      %vm1434 = vcmask 1042432
      %v1435 = vrot.slane %v1022, 5
      %v1436 = vrot.slane %v1027, 5
      %v1437 = vsel %vm1434, %v1435, %v1436
      %v1438 = vrot.slane %v1036, 5
      %v1439 = vrot.slane %v1039, 5
      %v1440 = vsel %vm1434, %v1438, %v1439
      %v1441 = vrot.slane %v1048, 5
      %v1442 = vrot.slane %v1053, 5
      %v1443 = vsel %vm1434, %v1441, %v1442
      %v1444 = vrot.slane %v1062, 5
      %v1445 = vrot.slane %v1065, 5
      %v1446 = vsel %vm1434, %v1444, %v1445
      %v1447 = vrot.slane %v1074, 5
      %v1448 = vrot.slane %v1079, 5
      %v1449 = vsel %vm1434, %v1447, %v1448
      %v1450 = vrot.slane %v1088, 5
      %v1451 = vrot.slane %v1091, 5
      %v1452 = vsel %vm1434, %v1450, %v1451
      %v1453 = vrot.slane %v1100, 5
      %v1454 = vrot.slane %v1105, 5
      %v1455 = vsel %vm1434, %v1453, %v1454
      %v1456 = vrot.slane %v1114, 5
      %v1457 = vrot.slane %v1117, 5
      %v1458 = vsel %vm1434, %v1456, %v1457
      %1459 = vrot.lane.b32.xlu0 %v1435, 96
      %v1460 = vpop.permute.xlu0 %1459
      %1461 = vrot.lane.b32.xlu0 %v1437, 96
      %v1462 = vpop.permute.xlu0 %1461
      %1463 = vrot.lane.b32.xlu0 %v1438, 96
      %v1464 = vpop.permute.xlu0 %1463
      %1465 = vrot.lane.b32.xlu0 %v1440, 96
      %v1466 = vpop.permute.xlu0 %1465
      %1467 = vrot.lane.b32.xlu0 %v1441, 96
      %v1468 = vpop.permute.xlu0 %1467
      %1469 = vrot.lane.b32.xlu0 %v1443, 96
      %v1470 = vpop.permute.xlu0 %1469
      %1471 = vrot.lane.b32.xlu0 %v1444, 96
      %v1472 = vpop.permute.xlu0 %1471
      %1473 = vrot.lane.b32.xlu0 %v1446, 96
      %v1474 = vpop.permute.xlu0 %1473
      %1475 = vrot.lane.b32.xlu0 %v1447, 96
      %v1476 = vpop.permute.xlu0 %1475
      %1477 = vrot.lane.b32.xlu0 %v1449, 96
      %v1478 = vpop.permute.xlu0 %1477
      %1479 = vrot.lane.b32.xlu0 %v1450, 96
      %v1480 = vpop.permute.xlu0 %1479
      %1481 = vrot.lane.b32.xlu0 %v1452, 96
      %v1482 = vpop.permute.xlu0 %1481
      %1483 = vrot.lane.b32.xlu0 %v1453, 96
      %v1484 = vpop.permute.xlu0 %1483
      %1485 = vrot.lane.b32.xlu0 %v1455, 96
      %v1486 = vpop.permute.xlu0 %1485
      %1487 = vrot.lane.b32.xlu0 %v1456, 96
      %v1488 = vpop.permute.xlu0 %1487
      %1489 = vrot.lane.b32.xlu0 %v1458, 96
      %v1490 = vpop.permute.xlu0 %1489
      %v1507 = vadd.f32 %v1418, %v1460
      %v1508 = vadd.f32 %v1419, %v1462
      %v1509 = vadd.f32 %v1420, %v1464
      %v1510 = vadd.f32 %v1421, %v1466
      %v1511 = vadd.f32 %v1422, %v1468
      %v1512 = vadd.f32 %v1423, %v1470
      %v1513 = vadd.f32 %v1424, %v1472
      %v1514 = vadd.f32 %v1425, %v1474
      %v1515 = vadd.f32 %v1426, %v1476
      %v1516 = vadd.f32 %v1427, %v1478
      %v1517 = vadd.f32 %v1428, %v1480
      %v1518 = vadd.f32 %v1429, %v1482
      %v1519 = vadd.f32 %v1430, %v1484
      %v1520 = vadd.f32 %v1431, %v1486
      %v1521 = vadd.f32 %v1432, %v1488
      %v1522 = vadd.f32 %v1433, %v1490
      %vm1523 = vcmask 1041408
      %v1524 = vrot.slane %v1022, 6
      %v1525 = vrot.slane %v1027, 6
      %v1526 = vsel %vm1523, %v1524, %v1525
      %v1527 = vrot.slane %v1036, 6
      %v1528 = vrot.slane %v1039, 6
      %v1529 = vsel %vm1523, %v1527, %v1528
      %v1530 = vrot.slane %v1048, 6
      %v1531 = vrot.slane %v1053, 6
      %v1532 = vsel %vm1523, %v1530, %v1531
      %v1533 = vrot.slane %v1062, 6
      %v1534 = vrot.slane %v1065, 6
      %v1535 = vsel %vm1523, %v1533, %v1534
      %v1536 = vrot.slane %v1074, 6
      %v1537 = vrot.slane %v1079, 6
      %v1538 = vsel %vm1523, %v1536, %v1537
      %v1539 = vrot.slane %v1088, 6
      %v1540 = vrot.slane %v1091, 6
      %v1541 = vsel %vm1523, %v1539, %v1540
      %v1542 = vrot.slane %v1100, 6
      %v1543 = vrot.slane %v1105, 6
      %v1544 = vsel %vm1523, %v1542, %v1543
      %v1545 = vrot.slane %v1114, 6
      %v1546 = vrot.slane %v1117, 6
      %v1547 = vsel %vm1523, %v1545, %v1546
      %1548 = vrot.lane.b32.xlu0 %v1524, 64
      %v1549 = vpop.permute.xlu0 %1548
      %1550 = vrot.lane.b32.xlu0 %v1526, 64
      %v1551 = vpop.permute.xlu0 %1550
      %1552 = vrot.lane.b32.xlu0 %v1527, 64
      %v1553 = vpop.permute.xlu0 %1552
      %1554 = vrot.lane.b32.xlu0 %v1529, 64
      %v1555 = vpop.permute.xlu0 %1554
      %1556 = vrot.lane.b32.xlu0 %v1530, 64
      %v1557 = vpop.permute.xlu0 %1556
      %1558 = vrot.lane.b32.xlu0 %v1532, 64
      %v1559 = vpop.permute.xlu0 %1558
      %1560 = vrot.lane.b32.xlu0 %v1533, 64
      %v1561 = vpop.permute.xlu0 %1560
      %1562 = vrot.lane.b32.xlu0 %v1535, 64
      %v1563 = vpop.permute.xlu0 %1562
      %1564 = vrot.lane.b32.xlu0 %v1536, 64
      %v1565 = vpop.permute.xlu0 %1564
      %1566 = vrot.lane.b32.xlu0 %v1538, 64
      %v1567 = vpop.permute.xlu0 %1566
      %1568 = vrot.lane.b32.xlu0 %v1539, 64
      %v1569 = vpop.permute.xlu0 %1568
      %1570 = vrot.lane.b32.xlu0 %v1541, 64
      %v1571 = vpop.permute.xlu0 %1570
      %1572 = vrot.lane.b32.xlu0 %v1542, 64
      %v1573 = vpop.permute.xlu0 %1572
      %1574 = vrot.lane.b32.xlu0 %v1544, 64
      %v1575 = vpop.permute.xlu0 %1574
      %1576 = vrot.lane.b32.xlu0 %v1545, 64
      %v1577 = vpop.permute.xlu0 %1576
      %1578 = vrot.lane.b32.xlu0 %v1547, 64
      %v1579 = vpop.permute.xlu0 %1578
      %v1596 = vadd.f32 %v1507, %v1549
      %v1597 = vadd.f32 %v1508, %v1551
      %v1598 = vadd.f32 %v1509, %v1553
      %v1599 = vadd.f32 %v1510, %v1555
      %v1600 = vadd.f32 %v1511, %v1557
      %v1601 = vadd.f32 %v1512, %v1559
      %v1602 = vadd.f32 %v1513, %v1561
      %v1603 = vadd.f32 %v1514, %v1563
      %v1604 = vadd.f32 %v1515, %v1565
      %v1605 = vadd.f32 %v1516, %v1567
      %v1606 = vadd.f32 %v1517, %v1569
      %v1607 = vadd.f32 %v1518, %v1571
      %v1608 = vadd.f32 %v1519, %v1573
      %v1609 = vadd.f32 %v1520, %v1575
      %v1610 = vadd.f32 %v1521, %v1577
      %v1611 = vadd.f32 %v1522, %v1579
      %s1612 = sadd.s32 0, 1
      %s1613 = smul.u32 %s1612, 24
      %s1614 = scalar_lea.vmem [#allocation4], %s1613
      %v1615 = vld [vmem:[%s1614] sm:$0xff]
      %v1616 = vld [vmem:[%s1614 + $0x8] sm:$0xff]
      %v1617 = vld [vmem:[%s1614 + $0x10] sm:$0xff]
      %v1618 = vld [vmem:[%s1614 + $0x18] sm:$0xff]
      %v1619 = vld [vmem:[%s1614 + $0x20] sm:$0xff]
      %v1620 = vld [vmem:[%s1614 + $0x28] sm:$0xff]
      %v1621 = vld [vmem:[%s1614 + $0x30] sm:$0xff]
      %v1622 = vld [vmem:[%s1614 + $0x38] sm:$0xff]
      %v1623 = vld [vmem:[%s1614 + $0x40] sm:$0xff]
      %v1624 = vld [vmem:[%s1614 + $0x48] sm:$0xff]
      %v1625 = vld [vmem:[%s1614 + $0x50] sm:$0xff]
      %v1626 = vld [vmem:[%s1614 + $0x58] sm:$0xff]
      %v1627 = vld [vmem:[%s1614 + $0x60] sm:$0xff]
      %v1628 = vld [vmem:[%s1614 + $0x68] sm:$0xff]
      %v1629 = vld [vmem:[%s1614 + $0x70] sm:$0xff]
      %v1630 = vld [vmem:[%s1614 + $0x78] sm:$0xff]
      %v1631 = vld [vmem:[%s1614 + $0x80] sm:$0xff]
      %v1632 = vld [vmem:[%s1614 + $0x88] sm:$0xff]
      %v1633 = vld [vmem:[%s1614 + $0x90] sm:$0xff]
      %v1634 = vld [vmem:[%s1614 + $0x98] sm:$0xff]
      %v1635 = vld [vmem:[%s1614 + $0xa0] sm:$0xff]
      %v1636 = vld [vmem:[%s1614 + $0xa8] sm:$0xff]
      %v1637 = vld [vmem:[%s1614 + $0xb0] sm:$0xff]
      %v1638 = vld [vmem:[%s1614 + $0xb8] sm:$0xff]
      %v1639 = vpack.c.bf16 %v1616, %v1615
      %v1640 = vpack.c.bf16 %v1618, %v1617
      %v1641 = vpack.c.bf16 %v1620, %v1619
      %v1642 = vpack.c.bf16 %v1622, %v1621
      %v1643 = vpack.c.bf16 %v1624, %v1623
      %v1644 = vpack.c.bf16 %v1626, %v1625
      %v1645 = vpack.c.bf16 %v1628, %v1627
      %v1646 = vpack.c.bf16 %v1630, %v1629
      %v1647 = vpack.c.bf16 %v1632, %v1631
      %v1648 = vpack.c.bf16 %v1634, %v1633
      %v1649 = vpack.c.bf16 %v1636, %v1635
      %v1650 = vpack.c.bf16 %v1638, %v1637
      %s1651 = scalar_lea.vmem %s392, 32
      %v1652 = vld [vmem:[%s1651] sm:$0xff]
      %v1653 = vld [vmem:[%s1651 + $0x8] sm:$0xff]
      %v1654 = vld [vmem:[%s1651 + $0x10] sm:$0xff]
      %v1655 = vld [vmem:[%s1651 + $0x18] sm:$0xff]
      %v1660 = vunpack.c.l.b16 %v1652
      %v1661 = vunpack.c.h.b16 %v1652
      %v1662 = vunpack.c.l.b16 %v1653
      %v1663 = vunpack.c.h.b16 %v1653
      %v1664 = vunpack.c.l.b16 %v1654
      %v1665 = vunpack.c.h.b16 %v1654
      %v1666 = vunpack.c.l.b16 %v1655
      %v1667 = vunpack.c.h.b16 %v1655
      %v1668 = vpack.c.b16 %v1662, %v1660
      %v1669 = vpack.c.b16 %v1663, %v1661
      %v1670 = vpack.c.b16 %v1666, %v1664
      %v1671 = vpack.c.b16 %v1667, %v1665
      %v1677 = vsel %vm716, %v1639, 0
      %v1680 = vsel %vm716, %v1640, 0
      %v1683 = vsel %vm716, %v1641, 0
      %v1686 = vsel %vm716, %v1642, 0
      %v1689 = vsel %vm716, %v1643, 0
      %v1692 = vsel %vm716, %v1644, 0
      %v1695 = vsel %vm716, %v1645, 0
      %v1698 = vsel %vm716, %v1646, 0
      %v1701 = vsel %vm716, %v1647, 0
      %v1704 = vsel %vm716, %v1648, 0
      %v1707 = vsel %vm716, %v1649, 0
      %v1710 = vsel %vm716, %v1650, 0
      %1712 = vmatprep.subr.bf16.mxu0 %v1669
      %1713 = vmatpush1.bf16.msra.mxu0 %v1668
      %1714 = vmatprep.subr.bf16.mxu0 %v1671
      %1715 = vmatpush1.bf16.msra.mxu0 %v1670
      %1716 = vmatprep.subr.bf16.mxu0 0
      %1717 = vmatpush1.bf16.msra.mxu0 0
      %1718 = vmatprep.subr.bf16.mxu0 0
      %1719 = vmatpush1.bf16.msra.mxu0 0
      %1720 = vmatprep.subr.bf16.mxu0 0
      %1721 = vmatpush1.bf16.msra.mxu0 0
      %1722 = vmatprep.subr.bf16.mxu0 0
      %1723 = vmatpush1.bf16.msra.mxu0 0
      %1724 = vmatprep.subr.bf16.mxu0 0
      %1725 = vmatpush1.bf16.msra.mxu0 0
      %1726 = vmatprep.subr.bf16.mxu0 0
      %1727 = vmatpush1.bf16.msra.mxu0 0
      %1728 = vmatprep.subr.bf16.mxu0 0
      %1729 = vmatpush1.bf16.msra.mxu0 0
      %1730 = vmatprep.subr.bf16.mxu0 0
      %1731 = vmatpush1.bf16.msra.mxu0 0
      %1732 = vmatprep.subr.bf16.mxu0 0
      %1733 = vmatpush1.bf16.msra.mxu0 0
      %1734 = vmatprep.subr.bf16.mxu0 0
      %1735 = vmatpush1.bf16.msra.mxu0 0
      %1736 = vmatprep.subr.bf16.mxu0 0
      %1737 = vmatpush1.bf16.msra.mxu0 0
      %1738 = vmatprep.subr.bf16.mxu0 0
      %1739 = vmatpush1.bf16.msra.mxu0 0
      %1740 = vmatprep.subr.bf16.mxu0 0
      %1741 = vmatpush1.bf16.msra.mxu0 0
      %1742 = vmatprep.subr.bf16.mxu0 0
      %1743 = vmatpush1.bf16.msra.mxu0 0
      %1744 = vmatprep.mubr.bf16.mxu0 0
      %1745 = vmatmul.mubr.bf16.gmra.mrb[0].mxu0 %v1677
      %v1746 = vpop.f32.mrb[0].mxu0
      %v1747 = vadd.f32 0.0, %v1746
      %v1748 = vpop.f32.mrb[0].mxu0
      %v1749 = vpop.f32.mrb[0].mxu0
      %v1750 = vadd.f32 0.0, %v1749
      %v1751 = vpop.f32.mrb[0].mxu0
      %v1752 = vadd.f32 0.0, %v1751
      %1753 = vmatprep.mubr.bf16.mxu0 0
      %1754 = vmatmul.mubr.bf16.gmra.mrb[0].mxu0 %v1680
      %v1755 = vpop.f32.mrb[0].mxu0
      %v1756 = vpop.f32.mrb[0].mxu0
      %v1757 = vadd.f32 0.0, %v1756
      %v1758 = vpop.f32.mrb[0].mxu0
      %v1759 = vadd.f32 0.0, %v1758
      %v1760 = vpop.f32.mrb[0].mxu0
      %1761 = vmatprep.mubr.bf16.mxu0 0
      %1762 = vmatmul.mubr.bf16.gmra.mrb[0].mxu0 %v1683
      %v1763 = vpop.f32.mrb[0].mxu0
      %v1764 = vadd.f32 0.0, %v1763
      %v1765 = vpop.f32.mrb[0].mxu0
      %v1766 = vadd.f32 0.0, %v1765
      %v1767 = vpop.f32.mrb[0].mxu0
      %v1768 = vpop.f32.mrb[0].mxu0
      %v1769 = vadd.f32 0.0, %v1768
      %1770 = vmatprep.mubr.bf16.mxu0 0
      %1771 = vmatmul.mubr.bf16.gmra.mrb[0].mxu0 %v1686
      %v1772 = vpop.f32.mrb[0].mxu0
      %v1773 = vadd.f32 0.0, %v1772
      %v1774 = vpop.f32.mrb[0].mxu0
      %v1775 = vpop.f32.mrb[0].mxu0
      %v1776 = vadd.f32 0.0, %v1775
      %v1777 = vpop.f32.mrb[0].mxu0
      %v1778 = vadd.f32 0.0, %v1777
      %1779 = vmatprep.mubr.bf16.mxu0 0
      %1780 = vmatmul.mubr.bf16.gmra.mrb[0].mxu0 %v1689
      %v1781 = vpop.f32.mrb[0].mxu0
      %v1782 = vpop.f32.mrb[0].mxu0
      %v1783 = vadd.f32 0.0, %v1782
      %v1784 = vpop.f32.mrb[0].mxu0
      %v1785 = vadd.f32 0.0, %v1784
      %v1786 = vpop.f32.mrb[0].mxu0
      %1787 = vmatprep.mubr.bf16.mxu0 0
      %1788 = vmatmul.mubr.bf16.gmra.mrb[0].mxu0 %v1692
      %v1789 = vpop.f32.mrb[0].mxu0
      %v1790 = vadd.f32 0.0, %v1789
      %v1791 = vpop.f32.mrb[0].mxu0
      %v1792 = vadd.f32 0.0, %v1791
      %v1793 = vpop.f32.mrb[0].mxu0
      %v1794 = vpop.f32.mrb[0].mxu0
      %v1795 = vadd.f32 0.0, %v1794
      %1796 = vmatprep.mubr.bf16.mxu0 0
      %1797 = vmatmul.mubr.bf16.gmra.mrb[0].mxu0 %v1695
      %v1798 = vpop.f32.mrb[0].mxu0
      %v1799 = vadd.f32 0.0, %v1798
      %v1800 = vpop.f32.mrb[0].mxu0
      %v1801 = vpop.f32.mrb[0].mxu0
      %v1802 = vadd.f32 0.0, %v1801
      %v1803 = vpop.f32.mrb[0].mxu0
      %v1804 = vadd.f32 0.0, %v1803
      %1805 = vmatprep.mubr.bf16.mxu0 0
      %1806 = vmatmul.mubr.bf16.gmra.mrb[0].mxu0 %v1698
      %v1807 = vpop.f32.mrb[0].mxu0
      %v1808 = vpop.f32.mrb[0].mxu0
      %v1809 = vadd.f32 0.0, %v1808
      %v1810 = vpop.f32.mrb[0].mxu0
      %v1811 = vadd.f32 0.0, %v1810
      %v1812 = vpop.f32.mrb[0].mxu0
      %1813 = vmatprep.mubr.bf16.mxu0 0
      %1814 = vmatmul.mubr.bf16.gmra.mrb[0].mxu0 %v1701
      %v1815 = vpop.f32.mrb[0].mxu0
      %v1816 = vadd.f32 0.0, %v1815
      %v1817 = vpop.f32.mrb[0].mxu0
      %v1818 = vadd.f32 0.0, %v1817
      %v1819 = vpop.f32.mrb[0].mxu0
      %v1820 = vpop.f32.mrb[0].mxu0
      %v1821 = vadd.f32 0.0, %v1820
      %1822 = vmatprep.mubr.bf16.mxu0 0
      %1823 = vmatmul.mubr.bf16.gmra.mrb[0].mxu0 %v1704
      %v1824 = vpop.f32.mrb[0].mxu0
      %v1825 = vadd.f32 0.0, %v1824
      %v1826 = vpop.f32.mrb[0].mxu0
      %v1827 = vpop.f32.mrb[0].mxu0
      %v1828 = vadd.f32 0.0, %v1827
      %v1829 = vpop.f32.mrb[0].mxu0
      %v1830 = vadd.f32 0.0, %v1829
      %1831 = vmatprep.mubr.bf16.mxu0 0
      %1832 = vmatmul.mubr.bf16.gmra.mrb[0].mxu0 %v1707
      %v1833 = vpop.f32.mrb[0].mxu0
      %v1834 = vpop.f32.mrb[0].mxu0
      %v1835 = vadd.f32 0.0, %v1834
      %v1836 = vpop.f32.mrb[0].mxu0
      %v1837 = vadd.f32 0.0, %v1836
      %v1838 = vpop.f32.mrb[0].mxu0
      %1839 = vmatprep.mubr.bf16.mxu0 0
      %1840 = vmatmul.mubr.bf16.gmra.mrb[0].mxu0 %v1710
      %v1841 = vpop.f32.mrb[0].mxu0
      %v1842 = vadd.f32 0.0, %v1841
      %v1843 = vpop.f32.mrb[0].mxu0
      %v1844 = vadd.f32 0.0, %v1843
      %v1845 = vpop.f32.mrb[0].mxu0
      %v1846 = vpop.f32.mrb[0].mxu0
      %v1847 = vadd.f32 0.0, %v1846
      %1848 = vdwg.mxu0
      %v1865 = vrot.slane %v1747, 1
      %v1866 = vrot.slane %v1750, 1
      %v1867 = vsel %vm1135, %v1865, %v1866
      %v1868 = vrot.slane %v1759, 1
      %v1869 = vrot.slane %v1764, 1
      %v1870 = vsel %vm1135, %v1868, %v1869
      %v1871 = vrot.slane %v1773, 1
      %v1872 = vrot.slane %v1776, 1
      %v1873 = vsel %vm1135, %v1871, %v1872
      %v1874 = vrot.slane %v1785, 1
      %v1875 = vrot.slane %v1790, 1
      %v1876 = vsel %vm1135, %v1874, %v1875
      %v1877 = vrot.slane %v1799, 1
      %v1878 = vrot.slane %v1802, 1
      %v1879 = vsel %vm1135, %v1877, %v1878
      %v1880 = vrot.slane %v1811, 1
      %v1881 = vrot.slane %v1816, 1
      %v1882 = vsel %vm1135, %v1880, %v1881
      %v1883 = vrot.slane %v1825, 1
      %v1884 = vrot.slane %v1828, 1
      %v1885 = vsel %vm1135, %v1883, %v1884
      %v1886 = vrot.slane %v1837, 1
      %v1887 = vrot.slane %v1842, 1
      %v1888 = vsel %vm1135, %v1886, %v1887
      %1889 = vrot.lane.b32.xlu0 %v1867, 96
      %v1890 = vpop.permute.xlu0 %1889
      %1891 = vrot.lane.b32.xlu0 %v1866, 96
      %v1892 = vpop.permute.xlu0 %1891
      %1893 = vrot.lane.b32.xlu0 %v1870, 96
      %v1894 = vpop.permute.xlu0 %1893
      %1895 = vrot.lane.b32.xlu0 %v1869, 96
      %v1896 = vpop.permute.xlu0 %1895
      %1897 = vrot.lane.b32.xlu0 %v1873, 96
      %v1898 = vpop.permute.xlu0 %1897
      %1899 = vrot.lane.b32.xlu0 %v1872, 96
      %v1900 = vpop.permute.xlu0 %1899
      %1901 = vrot.lane.b32.xlu0 %v1876, 96
      %v1902 = vpop.permute.xlu0 %1901
      %1903 = vrot.lane.b32.xlu0 %v1875, 96
      %v1904 = vpop.permute.xlu0 %1903
      %1905 = vrot.lane.b32.xlu0 %v1879, 96
      %v1906 = vpop.permute.xlu0 %1905
      %1907 = vrot.lane.b32.xlu0 %v1878, 96
      %v1908 = vpop.permute.xlu0 %1907
      %1909 = vrot.lane.b32.xlu0 %v1882, 96
      %v1910 = vpop.permute.xlu0 %1909
      %1911 = vrot.lane.b32.xlu0 %v1881, 96
      %v1912 = vpop.permute.xlu0 %1911
      %1913 = vrot.lane.b32.xlu0 %v1885, 96
      %v1914 = vpop.permute.xlu0 %1913
      %1915 = vrot.lane.b32.xlu0 %v1884, 96
      %v1916 = vpop.permute.xlu0 %1915
      %1917 = vrot.lane.b32.xlu0 %v1888, 96
      %v1918 = vpop.permute.xlu0 %1917
      %1919 = vrot.lane.b32.xlu0 %v1887, 96
      %v1920 = vpop.permute.xlu0 %1919
      %v1937 = vadd.f32 %v1747, %v1890
      %v1938 = vadd.f32 %v1750, %v1892
      %v1939 = vadd.f32 %v1759, %v1894
      %v1940 = vadd.f32 %v1764, %v1896
      %v1941 = vadd.f32 %v1773, %v1898
      %v1942 = vadd.f32 %v1776, %v1900
      %v1943 = vadd.f32 %v1785, %v1902
      %v1944 = vadd.f32 %v1790, %v1904
      %v1945 = vadd.f32 %v1799, %v1906
      %v1946 = vadd.f32 %v1802, %v1908
      %v1947 = vadd.f32 %v1811, %v1910
      %v1948 = vadd.f32 %v1816, %v1912
      %v1949 = vadd.f32 %v1825, %v1914
      %v1950 = vadd.f32 %v1828, %v1916
      %v1951 = vadd.f32 %v1837, %v1918
      %v1952 = vadd.f32 %v1842, %v1920
      %v1953 = vrot.slane %v1747, 2
      %v1954 = vrot.slane %v1750, 2
      %v1955 = vsel %vm1224, %v1953, %v1954
      %v1956 = vrot.slane %v1759, 2
      %v1957 = vrot.slane %v1764, 2
      %v1958 = vsel %vm1224, %v1956, %v1957
      %v1959 = vrot.slane %v1773, 2
      %v1960 = vrot.slane %v1776, 2
      %v1961 = vsel %vm1224, %v1959, %v1960
      %v1962 = vrot.slane %v1785, 2
      %v1963 = vrot.slane %v1790, 2
      %v1964 = vsel %vm1224, %v1962, %v1963
      %v1965 = vrot.slane %v1799, 2
      %v1966 = vrot.slane %v1802, 2
      %v1967 = vsel %vm1224, %v1965, %v1966
      %v1968 = vrot.slane %v1811, 2
      %v1969 = vrot.slane %v1816, 2
      %v1970 = vsel %vm1224, %v1968, %v1969
      %v1971 = vrot.slane %v1825, 2
      %v1972 = vrot.slane %v1828, 2
      %v1973 = vsel %vm1224, %v1971, %v1972
      %v1974 = vrot.slane %v1837, 2
      %v1975 = vrot.slane %v1842, 2
      %v1976 = vsel %vm1224, %v1974, %v1975
      %1977 = vrot.lane.b32.xlu0 %v1955, 64
      %v1978 = vpop.permute.xlu0 %1977
      %1979 = vrot.lane.b32.xlu0 %v1954, 64
      %v1980 = vpop.permute.xlu0 %1979
      %1981 = vrot.lane.b32.xlu0 %v1958, 64
      %v1982 = vpop.permute.xlu0 %1981
      %1983 = vrot.lane.b32.xlu0 %v1957, 64
      %v1984 = vpop.permute.xlu0 %1983
      %1985 = vrot.lane.b32.xlu0 %v1961, 64
      %v1986 = vpop.permute.xlu0 %1985
      %1987 = vrot.lane.b32.xlu0 %v1960, 64
      %v1988 = vpop.permute.xlu0 %1987
      %1989 = vrot.lane.b32.xlu0 %v1964, 64
      %v1990 = vpop.permute.xlu0 %1989
      %1991 = vrot.lane.b32.xlu0 %v1963, 64
      %v1992 = vpop.permute.xlu0 %1991
      %1993 = vrot.lane.b32.xlu0 %v1967, 64
      %v1994 = vpop.permute.xlu0 %1993
      %1995 = vrot.lane.b32.xlu0 %v1966, 64
      %v1996 = vpop.permute.xlu0 %1995
      %1997 = vrot.lane.b32.xlu0 %v1970, 64
      %v1998 = vpop.permute.xlu0 %1997
      %1999 = vrot.lane.b32.xlu0 %v1969, 64
      %v2000 = vpop.permute.xlu0 %1999
      %2001 = vrot.lane.b32.xlu0 %v1973, 64
      %v2002 = vpop.permute.xlu0 %2001
      %2003 = vrot.lane.b32.xlu0 %v1972, 64
      %v2004 = vpop.permute.xlu0 %2003
      %2005 = vrot.lane.b32.xlu0 %v1976, 64
      %v2006 = vpop.permute.xlu0 %2005
      %2007 = vrot.lane.b32.xlu0 %v1975, 64
      %v2008 = vpop.permute.xlu0 %2007
      %v2025 = vadd.f32 %v1937, %v1978
      %v2026 = vadd.f32 %v1938, %v1980
      %v2027 = vadd.f32 %v1939, %v1982
      %v2028 = vadd.f32 %v1940, %v1984
      %v2029 = vadd.f32 %v1941, %v1986
      %v2030 = vadd.f32 %v1942, %v1988
      %v2031 = vadd.f32 %v1943, %v1990
      %v2032 = vadd.f32 %v1944, %v1992
      %v2033 = vadd.f32 %v1945, %v1994
      %v2034 = vadd.f32 %v1946, %v1996
      %v2035 = vadd.f32 %v1947, %v1998
      %v2036 = vadd.f32 %v1948, %v2000
      %v2037 = vadd.f32 %v1949, %v2002
      %v2038 = vadd.f32 %v1950, %v2004
      %v2039 = vadd.f32 %v1951, %v2006
      %v2040 = vadd.f32 %v1952, %v2008
      %v2041 = vrot.slane %v1750, 3
      %v2042 = vrot.slane %v1764, 3
      %v2043 = vrot.slane %v1776, 3
      %v2044 = vrot.slane %v1790, 3
      %v2045 = vrot.slane %v1802, 3
      %v2046 = vrot.slane %v1816, 3
      %v2047 = vrot.slane %v1828, 3
      %v2048 = vrot.slane %v1842, 3
      %2049 = vrot.lane.b32.xlu0 %v2041, 32
      %v2050 = vpop.permute.xlu0 %2049
      %2051 = vrot.lane.b32.xlu0 %v2042, 32
      %v2052 = vpop.permute.xlu0 %2051
      %2053 = vrot.lane.b32.xlu0 %v2043, 32
      %v2054 = vpop.permute.xlu0 %2053
      %2055 = vrot.lane.b32.xlu0 %v2044, 32
      %v2056 = vpop.permute.xlu0 %2055
      %2057 = vrot.lane.b32.xlu0 %v2045, 32
      %v2058 = vpop.permute.xlu0 %2057
      %2059 = vrot.lane.b32.xlu0 %v2046, 32
      %v2060 = vpop.permute.xlu0 %2059
      %2061 = vrot.lane.b32.xlu0 %v2047, 32
      %v2062 = vpop.permute.xlu0 %2061
      %2063 = vrot.lane.b32.xlu0 %v2048, 32
      %v2064 = vpop.permute.xlu0 %2063
      %v2073 = vadd.f32 %v2025, %v2050
      %v2074 = vadd.f32 %v2026, %v2050
      %v2075 = vadd.f32 %v2027, %v2052
      %v2076 = vadd.f32 %v2028, %v2052
      %v2077 = vadd.f32 %v2029, %v2054
      %v2078 = vadd.f32 %v2030, %v2054
      %v2079 = vadd.f32 %v2031, %v2056
      %v2080 = vadd.f32 %v2032, %v2056
      %v2081 = vadd.f32 %v2033, %v2058
      %v2082 = vadd.f32 %v2034, %v2058
      %v2083 = vadd.f32 %v2035, %v2060
      %v2084 = vadd.f32 %v2036, %v2060
      %v2085 = vadd.f32 %v2037, %v2062
      %v2086 = vadd.f32 %v2038, %v2062
      %v2087 = vadd.f32 %v2039, %v2064
      %v2088 = vadd.f32 %v2040, %v2064
      %v2105 = vrot.slane %v1752, 4
      %v2106 = vrot.slane %v1757, 4
      %v2107 = vsel %vm1377, %v2105, %v2106
      %v2108 = vrot.slane %v1766, 4
      %v2109 = vrot.slane %v1769, 4
      %v2110 = vsel %vm1377, %v2108, %v2109
      %v2111 = vrot.slane %v1778, 4
      %v2112 = vrot.slane %v1783, 4
      %v2113 = vsel %vm1377, %v2111, %v2112
      %v2114 = vrot.slane %v1792, 4
      %v2115 = vrot.slane %v1795, 4
      %v2116 = vsel %vm1377, %v2114, %v2115
      %v2117 = vrot.slane %v1804, 4
      %v2118 = vrot.slane %v1809, 4
      %v2119 = vsel %vm1377, %v2117, %v2118
      %v2120 = vrot.slane %v1818, 4
      %v2121 = vrot.slane %v1821, 4
      %v2122 = vsel %vm1377, %v2120, %v2121
      %v2123 = vrot.slane %v1830, 4
      %v2124 = vrot.slane %v1835, 4
      %v2125 = vsel %vm1377, %v2123, %v2124
      %v2126 = vrot.slane %v1844, 4
      %v2127 = vrot.slane %v1847, 4
      %v2128 = vsel %vm1377, %v2126, %v2127
      %v2145 = vadd.f32 %v2073, %v2105
      %v2146 = vadd.f32 %v2074, %v2107
      %v2147 = vadd.f32 %v2075, %v2108
      %v2148 = vadd.f32 %v2076, %v2110
      %v2149 = vadd.f32 %v2077, %v2111
      %v2150 = vadd.f32 %v2078, %v2113
      %v2151 = vadd.f32 %v2079, %v2114
      %v2152 = vadd.f32 %v2080, %v2116
      %v2153 = vadd.f32 %v2081, %v2117
      %v2154 = vadd.f32 %v2082, %v2119
      %v2155 = vadd.f32 %v2083, %v2120
      %v2156 = vadd.f32 %v2084, %v2122
      %v2157 = vadd.f32 %v2085, %v2123
      %v2158 = vadd.f32 %v2086, %v2125
      %v2159 = vadd.f32 %v2087, %v2126
      %v2160 = vadd.f32 %v2088, %v2128
      %v2161 = vrot.slane %v1752, 5
      %v2162 = vrot.slane %v1757, 5
      %v2163 = vsel %vm1434, %v2161, %v2162
      %v2164 = vrot.slane %v1766, 5
      %v2165 = vrot.slane %v1769, 5
      %v2166 = vsel %vm1434, %v2164, %v2165
      %v2167 = vrot.slane %v1778, 5
      %v2168 = vrot.slane %v1783, 5
      %v2169 = vsel %vm1434, %v2167, %v2168
      %v2170 = vrot.slane %v1792, 5
      %v2171 = vrot.slane %v1795, 5
      %v2172 = vsel %vm1434, %v2170, %v2171
      %v2173 = vrot.slane %v1804, 5
      %v2174 = vrot.slane %v1809, 5
      %v2175 = vsel %vm1434, %v2173, %v2174
      %v2176 = vrot.slane %v1818, 5
      %v2177 = vrot.slane %v1821, 5
      %v2178 = vsel %vm1434, %v2176, %v2177
      %v2179 = vrot.slane %v1830, 5
      %v2180 = vrot.slane %v1835, 5
      %v2181 = vsel %vm1434, %v2179, %v2180
      %v2182 = vrot.slane %v1844, 5
      %v2183 = vrot.slane %v1847, 5
      %v2184 = vsel %vm1434, %v2182, %v2183
      %2185 = vrot.lane.b32.xlu0 %v2161, 96
      %v2186 = vpop.permute.xlu0 %2185
      %2187 = vrot.lane.b32.xlu0 %v2163, 96
      %v2188 = vpop.permute.xlu0 %2187
      %2189 = vrot.lane.b32.xlu0 %v2164, 96
      %v2190 = vpop.permute.xlu0 %2189
      %2191 = vrot.lane.b32.xlu0 %v2166, 96
      %v2192 = vpop.permute.xlu0 %2191
      %2193 = vrot.lane.b32.xlu0 %v2167, 96
      %v2194 = vpop.permute.xlu0 %2193
      %2195 = vrot.lane.b32.xlu0 %v2169, 96
      %v2196 = vpop.permute.xlu0 %2195
      %2197 = vrot.lane.b32.xlu0 %v2170, 96
      %v2198 = vpop.permute.xlu0 %2197
      %2199 = vrot.lane.b32.xlu0 %v2172, 96
      %v2200 = vpop.permute.xlu0 %2199
      %2201 = vrot.lane.b32.xlu0 %v2173, 96
      %v2202 = vpop.permute.xlu0 %2201
      %2203 = vrot.lane.b32.xlu0 %v2175, 96
      %v2204 = vpop.permute.xlu0 %2203
      %2205 = vrot.lane.b32.xlu0 %v2176, 96
      %v2206 = vpop.permute.xlu0 %2205
      %2207 = vrot.lane.b32.xlu0 %v2178, 96
      %v2208 = vpop.permute.xlu0 %2207
      %2209 = vrot.lane.b32.xlu0 %v2179, 96
      %v2210 = vpop.permute.xlu0 %2209
      %2211 = vrot.lane.b32.xlu0 %v2181, 96
      %v2212 = vpop.permute.xlu0 %2211
      %2213 = vrot.lane.b32.xlu0 %v2182, 96
      %v2214 = vpop.permute.xlu0 %2213
      %2215 = vrot.lane.b32.xlu0 %v2184, 96
      %v2216 = vpop.permute.xlu0 %2215
      %v2233 = vadd.f32 %v2145, %v2186
      %v2234 = vadd.f32 %v2146, %v2188
      %v2235 = vadd.f32 %v2147, %v2190
      %v2236 = vadd.f32 %v2148, %v2192
      %v2237 = vadd.f32 %v2149, %v2194
      %v2238 = vadd.f32 %v2150, %v2196
      %v2239 = vadd.f32 %v2151, %v2198
      %v2240 = vadd.f32 %v2152, %v2200
      %v2241 = vadd.f32 %v2153, %v2202
      %v2242 = vadd.f32 %v2154, %v2204
      %v2243 = vadd.f32 %v2155, %v2206
      %v2244 = vadd.f32 %v2156, %v2208
      %v2245 = vadd.f32 %v2157, %v2210
      %v2246 = vadd.f32 %v2158, %v2212
      %v2247 = vadd.f32 %v2159, %v2214
      %v2248 = vadd.f32 %v2160, %v2216
      %v2249 = vrot.slane %v1752, 6
      %v2250 = vrot.slane %v1757, 6
      %v2251 = vsel %vm1523, %v2249, %v2250
      %v2252 = vrot.slane %v1766, 6
      %v2253 = vrot.slane %v1769, 6
      %v2254 = vsel %vm1523, %v2252, %v2253
      %v2255 = vrot.slane %v1778, 6
      %v2256 = vrot.slane %v1783, 6
      %v2257 = vsel %vm1523, %v2255, %v2256
      %v2258 = vrot.slane %v1792, 6
      %v2259 = vrot.slane %v1795, 6
      %v2260 = vsel %vm1523, %v2258, %v2259
      %v2261 = vrot.slane %v1804, 6
      %v2262 = vrot.slane %v1809, 6
      %v2263 = vsel %vm1523, %v2261, %v2262
      %v2264 = vrot.slane %v1818, 6
      %v2265 = vrot.slane %v1821, 6
      %v2266 = vsel %vm1523, %v2264, %v2265
      %v2267 = vrot.slane %v1830, 6
      %v2268 = vrot.slane %v1835, 6
      %v2269 = vsel %vm1523, %v2267, %v2268
      %v2270 = vrot.slane %v1844, 6
      %v2271 = vrot.slane %v1847, 6
      %v2272 = vsel %vm1523, %v2270, %v2271
      %2273 = vrot.lane.b32.xlu0 %v2249, 64
      %v2274 = vpop.permute.xlu0 %2273
      %2275 = vrot.lane.b32.xlu0 %v2251, 64
      %v2276 = vpop.permute.xlu0 %2275
      %2277 = vrot.lane.b32.xlu0 %v2252, 64
      %v2278 = vpop.permute.xlu0 %2277
      %2279 = vrot.lane.b32.xlu0 %v2254, 64
      %v2280 = vpop.permute.xlu0 %2279
      %2281 = vrot.lane.b32.xlu0 %v2255, 64
      %v2282 = vpop.permute.xlu0 %2281
      %2283 = vrot.lane.b32.xlu0 %v2257, 64
      %v2284 = vpop.permute.xlu0 %2283
      %2285 = vrot.lane.b32.xlu0 %v2258, 64
      %v2286 = vpop.permute.xlu0 %2285
      %2287 = vrot.lane.b32.xlu0 %v2260, 64
      %v2288 = vpop.permute.xlu0 %2287
      %2289 = vrot.lane.b32.xlu0 %v2261, 64
      %v2290 = vpop.permute.xlu0 %2289
      %2291 = vrot.lane.b32.xlu0 %v2263, 64
      %v2292 = vpop.permute.xlu0 %2291
      %2293 = vrot.lane.b32.xlu0 %v2264, 64
      %v2294 = vpop.permute.xlu0 %2293
      %2295 = vrot.lane.b32.xlu0 %v2266, 64
      %v2296 = vpop.permute.xlu0 %2295
      %2297 = vrot.lane.b32.xlu0 %v2267, 64
      %v2298 = vpop.permute.xlu0 %2297
      %2299 = vrot.lane.b32.xlu0 %v2269, 64
      %v2300 = vpop.permute.xlu0 %2299
      %2301 = vrot.lane.b32.xlu0 %v2270, 64
      %v2302 = vpop.permute.xlu0 %2301
      %2303 = vrot.lane.b32.xlu0 %v2272, 64
      %v2304 = vpop.permute.xlu0 %2303
      %v2321 = vadd.f32 %v2233, %v2274
      %v2322 = vadd.f32 %v2234, %v2276
      %v2323 = vadd.f32 %v2235, %v2278
      %v2324 = vadd.f32 %v2236, %v2280
      %v2325 = vadd.f32 %v2237, %v2282
      %v2326 = vadd.f32 %v2238, %v2284
      %v2327 = vadd.f32 %v2239, %v2286
      %v2328 = vadd.f32 %v2240, %v2288
      %v2329 = vadd.f32 %v2241, %v2290
      %v2330 = vadd.f32 %v2242, %v2292
      %v2331 = vadd.f32 %v2243, %v2294
      %v2332 = vadd.f32 %v2244, %v2296
      %v2333 = vadd.f32 %v2245, %v2298
      %v2334 = vadd.f32 %v2246, %v2300
      %v2335 = vadd.f32 %v2247, %v2302
      %v2336 = vadd.f32 %v2248, %v2304
      %v2337 = vadd.f32 %v1596, %v2321
      %v2338 = vadd.f32 %v1597, %v2322
      %v2339 = vadd.f32 %v1598, %v2323
      %v2340 = vadd.f32 %v1599, %v2324
      %v2341 = vadd.f32 %v1600, %v2325
      %v2342 = vadd.f32 %v1601, %v2326
      %v2343 = vadd.f32 %v1602, %v2327
      %v2344 = vadd.f32 %v1603, %v2328
      %v2345 = vadd.f32 %v1604, %v2329
      %v2346 = vadd.f32 %v1605, %v2330
      %v2347 = vadd.f32 %v1606, %v2331
      %v2348 = vadd.f32 %v1607, %v2332
      %v2349 = vadd.f32 %v1608, %v2333
      %v2350 = vadd.f32 %v1609, %v2334
      %v2351 = vadd.f32 %v1610, %v2335
      %v2352 = vadd.f32 %v1611, %v2336
      %s2353 = sadd.s32 0, 2
      %s2354 = smul.u32 %s2353, 24
      %s2355 = scalar_lea.vmem [#allocation4], %s2354
      %v2356 = vld [vmem:[%s2355] sm:$0xff]
      %v2357 = vld [vmem:[%s2355 + $0x8] sm:$0xff]
      %v2358 = vld [vmem:[%s2355 + $0x10] sm:$0xff]
      %v2359 = vld [vmem:[%s2355 + $0x18] sm:$0xff]
      %v2360 = vld [vmem:[%s2355 + $0x20] sm:$0xff]
      %v2361 = vld [vmem:[%s2355 + $0x28] sm:$0xff]
      %v2362 = vld [vmem:[%s2355 + $0x30] sm:$0xff]
      %v2363 = vld [vmem:[%s2355 + $0x38] sm:$0xff]
      %v2364 = vld [vmem:[%s2355 + $0x40] sm:$0xff]
      %v2365 = vld [vmem:[%s2355 + $0x48] sm:$0xff]
      %v2366 = vld [vmem:[%s2355 + $0x50] sm:$0xff]
      %v2367 = vld [vmem:[%s2355 + $0x58] sm:$0xff]
      %v2368 = vld [vmem:[%s2355 + $0x60] sm:$0xff]
      %v2369 = vld [vmem:[%s2355 + $0x68] sm:$0xff]
      %v2370 = vld [vmem:[%s2355 + $0x70] sm:$0xff]
      %v2371 = vld [vmem:[%s2355 + $0x78] sm:$0xff]
      %v2372 = vld [vmem:[%s2355 + $0x80] sm:$0xff]
      %v2373 = vld [vmem:[%s2355 + $0x88] sm:$0xff]
      %v2374 = vld [vmem:[%s2355 + $0x90] sm:$0xff]
      %v2375 = vld [vmem:[%s2355 + $0x98] sm:$0xff]
      %v2376 = vld [vmem:[%s2355 + $0xa0] sm:$0xff]
      %v2377 = vld [vmem:[%s2355 + $0xa8] sm:$0xff]
      %v2378 = vld [vmem:[%s2355 + $0xb0] sm:$0xff]
      %v2379 = vld [vmem:[%s2355 + $0xb8] sm:$0xff]
      %v2380 = vpack.c.bf16 %v2357, %v2356
      %v2381 = vpack.c.bf16 %v2359, %v2358
      %v2382 = vpack.c.bf16 %v2361, %v2360
      %v2383 = vpack.c.bf16 %v2363, %v2362
      %v2384 = vpack.c.bf16 %v2365, %v2364
      %v2385 = vpack.c.bf16 %v2367, %v2366
      %v2386 = vpack.c.bf16 %v2369, %v2368
      %v2387 = vpack.c.bf16 %v2371, %v2370
      %v2388 = vpack.c.bf16 %v2373, %v2372
      %v2389 = vpack.c.bf16 %v2375, %v2374
      %v2390 = vpack.c.bf16 %v2377, %v2376
      %v2391 = vpack.c.bf16 %v2379, %v2378
      %s2392 = scalar_lea.vmem %s392, 64
      %v2393 = vld [vmem:[%s2392] sm:$0xff]
      %v2394 = vld [vmem:[%s2392 + $0x8] sm:$0xff]
      %v2395 = vld [vmem:[%s2392 + $0x10] sm:$0xff]
      %v2396 = vld [vmem:[%s2392 + $0x18] sm:$0xff]
      %v2401 = vunpack.c.l.b16 %v2393
      %v2402 = vunpack.c.h.b16 %v2393
      %v2403 = vunpack.c.l.b16 %v2394
      %v2404 = vunpack.c.h.b16 %v2394
      %v2405 = vunpack.c.l.b16 %v2395
      %v2406 = vunpack.c.h.b16 %v2395
      %v2407 = vunpack.c.l.b16 %v2396
      %v2408 = vunpack.c.h.b16 %v2396
      %v2409 = vpack.c.b16 %v2403, %v2401
      %v2410 = vpack.c.b16 %v2404, %v2402
      %v2411 = vpack.c.b16 %v2407, %v2405
      %v2412 = vpack.c.b16 %v2408, %v2406
      %v2418 = vsel %vm716, %v2380, 0
      %v2421 = vsel %vm716, %v2381, 0
      %v2424 = vsel %vm716, %v2382, 0
      %v2427 = vsel %vm716, %v2383, 0
      %v2430 = vsel %vm716, %v2384, 0
      %v2433 = vsel %vm716, %v2385, 0
      %v2436 = vsel %vm716, %v2386, 0
      %v2439 = vsel %vm716, %v2387, 0
      %v2442 = vsel %vm716, %v2388, 0
      %v2445 = vsel %vm716, %v2389, 0
      %v2448 = vsel %vm716, %v2390, 0
      %v2451 = vsel %vm716, %v2391, 0
      %2453 = vmatprep.subr.bf16.mxu0 %v2410
      %2454 = vmatpush1.bf16.msra.mxu0 %v2409
      %2455 = vmatprep.subr.bf16.mxu0 %v2412
      %2456 = vmatpush1.bf16.msra.mxu0 %v2411
      %2457 = vmatprep.subr.bf16.mxu0 0
      %2458 = vmatpush1.bf16.msra.mxu0 0
      %2459 = vmatprep.subr.bf16.mxu0 0
      %2460 = vmatpush1.bf16.msra.mxu0 0
      %2461 = vmatprep.subr.bf16.mxu0 0
      %2462 = vmatpush1.bf16.msra.mxu0 0
      %2463 = vmatprep.subr.bf16.mxu0 0
      %2464 = vmatpush1.bf16.msra.mxu0 0
      %2465 = vmatprep.subr.bf16.mxu0 0
      %2466 = vmatpush1.bf16.msra.mxu0 0
      %2467 = vmatprep.subr.bf16.mxu0 0
      %2468 = vmatpush1.bf16.msra.mxu0 0
      %2469 = vmatprep.subr.bf16.mxu0 0
      %2470 = vmatpush1.bf16.msra.mxu0 0
      %2471 = vmatprep.subr.bf16.mxu0 0
      %2472 = vmatpush1.bf16.msra.mxu0 0
      %2473 = vmatprep.subr.bf16.mxu0 0
      %2474 = vmatpush1.bf16.msra.mxu0 0
      %2475 = vmatprep.subr.bf16.mxu0 0
      %2476 = vmatpush1.bf16.msra.mxu0 0
      %2477 = vmatprep.subr.bf16.mxu0 0
      %2478 = vmatpush1.bf16.msra.mxu0 0
      %2479 = vmatprep.subr.bf16.mxu0 0
      %2480 = vmatpush1.bf16.msra.mxu0 0
      %2481 = vmatprep.subr.bf16.mxu0 0
      %2482 = vmatpush1.bf16.msra.mxu0 0
      %2483 = vmatprep.subr.bf16.mxu0 0
      %2484 = vmatpush1.bf16.msra.mxu0 0
      %2485 = vmatprep.mubr.bf16.mxu0 0
      %2486 = vmatmul.mubr.bf16.gmra.mrb[0].mxu0 %v2418
      %v2487 = vpop.f32.mrb[0].mxu0
      %v2488 = vadd.f32 0.0, %v2487
      %v2489 = vpop.f32.mrb[0].mxu0
      %v2490 = vpop.f32.mrb[0].mxu0
      %v2491 = vadd.f32 0.0, %v2490
      %v2492 = vpop.f32.mrb[0].mxu0
      %v2493 = vadd.f32 0.0, %v2492
      %2494 = vmatprep.mubr.bf16.mxu0 0
      %2495 = vmatmul.mubr.bf16.gmra.mrb[0].mxu0 %v2421
      %v2496 = vpop.f32.mrb[0].mxu0
      %v2497 = vpop.f32.mrb[0].mxu0
      %v2498 = vadd.f32 0.0, %v2497
      %v2499 = vpop.f32.mrb[0].mxu0
      %v2500 = vadd.f32 0.0, %v2499
      %v2501 = vpop.f32.mrb[0].mxu0
      %2502 = vmatprep.mubr.bf16.mxu0 0
      %2503 = vmatmul.mubr.bf16.gmra.mrb[0].mxu0 %v2424
      %v2504 = vpop.f32.mrb[0].mxu0
      %v2505 = vadd.f32 0.0, %v2504
      %v2506 = vpop.f32.mrb[0].mxu0
      %v2507 = vadd.f32 0.0, %v2506
      %v2508 = vpop.f32.mrb[0].mxu0
      %v2509 = vpop.f32.mrb[0].mxu0
      %v2510 = vadd.f32 0.0, %v2509
      %2511 = vmatprep.mubr.bf16.mxu0 0
      %2512 = vmatmul.mubr.bf16.gmra.mrb[0].mxu0 %v2427
      %v2513 = vpop.f32.mrb[0].mxu0
      %v2514 = vadd.f32 0.0, %v2513
      %v2515 = vpop.f32.mrb[0].mxu0
      %v2516 = vpop.f32.mrb[0].mxu0
      %v2517 = vadd.f32 0.0, %v2516
      %v2518 = vpop.f32.mrb[0].mxu0
      %v2519 = vadd.f32 0.0, %v2518
      %2520 = vmatprep.mubr.bf16.mxu0 0
      %2521 = vmatmul.mubr.bf16.gmra.mrb[0].mxu0 %v2430
      %v2522 = vpop.f32.mrb[0].mxu0
      %v2523 = vpop.f32.mrb[0].mxu0
      %v2524 = vadd.f32 0.0, %v2523
      %v2525 = vpop.f32.mrb[0].mxu0
      %v2526 = vadd.f32 0.0, %v2525
      %v2527 = vpop.f32.mrb[0].mxu0
      %2528 = vmatprep.mubr.bf16.mxu0 0
      %2529 = vmatmul.mubr.bf16.gmra.mrb[0].mxu0 %v2433
      %v2530 = vpop.f32.mrb[0].mxu0
      %v2531 = vadd.f32 0.0, %v2530
      %v2532 = vpop.f32.mrb[0].mxu0
      %v2533 = vadd.f32 0.0, %v2532
      %v2534 = vpop.f32.mrb[0].mxu0
      %v2535 = vpop.f32.mrb[0].mxu0
      %v2536 = vadd.f32 0.0, %v2535
      %2537 = vmatprep.mubr.bf16.mxu0 0
      %2538 = vmatmul.mubr.bf16.gmra.mrb[0].mxu0 %v2436
      %v2539 = vpop.f32.mrb[0].mxu0
      %v2540 = vadd.f32 0.0, %v2539
      %v2541 = vpop.f32.mrb[0].mxu0
      %v2542 = vpop.f32.mrb[0].mxu0
      %v2543 = vadd.f32 0.0, %v2542
      %v2544 = vpop.f32.mrb[0].mxu0
      %v2545 = vadd.f32 0.0, %v2544
      %2546 = vmatprep.mubr.bf16.mxu0 0
      %2547 = vmatmul.mubr.bf16.gmra.mrb[0].mxu0 %v2439
      %v2548 = vpop.f32.mrb[0].mxu0
      %v2549 = vpop.f32.mrb[0].mxu0
      %v2550 = vadd.f32 0.0, %v2549
      %v2551 = vpop.f32.mrb[0].mxu0
      %v2552 = vadd.f32 0.0, %v2551
      %v2553 = vpop.f32.mrb[0].mxu0
      %2554 = vmatprep.mubr.bf16.mxu0 0
      %2555 = vmatmul.mubr.bf16.gmra.mrb[0].mxu0 %v2442
      %v2556 = vpop.f32.mrb[0].mxu0
      %v2557 = vadd.f32 0.0, %v2556
      %v2558 = vpop.f32.mrb[0].mxu0
      %v2559 = vadd.f32 0.0, %v2558
      %v2560 = vpop.f32.mrb[0].mxu0
      %v2561 = vpop.f32.mrb[0].mxu0
      %v2562 = vadd.f32 0.0, %v2561
      %2563 = vmatprep.mubr.bf16.mxu0 0
      %2564 = vmatmul.mubr.bf16.gmra.mrb[0].mxu0 %v2445
      %v2565 = vpop.f32.mrb[0].mxu0
      %v2566 = vadd.f32 0.0, %v2565
      %v2567 = vpop.f32.mrb[0].mxu0
      %v2568 = vpop.f32.mrb[0].mxu0
      %v2569 = vadd.f32 0.0, %v2568
      %v2570 = vpop.f32.mrb[0].mxu0
      %v2571 = vadd.f32 0.0, %v2570
      %2572 = vmatprep.mubr.bf16.mxu0 0
      %2573 = vmatmul.mubr.bf16.gmra.mrb[0].mxu0 %v2448
      %v2574 = vpop.f32.mrb[0].mxu0
      %v2575 = vpop.f32.mrb[0].mxu0
      %v2576 = vadd.f32 0.0, %v2575
      %v2577 = vpop.f32.mrb[0].mxu0
      %v2578 = vadd.f32 0.0, %v2577
      %v2579 = vpop.f32.mrb[0].mxu0
      %2580 = vmatprep.mubr.bf16.mxu0 0
      %2581 = vmatmul.mubr.bf16.gmra.mrb[0].mxu0 %v2451
      %v2582 = vpop.f32.mrb[0].mxu0
      %v2583 = vadd.f32 0.0, %v2582
      %v2584 = vpop.f32.mrb[0].mxu0
      %v2585 = vadd.f32 0.0, %v2584
      %v2586 = vpop.f32.mrb[0].mxu0
      %v2587 = vpop.f32.mrb[0].mxu0
      %v2588 = vadd.f32 0.0, %v2587
      %2589 = vdwg.mxu0
      %v2606 = vrot.slane %v2488, 1
      %v2607 = vrot.slane %v2491, 1
      %v2608 = vsel %vm1135, %v2606, %v2607
      %v2609 = vrot.slane %v2500, 1
      %v2610 = vrot.slane %v2505, 1
      %v2611 = vsel %vm1135, %v2609, %v2610
      %v2612 = vrot.slane %v2514, 1
      %v2613 = vrot.slane %v2517, 1
      %v2614 = vsel %vm1135, %v2612, %v2613
      %v2615 = vrot.slane %v2526, 1
      %v2616 = vrot.slane %v2531, 1
      %v2617 = vsel %vm1135, %v2615, %v2616
      %v2618 = vrot.slane %v2540, 1
      %v2619 = vrot.slane %v2543, 1
      %v2620 = vsel %vm1135, %v2618, %v2619
      %v2621 = vrot.slane %v2552, 1
      %v2622 = vrot.slane %v2557, 1
      %v2623 = vsel %vm1135, %v2621, %v2622
      %v2624 = vrot.slane %v2566, 1
      %v2625 = vrot.slane %v2569, 1
      %v2626 = vsel %vm1135, %v2624, %v2625
      %v2627 = vrot.slane %v2578, 1
      %v2628 = vrot.slane %v2583, 1
      %v2629 = vsel %vm1135, %v2627, %v2628
      %2630 = vrot.lane.b32.xlu0 %v2608, 96
      %v2631 = vpop.permute.xlu0 %2630
      %2632 = vrot.lane.b32.xlu0 %v2607, 96
      %v2633 = vpop.permute.xlu0 %2632
      %2634 = vrot.lane.b32.xlu0 %v2611, 96
      %v2635 = vpop.permute.xlu0 %2634
      %2636 = vrot.lane.b32.xlu0 %v2610, 96
      %v2637 = vpop.permute.xlu0 %2636
      %2638 = vrot.lane.b32.xlu0 %v2614, 96
      %v2639 = vpop.permute.xlu0 %2638
      %2640 = vrot.lane.b32.xlu0 %v2613, 96
      %v2641 = vpop.permute.xlu0 %2640
      %2642 = vrot.lane.b32.xlu0 %v2617, 96
      %v2643 = vpop.permute.xlu0 %2642
      %2644 = vrot.lane.b32.xlu0 %v2616, 96
      %v2645 = vpop.permute.xlu0 %2644
      %2646 = vrot.lane.b32.xlu0 %v2620, 96
      %v2647 = vpop.permute.xlu0 %2646
      %2648 = vrot.lane.b32.xlu0 %v2619, 96
      %v2649 = vpop.permute.xlu0 %2648
      %2650 = vrot.lane.b32.xlu0 %v2623, 96
      %v2651 = vpop.permute.xlu0 %2650
      %2652 = vrot.lane.b32.xlu0 %v2622, 96
      %v2653 = vpop.permute.xlu0 %2652
      %2654 = vrot.lane.b32.xlu0 %v2626, 96
      %v2655 = vpop.permute.xlu0 %2654
      %2656 = vrot.lane.b32.xlu0 %v2625, 96
      %v2657 = vpop.permute.xlu0 %2656
      %2658 = vrot.lane.b32.xlu0 %v2629, 96
      %v2659 = vpop.permute.xlu0 %2658
      %2660 = vrot.lane.b32.xlu0 %v2628, 96
      %v2661 = vpop.permute.xlu0 %2660
      %v2678 = vadd.f32 %v2488, %v2631
      %v2679 = vadd.f32 %v2491, %v2633
      %v2680 = vadd.f32 %v2500, %v2635
      %v2681 = vadd.f32 %v2505, %v2637
      %v2682 = vadd.f32 %v2514, %v2639
      %v2683 = vadd.f32 %v2517, %v2641
      %v2684 = vadd.f32 %v2526, %v2643
      %v2685 = vadd.f32 %v2531, %v2645
      %v2686 = vadd.f32 %v2540, %v2647
      %v2687 = vadd.f32 %v2543, %v2649
      %v2688 = vadd.f32 %v2552, %v2651
      %v2689 = vadd.f32 %v2557, %v2653
      %v2690 = vadd.f32 %v2566, %v2655
      %v2691 = vadd.f32 %v2569, %v2657
      %v2692 = vadd.f32 %v2578, %v2659
      %v2693 = vadd.f32 %v2583, %v2661
      %v2694 = vrot.slane %v2488, 2
      %v2695 = vrot.slane %v2491, 2
      %v2696 = vsel %vm1224, %v2694, %v2695
      %v2697 = vrot.slane %v2500, 2
      %v2698 = vrot.slane %v2505, 2
      %v2699 = vsel %vm1224, %v2697, %v2698
      %v2700 = vrot.slane %v2514, 2
      %v2701 = vrot.slane %v2517, 2
      %v2702 = vsel %vm1224, %v2700, %v2701
      %v2703 = vrot.slane %v2526, 2
      %v2704 = vrot.slane %v2531, 2
      %v2705 = vsel %vm1224, %v2703, %v2704
      %v2706 = vrot.slane %v2540, 2
      %v2707 = vrot.slane %v2543, 2
      %v2708 = vsel %vm1224, %v2706, %v2707
      %v2709 = vrot.slane %v2552, 2
      %v2710 = vrot.slane %v2557, 2
      %v2711 = vsel %vm1224, %v2709, %v2710
      %v2712 = vrot.slane %v2566, 2
      %v2713 = vrot.slane %v2569, 2
      %v2714 = vsel %vm1224, %v2712, %v2713
      %v2715 = vrot.slane %v2578, 2
      %v2716 = vrot.slane %v2583, 2
      %v2717 = vsel %vm1224, %v2715, %v2716
      %2718 = vrot.lane.b32.xlu0 %v2696, 64
      %v2719 = vpop.permute.xlu0 %2718
      %2720 = vrot.lane.b32.xlu0 %v2695, 64
      %v2721 = vpop.permute.xlu0 %2720
      %2722 = vrot.lane.b32.xlu0 %v2699, 64
      %v2723 = vpop.permute.xlu0 %2722
      %2724 = vrot.lane.b32.xlu0 %v2698, 64
      %v2725 = vpop.permute.xlu0 %2724
      %2726 = vrot.lane.b32.xlu0 %v2702, 64
      %v2727 = vpop.permute.xlu0 %2726
      %2728 = vrot.lane.b32.xlu0 %v2701, 64
      %v2729 = vpop.permute.xlu0 %2728
      %2730 = vrot.lane.b32.xlu0 %v2705, 64
      %v2731 = vpop.permute.xlu0 %2730
      %2732 = vrot.lane.b32.xlu0 %v2704, 64
      %v2733 = vpop.permute.xlu0 %2732
      %2734 = vrot.lane.b32.xlu0 %v2708, 64
      %v2735 = vpop.permute.xlu0 %2734
      %2736 = vrot.lane.b32.xlu0 %v2707, 64
      %v2737 = vpop.permute.xlu0 %2736
      %2738 = vrot.lane.b32.xlu0 %v2711, 64
      %v2739 = vpop.permute.xlu0 %2738
      %2740 = vrot.lane.b32.xlu0 %v2710, 64
      %v2741 = vpop.permute.xlu0 %2740
      %2742 = vrot.lane.b32.xlu0 %v2714, 64
      %v2743 = vpop.permute.xlu0 %2742
      %2744 = vrot.lane.b32.xlu0 %v2713, 64
      %v2745 = vpop.permute.xlu0 %2744
      %2746 = vrot.lane.b32.xlu0 %v2717, 64
      %v2747 = vpop.permute.xlu0 %2746
      %2748 = vrot.lane.b32.xlu0 %v2716, 64
      %v2749 = vpop.permute.xlu0 %2748
      %v2766 = vadd.f32 %v2678, %v2719
      %v2767 = vadd.f32 %v2679, %v2721
      %v2768 = vadd.f32 %v2680, %v2723
      %v2769 = vadd.f32 %v2681, %v2725
      %v2770 = vadd.f32 %v2682, %v2727
      %v2771 = vadd.f32 %v2683, %v2729
      %v2772 = vadd.f32 %v2684, %v2731
      %v2773 = vadd.f32 %v2685, %v2733
      %v2774 = vadd.f32 %v2686, %v2735
      %v2775 = vadd.f32 %v2687, %v2737
      %v2776 = vadd.f32 %v2688, %v2739
      %v2777 = vadd.f32 %v2689, %v2741
      %v2778 = vadd.f32 %v2690, %v2743
      %v2779 = vadd.f32 %v2691, %v2745
      %v2780 = vadd.f32 %v2692, %v2747
      %v2781 = vadd.f32 %v2693, %v2749
      %v2782 = vrot.slane %v2491, 3
      %v2783 = vrot.slane %v2505, 3
      %v2784 = vrot.slane %v2517, 3
      %v2785 = vrot.slane %v2531, 3
      %v2786 = vrot.slane %v2543, 3
      %v2787 = vrot.slane %v2557, 3
      %v2788 = vrot.slane %v2569, 3
      %v2789 = vrot.slane %v2583, 3
      %2790 = vrot.lane.b32.xlu0 %v2782, 32
      %v2791 = vpop.permute.xlu0 %2790
      %2792 = vrot.lane.b32.xlu0 %v2783, 32
      %v2793 = vpop.permute.xlu0 %2792
      %2794 = vrot.lane.b32.xlu0 %v2784, 32
      %v2795 = vpop.permute.xlu0 %2794
      %2796 = vrot.lane.b32.xlu0 %v2785, 32
      %v2797 = vpop.permute.xlu0 %2796
      %2798 = vrot.lane.b32.xlu0 %v2786, 32
      %v2799 = vpop.permute.xlu0 %2798
      %2800 = vrot.lane.b32.xlu0 %v2787, 32
      %v2801 = vpop.permute.xlu0 %2800
      %2802 = vrot.lane.b32.xlu0 %v2788, 32
      %v2803 = vpop.permute.xlu0 %2802
      %2804 = vrot.lane.b32.xlu0 %v2789, 32
      %v2805 = vpop.permute.xlu0 %2804
      %v2814 = vadd.f32 %v2766, %v2791
      %v2815 = vadd.f32 %v2767, %v2791
      %v2816 = vadd.f32 %v2768, %v2793
      %v2817 = vadd.f32 %v2769, %v2793
      %v2818 = vadd.f32 %v2770, %v2795
      %v2819 = vadd.f32 %v2771, %v2795
      %v2820 = vadd.f32 %v2772, %v2797
      %v2821 = vadd.f32 %v2773, %v2797
      %v2822 = vadd.f32 %v2774, %v2799
      %v2823 = vadd.f32 %v2775, %v2799
      %v2824 = vadd.f32 %v2776, %v2801
      %v2825 = vadd.f32 %v2777, %v2801
      %v2826 = vadd.f32 %v2778, %v2803
      %v2827 = vadd.f32 %v2779, %v2803
      %v2828 = vadd.f32 %v2780, %v2805
      %v2829 = vadd.f32 %v2781, %v2805
      %v2846 = vrot.slane %v2493, 4
      %v2847 = vrot.slane %v2498, 4
      %v2848 = vsel %vm1377, %v2846, %v2847
      %v2849 = vrot.slane %v2507, 4
      %v2850 = vrot.slane %v2510, 4
      %v2851 = vsel %vm1377, %v2849, %v2850
      %v2852 = vrot.slane %v2519, 4
      %v2853 = vrot.slane %v2524, 4
      %v2854 = vsel %vm1377, %v2852, %v2853
      %v2855 = vrot.slane %v2533, 4
      %v2856 = vrot.slane %v2536, 4
      %v2857 = vsel %vm1377, %v2855, %v2856
      %v2858 = vrot.slane %v2545, 4
      %v2859 = vrot.slane %v2550, 4
      %v2860 = vsel %vm1377, %v2858, %v2859
      %v2861 = vrot.slane %v2559, 4
      %v2862 = vrot.slane %v2562, 4
      %v2863 = vsel %vm1377, %v2861, %v2862
      %v2864 = vrot.slane %v2571, 4
      %v2865 = vrot.slane %v2576, 4
      %v2866 = vsel %vm1377, %v2864, %v2865
      %v2867 = vrot.slane %v2585, 4
      %v2868 = vrot.slane %v2588, 4
      %v2869 = vsel %vm1377, %v2867, %v2868
      %v2886 = vadd.f32 %v2814, %v2846
      %v2887 = vadd.f32 %v2815, %v2848
      %v2888 = vadd.f32 %v2816, %v2849
      %v2889 = vadd.f32 %v2817, %v2851
      %v2890 = vadd.f32 %v2818, %v2852
      %v2891 = vadd.f32 %v2819, %v2854
      %v2892 = vadd.f32 %v2820, %v2855
      %v2893 = vadd.f32 %v2821, %v2857
      %v2894 = vadd.f32 %v2822, %v2858
      %v2895 = vadd.f32 %v2823, %v2860
      %v2896 = vadd.f32 %v2824, %v2861
      %v2897 = vadd.f32 %v2825, %v2863
      %v2898 = vadd.f32 %v2826, %v2864
      %v2899 = vadd.f32 %v2827, %v2866
      %v2900 = vadd.f32 %v2828, %v2867
      %v2901 = vadd.f32 %v2829, %v2869
      %v2902 = vrot.slane %v2493, 5
      %v2903 = vrot.slane %v2498, 5
      %v2904 = vsel %vm1434, %v2902, %v2903
      %v2905 = vrot.slane %v2507, 5
      %v2906 = vrot.slane %v2510, 5
      %v2907 = vsel %vm1434, %v2905, %v2906
      %v2908 = vrot.slane %v2519, 5
      %v2909 = vrot.slane %v2524, 5
      %v2910 = vsel %vm1434, %v2908, %v2909
      %v2911 = vrot.slane %v2533, 5
      %v2912 = vrot.slane %v2536, 5
      %v2913 = vsel %vm1434, %v2911, %v2912
      %v2914 = vrot.slane %v2545, 5
      %v2915 = vrot.slane %v2550, 5
      %v2916 = vsel %vm1434, %v2914, %v2915
      %v2917 = vrot.slane %v2559, 5
      %v2918 = vrot.slane %v2562, 5
      %v2919 = vsel %vm1434, %v2917, %v2918
      %v2920 = vrot.slane %v2571, 5
      %v2921 = vrot.slane %v2576, 5
      %v2922 = vsel %vm1434, %v2920, %v2921
      %v2923 = vrot.slane %v2585, 5
      %v2924 = vrot.slane %v2588, 5
      %v2925 = vsel %vm1434, %v2923, %v2924
      %2926 = vrot.lane.b32.xlu0 %v2902, 96
      %v2927 = vpop.permute.xlu0 %2926
      %2928 = vrot.lane.b32.xlu0 %v2904, 96
      %v2929 = vpop.permute.xlu0 %2928
      %2930 = vrot.lane.b32.xlu0 %v2905, 96
      %v2931 = vpop.permute.xlu0 %2930
      %2932 = vrot.lane.b32.xlu0 %v2907, 96
      %v2933 = vpop.permute.xlu0 %2932
      %2934 = vrot.lane.b32.xlu0 %v2908, 96
      %v2935 = vpop.permute.xlu0 %2934
      %2936 = vrot.lane.b32.xlu0 %v2910, 96
      %v2937 = vpop.permute.xlu0 %2936
      %2938 = vrot.lane.b32.xlu0 %v2911, 96
      %v2939 = vpop.permute.xlu0 %2938
      %2940 = vrot.lane.b32.xlu0 %v2913, 96
      %v2941 = vpop.permute.xlu0 %2940
      %2942 = vrot.lane.b32.xlu0 %v2914, 96
      %v2943 = vpop.permute.xlu0 %2942
      %2944 = vrot.lane.b32.xlu0 %v2916, 96
      %v2945 = vpop.permute.xlu0 %2944
      %2946 = vrot.lane.b32.xlu0 %v2917, 96
      %v2947 = vpop.permute.xlu0 %2946
      %2948 = vrot.lane.b32.xlu0 %v2919, 96
      %v2949 = vpop.permute.xlu0 %2948
      %2950 = vrot.lane.b32.xlu0 %v2920, 96
      %v2951 = vpop.permute.xlu0 %2950
      %2952 = vrot.lane.b32.xlu0 %v2922, 96
      %v2953 = vpop.permute.xlu0 %2952
      %2954 = vrot.lane.b32.xlu0 %v2923, 96
      %v2955 = vpop.permute.xlu0 %2954
      %2956 = vrot.lane.b32.xlu0 %v2925, 96
      %v2957 = vpop.permute.xlu0 %2956
      %v2974 = vadd.f32 %v2886, %v2927
      %v2975 = vadd.f32 %v2887, %v2929
      %v2976 = vadd.f32 %v2888, %v2931
      %v2977 = vadd.f32 %v2889, %v2933
      %v2978 = vadd.f32 %v2890, %v2935
      %v2979 = vadd.f32 %v2891, %v2937
      %v2980 = vadd.f32 %v2892, %v2939
      %v2981 = vadd.f32 %v2893, %v2941
      %v2982 = vadd.f32 %v2894, %v2943
      %v2983 = vadd.f32 %v2895, %v2945
      %v2984 = vadd.f32 %v2896, %v2947
      %v2985 = vadd.f32 %v2897, %v2949
      %v2986 = vadd.f32 %v2898, %v2951
      %v2987 = vadd.f32 %v2899, %v2953
      %v2988 = vadd.f32 %v2900, %v2955
      %v2989 = vadd.f32 %v2901, %v2957
      %v2990 = vrot.slane %v2493, 6
      %v2991 = vrot.slane %v2498, 6
      %v2992 = vsel %vm1523, %v2990, %v2991
      %v2993 = vrot.slane %v2507, 6
      %v2994 = vrot.slane %v2510, 6
      %v2995 = vsel %vm1523, %v2993, %v2994
      %v2996 = vrot.slane %v2519, 6
      %v2997 = vrot.slane %v2524, 6
      %v2998 = vsel %vm1523, %v2996, %v2997
      %v2999 = vrot.slane %v2533, 6
      %v3000 = vrot.slane %v2536, 6
      %v3001 = vsel %vm1523, %v2999, %v3000
      %v3002 = vrot.slane %v2545, 6
      %v3003 = vrot.slane %v2550, 6
      %v3004 = vsel %vm1523, %v3002, %v3003
      %v3005 = vrot.slane %v2559, 6
      %v3006 = vrot.slane %v2562, 6
      %v3007 = vsel %vm1523, %v3005, %v3006
      %v3008 = vrot.slane %v2571, 6
      %v3009 = vrot.slane %v2576, 6
      %v3010 = vsel %vm1523, %v3008, %v3009
      %v3011 = vrot.slane %v2585, 6
      %v3012 = vrot.slane %v2588, 6
      %v3013 = vsel %vm1523, %v3011, %v3012
      %3014 = vrot.lane.b32.xlu0 %v2990, 64
      %v3015 = vpop.permute.xlu0 %3014
      %3016 = vrot.lane.b32.xlu0 %v2992, 64
      %v3017 = vpop.permute.xlu0 %3016
      %3018 = vrot.lane.b32.xlu0 %v2993, 64
      %v3019 = vpop.permute.xlu0 %3018
      %3020 = vrot.lane.b32.xlu0 %v2995, 64
      %v3021 = vpop.permute.xlu0 %3020
      %3022 = vrot.lane.b32.xlu0 %v2996, 64
      %v3023 = vpop.permute.xlu0 %3022
      %3024 = vrot.lane.b32.xlu0 %v2998, 64
      %v3025 = vpop.permute.xlu0 %3024
      %3026 = vrot.lane.b32.xlu0 %v2999, 64
      %v3027 = vpop.permute.xlu0 %3026
      %3028 = vrot.lane.b32.xlu0 %v3001, 64
      %v3029 = vpop.permute.xlu0 %3028
      %3030 = vrot.lane.b32.xlu0 %v3002, 64
      %v3031 = vpop.permute.xlu0 %3030
      %3032 = vrot.lane.b32.xlu0 %v3004, 64
      %v3033 = vpop.permute.xlu0 %3032
      %3034 = vrot.lane.b32.xlu0 %v3005, 64
      %v3035 = vpop.permute.xlu0 %3034
      %3036 = vrot.lane.b32.xlu0 %v3007, 64
      %v3037 = vpop.permute.xlu0 %3036
      %3038 = vrot.lane.b32.xlu0 %v3008, 64
      %v3039 = vpop.permute.xlu0 %3038
      %3040 = vrot.lane.b32.xlu0 %v3010, 64
      %v3041 = vpop.permute.xlu0 %3040
      %3042 = vrot.lane.b32.xlu0 %v3011, 64
      %v3043 = vpop.permute.xlu0 %3042
      %3044 = vrot.lane.b32.xlu0 %v3013, 64
      %v3045 = vpop.permute.xlu0 %3044
      %v3062 = vadd.f32 %v2974, %v3015
      %v3063 = vadd.f32 %v2975, %v3017
      %v3064 = vadd.f32 %v2976, %v3019
      %v3065 = vadd.f32 %v2977, %v3021
      %v3066 = vadd.f32 %v2978, %v3023
      %v3067 = vadd.f32 %v2979, %v3025
      %v3068 = vadd.f32 %v2980, %v3027
      %v3069 = vadd.f32 %v2981, %v3029
      %v3070 = vadd.f32 %v2982, %v3031
      %v3071 = vadd.f32 %v2983, %v3033
      %v3072 = vadd.f32 %v2984, %v3035
      %v3073 = vadd.f32 %v2985, %v3037
      %v3074 = vadd.f32 %v2986, %v3039
      %v3075 = vadd.f32 %v2987, %v3041
      %v3076 = vadd.f32 %v2988, %v3043
      %v3077 = vadd.f32 %v2989, %v3045
      %v3078 = vadd.f32 %v2337, %v3062
      %v3079 = vadd.f32 %v2338, %v3063
      %v3080 = vadd.f32 %v2339, %v3064
      %v3081 = vadd.f32 %v2340, %v3065
      %v3082 = vadd.f32 %v2341, %v3066
      %v3083 = vadd.f32 %v2342, %v3067
      %v3084 = vadd.f32 %v2343, %v3068
      %v3085 = vadd.f32 %v2344, %v3069
      %v3086 = vadd.f32 %v2345, %v3070
      %v3087 = vadd.f32 %v2346, %v3071
      %v3088 = vadd.f32 %v2347, %v3072
      %v3089 = vadd.f32 %v2348, %v3073
      %v3090 = vadd.f32 %v2349, %v3074
      %v3091 = vadd.f32 %v2350, %v3075
      %v3092 = vadd.f32 %v2351, %v3076
      %v3093 = vadd.f32 %v2352, %v3077
      %s3094 = sadd.s32 0, 3
      %s3095 = smul.u32 %s3094, 24
      %s3096 = scalar_lea.vmem [#allocation4], %s3095
      %v3097 = vld [vmem:[%s3096] sm:$0xff]
      %v3098 = vld [vmem:[%s3096 + $0x8] sm:$0xff]
      %v3099 = vld [vmem:[%s3096 + $0x10] sm:$0xff]
      %v3100 = vld [vmem:[%s3096 + $0x18] sm:$0xff]
      %v3101 = vld [vmem:[%s3096 + $0x20] sm:$0xff]
      %v3102 = vld [vmem:[%s3096 + $0x28] sm:$0xff]
      %v3103 = vld [vmem:[%s3096 + $0x30] sm:$0xff]
      %v3104 = vld [vmem:[%s3096 + $0x38] sm:$0xff]
      %v3105 = vld [vmem:[%s3096 + $0x40] sm:$0xff]
      %v3106 = vld [vmem:[%s3096 + $0x48] sm:$0xff]
      %v3107 = vld [vmem:[%s3096 + $0x50] sm:$0xff]
      %v3108 = vld [vmem:[%s3096 + $0x58] sm:$0xff]
      %v3109 = vld [vmem:[%s3096 + $0x60] sm:$0xff]
      %v3110 = vld [vmem:[%s3096 + $0x68] sm:$0xff]
      %v3111 = vld [vmem:[%s3096 + $0x70] sm:$0xff]
      %v3112 = vld [vmem:[%s3096 + $0x78] sm:$0xff]
      %v3113 = vld [vmem:[%s3096 + $0x80] sm:$0xff]
      %v3114 = vld [vmem:[%s3096 + $0x88] sm:$0xff]
      %v3115 = vld [vmem:[%s3096 + $0x90] sm:$0xff]
      %v3116 = vld [vmem:[%s3096 + $0x98] sm:$0xff]
      %v3117 = vld [vmem:[%s3096 + $0xa0] sm:$0xff]
      %v3118 = vld [vmem:[%s3096 + $0xa8] sm:$0xff]
      %v3119 = vld [vmem:[%s3096 + $0xb0] sm:$0xff]
      %v3120 = vld [vmem:[%s3096 + $0xb8] sm:$0xff]
      %v3121 = vpack.c.bf16 %v3098, %v3097
      %v3122 = vpack.c.bf16 %v3100, %v3099
      %v3123 = vpack.c.bf16 %v3102, %v3101
      %v3124 = vpack.c.bf16 %v3104, %v3103
      %v3125 = vpack.c.bf16 %v3106, %v3105
      %v3126 = vpack.c.bf16 %v3108, %v3107
      %v3127 = vpack.c.bf16 %v3110, %v3109
      %v3128 = vpack.c.bf16 %v3112, %v3111
      %v3129 = vpack.c.bf16 %v3114, %v3113
      %v3130 = vpack.c.bf16 %v3116, %v3115
      %v3131 = vpack.c.bf16 %v3118, %v3117
      %v3132 = vpack.c.bf16 %v3120, %v3119
      %s3133 = scalar_lea.vmem %s392, 96
      %v3134 = vld [vmem:[%s3133] sm:$0xff]
      %v3135 = vld [vmem:[%s3133 + $0x8] sm:$0xff]
      %v3136 = vld [vmem:[%s3133 + $0x10] sm:$0xff]
      %v3137 = vld [vmem:[%s3133 + $0x18] sm:$0xff]
      %v3142 = vunpack.c.l.b16 %v3134
      %v3143 = vunpack.c.h.b16 %v3134
      %v3144 = vunpack.c.l.b16 %v3135
      %v3145 = vunpack.c.h.b16 %v3135
      %v3146 = vunpack.c.l.b16 %v3136
      %v3147 = vunpack.c.h.b16 %v3136
      %v3148 = vunpack.c.l.b16 %v3137
      %v3149 = vunpack.c.h.b16 %v3137
      %v3150 = vpack.c.b16 %v3144, %v3142
      %v3151 = vpack.c.b16 %v3145, %v3143
      %v3152 = vpack.c.b16 %v3148, %v3146
      %v3153 = vpack.c.b16 %v3149, %v3147
      %v3159 = vsel %vm716, %v3121, 0
      %v3162 = vsel %vm716, %v3122, 0
      %v3165 = vsel %vm716, %v3123, 0
      %v3168 = vsel %vm716, %v3124, 0
      %v3171 = vsel %vm716, %v3125, 0
      %v3174 = vsel %vm716, %v3126, 0
      %v3177 = vsel %vm716, %v3127, 0
      %v3180 = vsel %vm716, %v3128, 0
      %v3183 = vsel %vm716, %v3129, 0
      %v3186 = vsel %vm716, %v3130, 0
      %v3189 = vsel %vm716, %v3131, 0
      %v3192 = vsel %vm716, %v3132, 0
      %3194 = vmatprep.subr.bf16.mxu0 %v3151
      %3195 = vmatpush1.bf16.msra.mxu0 %v3150
      %3196 = vmatprep.subr.bf16.mxu0 %v3153
      %3197 = vmatpush1.bf16.msra.mxu0 %v3152
      %3198 = vmatprep.subr.bf16.mxu0 0
      %3199 = vmatpush1.bf16.msra.mxu0 0
      %3200 = vmatprep.subr.bf16.mxu0 0
      %3201 = vmatpush1.bf16.msra.mxu0 0
      %3202 = vmatprep.subr.bf16.mxu0 0
      %3203 = vmatpush1.bf16.msra.mxu0 0
      %3204 = vmatprep.subr.bf16.mxu0 0
      %3205 = vmatpush1.bf16.msra.mxu0 0
      %3206 = vmatprep.subr.bf16.mxu0 0
      %3207 = vmatpush1.bf16.msra.mxu0 0
      %3208 = vmatprep.subr.bf16.mxu0 0
      %3209 = vmatpush1.bf16.msra.mxu0 0
      %3210 = vmatprep.subr.bf16.mxu0 0
      %3211 = vmatpush1.bf16.msra.mxu0 0
      %3212 = vmatprep.subr.bf16.mxu0 0
      %3213 = vmatpush1.bf16.msra.mxu0 0
      %3214 = vmatprep.subr.bf16.mxu0 0
      %3215 = vmatpush1.bf16.msra.mxu0 0
      %3216 = vmatprep.subr.bf16.mxu0 0
      %3217 = vmatpush1.bf16.msra.mxu0 0
      %3218 = vmatprep.subr.bf16.mxu0 0
      %3219 = vmatpush1.bf16.msra.mxu0 0
      %3220 = vmatprep.subr.bf16.mxu0 0
      %3221 = vmatpush1.bf16.msra.mxu0 0
      %3222 = vmatprep.subr.bf16.mxu0 0
      %3223 = vmatpush1.bf16.msra.mxu0 0
      %3224 = vmatprep.subr.bf16.mxu0 0
      %3225 = vmatpush1.bf16.msra.mxu0 0
      %3226 = vmatprep.mubr.bf16.mxu0 0
      %3227 = vmatmul.mubr.bf16.gmra.mrb[0].mxu0 %v3159
      %v3228 = vpop.f32.mrb[0].mxu0
      %v3229 = vadd.f32 0.0, %v3228
      %v3230 = vpop.f32.mrb[0].mxu0
      %v3231 = vpop.f32.mrb[0].mxu0
      %v3232 = vadd.f32 0.0, %v3231
      %v3233 = vpop.f32.mrb[0].mxu0
      %v3234 = vadd.f32 0.0, %v3233
      %3235 = vmatprep.mubr.bf16.mxu0 0
      %3236 = vmatmul.mubr.bf16.gmra.mrb[0].mxu0 %v3162
      %v3237 = vpop.f32.mrb[0].mxu0
      %v3238 = vpop.f32.mrb[0].mxu0
      %v3239 = vadd.f32 0.0, %v3238
      %v3240 = vpop.f32.mrb[0].mxu0
      %v3241 = vadd.f32 0.0, %v3240
      %v3242 = vpop.f32.mrb[0].mxu0
      %3243 = vmatprep.mubr.bf16.mxu0 0
      %3244 = vmatmul.mubr.bf16.gmra.mrb[0].mxu0 %v3165
      %v3245 = vpop.f32.mrb[0].mxu0
      %v3246 = vadd.f32 0.0, %v3245
      %v3247 = vpop.f32.mrb[0].mxu0
      %v3248 = vadd.f32 0.0, %v3247
      %v3249 = vpop.f32.mrb[0].mxu0
      %v3250 = vpop.f32.mrb[0].mxu0
      %v3251 = vadd.f32 0.0, %v3250
      %3252 = vmatprep.mubr.bf16.mxu0 0
      %3253 = vmatmul.mubr.bf16.gmra.mrb[0].mxu0 %v3168
      %v3254 = vpop.f32.mrb[0].mxu0
      %v3255 = vadd.f32 0.0, %v3254
      %v3256 = vpop.f32.mrb[0].mxu0
      %v3257 = vpop.f32.mrb[0].mxu0
      %v3258 = vadd.f32 0.0, %v3257
      %v3259 = vpop.f32.mrb[0].mxu0
      %v3260 = vadd.f32 0.0, %v3259
      %3261 = vmatprep.mubr.bf16.mxu0 0
      %3262 = vmatmul.mubr.bf16.gmra.mrb[0].mxu0 %v3171
      %v3263 = vpop.f32.mrb[0].mxu0
      %v3264 = vpop.f32.mrb[0].mxu0
      %v3265 = vadd.f32 0.0, %v3264
      %v3266 = vpop.f32.mrb[0].mxu0
      %v3267 = vadd.f32 0.0, %v3266
      %v3268 = vpop.f32.mrb[0].mxu0
      %3269 = vmatprep.mubr.bf16.mxu0 0
      %3270 = vmatmul.mubr.bf16.gmra.mrb[0].mxu0 %v3174
      %v3271 = vpop.f32.mrb[0].mxu0
      %v3272 = vadd.f32 0.0, %v3271
      %v3273 = vpop.f32.mrb[0].mxu0
      %v3274 = vadd.f32 0.0, %v3273
      %v3275 = vpop.f32.mrb[0].mxu0
      %v3276 = vpop.f32.mrb[0].mxu0
      %v3277 = vadd.f32 0.0, %v3276
      %3278 = vmatprep.mubr.bf16.mxu0 0
      %3279 = vmatmul.mubr.bf16.gmra.mrb[0].mxu0 %v3177
      %v3280 = vpop.f32.mrb[0].mxu0
      %v3281 = vadd.f32 0.0, %v3280
      %v3282 = vpop.f32.mrb[0].mxu0
      %v3283 = vpop.f32.mrb[0].mxu0
      %v3284 = vadd.f32 0.0, %v3283
      %v3285 = vpop.f32.mrb[0].mxu0
      %v3286 = vadd.f32 0.0, %v3285
      %3287 = vmatprep.mubr.bf16.mxu0 0
      %3288 = vmatmul.mubr.bf16.gmra.mrb[0].mxu0 %v3180
      %v3289 = vpop.f32.mrb[0].mxu0
      %v3290 = vpop.f32.mrb[0].mxu0
      %v3291 = vadd.f32 0.0, %v3290
      %v3292 = vpop.f32.mrb[0].mxu0
      %v3293 = vadd.f32 0.0, %v3292
      %v3294 = vpop.f32.mrb[0].mxu0
      %3295 = vmatprep.mubr.bf16.mxu0 0
      %3296 = vmatmul.mubr.bf16.gmra.mrb[0].mxu0 %v3183
      %v3297 = vpop.f32.mrb[0].mxu0
      %v3298 = vadd.f32 0.0, %v3297
      %v3299 = vpop.f32.mrb[0].mxu0
      %v3300 = vadd.f32 0.0, %v3299
      %v3301 = vpop.f32.mrb[0].mxu0
      %v3302 = vpop.f32.mrb[0].mxu0
      %v3303 = vadd.f32 0.0, %v3302
      %3304 = vmatprep.mubr.bf16.mxu0 0
      %3305 = vmatmul.mubr.bf16.gmra.mrb[0].mxu0 %v3186
      %v3306 = vpop.f32.mrb[0].mxu0
      %v3307 = vadd.f32 0.0, %v3306
      %v3308 = vpop.f32.mrb[0].mxu0
      %v3309 = vpop.f32.mrb[0].mxu0
      %v3310 = vadd.f32 0.0, %v3309
      %v3311 = vpop.f32.mrb[0].mxu0
      %v3312 = vadd.f32 0.0, %v3311
      %3313 = vmatprep.mubr.bf16.mxu0 0
      %3314 = vmatmul.mubr.bf16.gmra.mrb[0].mxu0 %v3189
      %v3315 = vpop.f32.mrb[0].mxu0
      %v3316 = vpop.f32.mrb[0].mxu0
      %v3317 = vadd.f32 0.0, %v3316
      %v3318 = vpop.f32.mrb[0].mxu0
      %v3319 = vadd.f32 0.0, %v3318
      %v3320 = vpop.f32.mrb[0].mxu0
      %3321 = vmatprep.mubr.bf16.mxu0 0
      %3322 = vmatmul.mubr.bf16.gmra.mrb[0].mxu0 %v3192
      %v3323 = vpop.f32.mrb[0].mxu0
      %v3324 = vadd.f32 0.0, %v3323
      %v3325 = vpop.f32.mrb[0].mxu0
      %v3326 = vadd.f32 0.0, %v3325
      %v3327 = vpop.f32.mrb[0].mxu0
      %v3328 = vpop.f32.mrb[0].mxu0
      %v3329 = vadd.f32 0.0, %v3328
      %3330 = vdwg.mxu0
      %v3347 = vrot.slane %v3229, 1
      %v3348 = vrot.slane %v3232, 1
      %v3349 = vsel %vm1135, %v3347, %v3348
      %v3350 = vrot.slane %v3241, 1
      %v3351 = vrot.slane %v3246, 1
      %v3352 = vsel %vm1135, %v3350, %v3351
      %v3353 = vrot.slane %v3255, 1
      %v3354 = vrot.slane %v3258, 1
      %v3355 = vsel %vm1135, %v3353, %v3354
      %v3356 = vrot.slane %v3267, 1
      %v3357 = vrot.slane %v3272, 1
      %v3358 = vsel %vm1135, %v3356, %v3357
      %v3359 = vrot.slane %v3281, 1
      %v3360 = vrot.slane %v3284, 1
      %v3361 = vsel %vm1135, %v3359, %v3360
      %v3362 = vrot.slane %v3293, 1
      %v3363 = vrot.slane %v3298, 1
      %v3364 = vsel %vm1135, %v3362, %v3363
      %v3365 = vrot.slane %v3307, 1
      %v3366 = vrot.slane %v3310, 1
      %v3367 = vsel %vm1135, %v3365, %v3366
      %v3368 = vrot.slane %v3319, 1
      %v3369 = vrot.slane %v3324, 1
      %v3370 = vsel %vm1135, %v3368, %v3369
      %3371 = vrot.lane.b32.xlu0 %v3349, 96
      %v3372 = vpop.permute.xlu0 %3371
      %3373 = vrot.lane.b32.xlu0 %v3348, 96
      %v3374 = vpop.permute.xlu0 %3373
      %3375 = vrot.lane.b32.xlu0 %v3352, 96
      %v3376 = vpop.permute.xlu0 %3375
      %3377 = vrot.lane.b32.xlu0 %v3351, 96
      %v3378 = vpop.permute.xlu0 %3377
      %3379 = vrot.lane.b32.xlu0 %v3355, 96
      %v3380 = vpop.permute.xlu0 %3379
      %3381 = vrot.lane.b32.xlu0 %v3354, 96
      %v3382 = vpop.permute.xlu0 %3381
      %3383 = vrot.lane.b32.xlu0 %v3358, 96
      %v3384 = vpop.permute.xlu0 %3383
      %3385 = vrot.lane.b32.xlu0 %v3357, 96
      %v3386 = vpop.permute.xlu0 %3385
      %3387 = vrot.lane.b32.xlu0 %v3361, 96
      %v3388 = vpop.permute.xlu0 %3387
      %3389 = vrot.lane.b32.xlu0 %v3360, 96
      %v3390 = vpop.permute.xlu0 %3389
      %3391 = vrot.lane.b32.xlu0 %v3364, 96
      %v3392 = vpop.permute.xlu0 %3391
      %3393 = vrot.lane.b32.xlu0 %v3363, 96
      %v3394 = vpop.permute.xlu0 %3393
      %3395 = vrot.lane.b32.xlu0 %v3367, 96
      %v3396 = vpop.permute.xlu0 %3395
      %3397 = vrot.lane.b32.xlu0 %v3366, 96
      %v3398 = vpop.permute.xlu0 %3397
      %3399 = vrot.lane.b32.xlu0 %v3370, 96
      %v3400 = vpop.permute.xlu0 %3399
      %3401 = vrot.lane.b32.xlu0 %v3369, 96
      %v3402 = vpop.permute.xlu0 %3401
      %v3419 = vadd.f32 %v3229, %v3372
      %v3420 = vadd.f32 %v3232, %v3374
      %v3421 = vadd.f32 %v3241, %v3376
      %v3422 = vadd.f32 %v3246, %v3378
      %v3423 = vadd.f32 %v3255, %v3380
      %v3424 = vadd.f32 %v3258, %v3382
      %v3425 = vadd.f32 %v3267, %v3384
      %v3426 = vadd.f32 %v3272, %v3386
      %v3427 = vadd.f32 %v3281, %v3388
      %v3428 = vadd.f32 %v3284, %v3390
      %v3429 = vadd.f32 %v3293, %v3392
      %v3430 = vadd.f32 %v3298, %v3394
      %v3431 = vadd.f32 %v3307, %v3396
      %v3432 = vadd.f32 %v3310, %v3398
      %v3433 = vadd.f32 %v3319, %v3400
      %v3434 = vadd.f32 %v3324, %v3402
      %v3435 = vrot.slane %v3229, 2
      %v3436 = vrot.slane %v3232, 2
      %v3437 = vsel %vm1224, %v3435, %v3436
      %v3438 = vrot.slane %v3241, 2
      %v3439 = vrot.slane %v3246, 2
      %v3440 = vsel %vm1224, %v3438, %v3439
      %v3441 = vrot.slane %v3255, 2
      %v3442 = vrot.slane %v3258, 2
      %v3443 = vsel %vm1224, %v3441, %v3442
      %v3444 = vrot.slane %v3267, 2
      %v3445 = vrot.slane %v3272, 2
      %v3446 = vsel %vm1224, %v3444, %v3445
      %v3447 = vrot.slane %v3281, 2
      %v3448 = vrot.slane %v3284, 2
      %v3449 = vsel %vm1224, %v3447, %v3448
      %v3450 = vrot.slane %v3293, 2
      %v3451 = vrot.slane %v3298, 2
      %v3452 = vsel %vm1224, %v3450, %v3451
      %v3453 = vrot.slane %v3307, 2
      %v3454 = vrot.slane %v3310, 2
      %v3455 = vsel %vm1224, %v3453, %v3454
      %v3456 = vrot.slane %v3319, 2
      %v3457 = vrot.slane %v3324, 2
      %v3458 = vsel %vm1224, %v3456, %v3457
      %3459 = vrot.lane.b32.xlu0 %v3437, 64
      %v3460 = vpop.permute.xlu0 %3459
      %3461 = vrot.lane.b32.xlu0 %v3436, 64
      %v3462 = vpop.permute.xlu0 %3461
      %3463 = vrot.lane.b32.xlu0 %v3440, 64
      %v3464 = vpop.permute.xlu0 %3463
      %3465 = vrot.lane.b32.xlu0 %v3439, 64
      %v3466 = vpop.permute.xlu0 %3465
      %3467 = vrot.lane.b32.xlu0 %v3443, 64
      %v3468 = vpop.permute.xlu0 %3467
      %3469 = vrot.lane.b32.xlu0 %v3442, 64
      %v3470 = vpop.permute.xlu0 %3469
      %3471 = vrot.lane.b32.xlu0 %v3446, 64
      %v3472 = vpop.permute.xlu0 %3471
      %3473 = vrot.lane.b32.xlu0 %v3445, 64
      %v3474 = vpop.permute.xlu0 %3473
      %3475 = vrot.lane.b32.xlu0 %v3449, 64
      %v3476 = vpop.permute.xlu0 %3475
      %3477 = vrot.lane.b32.xlu0 %v3448, 64
      %v3478 = vpop.permute.xlu0 %3477
      %3479 = vrot.lane.b32.xlu0 %v3452, 64
      %v3480 = vpop.permute.xlu0 %3479
      %3481 = vrot.lane.b32.xlu0 %v3451, 64
      %v3482 = vpop.permute.xlu0 %3481
      %3483 = vrot.lane.b32.xlu0 %v3455, 64
      %v3484 = vpop.permute.xlu0 %3483
      %3485 = vrot.lane.b32.xlu0 %v3454, 64
      %v3486 = vpop.permute.xlu0 %3485
      %3487 = vrot.lane.b32.xlu0 %v3458, 64
      %v3488 = vpop.permute.xlu0 %3487
      %3489 = vrot.lane.b32.xlu0 %v3457, 64
      %v3490 = vpop.permute.xlu0 %3489
      %v3507 = vadd.f32 %v3419, %v3460
      %v3508 = vadd.f32 %v3420, %v3462
      %v3509 = vadd.f32 %v3421, %v3464
      %v3510 = vadd.f32 %v3422, %v3466
      %v3511 = vadd.f32 %v3423, %v3468
      %v3512 = vadd.f32 %v3424, %v3470
      %v3513 = vadd.f32 %v3425, %v3472
      %v3514 = vadd.f32 %v3426, %v3474
      %v3515 = vadd.f32 %v3427, %v3476
      %v3516 = vadd.f32 %v3428, %v3478
      %v3517 = vadd.f32 %v3429, %v3480
      %v3518 = vadd.f32 %v3430, %v3482
      %v3519 = vadd.f32 %v3431, %v3484
      %v3520 = vadd.f32 %v3432, %v3486
      %v3521 = vadd.f32 %v3433, %v3488
      %v3522 = vadd.f32 %v3434, %v3490
      %v3523 = vrot.slane %v3232, 3
      %v3524 = vrot.slane %v3246, 3
      %v3525 = vrot.slane %v3258, 3
      %v3526 = vrot.slane %v3272, 3
      %v3527 = vrot.slane %v3284, 3
      %v3528 = vrot.slane %v3298, 3
      %v3529 = vrot.slane %v3310, 3
      %v3530 = vrot.slane %v3324, 3
      %3531 = vrot.lane.b32.xlu0 %v3523, 32
      %v3532 = vpop.permute.xlu0 %3531
      %3533 = vrot.lane.b32.xlu0 %v3524, 32
      %v3534 = vpop.permute.xlu0 %3533
      %3535 = vrot.lane.b32.xlu0 %v3525, 32
      %v3536 = vpop.permute.xlu0 %3535
      %3537 = vrot.lane.b32.xlu0 %v3526, 32
      %v3538 = vpop.permute.xlu0 %3537
      %3539 = vrot.lane.b32.xlu0 %v3527, 32
      %v3540 = vpop.permute.xlu0 %3539
      %3541 = vrot.lane.b32.xlu0 %v3528, 32
      %v3542 = vpop.permute.xlu0 %3541
      %3543 = vrot.lane.b32.xlu0 %v3529, 32
      %v3544 = vpop.permute.xlu0 %3543
      %3545 = vrot.lane.b32.xlu0 %v3530, 32
      %v3546 = vpop.permute.xlu0 %3545
      %v3555 = vadd.f32 %v3507, %v3532
      %v3556 = vadd.f32 %v3508, %v3532
      %v3557 = vadd.f32 %v3509, %v3534
      %v3558 = vadd.f32 %v3510, %v3534
      %v3559 = vadd.f32 %v3511, %v3536
      %v3560 = vadd.f32 %v3512, %v3536
      %v3561 = vadd.f32 %v3513, %v3538
      %v3562 = vadd.f32 %v3514, %v3538
      %v3563 = vadd.f32 %v3515, %v3540
      %v3564 = vadd.f32 %v3516, %v3540
      %v3565 = vadd.f32 %v3517, %v3542
      %v3566 = vadd.f32 %v3518, %v3542
      %v3567 = vadd.f32 %v3519, %v3544
      %v3568 = vadd.f32 %v3520, %v3544
      %v3569 = vadd.f32 %v3521, %v3546
      %v3570 = vadd.f32 %v3522, %v3546
      %v3587 = vrot.slane %v3234, 4
      %v3588 = vrot.slane %v3239, 4
      %v3589 = vsel %vm1377, %v3587, %v3588
      %v3590 = vrot.slane %v3248, 4
      %v3591 = vrot.slane %v3251, 4
      %v3592 = vsel %vm1377, %v3590, %v3591
      %v3593 = vrot.slane %v3260, 4
      %v3594 = vrot.slane %v3265, 4
      %v3595 = vsel %vm1377, %v3593, %v3594
      %v3596 = vrot.slane %v3274, 4
      %v3597 = vrot.slane %v3277, 4
      %v3598 = vsel %vm1377, %v3596, %v3597
      %v3599 = vrot.slane %v3286, 4
      %v3600 = vrot.slane %v3291, 4
      %v3601 = vsel %vm1377, %v3599, %v3600
      %v3602 = vrot.slane %v3300, 4
      %v3603 = vrot.slane %v3303, 4
      %v3604 = vsel %vm1377, %v3602, %v3603
      %v3605 = vrot.slane %v3312, 4
      %v3606 = vrot.slane %v3317, 4
      %v3607 = vsel %vm1377, %v3605, %v3606
      %v3608 = vrot.slane %v3326, 4
      %v3609 = vrot.slane %v3329, 4
      %v3610 = vsel %vm1377, %v3608, %v3609
      %v3627 = vadd.f32 %v3555, %v3587
      %v3628 = vadd.f32 %v3556, %v3589
      %v3629 = vadd.f32 %v3557, %v3590
      %v3630 = vadd.f32 %v3558, %v3592
      %v3631 = vadd.f32 %v3559, %v3593
      %v3632 = vadd.f32 %v3560, %v3595
      %v3633 = vadd.f32 %v3561, %v3596
      %v3634 = vadd.f32 %v3562, %v3598
      %v3635 = vadd.f32 %v3563, %v3599
      %v3636 = vadd.f32 %v3564, %v3601
      %v3637 = vadd.f32 %v3565, %v3602
      %v3638 = vadd.f32 %v3566, %v3604
      %v3639 = vadd.f32 %v3567, %v3605
      %v3640 = vadd.f32 %v3568, %v3607
      %v3641 = vadd.f32 %v3569, %v3608
      %v3642 = vadd.f32 %v3570, %v3610
      %v3643 = vrot.slane %v3234, 5
      %v3644 = vrot.slane %v3239, 5
      %v3645 = vsel %vm1434, %v3643, %v3644
      %v3646 = vrot.slane %v3248, 5
      %v3647 = vrot.slane %v3251, 5
      %v3648 = vsel %vm1434, %v3646, %v3647
      %v3649 = vrot.slane %v3260, 5
      %v3650 = vrot.slane %v3265, 5
      %v3651 = vsel %vm1434, %v3649, %v3650
      %v3652 = vrot.slane %v3274, 5
      %v3653 = vrot.slane %v3277, 5
      %v3654 = vsel %vm1434, %v3652, %v3653
      %v3655 = vrot.slane %v3286, 5
      %v3656 = vrot.slane %v3291, 5
      %v3657 = vsel %vm1434, %v3655, %v3656
      %v3658 = vrot.slane %v3300, 5
      %v3659 = vrot.slane %v3303, 5
      %v3660 = vsel %vm1434, %v3658, %v3659
      %v3661 = vrot.slane %v3312, 5
      %v3662 = vrot.slane %v3317, 5
      %v3663 = vsel %vm1434, %v3661, %v3662
      %v3664 = vrot.slane %v3326, 5
      %v3665 = vrot.slane %v3329, 5
      %v3666 = vsel %vm1434, %v3664, %v3665
      %3667 = vrot.lane.b32.xlu0 %v3643, 96
      %v3668 = vpop.permute.xlu0 %3667
      %3669 = vrot.lane.b32.xlu0 %v3645, 96
      %v3670 = vpop.permute.xlu0 %3669
      %3671 = vrot.lane.b32.xlu0 %v3646, 96
      %v3672 = vpop.permute.xlu0 %3671
      %3673 = vrot.lane.b32.xlu0 %v3648, 96
      %v3674 = vpop.permute.xlu0 %3673
      %3675 = vrot.lane.b32.xlu0 %v3649, 96
      %v3676 = vpop.permute.xlu0 %3675
      %3677 = vrot.lane.b32.xlu0 %v3651, 96
      %v3678 = vpop.permute.xlu0 %3677
      %3679 = vrot.lane.b32.xlu0 %v3652, 96
      %v3680 = vpop.permute.xlu0 %3679
      %3681 = vrot.lane.b32.xlu0 %v3654, 96
      %v3682 = vpop.permute.xlu0 %3681
      %3683 = vrot.lane.b32.xlu0 %v3655, 96
      %v3684 = vpop.permute.xlu0 %3683
      %3685 = vrot.lane.b32.xlu0 %v3657, 96
      %v3686 = vpop.permute.xlu0 %3685
      %3687 = vrot.lane.b32.xlu0 %v3658, 96
      %v3688 = vpop.permute.xlu0 %3687
      %3689 = vrot.lane.b32.xlu0 %v3660, 96
      %v3690 = vpop.permute.xlu0 %3689
      %3691 = vrot.lane.b32.xlu0 %v3661, 96
      %v3692 = vpop.permute.xlu0 %3691
      %3693 = vrot.lane.b32.xlu0 %v3663, 96
      %v3694 = vpop.permute.xlu0 %3693
      %3695 = vrot.lane.b32.xlu0 %v3664, 96
      %v3696 = vpop.permute.xlu0 %3695
      %3697 = vrot.lane.b32.xlu0 %v3666, 96
      %v3698 = vpop.permute.xlu0 %3697
      %v3715 = vadd.f32 %v3627, %v3668
      %v3716 = vadd.f32 %v3628, %v3670
      %v3717 = vadd.f32 %v3629, %v3672
      %v3718 = vadd.f32 %v3630, %v3674
      %v3719 = vadd.f32 %v3631, %v3676
      %v3720 = vadd.f32 %v3632, %v3678
      %v3721 = vadd.f32 %v3633, %v3680
      %v3722 = vadd.f32 %v3634, %v3682
      %v3723 = vadd.f32 %v3635, %v3684
      %v3724 = vadd.f32 %v3636, %v3686
      %v3725 = vadd.f32 %v3637, %v3688
      %v3726 = vadd.f32 %v3638, %v3690
      %v3727 = vadd.f32 %v3639, %v3692
      %v3728 = vadd.f32 %v3640, %v3694
      %v3729 = vadd.f32 %v3641, %v3696
      %v3730 = vadd.f32 %v3642, %v3698
      %v3731 = vrot.slane %v3234, 6
      %v3732 = vrot.slane %v3239, 6
      %v3733 = vsel %vm1523, %v3731, %v3732
      %v3734 = vrot.slane %v3248, 6
      %v3735 = vrot.slane %v3251, 6
      %v3736 = vsel %vm1523, %v3734, %v3735
      %v3737 = vrot.slane %v3260, 6
      %v3738 = vrot.slane %v3265, 6
      %v3739 = vsel %vm1523, %v3737, %v3738
      %v3740 = vrot.slane %v3274, 6
      %v3741 = vrot.slane %v3277, 6
      %v3742 = vsel %vm1523, %v3740, %v3741
      %v3743 = vrot.slane %v3286, 6
      %v3744 = vrot.slane %v3291, 6
      %v3745 = vsel %vm1523, %v3743, %v3744
      %v3746 = vrot.slane %v3300, 6
      %v3747 = vrot.slane %v3303, 6
      %v3748 = vsel %vm1523, %v3746, %v3747
      %v3749 = vrot.slane %v3312, 6
      %v3750 = vrot.slane %v3317, 6
      %v3751 = vsel %vm1523, %v3749, %v3750
      %v3752 = vrot.slane %v3326, 6
      %v3753 = vrot.slane %v3329, 6
      %v3754 = vsel %vm1523, %v3752, %v3753
      %3755 = vrot.lane.b32.xlu0 %v3731, 64
      %v3756 = vpop.permute.xlu0 %3755
      %3757 = vrot.lane.b32.xlu0 %v3733, 64
      %v3758 = vpop.permute.xlu0 %3757
      %3759 = vrot.lane.b32.xlu0 %v3734, 64
      %v3760 = vpop.permute.xlu0 %3759
      %3761 = vrot.lane.b32.xlu0 %v3736, 64
      %v3762 = vpop.permute.xlu0 %3761
      %3763 = vrot.lane.b32.xlu0 %v3737, 64
      %v3764 = vpop.permute.xlu0 %3763
      %3765 = vrot.lane.b32.xlu0 %v3739, 64
      %v3766 = vpop.permute.xlu0 %3765
      %3767 = vrot.lane.b32.xlu0 %v3740, 64
      %v3768 = vpop.permute.xlu0 %3767
      %3769 = vrot.lane.b32.xlu0 %v3742, 64
      %v3770 = vpop.permute.xlu0 %3769
      %3771 = vrot.lane.b32.xlu0 %v3743, 64
      %v3772 = vpop.permute.xlu0 %3771
      %3773 = vrot.lane.b32.xlu0 %v3745, 64
      %v3774 = vpop.permute.xlu0 %3773
      %3775 = vrot.lane.b32.xlu0 %v3746, 64
      %v3776 = vpop.permute.xlu0 %3775
      %3777 = vrot.lane.b32.xlu0 %v3748, 64
      %v3778 = vpop.permute.xlu0 %3777
      %3779 = vrot.lane.b32.xlu0 %v3749, 64
      %v3780 = vpop.permute.xlu0 %3779
      %3781 = vrot.lane.b32.xlu0 %v3751, 64
      %v3782 = vpop.permute.xlu0 %3781
      %3783 = vrot.lane.b32.xlu0 %v3752, 64
      %v3784 = vpop.permute.xlu0 %3783
      %3785 = vrot.lane.b32.xlu0 %v3754, 64
      %v3786 = vpop.permute.xlu0 %3785
      %v3803 = vadd.f32 %v3715, %v3756
      %v3804 = vadd.f32 %v3716, %v3758
      %v3805 = vadd.f32 %v3717, %v3760
      %v3806 = vadd.f32 %v3718, %v3762
      %v3807 = vadd.f32 %v3719, %v3764
      %v3808 = vadd.f32 %v3720, %v3766
      %v3809 = vadd.f32 %v3721, %v3768
      %v3810 = vadd.f32 %v3722, %v3770
      %v3811 = vadd.f32 %v3723, %v3772
      %v3812 = vadd.f32 %v3724, %v3774
      %v3813 = vadd.f32 %v3725, %v3776
      %v3814 = vadd.f32 %v3726, %v3778
      %v3815 = vadd.f32 %v3727, %v3780
      %v3816 = vadd.f32 %v3728, %v3782
      %v3817 = vadd.f32 %v3729, %v3784
      %v3818 = vadd.f32 %v3730, %v3786
      %v3819 = vadd.f32 %v3078, %v3803
      %v3820 = vadd.f32 %v3079, %v3804
      %v3821 = vadd.f32 %v3080, %v3805
      %v3822 = vadd.f32 %v3081, %v3806
      %v3823 = vadd.f32 %v3082, %v3807
      %v3824 = vadd.f32 %v3083, %v3808
      %v3825 = vadd.f32 %v3084, %v3809
      %v3826 = vadd.f32 %v3085, %v3810
      %v3827 = vadd.f32 %v3086, %v3811
      %v3828 = vadd.f32 %v3087, %v3812
      %v3829 = vadd.f32 %v3088, %v3813
      %v3830 = vadd.f32 %v3089, %v3814
      %v3831 = vadd.f32 %v3090, %v3815
      %v3832 = vadd.f32 %v3091, %v3816
      %v3833 = vadd.f32 %v3092, %v3817
      %v3834 = vadd.f32 %v3093, %v3818
      %s3835 = sadd.s32 0, 4
      %s3836 = smul.u32 %s3835, 24
      %s3837 = scalar_lea.vmem [#allocation4], %s3836
      %v3838 = vld [vmem:[%s3837] sm:$0xff]
      %v3839 = vld [vmem:[%s3837 + $0x8] sm:$0xff]
      %v3840 = vld [vmem:[%s3837 + $0x10] sm:$0xff]
      %v3841 = vld [vmem:[%s3837 + $0x18] sm:$0xff]
      %v3842 = vld [vmem:[%s3837 + $0x20] sm:$0xff]
      %v3843 = vld [vmem:[%s3837 + $0x28] sm:$0xff]
      %v3844 = vld [vmem:[%s3837 + $0x30] sm:$0xff]
      %v3845 = vld [vmem:[%s3837 + $0x38] sm:$0xff]
      %v3846 = vld [vmem:[%s3837 + $0x40] sm:$0xff]
      %v3847 = vld [vmem:[%s3837 + $0x48] sm:$0xff]
      %v3848 = vld [vmem:[%s3837 + $0x50] sm:$0xff]
      %v3849 = vld [vmem:[%s3837 + $0x58] sm:$0xff]
      %v3850 = vld [vmem:[%s3837 + $0x60] sm:$0xff]
      %v3851 = vld [vmem:[%s3837 + $0x68] sm:$0xff]
      %v3852 = vld [vmem:[%s3837 + $0x70] sm:$0xff]
      %v3853 = vld [vmem:[%s3837 + $0x78] sm:$0xff]
      %v3854 = vld [vmem:[%s3837 + $0x80] sm:$0xff]
      %v3855 = vld [vmem:[%s3837 + $0x88] sm:$0xff]
      %v3856 = vld [vmem:[%s3837 + $0x90] sm:$0xff]
      %v3857 = vld [vmem:[%s3837 + $0x98] sm:$0xff]
      %v3858 = vld [vmem:[%s3837 + $0xa0] sm:$0xff]
      %v3859 = vld [vmem:[%s3837 + $0xa8] sm:$0xff]
      %v3860 = vld [vmem:[%s3837 + $0xb0] sm:$0xff]
      %v3861 = vld [vmem:[%s3837 + $0xb8] sm:$0xff]
      %v3862 = vpack.c.bf16 %v3839, %v3838
      %v3863 = vpack.c.bf16 %v3841, %v3840
      %v3864 = vpack.c.bf16 %v3843, %v3842
      %v3865 = vpack.c.bf16 %v3845, %v3844
      %v3866 = vpack.c.bf16 %v3847, %v3846
      %v3867 = vpack.c.bf16 %v3849, %v3848
      %v3868 = vpack.c.bf16 %v3851, %v3850
      %v3869 = vpack.c.bf16 %v3853, %v3852
      %v3870 = vpack.c.bf16 %v3855, %v3854
      %v3871 = vpack.c.bf16 %v3857, %v3856
      %v3872 = vpack.c.bf16 %v3859, %v3858
      %v3873 = vpack.c.bf16 %v3861, %v3860
      %s3874 = scalar_lea.vmem %s392, 128
      %v3875 = vld [vmem:[%s3874] sm:$0xff]
      %v3876 = vld [vmem:[%s3874 + $0x8] sm:$0xff]
      %v3877 = vld [vmem:[%s3874 + $0x10] sm:$0xff]
      %v3878 = vld [vmem:[%s3874 + $0x18] sm:$0xff]
      %v3883 = vunpack.c.l.b16 %v3875
      %v3884 = vunpack.c.h.b16 %v3875
      %v3885 = vunpack.c.l.b16 %v3876
      %v3886 = vunpack.c.h.b16 %v3876
      %v3887 = vunpack.c.l.b16 %v3877
      %v3888 = vunpack.c.h.b16 %v3877
      %v3889 = vunpack.c.l.b16 %v3878
      %v3890 = vunpack.c.h.b16 %v3878
      %v3891 = vpack.c.b16 %v3885, %v3883
      %v3892 = vpack.c.b16 %v3886, %v3884
      %v3893 = vpack.c.b16 %v3889, %v3887
      %v3894 = vpack.c.b16 %v3890, %v3888
      %v3900 = vsel %vm716, %v3862, 0
      %v3903 = vsel %vm716, %v3863, 0
      %v3906 = vsel %vm716, %v3864, 0
      %v3909 = vsel %vm716, %v3865, 0
      %v3912 = vsel %vm716, %v3866, 0
      %v3915 = vsel %vm716, %v3867, 0
      %v3918 = vsel %vm716, %v3868, 0
      %v3921 = vsel %vm716, %v3869, 0
      %v3924 = vsel %vm716, %v3870, 0
      %v3927 = vsel %vm716, %v3871, 0
      %v3930 = vsel %vm716, %v3872, 0
      %v3933 = vsel %vm716, %v3873, 0
      %3935 = vmatprep.subr.bf16.mxu0 %v3892
      %3936 = vmatpush1.bf16.msra.mxu0 %v3891
      %3937 = vmatprep.subr.bf16.mxu0 %v3894
      %3938 = vmatpush1.bf16.msra.mxu0 %v3893
      %3939 = vmatprep.subr.bf16.mxu0 0
      %3940 = vmatpush1.bf16.msra.mxu0 0
      %3941 = vmatprep.subr.bf16.mxu0 0
      %3942 = vmatpush1.bf16.msra.mxu0 0
      %3943 = vmatprep.subr.bf16.mxu0 0
      %3944 = vmatpush1.bf16.msra.mxu0 0
      %3945 = vmatprep.subr.bf16.mxu0 0
      %3946 = vmatpush1.bf16.msra.mxu0 0
      %3947 = vmatprep.subr.bf16.mxu0 0
      %3948 = vmatpush1.bf16.msra.mxu0 0
      %3949 = vmatprep.subr.bf16.mxu0 0
      %3950 = vmatpush1.bf16.msra.mxu0 0
      %3951 = vmatprep.subr.bf16.mxu0 0
      %3952 = vmatpush1.bf16.msra.mxu0 0
      %3953 = vmatprep.subr.bf16.mxu0 0
      %3954 = vmatpush1.bf16.msra.mxu0 0
      %3955 = vmatprep.subr.bf16.mxu0 0
      %3956 = vmatpush1.bf16.msra.mxu0 0
      %3957 = vmatprep.subr.bf16.mxu0 0
      %3958 = vmatpush1.bf16.msra.mxu0 0
      %3959 = vmatprep.subr.bf16.mxu0 0
      %3960 = vmatpush1.bf16.msra.mxu0 0
      %3961 = vmatprep.subr.bf16.mxu0 0
      %3962 = vmatpush1.bf16.msra.mxu0 0
      %3963 = vmatprep.subr.bf16.mxu0 0
      %3964 = vmatpush1.bf16.msra.mxu0 0
      %3965 = vmatprep.subr.bf16.mxu0 0
      %3966 = vmatpush1.bf16.msra.mxu0 0
      %3967 = vmatprep.mubr.bf16.mxu0 0
      %3968 = vmatmul.mubr.bf16.gmra.mrb[0].mxu0 %v3900
      %v3969 = vpop.f32.mrb[0].mxu0
      %v3970 = vadd.f32 0.0, %v3969
      %v3971 = vpop.f32.mrb[0].mxu0
      %v3972 = vpop.f32.mrb[0].mxu0
      %v3973 = vadd.f32 0.0, %v3972
      %v3974 = vpop.f32.mrb[0].mxu0
      %v3975 = vadd.f32 0.0, %v3974
      %3976 = vmatprep.mubr.bf16.mxu0 0
      %3977 = vmatmul.mubr.bf16.gmra.mrb[0].mxu0 %v3903
      %v3978 = vpop.f32.mrb[0].mxu0
      %v3979 = vpop.f32.mrb[0].mxu0
      %v3980 = vadd.f32 0.0, %v3979
      %v3981 = vpop.f32.mrb[0].mxu0
      %v3982 = vadd.f32 0.0, %v3981
      %v3983 = vpop.f32.mrb[0].mxu0
      %3984 = vmatprep.mubr.bf16.mxu0 0
      %3985 = vmatmul.mubr.bf16.gmra.mrb[0].mxu0 %v3906
      %v3986 = vpop.f32.mrb[0].mxu0
      %v3987 = vadd.f32 0.0, %v3986
      %v3988 = vpop.f32.mrb[0].mxu0
      %v3989 = vadd.f32 0.0, %v3988
      %v3990 = vpop.f32.mrb[0].mxu0
      %v3991 = vpop.f32.mrb[0].mxu0
      %v3992 = vadd.f32 0.0, %v3991
      %3993 = vmatprep.mubr.bf16.mxu0 0
      %3994 = vmatmul.mubr.bf16.gmra.mrb[0].mxu0 %v3909
      %v3995 = vpop.f32.mrb[0].mxu0
      %v3996 = vadd.f32 0.0, %v3995
      %v3997 = vpop.f32.mrb[0].mxu0
      %v3998 = vpop.f32.mrb[0].mxu0
      %v3999 = vadd.f32 0.0, %v3998
      %v4000 = vpop.f32.mrb[0].mxu0
      %v4001 = vadd.f32 0.0, %v4000
      %4002 = vmatprep.mubr.bf16.mxu0 0
      %4003 = vmatmul.mubr.bf16.gmra.mrb[0].mxu0 %v3912
      %v4004 = vpop.f32.mrb[0].mxu0
      %v4005 = vpop.f32.mrb[0].mxu0
      %v4006 = vadd.f32 0.0, %v4005
      %v4007 = vpop.f32.mrb[0].mxu0
      %v4008 = vadd.f32 0.0, %v4007
      %v4009 = vpop.f32.mrb[0].mxu0
      %4010 = vmatprep.mubr.bf16.mxu0 0
      %4011 = vmatmul.mubr.bf16.gmra.mrb[0].mxu0 %v3915
      %v4012 = vpop.f32.mrb[0].mxu0
      %v4013 = vadd.f32 0.0, %v4012
      %v4014 = vpop.f32.mrb[0].mxu0
      %v4015 = vadd.f32 0.0, %v4014
      %v4016 = vpop.f32.mrb[0].mxu0
      %v4017 = vpop.f32.mrb[0].mxu0
      %v4018 = vadd.f32 0.0, %v4017
      %4019 = vmatprep.mubr.bf16.mxu0 0
      %4020 = vmatmul.mubr.bf16.gmra.mrb[0].mxu0 %v3918
      %v4021 = vpop.f32.mrb[0].mxu0
      %v4022 = vadd.f32 0.0, %v4021
      %v4023 = vpop.f32.mrb[0].mxu0
      %v4024 = vpop.f32.mrb[0].mxu0
      %v4025 = vadd.f32 0.0, %v4024
      %v4026 = vpop.f32.mrb[0].mxu0
      %v4027 = vadd.f32 0.0, %v4026
      %4028 = vmatprep.mubr.bf16.mxu0 0
      %4029 = vmatmul.mubr.bf16.gmra.mrb[0].mxu0 %v3921
      %v4030 = vpop.f32.mrb[0].mxu0
      %v4031 = vpop.f32.mrb[0].mxu0
      %v4032 = vadd.f32 0.0, %v4031
      %v4033 = vpop.f32.mrb[0].mxu0
      %v4034 = vadd.f32 0.0, %v4033
      %v4035 = vpop.f32.mrb[0].mxu0
      %4036 = vmatprep.mubr.bf16.mxu0 0
      %4037 = vmatmul.mubr.bf16.gmra.mrb[0].mxu0 %v3924
      %v4038 = vpop.f32.mrb[0].mxu0
      %v4039 = vadd.f32 0.0, %v4038
      %v4040 = vpop.f32.mrb[0].mxu0
      %v4041 = vadd.f32 0.0, %v4040
      %v4042 = vpop.f32.mrb[0].mxu0
      %v4043 = vpop.f32.mrb[0].mxu0
      %v4044 = vadd.f32 0.0, %v4043
      %4045 = vmatprep.mubr.bf16.mxu0 0
      %4046 = vmatmul.mubr.bf16.gmra.mrb[0].mxu0 %v3927
      %v4047 = vpop.f32.mrb[0].mxu0
      %v4048 = vadd.f32 0.0, %v4047
      %v4049 = vpop.f32.mrb[0].mxu0
      %v4050 = vpop.f32.mrb[0].mxu0
      %v4051 = vadd.f32 0.0, %v4050
      %v4052 = vpop.f32.mrb[0].mxu0
      %v4053 = vadd.f32 0.0, %v4052
      %4054 = vmatprep.mubr.bf16.mxu0 0
      %4055 = vmatmul.mubr.bf16.gmra.mrb[0].mxu0 %v3930
      %v4056 = vpop.f32.mrb[0].mxu0
      %v4057 = vpop.f32.mrb[0].mxu0
      %v4058 = vadd.f32 0.0, %v4057
      %v4059 = vpop.f32.mrb[0].mxu0
      %v4060 = vadd.f32 0.0, %v4059
      %v4061 = vpop.f32.mrb[0].mxu0
      %4062 = vmatprep.mubr.bf16.mxu0 0
      %4063 = vmatmul.mubr.bf16.gmra.mrb[0].mxu0 %v3933
      %v4064 = vpop.f32.mrb[0].mxu0
      %v4065 = vadd.f32 0.0, %v4064
      %v4066 = vpop.f32.mrb[0].mxu0
      %v4067 = vadd.f32 0.0, %v4066
      %v4068 = vpop.f32.mrb[0].mxu0
      %v4069 = vpop.f32.mrb[0].mxu0
      %v4070 = vadd.f32 0.0, %v4069
      %4071 = vdwg.mxu0
      %v4088 = vrot.slane %v3970, 1
      %v4089 = vrot.slane %v3973, 1
      %v4090 = vsel %vm1135, %v4088, %v4089
      %v4091 = vrot.slane %v3982, 1
      %v4092 = vrot.slane %v3987, 1
      %v4093 = vsel %vm1135, %v4091, %v4092
      %v4094 = vrot.slane %v3996, 1
      %v4095 = vrot.slane %v3999, 1
      %v4096 = vsel %vm1135, %v4094, %v4095
      %v4097 = vrot.slane %v4008, 1
      %v4098 = vrot.slane %v4013, 1
      %v4099 = vsel %vm1135, %v4097, %v4098
      %v4100 = vrot.slane %v4022, 1
      %v4101 = vrot.slane %v4025, 1
      %v4102 = vsel %vm1135, %v4100, %v4101
      %v4103 = vrot.slane %v4034, 1
      %v4104 = vrot.slane %v4039, 1
      %v4105 = vsel %vm1135, %v4103, %v4104
      %v4106 = vrot.slane %v4048, 1
      %v4107 = vrot.slane %v4051, 1
      %v4108 = vsel %vm1135, %v4106, %v4107
      %v4109 = vrot.slane %v4060, 1
      %v4110 = vrot.slane %v4065, 1
      %v4111 = vsel %vm1135, %v4109, %v4110
      %4112 = vrot.lane.b32.xlu0 %v4090, 96
      %v4113 = vpop.permute.xlu0 %4112
      %4114 = vrot.lane.b32.xlu0 %v4089, 96
      %v4115 = vpop.permute.xlu0 %4114
      %4116 = vrot.lane.b32.xlu0 %v4093, 96
      %v4117 = vpop.permute.xlu0 %4116
      %4118 = vrot.lane.b32.xlu0 %v4092, 96
      %v4119 = vpop.permute.xlu0 %4118
      %4120 = vrot.lane.b32.xlu0 %v4096, 96
      %v4121 = vpop.permute.xlu0 %4120
      %4122 = vrot.lane.b32.xlu0 %v4095, 96
      %v4123 = vpop.permute.xlu0 %4122
      %4124 = vrot.lane.b32.xlu0 %v4099, 96
      %v4125 = vpop.permute.xlu0 %4124
      %4126 = vrot.lane.b32.xlu0 %v4098, 96
      %v4127 = vpop.permute.xlu0 %4126
      %4128 = vrot.lane.b32.xlu0 %v4102, 96
      %v4129 = vpop.permute.xlu0 %4128
      %4130 = vrot.lane.b32.xlu0 %v4101, 96
      %v4131 = vpop.permute.xlu0 %4130
      %4132 = vrot.lane.b32.xlu0 %v4105, 96
      %v4133 = vpop.permute.xlu0 %4132
      %4134 = vrot.lane.b32.xlu0 %v4104, 96
      %v4135 = vpop.permute.xlu0 %4134
      %4136 = vrot.lane.b32.xlu0 %v4108, 96
      %v4137 = vpop.permute.xlu0 %4136
      %4138 = vrot.lane.b32.xlu0 %v4107, 96
      %v4139 = vpop.permute.xlu0 %4138
      %4140 = vrot.lane.b32.xlu0 %v4111, 96
      %v4141 = vpop.permute.xlu0 %4140
      %4142 = vrot.lane.b32.xlu0 %v4110, 96
      %v4143 = vpop.permute.xlu0 %4142
      %v4160 = vadd.f32 %v3970, %v4113
      %v4161 = vadd.f32 %v3973, %v4115
      %v4162 = vadd.f32 %v3982, %v4117
      %v4163 = vadd.f32 %v3987, %v4119
      %v4164 = vadd.f32 %v3996, %v4121
      %v4165 = vadd.f32 %v3999, %v4123
      %v4166 = vadd.f32 %v4008, %v4125
      %v4167 = vadd.f32 %v4013, %v4127
      %v4168 = vadd.f32 %v4022, %v4129
      %v4169 = vadd.f32 %v4025, %v4131
      %v4170 = vadd.f32 %v4034, %v4133
      %v4171 = vadd.f32 %v4039, %v4135
      %v4172 = vadd.f32 %v4048, %v4137
      %v4173 = vadd.f32 %v4051, %v4139
      %v4174 = vadd.f32 %v4060, %v4141
      %v4175 = vadd.f32 %v4065, %v4143
      %v4176 = vrot.slane %v3970, 2
      %v4177 = vrot.slane %v3973, 2
      %v4178 = vsel %vm1224, %v4176, %v4177
      %v4179 = vrot.slane %v3982, 2
      %v4180 = vrot.slane %v3987, 2
      %v4181 = vsel %vm1224, %v4179, %v4180
      %v4182 = vrot.slane %v3996, 2
      %v4183 = vrot.slane %v3999, 2
      %v4184 = vsel %vm1224, %v4182, %v4183
      %v4185 = vrot.slane %v4008, 2
      %v4186 = vrot.slane %v4013, 2
      %v4187 = vsel %vm1224, %v4185, %v4186
      %v4188 = vrot.slane %v4022, 2
      %v4189 = vrot.slane %v4025, 2
      %v4190 = vsel %vm1224, %v4188, %v4189
      %v4191 = vrot.slane %v4034, 2
      %v4192 = vrot.slane %v4039, 2
      %v4193 = vsel %vm1224, %v4191, %v4192
      %v4194 = vrot.slane %v4048, 2
      %v4195 = vrot.slane %v4051, 2
      %v4196 = vsel %vm1224, %v4194, %v4195
      %v4197 = vrot.slane %v4060, 2
      %v4198 = vrot.slane %v4065, 2
      %v4199 = vsel %vm1224, %v4197, %v4198
      %4200 = vrot.lane.b32.xlu0 %v4178, 64
      %v4201 = vpop.permute.xlu0 %4200
      %4202 = vrot.lane.b32.xlu0 %v4177, 64
      %v4203 = vpop.permute.xlu0 %4202
      %4204 = vrot.lane.b32.xlu0 %v4181, 64
      %v4205 = vpop.permute.xlu0 %4204
      %4206 = vrot.lane.b32.xlu0 %v4180, 64
      %v4207 = vpop.permute.xlu0 %4206
      %4208 = vrot.lane.b32.xlu0 %v4184, 64
      %v4209 = vpop.permute.xlu0 %4208
      %4210 = vrot.lane.b32.xlu0 %v4183, 64
      %v4211 = vpop.permute.xlu0 %4210
      %4212 = vrot.lane.b32.xlu0 %v4187, 64
      %v4213 = vpop.permute.xlu0 %4212
      %4214 = vrot.lane.b32.xlu0 %v4186, 64
      %v4215 = vpop.permute.xlu0 %4214
      %4216 = vrot.lane.b32.xlu0 %v4190, 64
      %v4217 = vpop.permute.xlu0 %4216
      %4218 = vrot.lane.b32.xlu0 %v4189, 64
      %v4219 = vpop.permute.xlu0 %4218
      %4220 = vrot.lane.b32.xlu0 %v4193, 64
      %v4221 = vpop.permute.xlu0 %4220
      %4222 = vrot.lane.b32.xlu0 %v4192, 64
      %v4223 = vpop.permute.xlu0 %4222
      %4224 = vrot.lane.b32.xlu0 %v4196, 64
      %v4225 = vpop.permute.xlu0 %4224
      %4226 = vrot.lane.b32.xlu0 %v4195, 64
      %v4227 = vpop.permute.xlu0 %4226
      %4228 = vrot.lane.b32.xlu0 %v4199, 64
      %v4229 = vpop.permute.xlu0 %4228
      %4230 = vrot.lane.b32.xlu0 %v4198, 64
      %v4231 = vpop.permute.xlu0 %4230
      %v4248 = vadd.f32 %v4160, %v4201
      %v4249 = vadd.f32 %v4161, %v4203
      %v4250 = vadd.f32 %v4162, %v4205
      %v4251 = vadd.f32 %v4163, %v4207
      %v4252 = vadd.f32 %v4164, %v4209
      %v4253 = vadd.f32 %v4165, %v4211
      %v4254 = vadd.f32 %v4166, %v4213
      %v4255 = vadd.f32 %v4167, %v4215
      %v4256 = vadd.f32 %v4168, %v4217
      %v4257 = vadd.f32 %v4169, %v4219
      %v4258 = vadd.f32 %v4170, %v4221
      %v4259 = vadd.f32 %v4171, %v4223
      %v4260 = vadd.f32 %v4172, %v4225
      %v4261 = vadd.f32 %v4173, %v4227
      %v4262 = vadd.f32 %v4174, %v4229
      %v4263 = vadd.f32 %v4175, %v4231
      %v4264 = vrot.slane %v3973, 3
      %v4265 = vrot.slane %v3987, 3
      %v4266 = vrot.slane %v3999, 3
      %v4267 = vrot.slane %v4013, 3
      %v4268 = vrot.slane %v4025, 3
      %v4269 = vrot.slane %v4039, 3
      %v4270 = vrot.slane %v4051, 3
      %v4271 = vrot.slane %v4065, 3
      %4272 = vrot.lane.b32.xlu0 %v4264, 32
      %v4273 = vpop.permute.xlu0 %4272
      %4274 = vrot.lane.b32.xlu0 %v4265, 32
      %v4275 = vpop.permute.xlu0 %4274
      %4276 = vrot.lane.b32.xlu0 %v4266, 32
      %v4277 = vpop.permute.xlu0 %4276
      %4278 = vrot.lane.b32.xlu0 %v4267, 32
      %v4279 = vpop.permute.xlu0 %4278
      %4280 = vrot.lane.b32.xlu0 %v4268, 32
      %v4281 = vpop.permute.xlu0 %4280
      %4282 = vrot.lane.b32.xlu0 %v4269, 32
      %v4283 = vpop.permute.xlu0 %4282
      %4284 = vrot.lane.b32.xlu0 %v4270, 32
      %v4285 = vpop.permute.xlu0 %4284
      %4286 = vrot.lane.b32.xlu0 %v4271, 32
      %v4287 = vpop.permute.xlu0 %4286
      %v4296 = vadd.f32 %v4248, %v4273
      %v4297 = vadd.f32 %v4249, %v4273
      %v4298 = vadd.f32 %v4250, %v4275
      %v4299 = vadd.f32 %v4251, %v4275
      %v4300 = vadd.f32 %v4252, %v4277
      %v4301 = vadd.f32 %v4253, %v4277
      %v4302 = vadd.f32 %v4254, %v4279
      %v4303 = vadd.f32 %v4255, %v4279
      %v4304 = vadd.f32 %v4256, %v4281
      %v4305 = vadd.f32 %v4257, %v4281
      %v4306 = vadd.f32 %v4258, %v4283
      %v4307 = vadd.f32 %v4259, %v4283
      %v4308 = vadd.f32 %v4260, %v4285
      %v4309 = vadd.f32 %v4261, %v4285
      %v4310 = vadd.f32 %v4262, %v4287
      %v4311 = vadd.f32 %v4263, %v4287
      %v4328 = vrot.slane %v3975, 4
      %v4329 = vrot.slane %v3980, 4
      %v4330 = vsel %vm1377, %v4328, %v4329
      %v4331 = vrot.slane %v3989, 4
      %v4332 = vrot.slane %v3992, 4
      %v4333 = vsel %vm1377, %v4331, %v4332
      %v4334 = vrot.slane %v4001, 4
      %v4335 = vrot.slane %v4006, 4
      %v4336 = vsel %vm1377, %v4334, %v4335
      %v4337 = vrot.slane %v4015, 4
      %v4338 = vrot.slane %v4018, 4
      %v4339 = vsel %vm1377, %v4337, %v4338
      %v4340 = vrot.slane %v4027, 4
      %v4341 = vrot.slane %v4032, 4
      %v4342 = vsel %vm1377, %v4340, %v4341
      %v4343 = vrot.slane %v4041, 4
      %v4344 = vrot.slane %v4044, 4
      %v4345 = vsel %vm1377, %v4343, %v4344
      %v4346 = vrot.slane %v4053, 4
      %v4347 = vrot.slane %v4058, 4
      %v4348 = vsel %vm1377, %v4346, %v4347
      %v4349 = vrot.slane %v4067, 4
      %v4350 = vrot.slane %v4070, 4
      %v4351 = vsel %vm1377, %v4349, %v4350
      %v4368 = vadd.f32 %v4296, %v4328
      %v4369 = vadd.f32 %v4297, %v4330
      %v4370 = vadd.f32 %v4298, %v4331
      %v4371 = vadd.f32 %v4299, %v4333
      %v4372 = vadd.f32 %v4300, %v4334
      %v4373 = vadd.f32 %v4301, %v4336
      %v4374 = vadd.f32 %v4302, %v4337
      %v4375 = vadd.f32 %v4303, %v4339
      %v4376 = vadd.f32 %v4304, %v4340
      %v4377 = vadd.f32 %v4305, %v4342
      %v4378 = vadd.f32 %v4306, %v4343
      %v4379 = vadd.f32 %v4307, %v4345
      %v4380 = vadd.f32 %v4308, %v4346
      %v4381 = vadd.f32 %v4309, %v4348
      %v4382 = vadd.f32 %v4310, %v4349
      %v4383 = vadd.f32 %v4311, %v4351
      %v4384 = vrot.slane %v3975, 5
      %v4385 = vrot.slane %v3980, 5
      %v4386 = vsel %vm1434, %v4384, %v4385
      %v4387 = vrot.slane %v3989, 5
      %v4388 = vrot.slane %v3992, 5
      %v4389 = vsel %vm1434, %v4387, %v4388
      %v4390 = vrot.slane %v4001, 5
      %v4391 = vrot.slane %v4006, 5
      %v4392 = vsel %vm1434, %v4390, %v4391
      %v4393 = vrot.slane %v4015, 5
      %v4394 = vrot.slane %v4018, 5
      %v4395 = vsel %vm1434, %v4393, %v4394
      %v4396 = vrot.slane %v4027, 5
      %v4397 = vrot.slane %v4032, 5
      %v4398 = vsel %vm1434, %v4396, %v4397
      %v4399 = vrot.slane %v4041, 5
      %v4400 = vrot.slane %v4044, 5
      %v4401 = vsel %vm1434, %v4399, %v4400
      %v4402 = vrot.slane %v4053, 5
      %v4403 = vrot.slane %v4058, 5
      %v4404 = vsel %vm1434, %v4402, %v4403
      %v4405 = vrot.slane %v4067, 5
      %v4406 = vrot.slane %v4070, 5
      %v4407 = vsel %vm1434, %v4405, %v4406
      %4408 = vrot.lane.b32.xlu0 %v4384, 96
      %v4409 = vpop.permute.xlu0 %4408
      %4410 = vrot.lane.b32.xlu0 %v4386, 96
      %v4411 = vpop.permute.xlu0 %4410
      %4412 = vrot.lane.b32.xlu0 %v4387, 96
      %v4413 = vpop.permute.xlu0 %4412
      %4414 = vrot.lane.b32.xlu0 %v4389, 96
      %v4415 = vpop.permute.xlu0 %4414
      %4416 = vrot.lane.b32.xlu0 %v4390, 96
      %v4417 = vpop.permute.xlu0 %4416
      %4418 = vrot.lane.b32.xlu0 %v4392, 96
      %v4419 = vpop.permute.xlu0 %4418
      %4420 = vrot.lane.b32.xlu0 %v4393, 96
      %v4421 = vpop.permute.xlu0 %4420
      %4422 = vrot.lane.b32.xlu0 %v4395, 96
      %v4423 = vpop.permute.xlu0 %4422
      %4424 = vrot.lane.b32.xlu0 %v4396, 96
      %v4425 = vpop.permute.xlu0 %4424
      %4426 = vrot.lane.b32.xlu0 %v4398, 96
      %v4427 = vpop.permute.xlu0 %4426
      %4428 = vrot.lane.b32.xlu0 %v4399, 96
      %v4429 = vpop.permute.xlu0 %4428
      %4430 = vrot.lane.b32.xlu0 %v4401, 96
      %v4431 = vpop.permute.xlu0 %4430
      %4432 = vrot.lane.b32.xlu0 %v4402, 96
      %v4433 = vpop.permute.xlu0 %4432
      %4434 = vrot.lane.b32.xlu0 %v4404, 96
      %v4435 = vpop.permute.xlu0 %4434
      %4436 = vrot.lane.b32.xlu0 %v4405, 96
      %v4437 = vpop.permute.xlu0 %4436
      %4438 = vrot.lane.b32.xlu0 %v4407, 96
      %v4439 = vpop.permute.xlu0 %4438
      %v4456 = vadd.f32 %v4368, %v4409
      %v4457 = vadd.f32 %v4369, %v4411
      %v4458 = vadd.f32 %v4370, %v4413
      %v4459 = vadd.f32 %v4371, %v4415
      %v4460 = vadd.f32 %v4372, %v4417
      %v4461 = vadd.f32 %v4373, %v4419
      %v4462 = vadd.f32 %v4374, %v4421
      %v4463 = vadd.f32 %v4375, %v4423
      %v4464 = vadd.f32 %v4376, %v4425
      %v4465 = vadd.f32 %v4377, %v4427
      %v4466 = vadd.f32 %v4378, %v4429
      %v4467 = vadd.f32 %v4379, %v4431
      %v4468 = vadd.f32 %v4380, %v4433
      %v4469 = vadd.f32 %v4381, %v4435
      %v4470 = vadd.f32 %v4382, %v4437
      %v4471 = vadd.f32 %v4383, %v4439
      %v4472 = vrot.slane %v3975, 6
      %v4473 = vrot.slane %v3980, 6
      %v4474 = vsel %vm1523, %v4472, %v4473
      %v4475 = vrot.slane %v3989, 6
      %v4476 = vrot.slane %v3992, 6
      %v4477 = vsel %vm1523, %v4475, %v4476
      %v4478 = vrot.slane %v4001, 6
      %v4479 = vrot.slane %v4006, 6
      %v4480 = vsel %vm1523, %v4478, %v4479
      %v4481 = vrot.slane %v4015, 6
      %v4482 = vrot.slane %v4018, 6
      %v4483 = vsel %vm1523, %v4481, %v4482
      %v4484 = vrot.slane %v4027, 6
      %v4485 = vrot.slane %v4032, 6
      %v4486 = vsel %vm1523, %v4484, %v4485
      %v4487 = vrot.slane %v4041, 6
      %v4488 = vrot.slane %v4044, 6
      %v4489 = vsel %vm1523, %v4487, %v4488
      %v4490 = vrot.slane %v4053, 6
      %v4491 = vrot.slane %v4058, 6
      %v4492 = vsel %vm1523, %v4490, %v4491
      %v4493 = vrot.slane %v4067, 6
      %v4494 = vrot.slane %v4070, 6
      %v4495 = vsel %vm1523, %v4493, %v4494
      %4496 = vrot.lane.b32.xlu0 %v4472, 64
      %v4497 = vpop.permute.xlu0 %4496
      %4498 = vrot.lane.b32.xlu0 %v4474, 64
      %v4499 = vpop.permute.xlu0 %4498
      %4500 = vrot.lane.b32.xlu0 %v4475, 64
      %v4501 = vpop.permute.xlu0 %4500
      %4502 = vrot.lane.b32.xlu0 %v4477, 64
      %v4503 = vpop.permute.xlu0 %4502
      %4504 = vrot.lane.b32.xlu0 %v4478, 64
      %v4505 = vpop.permute.xlu0 %4504
      %4506 = vrot.lane.b32.xlu0 %v4480, 64
      %v4507 = vpop.permute.xlu0 %4506
      %4508 = vrot.lane.b32.xlu0 %v4481, 64
      %v4509 = vpop.permute.xlu0 %4508
      %4510 = vrot.lane.b32.xlu0 %v4483, 64
      %v4511 = vpop.permute.xlu0 %4510
      %4512 = vrot.lane.b32.xlu0 %v4484, 64
      %v4513 = vpop.permute.xlu0 %4512
      %4514 = vrot.lane.b32.xlu0 %v4486, 64
      %v4515 = vpop.permute.xlu0 %4514
      %4516 = vrot.lane.b32.xlu0 %v4487, 64
      %v4517 = vpop.permute.xlu0 %4516
      %4518 = vrot.lane.b32.xlu0 %v4489, 64
      %v4519 = vpop.permute.xlu0 %4518
      %4520 = vrot.lane.b32.xlu0 %v4490, 64
      %v4521 = vpop.permute.xlu0 %4520
      %4522 = vrot.lane.b32.xlu0 %v4492, 64
      %v4523 = vpop.permute.xlu0 %4522
      %4524 = vrot.lane.b32.xlu0 %v4493, 64
      %v4525 = vpop.permute.xlu0 %4524
      %4526 = vrot.lane.b32.xlu0 %v4495, 64
      %v4527 = vpop.permute.xlu0 %4526
      %v4544 = vadd.f32 %v4456, %v4497
      %v4545 = vadd.f32 %v4457, %v4499
      %v4546 = vadd.f32 %v4458, %v4501
      %v4547 = vadd.f32 %v4459, %v4503
      %v4548 = vadd.f32 %v4460, %v4505
      %v4549 = vadd.f32 %v4461, %v4507
      %v4550 = vadd.f32 %v4462, %v4509
      %v4551 = vadd.f32 %v4463, %v4511
      %v4552 = vadd.f32 %v4464, %v4513
      %v4553 = vadd.f32 %v4465, %v4515
      %v4554 = vadd.f32 %v4466, %v4517
      %v4555 = vadd.f32 %v4467, %v4519
      %v4556 = vadd.f32 %v4468, %v4521
      %v4557 = vadd.f32 %v4469, %v4523
      %v4558 = vadd.f32 %v4470, %v4525
      %v4559 = vadd.f32 %v4471, %v4527
      %v4560 = vadd.f32 %v3819, %v4544
      %v4561 = vadd.f32 %v3820, %v4545
      %v4562 = vadd.f32 %v3821, %v4546
      %v4563 = vadd.f32 %v3822, %v4547
      %v4564 = vadd.f32 %v3823, %v4548
      %v4565 = vadd.f32 %v3824, %v4549
      %v4566 = vadd.f32 %v3825, %v4550
      %v4567 = vadd.f32 %v3826, %v4551
      %v4568 = vadd.f32 %v3827, %v4552
      %v4569 = vadd.f32 %v3828, %v4553
      %v4570 = vadd.f32 %v3829, %v4554
      %v4571 = vadd.f32 %v3830, %v4555
      %v4572 = vadd.f32 %v3831, %v4556
      %v4573 = vadd.f32 %v3832, %v4557
      %v4574 = vadd.f32 %v3833, %v4558
      %v4575 = vadd.f32 %v3834, %v4559
      %s4576 = sadd.s32 0, 5
      %s4577 = smul.u32 %s4576, 24
      %s4578 = scalar_lea.vmem [#allocation4], %s4577
      %v4579 = vld [vmem:[%s4578] sm:$0xff]
      %v4580 = vld [vmem:[%s4578 + $0x8] sm:$0xff]
      %v4581 = vld [vmem:[%s4578 + $0x10] sm:$0xff]
      %v4582 = vld [vmem:[%s4578 + $0x18] sm:$0xff]
      %v4583 = vld [vmem:[%s4578 + $0x20] sm:$0xff]
      %v4584 = vld [vmem:[%s4578 + $0x28] sm:$0xff]
      %v4585 = vld [vmem:[%s4578 + $0x30] sm:$0xff]
      %v4586 = vld [vmem:[%s4578 + $0x38] sm:$0xff]
      %v4587 = vld [vmem:[%s4578 + $0x40] sm:$0xff]
      %v4588 = vld [vmem:[%s4578 + $0x48] sm:$0xff]
      %v4589 = vld [vmem:[%s4578 + $0x50] sm:$0xff]
      %v4590 = vld [vmem:[%s4578 + $0x58] sm:$0xff]
      %v4591 = vld [vmem:[%s4578 + $0x60] sm:$0xff]
      %v4592 = vld [vmem:[%s4578 + $0x68] sm:$0xff]
      %v4593 = vld [vmem:[%s4578 + $0x70] sm:$0xff]
      %v4594 = vld [vmem:[%s4578 + $0x78] sm:$0xff]
      %v4595 = vld [vmem:[%s4578 + $0x80] sm:$0xff]
      %v4596 = vld [vmem:[%s4578 + $0x88] sm:$0xff]
      %v4597 = vld [vmem:[%s4578 + $0x90] sm:$0xff]
      %v4598 = vld [vmem:[%s4578 + $0x98] sm:$0xff]
      %v4599 = vld [vmem:[%s4578 + $0xa0] sm:$0xff]
      %v4600 = vld [vmem:[%s4578 + $0xa8] sm:$0xff]
      %v4601 = vld [vmem:[%s4578 + $0xb0] sm:$0xff]
      %v4602 = vld [vmem:[%s4578 + $0xb8] sm:$0xff]
      %v4603 = vpack.c.bf16 %v4580, %v4579
      %v4604 = vpack.c.bf16 %v4582, %v4581
      %v4605 = vpack.c.bf16 %v4584, %v4583
      %v4606 = vpack.c.bf16 %v4586, %v4585
      %v4607 = vpack.c.bf16 %v4588, %v4587
      %v4608 = vpack.c.bf16 %v4590, %v4589
      %v4609 = vpack.c.bf16 %v4592, %v4591
      %v4610 = vpack.c.bf16 %v4594, %v4593
      %v4611 = vpack.c.bf16 %v4596, %v4595
      %v4612 = vpack.c.bf16 %v4598, %v4597
      %v4613 = vpack.c.bf16 %v4600, %v4599
      %v4614 = vpack.c.bf16 %v4602, %v4601
      %s4615 = scalar_lea.vmem %s392, 160
      %v4616 = vld [vmem:[%s4615] sm:$0xff]
      %v4617 = vld [vmem:[%s4615 + $0x8] sm:$0xff]
      %v4618 = vld [vmem:[%s4615 + $0x10] sm:$0xff]
      %v4619 = vld [vmem:[%s4615 + $0x18] sm:$0xff]
      %v4624 = vunpack.c.l.b16 %v4616
      %v4625 = vunpack.c.h.b16 %v4616
      %v4626 = vunpack.c.l.b16 %v4617
      %v4627 = vunpack.c.h.b16 %v4617
      %v4628 = vunpack.c.l.b16 %v4618
      %v4629 = vunpack.c.h.b16 %v4618
      %v4630 = vunpack.c.l.b16 %v4619
      %v4631 = vunpack.c.h.b16 %v4619
      %v4632 = vpack.c.b16 %v4626, %v4624
      %v4633 = vpack.c.b16 %v4627, %v4625
      %v4634 = vpack.c.b16 %v4630, %v4628
      %v4635 = vpack.c.b16 %v4631, %v4629
      %v4641 = vsel %vm716, %v4603, 0
      %v4644 = vsel %vm716, %v4604, 0
      %v4647 = vsel %vm716, %v4605, 0
      %v4650 = vsel %vm716, %v4606, 0
      %v4653 = vsel %vm716, %v4607, 0
      %v4656 = vsel %vm716, %v4608, 0
      %v4659 = vsel %vm716, %v4609, 0
      %v4662 = vsel %vm716, %v4610, 0
      %v4665 = vsel %vm716, %v4611, 0
      %v4668 = vsel %vm716, %v4612, 0
      %v4671 = vsel %vm716, %v4613, 0
      %v4674 = vsel %vm716, %v4614, 0
      %4676 = vmatprep.subr.bf16.mxu0 %v4633
      %4677 = vmatpush1.bf16.msra.mxu0 %v4632
      %4678 = vmatprep.subr.bf16.mxu0 %v4635
      %4679 = vmatpush1.bf16.msra.mxu0 %v4634
      %4680 = vmatprep.subr.bf16.mxu0 0
      %4681 = vmatpush1.bf16.msra.mxu0 0
      %4682 = vmatprep.subr.bf16.mxu0 0
      %4683 = vmatpush1.bf16.msra.mxu0 0
      %4684 = vmatprep.subr.bf16.mxu0 0
      %4685 = vmatpush1.bf16.msra.mxu0 0
      %4686 = vmatprep.subr.bf16.mxu0 0
      %4687 = vmatpush1.bf16.msra.mxu0 0
      %4688 = vmatprep.subr.bf16.mxu0 0
      %4689 = vmatpush1.bf16.msra.mxu0 0
      %4690 = vmatprep.subr.bf16.mxu0 0
      %4691 = vmatpush1.bf16.msra.mxu0 0
      %4692 = vmatprep.subr.bf16.mxu0 0
      %4693 = vmatpush1.bf16.msra.mxu0 0
      %4694 = vmatprep.subr.bf16.mxu0 0
      %4695 = vmatpush1.bf16.msra.mxu0 0
      %4696 = vmatprep.subr.bf16.mxu0 0
      %4697 = vmatpush1.bf16.msra.mxu0 0
      %4698 = vmatprep.subr.bf16.mxu0 0
      %4699 = vmatpush1.bf16.msra.mxu0 0
      %4700 = vmatprep.subr.bf16.mxu0 0
      %4701 = vmatpush1.bf16.msra.mxu0 0
      %4702 = vmatprep.subr.bf16.mxu0 0
      %4703 = vmatpush1.bf16.msra.mxu0 0
      %4704 = vmatprep.subr.bf16.mxu0 0
      %4705 = vmatpush1.bf16.msra.mxu0 0
      %4706 = vmatprep.subr.bf16.mxu0 0
      %4707 = vmatpush1.bf16.msra.mxu0 0
      %4708 = vmatprep.mubr.bf16.mxu0 0
      %4709 = vmatmul.mubr.bf16.gmra.mrb[0].mxu0 %v4641
      %v4710 = vpop.f32.mrb[0].mxu0
      %v4711 = vadd.f32 0.0, %v4710
      %v4712 = vpop.f32.mrb[0].mxu0
      %v4713 = vpop.f32.mrb[0].mxu0
      %v4714 = vadd.f32 0.0, %v4713
      %v4715 = vpop.f32.mrb[0].mxu0
      %v4716 = vadd.f32 0.0, %v4715
      %4717 = vmatprep.mubr.bf16.mxu0 0
      %4718 = vmatmul.mubr.bf16.gmra.mrb[0].mxu0 %v4644
      %v4719 = vpop.f32.mrb[0].mxu0
      %v4720 = vpop.f32.mrb[0].mxu0
      %v4721 = vadd.f32 0.0, %v4720
      %v4722 = vpop.f32.mrb[0].mxu0
      %v4723 = vadd.f32 0.0, %v4722
      %v4724 = vpop.f32.mrb[0].mxu0
      %4725 = vmatprep.mubr.bf16.mxu0 0
      %4726 = vmatmul.mubr.bf16.gmra.mrb[0].mxu0 %v4647
      %v4727 = vpop.f32.mrb[0].mxu0
      %v4728 = vadd.f32 0.0, %v4727
      %v4729 = vpop.f32.mrb[0].mxu0
      %v4730 = vadd.f32 0.0, %v4729
      %v4731 = vpop.f32.mrb[0].mxu0
      %v4732 = vpop.f32.mrb[0].mxu0
      %v4733 = vadd.f32 0.0, %v4732
      %4734 = vmatprep.mubr.bf16.mxu0 0
      %4735 = vmatmul.mubr.bf16.gmra.mrb[0].mxu0 %v4650
      %v4736 = vpop.f32.mrb[0].mxu0
      %v4737 = vadd.f32 0.0, %v4736
      %v4738 = vpop.f32.mrb[0].mxu0
      %v4739 = vpop.f32.mrb[0].mxu0
      %v4740 = vadd.f32 0.0, %v4739
      %v4741 = vpop.f32.mrb[0].mxu0
      %v4742 = vadd.f32 0.0, %v4741
      %4743 = vmatprep.mubr.bf16.mxu0 0
      %4744 = vmatmul.mubr.bf16.gmra.mrb[0].mxu0 %v4653
      %v4745 = vpop.f32.mrb[0].mxu0
      %v4746 = vpop.f32.mrb[0].mxu0
      %v4747 = vadd.f32 0.0, %v4746
      %v4748 = vpop.f32.mrb[0].mxu0
      %v4749 = vadd.f32 0.0, %v4748
      %v4750 = vpop.f32.mrb[0].mxu0
      %4751 = vmatprep.mubr.bf16.mxu0 0
      %4752 = vmatmul.mubr.bf16.gmra.mrb[0].mxu0 %v4656
      %v4753 = vpop.f32.mrb[0].mxu0
      %v4754 = vadd.f32 0.0, %v4753
      %v4755 = vpop.f32.mrb[0].mxu0
      %v4756 = vadd.f32 0.0, %v4755
      %v4757 = vpop.f32.mrb[0].mxu0
      %v4758 = vpop.f32.mrb[0].mxu0
      %v4759 = vadd.f32 0.0, %v4758
      %4760 = vmatprep.mubr.bf16.mxu0 0
      %4761 = vmatmul.mubr.bf16.gmra.mrb[0].mxu0 %v4659
      %v4762 = vpop.f32.mrb[0].mxu0
      %v4763 = vadd.f32 0.0, %v4762
      %v4764 = vpop.f32.mrb[0].mxu0
      %v4765 = vpop.f32.mrb[0].mxu0
      %v4766 = vadd.f32 0.0, %v4765
      %v4767 = vpop.f32.mrb[0].mxu0
      %v4768 = vadd.f32 0.0, %v4767
      %4769 = vmatprep.mubr.bf16.mxu0 0
      %4770 = vmatmul.mubr.bf16.gmra.mrb[0].mxu0 %v4662
      %v4771 = vpop.f32.mrb[0].mxu0
      %v4772 = vpop.f32.mrb[0].mxu0
      %v4773 = vadd.f32 0.0, %v4772
      %v4774 = vpop.f32.mrb[0].mxu0
      %v4775 = vadd.f32 0.0, %v4774
      %v4776 = vpop.f32.mrb[0].mxu0
      %4777 = vmatprep.mubr.bf16.mxu0 0
      %4778 = vmatmul.mubr.bf16.gmra.mrb[0].mxu0 %v4665
      %v4779 = vpop.f32.mrb[0].mxu0
      %v4780 = vadd.f32 0.0, %v4779
      %v4781 = vpop.f32.mrb[0].mxu0
      %v4782 = vadd.f32 0.0, %v4781
      %v4783 = vpop.f32.mrb[0].mxu0
      %v4784 = vpop.f32.mrb[0].mxu0
      %v4785 = vadd.f32 0.0, %v4784
      %4786 = vmatprep.mubr.bf16.mxu0 0
      %4787 = vmatmul.mubr.bf16.gmra.mrb[0].mxu0 %v4668
      %v4788 = vpop.f32.mrb[0].mxu0
      %v4789 = vadd.f32 0.0, %v4788
      %v4790 = vpop.f32.mrb[0].mxu0
      %v4791 = vpop.f32.mrb[0].mxu0
      %v4792 = vadd.f32 0.0, %v4791
      %v4793 = vpop.f32.mrb[0].mxu0
      %v4794 = vadd.f32 0.0, %v4793
      %4795 = vmatprep.mubr.bf16.mxu0 0
      %4796 = vmatmul.mubr.bf16.gmra.mrb[0].mxu0 %v4671
      %v4797 = vpop.f32.mrb[0].mxu0
      %v4798 = vpop.f32.mrb[0].mxu0
      %v4799 = vadd.f32 0.0, %v4798
      %v4800 = vpop.f32.mrb[0].mxu0
      %v4801 = vadd.f32 0.0, %v4800
      %v4802 = vpop.f32.mrb[0].mxu0
      %4803 = vmatprep.mubr.bf16.mxu0 0
      %4804 = vmatmul.mubr.bf16.gmra.mrb[0].mxu0 %v4674
      %v4805 = vpop.f32.mrb[0].mxu0
      %v4806 = vadd.f32 0.0, %v4805
      %v4807 = vpop.f32.mrb[0].mxu0
      %v4808 = vadd.f32 0.0, %v4807
      %v4809 = vpop.f32.mrb[0].mxu0
      %v4810 = vpop.f32.mrb[0].mxu0
      %v4811 = vadd.f32 0.0, %v4810
      %4812 = vdwg.mxu0
      %v4829 = vrot.slane %v4711, 1
      %v4830 = vrot.slane %v4714, 1
      %v4831 = vsel %vm1135, %v4829, %v4830
      %v4832 = vrot.slane %v4723, 1
      %v4833 = vrot.slane %v4728, 1
      %v4834 = vsel %vm1135, %v4832, %v4833
      %v4835 = vrot.slane %v4737, 1
      %v4836 = vrot.slane %v4740, 1
      %v4837 = vsel %vm1135, %v4835, %v4836
      %v4838 = vrot.slane %v4749, 1
      %v4839 = vrot.slane %v4754, 1
      %v4840 = vsel %vm1135, %v4838, %v4839
      %v4841 = vrot.slane %v4763, 1
      %v4842 = vrot.slane %v4766, 1
      %v4843 = vsel %vm1135, %v4841, %v4842
      %v4844 = vrot.slane %v4775, 1
      %v4845 = vrot.slane %v4780, 1
      %v4846 = vsel %vm1135, %v4844, %v4845
      %v4847 = vrot.slane %v4789, 1
      %v4848 = vrot.slane %v4792, 1
      %v4849 = vsel %vm1135, %v4847, %v4848
      %v4850 = vrot.slane %v4801, 1
      %v4851 = vrot.slane %v4806, 1
      %v4852 = vsel %vm1135, %v4850, %v4851
      %4853 = vrot.lane.b32.xlu0 %v4831, 96
      %v4854 = vpop.permute.xlu0 %4853
      %4855 = vrot.lane.b32.xlu0 %v4830, 96
      %v4856 = vpop.permute.xlu0 %4855
      %4857 = vrot.lane.b32.xlu0 %v4834, 96
      %v4858 = vpop.permute.xlu0 %4857
      %4859 = vrot.lane.b32.xlu0 %v4833, 96
      %v4860 = vpop.permute.xlu0 %4859
      %4861 = vrot.lane.b32.xlu0 %v4837, 96
      %v4862 = vpop.permute.xlu0 %4861
      %4863 = vrot.lane.b32.xlu0 %v4836, 96
      %v4864 = vpop.permute.xlu0 %4863
      %4865 = vrot.lane.b32.xlu0 %v4840, 96
      %v4866 = vpop.permute.xlu0 %4865
      %4867 = vrot.lane.b32.xlu0 %v4839, 96
      %v4868 = vpop.permute.xlu0 %4867
      %4869 = vrot.lane.b32.xlu0 %v4843, 96
      %v4870 = vpop.permute.xlu0 %4869
      %4871 = vrot.lane.b32.xlu0 %v4842, 96
      %v4872 = vpop.permute.xlu0 %4871
      %4873 = vrot.lane.b32.xlu0 %v4846, 96
      %v4874 = vpop.permute.xlu0 %4873
      %4875 = vrot.lane.b32.xlu0 %v4845, 96
      %v4876 = vpop.permute.xlu0 %4875
      %4877 = vrot.lane.b32.xlu0 %v4849, 96
      %v4878 = vpop.permute.xlu0 %4877
      %4879 = vrot.lane.b32.xlu0 %v4848, 96
      %v4880 = vpop.permute.xlu0 %4879
      %4881 = vrot.lane.b32.xlu0 %v4852, 96
      %v4882 = vpop.permute.xlu0 %4881
      %4883 = vrot.lane.b32.xlu0 %v4851, 96
      %v4884 = vpop.permute.xlu0 %4883
      %v4901 = vadd.f32 %v4711, %v4854
      %v4902 = vadd.f32 %v4714, %v4856
      %v4903 = vadd.f32 %v4723, %v4858
      %v4904 = vadd.f32 %v4728, %v4860
      %v4905 = vadd.f32 %v4737, %v4862
      %v4906 = vadd.f32 %v4740, %v4864
      %v4907 = vadd.f32 %v4749, %v4866
      %v4908 = vadd.f32 %v4754, %v4868
      %v4909 = vadd.f32 %v4763, %v4870
      %v4910 = vadd.f32 %v4766, %v4872
      %v4911 = vadd.f32 %v4775, %v4874
      %v4912 = vadd.f32 %v4780, %v4876
      %v4913 = vadd.f32 %v4789, %v4878
      %v4914 = vadd.f32 %v4792, %v4880
      %v4915 = vadd.f32 %v4801, %v4882
      %v4916 = vadd.f32 %v4806, %v4884
      %v4917 = vrot.slane %v4711, 2
      %v4918 = vrot.slane %v4714, 2
      %v4919 = vsel %vm1224, %v4917, %v4918
      %v4920 = vrot.slane %v4723, 2
      %v4921 = vrot.slane %v4728, 2
      %v4922 = vsel %vm1224, %v4920, %v4921
      %v4923 = vrot.slane %v4737, 2
      %v4924 = vrot.slane %v4740, 2
      %v4925 = vsel %vm1224, %v4923, %v4924
      %v4926 = vrot.slane %v4749, 2
      %v4927 = vrot.slane %v4754, 2
      %v4928 = vsel %vm1224, %v4926, %v4927
      %v4929 = vrot.slane %v4763, 2
      %v4930 = vrot.slane %v4766, 2
      %v4931 = vsel %vm1224, %v4929, %v4930
      %v4932 = vrot.slane %v4775, 2
      %v4933 = vrot.slane %v4780, 2
      %v4934 = vsel %vm1224, %v4932, %v4933
      %v4935 = vrot.slane %v4789, 2
      %v4936 = vrot.slane %v4792, 2
      %v4937 = vsel %vm1224, %v4935, %v4936
      %v4938 = vrot.slane %v4801, 2
      %v4939 = vrot.slane %v4806, 2
      %v4940 = vsel %vm1224, %v4938, %v4939
      %4941 = vrot.lane.b32.xlu0 %v4919, 64
      %v4942 = vpop.permute.xlu0 %4941
      %4943 = vrot.lane.b32.xlu0 %v4918, 64
      %v4944 = vpop.permute.xlu0 %4943
      %4945 = vrot.lane.b32.xlu0 %v4922, 64
      %v4946 = vpop.permute.xlu0 %4945
      %4947 = vrot.lane.b32.xlu0 %v4921, 64
      %v4948 = vpop.permute.xlu0 %4947
      %4949 = vrot.lane.b32.xlu0 %v4925, 64
      %v4950 = vpop.permute.xlu0 %4949
      %4951 = vrot.lane.b32.xlu0 %v4924, 64
      %v4952 = vpop.permute.xlu0 %4951
      %4953 = vrot.lane.b32.xlu0 %v4928, 64
      %v4954 = vpop.permute.xlu0 %4953
      %4955 = vrot.lane.b32.xlu0 %v4927, 64
      %v4956 = vpop.permute.xlu0 %4955
      %4957 = vrot.lane.b32.xlu0 %v4931, 64
      %v4958 = vpop.permute.xlu0 %4957
      %4959 = vrot.lane.b32.xlu0 %v4930, 64
      %v4960 = vpop.permute.xlu0 %4959
      %4961 = vrot.lane.b32.xlu0 %v4934, 64
      %v4962 = vpop.permute.xlu0 %4961
      %4963 = vrot.lane.b32.xlu0 %v4933, 64
      %v4964 = vpop.permute.xlu0 %4963
      %4965 = vrot.lane.b32.xlu0 %v4937, 64
      %v4966 = vpop.permute.xlu0 %4965
      %4967 = vrot.lane.b32.xlu0 %v4936, 64
      %v4968 = vpop.permute.xlu0 %4967
      %4969 = vrot.lane.b32.xlu0 %v4940, 64
      %v4970 = vpop.permute.xlu0 %4969
      %4971 = vrot.lane.b32.xlu0 %v4939, 64
      %v4972 = vpop.permute.xlu0 %4971
      %v4989 = vadd.f32 %v4901, %v4942
      %v4990 = vadd.f32 %v4902, %v4944
      %v4991 = vadd.f32 %v4903, %v4946
      %v4992 = vadd.f32 %v4904, %v4948
      %v4993 = vadd.f32 %v4905, %v4950
      %v4994 = vadd.f32 %v4906, %v4952
      %v4995 = vadd.f32 %v4907, %v4954
      %v4996 = vadd.f32 %v4908, %v4956
      %v4997 = vadd.f32 %v4909, %v4958
      %v4998 = vadd.f32 %v4910, %v4960
      %v4999 = vadd.f32 %v4911, %v4962
      %v5000 = vadd.f32 %v4912, %v4964
      %v5001 = vadd.f32 %v4913, %v4966
      %v5002 = vadd.f32 %v4914, %v4968
      %v5003 = vadd.f32 %v4915, %v4970
      %v5004 = vadd.f32 %v4916, %v4972
      %v5005 = vrot.slane %v4714, 3
      %v5006 = vrot.slane %v4728, 3
      %v5007 = vrot.slane %v4740, 3
      %v5008 = vrot.slane %v4754, 3
      %v5009 = vrot.slane %v4766, 3
      %v5010 = vrot.slane %v4780, 3
      %v5011 = vrot.slane %v4792, 3
      %v5012 = vrot.slane %v4806, 3
      %5013 = vrot.lane.b32.xlu0 %v5005, 32
      %v5014 = vpop.permute.xlu0 %5013
      %5015 = vrot.lane.b32.xlu0 %v5006, 32
      %v5016 = vpop.permute.xlu0 %5015
      %5017 = vrot.lane.b32.xlu0 %v5007, 32
      %v5018 = vpop.permute.xlu0 %5017
      %5019 = vrot.lane.b32.xlu0 %v5008, 32
      %v5020 = vpop.permute.xlu0 %5019
      %5021 = vrot.lane.b32.xlu0 %v5009, 32
      %v5022 = vpop.permute.xlu0 %5021
      %5023 = vrot.lane.b32.xlu0 %v5010, 32
      %v5024 = vpop.permute.xlu0 %5023
      %5025 = vrot.lane.b32.xlu0 %v5011, 32
      %v5026 = vpop.permute.xlu0 %5025
      %5027 = vrot.lane.b32.xlu0 %v5012, 32
      %v5028 = vpop.permute.xlu0 %5027
      %v5037 = vadd.f32 %v4989, %v5014
      %v5038 = vadd.f32 %v4990, %v5014
      %v5039 = vadd.f32 %v4991, %v5016
      %v5040 = vadd.f32 %v4992, %v5016
      %v5041 = vadd.f32 %v4993, %v5018
      %v5042 = vadd.f32 %v4994, %v5018
      %v5043 = vadd.f32 %v4995, %v5020
      %v5044 = vadd.f32 %v4996, %v5020
      %v5045 = vadd.f32 %v4997, %v5022
      %v5046 = vadd.f32 %v4998, %v5022
      %v5047 = vadd.f32 %v4999, %v5024
      %v5048 = vadd.f32 %v5000, %v5024
      %v5049 = vadd.f32 %v5001, %v5026
      %v5050 = vadd.f32 %v5002, %v5026
      %v5051 = vadd.f32 %v5003, %v5028
      %v5052 = vadd.f32 %v5004, %v5028
      %v5069 = vrot.slane %v4716, 4
      %v5070 = vrot.slane %v4721, 4
      %v5071 = vsel %vm1377, %v5069, %v5070
      %v5072 = vrot.slane %v4730, 4
      %v5073 = vrot.slane %v4733, 4
      %v5074 = vsel %vm1377, %v5072, %v5073
      %v5075 = vrot.slane %v4742, 4
      %v5076 = vrot.slane %v4747, 4
      %v5077 = vsel %vm1377, %v5075, %v5076
      %v5078 = vrot.slane %v4756, 4
      %v5079 = vrot.slane %v4759, 4
      %v5080 = vsel %vm1377, %v5078, %v5079
      %v5081 = vrot.slane %v4768, 4
      %v5082 = vrot.slane %v4773, 4
      %v5083 = vsel %vm1377, %v5081, %v5082
      %v5084 = vrot.slane %v4782, 4
      %v5085 = vrot.slane %v4785, 4
      %v5086 = vsel %vm1377, %v5084, %v5085
      %v5087 = vrot.slane %v4794, 4
      %v5088 = vrot.slane %v4799, 4
      %v5089 = vsel %vm1377, %v5087, %v5088
      %v5090 = vrot.slane %v4808, 4
      %v5091 = vrot.slane %v4811, 4
      %v5092 = vsel %vm1377, %v5090, %v5091
      %v5109 = vadd.f32 %v5037, %v5069
      %v5110 = vadd.f32 %v5038, %v5071
      %v5111 = vadd.f32 %v5039, %v5072
      %v5112 = vadd.f32 %v5040, %v5074
      %v5113 = vadd.f32 %v5041, %v5075
      %v5114 = vadd.f32 %v5042, %v5077
      %v5115 = vadd.f32 %v5043, %v5078
      %v5116 = vadd.f32 %v5044, %v5080
      %v5117 = vadd.f32 %v5045, %v5081
      %v5118 = vadd.f32 %v5046, %v5083
      %v5119 = vadd.f32 %v5047, %v5084
      %v5120 = vadd.f32 %v5048, %v5086
      %v5121 = vadd.f32 %v5049, %v5087
      %v5122 = vadd.f32 %v5050, %v5089
      %v5123 = vadd.f32 %v5051, %v5090
      %v5124 = vadd.f32 %v5052, %v5092
      %v5125 = vrot.slane %v4716, 5
      %v5126 = vrot.slane %v4721, 5
      %v5127 = vsel %vm1434, %v5125, %v5126
      %v5128 = vrot.slane %v4730, 5
      %v5129 = vrot.slane %v4733, 5
      %v5130 = vsel %vm1434, %v5128, %v5129
      %v5131 = vrot.slane %v4742, 5
      %v5132 = vrot.slane %v4747, 5
      %v5133 = vsel %vm1434, %v5131, %v5132
      %v5134 = vrot.slane %v4756, 5
      %v5135 = vrot.slane %v4759, 5
      %v5136 = vsel %vm1434, %v5134, %v5135
      %v5137 = vrot.slane %v4768, 5
      %v5138 = vrot.slane %v4773, 5
      %v5139 = vsel %vm1434, %v5137, %v5138
      %v5140 = vrot.slane %v4782, 5
      %v5141 = vrot.slane %v4785, 5
      %v5142 = vsel %vm1434, %v5140, %v5141
      %v5143 = vrot.slane %v4794, 5
      %v5144 = vrot.slane %v4799, 5
      %v5145 = vsel %vm1434, %v5143, %v5144
      %v5146 = vrot.slane %v4808, 5
      %v5147 = vrot.slane %v4811, 5
      %v5148 = vsel %vm1434, %v5146, %v5147
      %5149 = vrot.lane.b32.xlu0 %v5125, 96
      %v5150 = vpop.permute.xlu0 %5149
      %5151 = vrot.lane.b32.xlu0 %v5127, 96
      %v5152 = vpop.permute.xlu0 %5151
      %5153 = vrot.lane.b32.xlu0 %v5128, 96
      %v5154 = vpop.permute.xlu0 %5153
      %5155 = vrot.lane.b32.xlu0 %v5130, 96
      %v5156 = vpop.permute.xlu0 %5155
      %5157 = vrot.lane.b32.xlu0 %v5131, 96
      %v5158 = vpop.permute.xlu0 %5157
      %5159 = vrot.lane.b32.xlu0 %v5133, 96
      %v5160 = vpop.permute.xlu0 %5159
      %5161 = vrot.lane.b32.xlu0 %v5134, 96
      %v5162 = vpop.permute.xlu0 %5161
      %5163 = vrot.lane.b32.xlu0 %v5136, 96
      %v5164 = vpop.permute.xlu0 %5163
      %5165 = vrot.lane.b32.xlu0 %v5137, 96
      %v5166 = vpop.permute.xlu0 %5165
      %5167 = vrot.lane.b32.xlu0 %v5139, 96
      %v5168 = vpop.permute.xlu0 %5167
      %5169 = vrot.lane.b32.xlu0 %v5140, 96
      %v5170 = vpop.permute.xlu0 %5169
      %5171 = vrot.lane.b32.xlu0 %v5142, 96
      %v5172 = vpop.permute.xlu0 %5171
      %5173 = vrot.lane.b32.xlu0 %v5143, 96
      %v5174 = vpop.permute.xlu0 %5173
      %5175 = vrot.lane.b32.xlu0 %v5145, 96
      %v5176 = vpop.permute.xlu0 %5175
      %5177 = vrot.lane.b32.xlu0 %v5146, 96
      %v5178 = vpop.permute.xlu0 %5177
      %5179 = vrot.lane.b32.xlu0 %v5148, 96
      %v5180 = vpop.permute.xlu0 %5179
      %v5197 = vadd.f32 %v5109, %v5150
      %v5198 = vadd.f32 %v5110, %v5152
      %v5199 = vadd.f32 %v5111, %v5154
      %v5200 = vadd.f32 %v5112, %v5156
      %v5201 = vadd.f32 %v5113, %v5158
      %v5202 = vadd.f32 %v5114, %v5160
      %v5203 = vadd.f32 %v5115, %v5162
      %v5204 = vadd.f32 %v5116, %v5164
      %v5205 = vadd.f32 %v5117, %v5166
      %v5206 = vadd.f32 %v5118, %v5168
      %v5207 = vadd.f32 %v5119, %v5170
      %v5208 = vadd.f32 %v5120, %v5172
      %v5209 = vadd.f32 %v5121, %v5174
      %v5210 = vadd.f32 %v5122, %v5176
      %v5211 = vadd.f32 %v5123, %v5178
      %v5212 = vadd.f32 %v5124, %v5180
      %v5213 = vrot.slane %v4716, 6
      %v5214 = vrot.slane %v4721, 6
      %v5215 = vsel %vm1523, %v5213, %v5214
      %v5216 = vrot.slane %v4730, 6
      %v5217 = vrot.slane %v4733, 6
      %v5218 = vsel %vm1523, %v5216, %v5217
      %v5219 = vrot.slane %v4742, 6
      %v5220 = vrot.slane %v4747, 6
      %v5221 = vsel %vm1523, %v5219, %v5220
      %v5222 = vrot.slane %v4756, 6
      %v5223 = vrot.slane %v4759, 6
      %v5224 = vsel %vm1523, %v5222, %v5223
      %v5225 = vrot.slane %v4768, 6
      %v5226 = vrot.slane %v4773, 6
      %v5227 = vsel %vm1523, %v5225, %v5226
      %v5228 = vrot.slane %v4782, 6
      %v5229 = vrot.slane %v4785, 6
      %v5230 = vsel %vm1523, %v5228, %v5229
      %v5231 = vrot.slane %v4794, 6
      %v5232 = vrot.slane %v4799, 6
      %v5233 = vsel %vm1523, %v5231, %v5232
      %v5234 = vrot.slane %v4808, 6
      %v5235 = vrot.slane %v4811, 6
      %v5236 = vsel %vm1523, %v5234, %v5235
      %5237 = vrot.lane.b32.xlu0 %v5213, 64
      %v5238 = vpop.permute.xlu0 %5237
      %5239 = vrot.lane.b32.xlu0 %v5215, 64
      %v5240 = vpop.permute.xlu0 %5239
      %5241 = vrot.lane.b32.xlu0 %v5216, 64
      %v5242 = vpop.permute.xlu0 %5241
      %5243 = vrot.lane.b32.xlu0 %v5218, 64
      %v5244 = vpop.permute.xlu0 %5243
      %5245 = vrot.lane.b32.xlu0 %v5219, 64
      %v5246 = vpop.permute.xlu0 %5245
      %5247 = vrot.lane.b32.xlu0 %v5221, 64
      %v5248 = vpop.permute.xlu0 %5247
      %5249 = vrot.lane.b32.xlu0 %v5222, 64
      %v5250 = vpop.permute.xlu0 %5249
      %5251 = vrot.lane.b32.xlu0 %v5224, 64
      %v5252 = vpop.permute.xlu0 %5251
      %5253 = vrot.lane.b32.xlu0 %v5225, 64
      %v5254 = vpop.permute.xlu0 %5253
      %5255 = vrot.lane.b32.xlu0 %v5227, 64
      %v5256 = vpop.permute.xlu0 %5255
      %5257 = vrot.lane.b32.xlu0 %v5228, 64
      %v5258 = vpop.permute.xlu0 %5257
      %5259 = vrot.lane.b32.xlu0 %v5230, 64
      %v5260 = vpop.permute.xlu0 %5259
      %5261 = vrot.lane.b32.xlu0 %v5231, 64
      %v5262 = vpop.permute.xlu0 %5261
      %5263 = vrot.lane.b32.xlu0 %v5233, 64
      %v5264 = vpop.permute.xlu0 %5263
      %5265 = vrot.lane.b32.xlu0 %v5234, 64
      %v5266 = vpop.permute.xlu0 %5265
      %5267 = vrot.lane.b32.xlu0 %v5236, 64
      %v5268 = vpop.permute.xlu0 %5267
      %v5285 = vadd.f32 %v5197, %v5238
      %v5286 = vadd.f32 %v5198, %v5240
      %v5287 = vadd.f32 %v5199, %v5242
      %v5288 = vadd.f32 %v5200, %v5244
      %v5289 = vadd.f32 %v5201, %v5246
      %v5290 = vadd.f32 %v5202, %v5248
      %v5291 = vadd.f32 %v5203, %v5250
      %v5292 = vadd.f32 %v5204, %v5252
      %v5293 = vadd.f32 %v5205, %v5254
      %v5294 = vadd.f32 %v5206, %v5256
      %v5295 = vadd.f32 %v5207, %v5258
      %v5296 = vadd.f32 %v5208, %v5260
      %v5297 = vadd.f32 %v5209, %v5262
      %v5298 = vadd.f32 %v5210, %v5264
      %v5299 = vadd.f32 %v5211, %v5266
      %v5300 = vadd.f32 %v5212, %v5268
      %v5301 = vadd.f32 %v4560, %v5285
      %v5302 = vadd.f32 %v4561, %v5286
      %v5303 = vadd.f32 %v4562, %v5287
      %v5304 = vadd.f32 %v4563, %v5288
      %v5305 = vadd.f32 %v4564, %v5289
      %v5306 = vadd.f32 %v4565, %v5290
      %v5307 = vadd.f32 %v4566, %v5291
      %v5308 = vadd.f32 %v4567, %v5292
      %v5309 = vadd.f32 %v4568, %v5293
      %v5310 = vadd.f32 %v4569, %v5294
      %v5311 = vadd.f32 %v4570, %v5295
      %v5312 = vadd.f32 %v4571, %v5296
      %v5313 = vadd.f32 %v4572, %v5297
      %v5314 = vadd.f32 %v4573, %v5298
      %v5315 = vadd.f32 %v4574, %v5299
      %v5316 = vadd.f32 %v4575, %v5300
      %s5317 = sadd.s32 0, 6
      %s5318 = smul.u32 %s5317, 24
      %s5319 = scalar_lea.vmem [#allocation4], %s5318
      %v5320 = vld [vmem:[%s5319] sm:$0xff]
      %v5321 = vld [vmem:[%s5319 + $0x8] sm:$0xff]
      %v5322 = vld [vmem:[%s5319 + $0x10] sm:$0xff]
      %v5323 = vld [vmem:[%s5319 + $0x18] sm:$0xff]
      %v5324 = vld [vmem:[%s5319 + $0x20] sm:$0xff]
      %v5325 = vld [vmem:[%s5319 + $0x28] sm:$0xff]
      %v5326 = vld [vmem:[%s5319 + $0x30] sm:$0xff]
      %v5327 = vld [vmem:[%s5319 + $0x38] sm:$0xff]
      %v5328 = vld [vmem:[%s5319 + $0x40] sm:$0xff]
      %v5329 = vld [vmem:[%s5319 + $0x48] sm:$0xff]
      %v5330 = vld [vmem:[%s5319 + $0x50] sm:$0xff]
      %v5331 = vld [vmem:[%s5319 + $0x58] sm:$0xff]
      %v5332 = vld [vmem:[%s5319 + $0x60] sm:$0xff]
      %v5333 = vld [vmem:[%s5319 + $0x68] sm:$0xff]
      %v5334 = vld [vmem:[%s5319 + $0x70] sm:$0xff]
      %v5335 = vld [vmem:[%s5319 + $0x78] sm:$0xff]
      %v5336 = vld [vmem:[%s5319 + $0x80] sm:$0xff]
      %v5337 = vld [vmem:[%s5319 + $0x88] sm:$0xff]
      %v5338 = vld [vmem:[%s5319 + $0x90] sm:$0xff]
      %v5339 = vld [vmem:[%s5319 + $0x98] sm:$0xff]
      %v5340 = vld [vmem:[%s5319 + $0xa0] sm:$0xff]
      %v5341 = vld [vmem:[%s5319 + $0xa8] sm:$0xff]
      %v5342 = vld [vmem:[%s5319 + $0xb0] sm:$0xff]
      %v5343 = vld [vmem:[%s5319 + $0xb8] sm:$0xff]
      %v5344 = vpack.c.bf16 %v5321, %v5320
      %v5345 = vpack.c.bf16 %v5323, %v5322
      %v5346 = vpack.c.bf16 %v5325, %v5324
      %v5347 = vpack.c.bf16 %v5327, %v5326
      %v5348 = vpack.c.bf16 %v5329, %v5328
      %v5349 = vpack.c.bf16 %v5331, %v5330
      %v5350 = vpack.c.bf16 %v5333, %v5332
      %v5351 = vpack.c.bf16 %v5335, %v5334
      %v5352 = vpack.c.bf16 %v5337, %v5336
      %v5353 = vpack.c.bf16 %v5339, %v5338
      %v5354 = vpack.c.bf16 %v5341, %v5340
      %v5355 = vpack.c.bf16 %v5343, %v5342
      %s5356 = scalar_lea.vmem %s392, 192
      %v5357 = vld [vmem:[%s5356] sm:$0xff]
      %v5358 = vld [vmem:[%s5356 + $0x8] sm:$0xff]
      %v5359 = vld [vmem:[%s5356 + $0x10] sm:$0xff]
      %v5360 = vld [vmem:[%s5356 + $0x18] sm:$0xff]
      %v5365 = vunpack.c.l.b16 %v5357
      %v5366 = vunpack.c.h.b16 %v5357
      %v5367 = vunpack.c.l.b16 %v5358
      %v5368 = vunpack.c.h.b16 %v5358
      %v5369 = vunpack.c.l.b16 %v5359
      %v5370 = vunpack.c.h.b16 %v5359
      %v5371 = vunpack.c.l.b16 %v5360
      %v5372 = vunpack.c.h.b16 %v5360
      %v5373 = vpack.c.b16 %v5367, %v5365
      %v5374 = vpack.c.b16 %v5368, %v5366
      %v5375 = vpack.c.b16 %v5371, %v5369
      %v5376 = vpack.c.b16 %v5372, %v5370
      %v5382 = vsel %vm716, %v5344, 0
      %v5385 = vsel %vm716, %v5345, 0
      %v5388 = vsel %vm716, %v5346, 0
      %v5391 = vsel %vm716, %v5347, 0
      %v5394 = vsel %vm716, %v5348, 0
      %v5397 = vsel %vm716, %v5349, 0
      %v5400 = vsel %vm716, %v5350, 0
      %v5403 = vsel %vm716, %v5351, 0
      %v5406 = vsel %vm716, %v5352, 0
      %v5409 = vsel %vm716, %v5353, 0
      %v5412 = vsel %vm716, %v5354, 0
      %v5415 = vsel %vm716, %v5355, 0
      %5417 = vmatprep.subr.bf16.mxu0 %v5374
      %5418 = vmatpush1.bf16.msra.mxu0 %v5373
      %5419 = vmatprep.subr.bf16.mxu0 %v5376
      %5420 = vmatpush1.bf16.msra.mxu0 %v5375
      %5421 = vmatprep.subr.bf16.mxu0 0
      %5422 = vmatpush1.bf16.msra.mxu0 0
      %5423 = vmatprep.subr.bf16.mxu0 0
      %5424 = vmatpush1.bf16.msra.mxu0 0
      %5425 = vmatprep.subr.bf16.mxu0 0
      %5426 = vmatpush1.bf16.msra.mxu0 0
      %5427 = vmatprep.subr.bf16.mxu0 0
      %5428 = vmatpush1.bf16.msra.mxu0 0
      %5429 = vmatprep.subr.bf16.mxu0 0
      %5430 = vmatpush1.bf16.msra.mxu0 0
      %5431 = vmatprep.subr.bf16.mxu0 0
      %5432 = vmatpush1.bf16.msra.mxu0 0
      %5433 = vmatprep.subr.bf16.mxu0 0
      %5434 = vmatpush1.bf16.msra.mxu0 0
      %5435 = vmatprep.subr.bf16.mxu0 0
      %5436 = vmatpush1.bf16.msra.mxu0 0
      %5437 = vmatprep.subr.bf16.mxu0 0
      %5438 = vmatpush1.bf16.msra.mxu0 0
      %5439 = vmatprep.subr.bf16.mxu0 0
      %5440 = vmatpush1.bf16.msra.mxu0 0
      %5441 = vmatprep.subr.bf16.mxu0 0
      %5442 = vmatpush1.bf16.msra.mxu0 0
      %5443 = vmatprep.subr.bf16.mxu0 0
      %5444 = vmatpush1.bf16.msra.mxu0 0
      %5445 = vmatprep.subr.bf16.mxu0 0
      %5446 = vmatpush1.bf16.msra.mxu0 0
      %5447 = vmatprep.subr.bf16.mxu0 0
      %5448 = vmatpush1.bf16.msra.mxu0 0
      %5449 = vmatprep.mubr.bf16.mxu0 0
      %5450 = vmatmul.mubr.bf16.gmra.mrb[0].mxu0 %v5382
      %v5451 = vpop.f32.mrb[0].mxu0
      %v5452 = vadd.f32 0.0, %v5451
      %v5453 = vpop.f32.mrb[0].mxu0
      %v5454 = vpop.f32.mrb[0].mxu0
      %v5455 = vadd.f32 0.0, %v5454
      %v5456 = vpop.f32.mrb[0].mxu0
      %v5457 = vadd.f32 0.0, %v5456
      %5458 = vmatprep.mubr.bf16.mxu0 0
      %5459 = vmatmul.mubr.bf16.gmra.mrb[0].mxu0 %v5385
      %v5460 = vpop.f32.mrb[0].mxu0
      %v5461 = vpop.f32.mrb[0].mxu0
      %v5462 = vadd.f32 0.0, %v5461
      %v5463 = vpop.f32.mrb[0].mxu0
      %v5464 = vadd.f32 0.0, %v5463
      %v5465 = vpop.f32.mrb[0].mxu0
      %5466 = vmatprep.mubr.bf16.mxu0 0
      %5467 = vmatmul.mubr.bf16.gmra.mrb[0].mxu0 %v5388
      %v5468 = vpop.f32.mrb[0].mxu0
      %v5469 = vadd.f32 0.0, %v5468
      %v5470 = vpop.f32.mrb[0].mxu0
      %v5471 = vadd.f32 0.0, %v5470
      %v5472 = vpop.f32.mrb[0].mxu0
      %v5473 = vpop.f32.mrb[0].mxu0
      %v5474 = vadd.f32 0.0, %v5473
      %5475 = vmatprep.mubr.bf16.mxu0 0
      %5476 = vmatmul.mubr.bf16.gmra.mrb[0].mxu0 %v5391
      %v5477 = vpop.f32.mrb[0].mxu0
      %v5478 = vadd.f32 0.0, %v5477
      %v5479 = vpop.f32.mrb[0].mxu0
      %v5480 = vpop.f32.mrb[0].mxu0
      %v5481 = vadd.f32 0.0, %v5480
      %v5482 = vpop.f32.mrb[0].mxu0
      %v5483 = vadd.f32 0.0, %v5482
      %5484 = vmatprep.mubr.bf16.mxu0 0
      %5485 = vmatmul.mubr.bf16.gmra.mrb[0].mxu0 %v5394
      %v5486 = vpop.f32.mrb[0].mxu0
      %v5487 = vpop.f32.mrb[0].mxu0
      %v5488 = vadd.f32 0.0, %v5487
      %v5489 = vpop.f32.mrb[0].mxu0
      %v5490 = vadd.f32 0.0, %v5489
      %v5491 = vpop.f32.mrb[0].mxu0
      %5492 = vmatprep.mubr.bf16.mxu0 0
      %5493 = vmatmul.mubr.bf16.gmra.mrb[0].mxu0 %v5397
      %v5494 = vpop.f32.mrb[0].mxu0
      %v5495 = vadd.f32 0.0, %v5494
      %v5496 = vpop.f32.mrb[0].mxu0
      %v5497 = vadd.f32 0.0, %v5496
      %v5498 = vpop.f32.mrb[0].mxu0
      %v5499 = vpop.f32.mrb[0].mxu0
      %v5500 = vadd.f32 0.0, %v5499
      %5501 = vmatprep.mubr.bf16.mxu0 0
      %5502 = vmatmul.mubr.bf16.gmra.mrb[0].mxu0 %v5400
      %v5503 = vpop.f32.mrb[0].mxu0
      %v5504 = vadd.f32 0.0, %v5503
      %v5505 = vpop.f32.mrb[0].mxu0
      %v5506 = vpop.f32.mrb[0].mxu0
      %v5507 = vadd.f32 0.0, %v5506
      %v5508 = vpop.f32.mrb[0].mxu0
      %v5509 = vadd.f32 0.0, %v5508
      %5510 = vmatprep.mubr.bf16.mxu0 0
      %5511 = vmatmul.mubr.bf16.gmra.mrb[0].mxu0 %v5403
      %v5512 = vpop.f32.mrb[0].mxu0
      %v5513 = vpop.f32.mrb[0].mxu0
      %v5514 = vadd.f32 0.0, %v5513
      %v5515 = vpop.f32.mrb[0].mxu0
      %v5516 = vadd.f32 0.0, %v5515
      %v5517 = vpop.f32.mrb[0].mxu0
      %5518 = vmatprep.mubr.bf16.mxu0 0
      %5519 = vmatmul.mubr.bf16.gmra.mrb[0].mxu0 %v5406
      %v5520 = vpop.f32.mrb[0].mxu0
      %v5521 = vadd.f32 0.0, %v5520
      %v5522 = vpop.f32.mrb[0].mxu0
      %v5523 = vadd.f32 0.0, %v5522
      %v5524 = vpop.f32.mrb[0].mxu0
      %v5525 = vpop.f32.mrb[0].mxu0
      %v5526 = vadd.f32 0.0, %v5525
      %5527 = vmatprep.mubr.bf16.mxu0 0
      %5528 = vmatmul.mubr.bf16.gmra.mrb[0].mxu0 %v5409
      %v5529 = vpop.f32.mrb[0].mxu0
      %v5530 = vadd.f32 0.0, %v5529
      %v5531 = vpop.f32.mrb[0].mxu0
      %v5532 = vpop.f32.mrb[0].mxu0
      %v5533 = vadd.f32 0.0, %v5532
      %v5534 = vpop.f32.mrb[0].mxu0
      %v5535 = vadd.f32 0.0, %v5534
      %5536 = vmatprep.mubr.bf16.mxu0 0
      %5537 = vmatmul.mubr.bf16.gmra.mrb[0].mxu0 %v5412
      %v5538 = vpop.f32.mrb[0].mxu0
      %v5539 = vpop.f32.mrb[0].mxu0
      %v5540 = vadd.f32 0.0, %v5539
      %v5541 = vpop.f32.mrb[0].mxu0
      %v5542 = vadd.f32 0.0, %v5541
      %v5543 = vpop.f32.mrb[0].mxu0
      %5544 = vmatprep.mubr.bf16.mxu0 0
      %5545 = vmatmul.mubr.bf16.gmra.mrb[0].mxu0 %v5415
      %v5546 = vpop.f32.mrb[0].mxu0
      %v5547 = vadd.f32 0.0, %v5546
      %v5548 = vpop.f32.mrb[0].mxu0
      %v5549 = vadd.f32 0.0, %v5548
      %v5550 = vpop.f32.mrb[0].mxu0
      %v5551 = vpop.f32.mrb[0].mxu0
      %v5552 = vadd.f32 0.0, %v5551
      %5553 = vdwg.mxu0
      %v5570 = vrot.slane %v5452, 1
      %v5571 = vrot.slane %v5455, 1
      %v5572 = vsel %vm1135, %v5570, %v5571
      %v5573 = vrot.slane %v5464, 1
      %v5574 = vrot.slane %v5469, 1
      %v5575 = vsel %vm1135, %v5573, %v5574
      %v5576 = vrot.slane %v5478, 1
      %v5577 = vrot.slane %v5481, 1
      %v5578 = vsel %vm1135, %v5576, %v5577
      %v5579 = vrot.slane %v5490, 1
      %v5580 = vrot.slane %v5495, 1
      %v5581 = vsel %vm1135, %v5579, %v5580
      %v5582 = vrot.slane %v5504, 1
      %v5583 = vrot.slane %v5507, 1
      %v5584 = vsel %vm1135, %v5582, %v5583
      %v5585 = vrot.slane %v5516, 1
      %v5586 = vrot.slane %v5521, 1
      %v5587 = vsel %vm1135, %v5585, %v5586
      %v5588 = vrot.slane %v5530, 1
      %v5589 = vrot.slane %v5533, 1
      %v5590 = vsel %vm1135, %v5588, %v5589
      %v5591 = vrot.slane %v5542, 1
      %v5592 = vrot.slane %v5547, 1
      %v5593 = vsel %vm1135, %v5591, %v5592
      %5594 = vrot.lane.b32.xlu0 %v5572, 96
      %v5595 = vpop.permute.xlu0 %5594
      %5596 = vrot.lane.b32.xlu0 %v5571, 96
      %v5597 = vpop.permute.xlu0 %5596
      %5598 = vrot.lane.b32.xlu0 %v5575, 96
      %v5599 = vpop.permute.xlu0 %5598
      %5600 = vrot.lane.b32.xlu0 %v5574, 96
      %v5601 = vpop.permute.xlu0 %5600
      %5602 = vrot.lane.b32.xlu0 %v5578, 96
      %v5603 = vpop.permute.xlu0 %5602
      %5604 = vrot.lane.b32.xlu0 %v5577, 96
      %v5605 = vpop.permute.xlu0 %5604
      %5606 = vrot.lane.b32.xlu0 %v5581, 96
      %v5607 = vpop.permute.xlu0 %5606
      %5608 = vrot.lane.b32.xlu0 %v5580, 96
      %v5609 = vpop.permute.xlu0 %5608
      %5610 = vrot.lane.b32.xlu0 %v5584, 96
      %v5611 = vpop.permute.xlu0 %5610
      %5612 = vrot.lane.b32.xlu0 %v5583, 96
      %v5613 = vpop.permute.xlu0 %5612
      %5614 = vrot.lane.b32.xlu0 %v5587, 96
      %v5615 = vpop.permute.xlu0 %5614
      %5616 = vrot.lane.b32.xlu0 %v5586, 96
      %v5617 = vpop.permute.xlu0 %5616
      %5618 = vrot.lane.b32.xlu0 %v5590, 96
      %v5619 = vpop.permute.xlu0 %5618
      %5620 = vrot.lane.b32.xlu0 %v5589, 96
      %v5621 = vpop.permute.xlu0 %5620
      %5622 = vrot.lane.b32.xlu0 %v5593, 96
      %v5623 = vpop.permute.xlu0 %5622
      %5624 = vrot.lane.b32.xlu0 %v5592, 96
      %v5625 = vpop.permute.xlu0 %5624
      %v5642 = vadd.f32 %v5452, %v5595
      %v5643 = vadd.f32 %v5455, %v5597
      %v5644 = vadd.f32 %v5464, %v5599
      %v5645 = vadd.f32 %v5469, %v5601
      %v5646 = vadd.f32 %v5478, %v5603
      %v5647 = vadd.f32 %v5481, %v5605
      %v5648 = vadd.f32 %v5490, %v5607
      %v5649 = vadd.f32 %v5495, %v5609
      %v5650 = vadd.f32 %v5504, %v5611
      %v5651 = vadd.f32 %v5507, %v5613
      %v5652 = vadd.f32 %v5516, %v5615
      %v5653 = vadd.f32 %v5521, %v5617
      %v5654 = vadd.f32 %v5530, %v5619
      %v5655 = vadd.f32 %v5533, %v5621
      %v5656 = vadd.f32 %v5542, %v5623
      %v5657 = vadd.f32 %v5547, %v5625
      %v5658 = vrot.slane %v5452, 2
      %v5659 = vrot.slane %v5455, 2
      %v5660 = vsel %vm1224, %v5658, %v5659
      %v5661 = vrot.slane %v5464, 2
      %v5662 = vrot.slane %v5469, 2
      %v5663 = vsel %vm1224, %v5661, %v5662
      %v5664 = vrot.slane %v5478, 2
      %v5665 = vrot.slane %v5481, 2
      %v5666 = vsel %vm1224, %v5664, %v5665
      %v5667 = vrot.slane %v5490, 2
      %v5668 = vrot.slane %v5495, 2
      %v5669 = vsel %vm1224, %v5667, %v5668
      %v5670 = vrot.slane %v5504, 2
      %v5671 = vrot.slane %v5507, 2
      %v5672 = vsel %vm1224, %v5670, %v5671
      %v5673 = vrot.slane %v5516, 2
      %v5674 = vrot.slane %v5521, 2
      %v5675 = vsel %vm1224, %v5673, %v5674
      %v5676 = vrot.slane %v5530, 2
      %v5677 = vrot.slane %v5533, 2
      %v5678 = vsel %vm1224, %v5676, %v5677
      %v5679 = vrot.slane %v5542, 2
      %v5680 = vrot.slane %v5547, 2
      %v5681 = vsel %vm1224, %v5679, %v5680
      %5682 = vrot.lane.b32.xlu0 %v5660, 64
      %v5683 = vpop.permute.xlu0 %5682
      %5684 = vrot.lane.b32.xlu0 %v5659, 64
      %v5685 = vpop.permute.xlu0 %5684
      %5686 = vrot.lane.b32.xlu0 %v5663, 64
      %v5687 = vpop.permute.xlu0 %5686
      %5688 = vrot.lane.b32.xlu0 %v5662, 64
      %v5689 = vpop.permute.xlu0 %5688
      %5690 = vrot.lane.b32.xlu0 %v5666, 64
      %v5691 = vpop.permute.xlu0 %5690
      %5692 = vrot.lane.b32.xlu0 %v5665, 64
      %v5693 = vpop.permute.xlu0 %5692
      %5694 = vrot.lane.b32.xlu0 %v5669, 64
      %v5695 = vpop.permute.xlu0 %5694
      %5696 = vrot.lane.b32.xlu0 %v5668, 64
      %v5697 = vpop.permute.xlu0 %5696
      %5698 = vrot.lane.b32.xlu0 %v5672, 64
      %v5699 = vpop.permute.xlu0 %5698
      %5700 = vrot.lane.b32.xlu0 %v5671, 64
      %v5701 = vpop.permute.xlu0 %5700
      %5702 = vrot.lane.b32.xlu0 %v5675, 64
      %v5703 = vpop.permute.xlu0 %5702
      %5704 = vrot.lane.b32.xlu0 %v5674, 64
      %v5705 = vpop.permute.xlu0 %5704
      %5706 = vrot.lane.b32.xlu0 %v5678, 64
      %v5707 = vpop.permute.xlu0 %5706
      %5708 = vrot.lane.b32.xlu0 %v5677, 64
      %v5709 = vpop.permute.xlu0 %5708
      %5710 = vrot.lane.b32.xlu0 %v5681, 64
      %v5711 = vpop.permute.xlu0 %5710
      %5712 = vrot.lane.b32.xlu0 %v5680, 64
      %v5713 = vpop.permute.xlu0 %5712
      %v5730 = vadd.f32 %v5642, %v5683
      %v5731 = vadd.f32 %v5643, %v5685
      %v5732 = vadd.f32 %v5644, %v5687
      %v5733 = vadd.f32 %v5645, %v5689
      %v5734 = vadd.f32 %v5646, %v5691
      %v5735 = vadd.f32 %v5647, %v5693
      %v5736 = vadd.f32 %v5648, %v5695
      %v5737 = vadd.f32 %v5649, %v5697
      %v5738 = vadd.f32 %v5650, %v5699
      %v5739 = vadd.f32 %v5651, %v5701
      %v5740 = vadd.f32 %v5652, %v5703
      %v5741 = vadd.f32 %v5653, %v5705
      %v5742 = vadd.f32 %v5654, %v5707
      %v5743 = vadd.f32 %v5655, %v5709
      %v5744 = vadd.f32 %v5656, %v5711
      %v5745 = vadd.f32 %v5657, %v5713
      %v5746 = vrot.slane %v5455, 3
      %v5747 = vrot.slane %v5469, 3
      %v5748 = vrot.slane %v5481, 3
      %v5749 = vrot.slane %v5495, 3
      %v5750 = vrot.slane %v5507, 3
      %v5751 = vrot.slane %v5521, 3
      %v5752 = vrot.slane %v5533, 3
      %v5753 = vrot.slane %v5547, 3
      %5754 = vrot.lane.b32.xlu0 %v5746, 32
      %v5755 = vpop.permute.xlu0 %5754
      %5756 = vrot.lane.b32.xlu0 %v5747, 32
      %v5757 = vpop.permute.xlu0 %5756
      %5758 = vrot.lane.b32.xlu0 %v5748, 32
      %v5759 = vpop.permute.xlu0 %5758
      %5760 = vrot.lane.b32.xlu0 %v5749, 32
      %v5761 = vpop.permute.xlu0 %5760
      %5762 = vrot.lane.b32.xlu0 %v5750, 32
      %v5763 = vpop.permute.xlu0 %5762
      %5764 = vrot.lane.b32.xlu0 %v5751, 32
      %v5765 = vpop.permute.xlu0 %5764
      %5766 = vrot.lane.b32.xlu0 %v5752, 32
      %v5767 = vpop.permute.xlu0 %5766
      %5768 = vrot.lane.b32.xlu0 %v5753, 32
      %v5769 = vpop.permute.xlu0 %5768
      %v5778 = vadd.f32 %v5730, %v5755
      %v5779 = vadd.f32 %v5731, %v5755
      %v5780 = vadd.f32 %v5732, %v5757
      %v5781 = vadd.f32 %v5733, %v5757
      %v5782 = vadd.f32 %v5734, %v5759
      %v5783 = vadd.f32 %v5735, %v5759
      %v5784 = vadd.f32 %v5736, %v5761
      %v5785 = vadd.f32 %v5737, %v5761
      %v5786 = vadd.f32 %v5738, %v5763
      %v5787 = vadd.f32 %v5739, %v5763
      %v5788 = vadd.f32 %v5740, %v5765
      %v5789 = vadd.f32 %v5741, %v5765
      %v5790 = vadd.f32 %v5742, %v5767
      %v5791 = vadd.f32 %v5743, %v5767
      %v5792 = vadd.f32 %v5744, %v5769
      %v5793 = vadd.f32 %v5745, %v5769
      %v5810 = vrot.slane %v5457, 4
      %v5811 = vrot.slane %v5462, 4
      %v5812 = vsel %vm1377, %v5810, %v5811
      %v5813 = vrot.slane %v5471, 4
      %v5814 = vrot.slane %v5474, 4
      %v5815 = vsel %vm1377, %v5813, %v5814
      %v5816 = vrot.slane %v5483, 4
      %v5817 = vrot.slane %v5488, 4
      %v5818 = vsel %vm1377, %v5816, %v5817
      %v5819 = vrot.slane %v5497, 4
      %v5820 = vrot.slane %v5500, 4
      %v5821 = vsel %vm1377, %v5819, %v5820
      %v5822 = vrot.slane %v5509, 4
      %v5823 = vrot.slane %v5514, 4
      %v5824 = vsel %vm1377, %v5822, %v5823
      %v5825 = vrot.slane %v5523, 4
      %v5826 = vrot.slane %v5526, 4
      %v5827 = vsel %vm1377, %v5825, %v5826
      %v5828 = vrot.slane %v5535, 4
      %v5829 = vrot.slane %v5540, 4
      %v5830 = vsel %vm1377, %v5828, %v5829
      %v5831 = vrot.slane %v5549, 4
      %v5832 = vrot.slane %v5552, 4
      %v5833 = vsel %vm1377, %v5831, %v5832
      %v5850 = vadd.f32 %v5778, %v5810
      %v5851 = vadd.f32 %v5779, %v5812
      %v5852 = vadd.f32 %v5780, %v5813
      %v5853 = vadd.f32 %v5781, %v5815
      %v5854 = vadd.f32 %v5782, %v5816
      %v5855 = vadd.f32 %v5783, %v5818
      %v5856 = vadd.f32 %v5784, %v5819
      %v5857 = vadd.f32 %v5785, %v5821
      %v5858 = vadd.f32 %v5786, %v5822
      %v5859 = vadd.f32 %v5787, %v5824
      %v5860 = vadd.f32 %v5788, %v5825
      %v5861 = vadd.f32 %v5789, %v5827
      %v5862 = vadd.f32 %v5790, %v5828
      %v5863 = vadd.f32 %v5791, %v5830
      %v5864 = vadd.f32 %v5792, %v5831
      %v5865 = vadd.f32 %v5793, %v5833
      %v5866 = vrot.slane %v5457, 5
      %v5867 = vrot.slane %v5462, 5
      %v5868 = vsel %vm1434, %v5866, %v5867
      %v5869 = vrot.slane %v5471, 5
      %v5870 = vrot.slane %v5474, 5
      %v5871 = vsel %vm1434, %v5869, %v5870
      %v5872 = vrot.slane %v5483, 5
      %v5873 = vrot.slane %v5488, 5
      %v5874 = vsel %vm1434, %v5872, %v5873
      %v5875 = vrot.slane %v5497, 5
      %v5876 = vrot.slane %v5500, 5
      %v5877 = vsel %vm1434, %v5875, %v5876
      %v5878 = vrot.slane %v5509, 5
      %v5879 = vrot.slane %v5514, 5
      %v5880 = vsel %vm1434, %v5878, %v5879
      %v5881 = vrot.slane %v5523, 5
      %v5882 = vrot.slane %v5526, 5
      %v5883 = vsel %vm1434, %v5881, %v5882
      %v5884 = vrot.slane %v5535, 5
      %v5885 = vrot.slane %v5540, 5
      %v5886 = vsel %vm1434, %v5884, %v5885
      %v5887 = vrot.slane %v5549, 5
      %v5888 = vrot.slane %v5552, 5
      %v5889 = vsel %vm1434, %v5887, %v5888
      %5890 = vrot.lane.b32.xlu0 %v5866, 96
      %v5891 = vpop.permute.xlu0 %5890
      %5892 = vrot.lane.b32.xlu0 %v5868, 96
      %v5893 = vpop.permute.xlu0 %5892
      %5894 = vrot.lane.b32.xlu0 %v5869, 96
      %v5895 = vpop.permute.xlu0 %5894
      %5896 = vrot.lane.b32.xlu0 %v5871, 96
      %v5897 = vpop.permute.xlu0 %5896
      %5898 = vrot.lane.b32.xlu0 %v5872, 96
      %v5899 = vpop.permute.xlu0 %5898
      %5900 = vrot.lane.b32.xlu0 %v5874, 96
      %v5901 = vpop.permute.xlu0 %5900
      %5902 = vrot.lane.b32.xlu0 %v5875, 96
      %v5903 = vpop.permute.xlu0 %5902
      %5904 = vrot.lane.b32.xlu0 %v5877, 96
      %v5905 = vpop.permute.xlu0 %5904
      %5906 = vrot.lane.b32.xlu0 %v5878, 96
      %v5907 = vpop.permute.xlu0 %5906
      %5908 = vrot.lane.b32.xlu0 %v5880, 96
      %v5909 = vpop.permute.xlu0 %5908
      %5910 = vrot.lane.b32.xlu0 %v5881, 96
      %v5911 = vpop.permute.xlu0 %5910
      %5912 = vrot.lane.b32.xlu0 %v5883, 96
      %v5913 = vpop.permute.xlu0 %5912
      %5914 = vrot.lane.b32.xlu0 %v5884, 96
      %v5915 = vpop.permute.xlu0 %5914
      %5916 = vrot.lane.b32.xlu0 %v5886, 96
      %v5917 = vpop.permute.xlu0 %5916
      %5918 = vrot.lane.b32.xlu0 %v5887, 96
      %v5919 = vpop.permute.xlu0 %5918
      %5920 = vrot.lane.b32.xlu0 %v5889, 96
      %v5921 = vpop.permute.xlu0 %5920
      %v5938 = vadd.f32 %v5850, %v5891
      %v5939 = vadd.f32 %v5851, %v5893
      %v5940 = vadd.f32 %v5852, %v5895
      %v5941 = vadd.f32 %v5853, %v5897
      %v5942 = vadd.f32 %v5854, %v5899
      %v5943 = vadd.f32 %v5855, %v5901
      %v5944 = vadd.f32 %v5856, %v5903
      %v5945 = vadd.f32 %v5857, %v5905
      %v5946 = vadd.f32 %v5858, %v5907
      %v5947 = vadd.f32 %v5859, %v5909
      %v5948 = vadd.f32 %v5860, %v5911
      %v5949 = vadd.f32 %v5861, %v5913
      %v5950 = vadd.f32 %v5862, %v5915
      %v5951 = vadd.f32 %v5863, %v5917
      %v5952 = vadd.f32 %v5864, %v5919
      %v5953 = vadd.f32 %v5865, %v5921
      %v5954 = vrot.slane %v5457, 6
      %v5955 = vrot.slane %v5462, 6
      %v5956 = vsel %vm1523, %v5954, %v5955
      %v5957 = vrot.slane %v5471, 6
      %v5958 = vrot.slane %v5474, 6
      %v5959 = vsel %vm1523, %v5957, %v5958
      %v5960 = vrot.slane %v5483, 6
      %v5961 = vrot.slane %v5488, 6
      %v5962 = vsel %vm1523, %v5960, %v5961
      %v5963 = vrot.slane %v5497, 6
      %v5964 = vrot.slane %v5500, 6
      %v5965 = vsel %vm1523, %v5963, %v5964
      %v5966 = vrot.slane %v5509, 6
      %v5967 = vrot.slane %v5514, 6
      %v5968 = vsel %vm1523, %v5966, %v5967
      %v5969 = vrot.slane %v5523, 6
      %v5970 = vrot.slane %v5526, 6
      %v5971 = vsel %vm1523, %v5969, %v5970
      %v5972 = vrot.slane %v5535, 6
      %v5973 = vrot.slane %v5540, 6
      %v5974 = vsel %vm1523, %v5972, %v5973
      %v5975 = vrot.slane %v5549, 6
      %v5976 = vrot.slane %v5552, 6
      %v5977 = vsel %vm1523, %v5975, %v5976
      %5978 = vrot.lane.b32.xlu0 %v5954, 64
      %v5979 = vpop.permute.xlu0 %5978
      %5980 = vrot.lane.b32.xlu0 %v5956, 64
      %v5981 = vpop.permute.xlu0 %5980
      %5982 = vrot.lane.b32.xlu0 %v5957, 64
      %v5983 = vpop.permute.xlu0 %5982
      %5984 = vrot.lane.b32.xlu0 %v5959, 64
      %v5985 = vpop.permute.xlu0 %5984
      %5986 = vrot.lane.b32.xlu0 %v5960, 64
      %v5987 = vpop.permute.xlu0 %5986
      %5988 = vrot.lane.b32.xlu0 %v5962, 64
      %v5989 = vpop.permute.xlu0 %5988
      %5990 = vrot.lane.b32.xlu0 %v5963, 64
      %v5991 = vpop.permute.xlu0 %5990
      %5992 = vrot.lane.b32.xlu0 %v5965, 64
      %v5993 = vpop.permute.xlu0 %5992
      %5994 = vrot.lane.b32.xlu0 %v5966, 64
      %v5995 = vpop.permute.xlu0 %5994
      %5996 = vrot.lane.b32.xlu0 %v5968, 64
      %v5997 = vpop.permute.xlu0 %5996
      %5998 = vrot.lane.b32.xlu0 %v5969, 64
      %v5999 = vpop.permute.xlu0 %5998
      %6000 = vrot.lane.b32.xlu0 %v5971, 64
      %v6001 = vpop.permute.xlu0 %6000
      %6002 = vrot.lane.b32.xlu0 %v5972, 64
      %v6003 = vpop.permute.xlu0 %6002
      %6004 = vrot.lane.b32.xlu0 %v5974, 64
      %v6005 = vpop.permute.xlu0 %6004
      %6006 = vrot.lane.b32.xlu0 %v5975, 64
      %v6007 = vpop.permute.xlu0 %6006
      %6008 = vrot.lane.b32.xlu0 %v5977, 64
      %v6009 = vpop.permute.xlu0 %6008
      %v6026 = vadd.f32 %v5938, %v5979
      %v6027 = vadd.f32 %v5939, %v5981
      %v6028 = vadd.f32 %v5940, %v5983
      %v6029 = vadd.f32 %v5941, %v5985
      %v6030 = vadd.f32 %v5942, %v5987
      %v6031 = vadd.f32 %v5943, %v5989
      %v6032 = vadd.f32 %v5944, %v5991
      %v6033 = vadd.f32 %v5945, %v5993
      %v6034 = vadd.f32 %v5946, %v5995
      %v6035 = vadd.f32 %v5947, %v5997
      %v6036 = vadd.f32 %v5948, %v5999
      %v6037 = vadd.f32 %v5949, %v6001
      %v6038 = vadd.f32 %v5950, %v6003
      %v6039 = vadd.f32 %v5951, %v6005
      %v6040 = vadd.f32 %v5952, %v6007
      %v6041 = vadd.f32 %v5953, %v6009
      %v6042 = vadd.f32 %v5301, %v6026
      %v6043 = vadd.f32 %v5302, %v6027
      %v6044 = vadd.f32 %v5303, %v6028
      %v6045 = vadd.f32 %v5304, %v6029
      %v6046 = vadd.f32 %v5305, %v6030
      %v6047 = vadd.f32 %v5306, %v6031
      %v6048 = vadd.f32 %v5307, %v6032
      %v6049 = vadd.f32 %v5308, %v6033
      %v6050 = vadd.f32 %v5309, %v6034
      %v6051 = vadd.f32 %v5310, %v6035
      %v6052 = vadd.f32 %v5311, %v6036
      %v6053 = vadd.f32 %v5312, %v6037
      %v6054 = vadd.f32 %v5313, %v6038
      %v6055 = vadd.f32 %v5314, %v6039
      %v6056 = vadd.f32 %v5315, %v6040
      %v6057 = vadd.f32 %v5316, %v6041
      %s6058 = smul.u32 0, 8
      %s6059 = scalar_lea.vmem [#allocation3], %s6058
      %vm6060 = vcmask 261125
      %6061 = vst.msk [vmem:[%s6059 - $0x5] sm:$0xe0] %vm6060, %v6042
      %vm6062 = vcmask 258048
      %6063 = vst.msk [vmem:[%s6059 + $0x3] sm:$0x1f] %vm6062, %v6043
      %6064 = vst.msk [vmem:[%s6059 + $0x3] sm:$0xe0] %vm6060, %v6044
      %6065 = vst.msk [vmem:[%s6059 + $0xb] sm:$0x1f] %vm6062, %v6045
      %6066 = vst.msk [vmem:[%s6059 + $0xb] sm:$0xe0] %vm6060, %v6046
      %6067 = vst.msk [vmem:[%s6059 + $0x13] sm:$0x1f] %vm6062, %v6047
      %6068 = vst.msk [vmem:[%s6059 + $0x13] sm:$0xe0] %vm6060, %v6048
      %6069 = vst.msk [vmem:[%s6059 + $0x1b] sm:$0x1f] %vm6062, %v6049
      %6070 = vst.msk [vmem:[%s6059 + $0x1b] sm:$0xe0] %vm6060, %v6050
      %6071 = vst.msk [vmem:[%s6059 + $0x23] sm:$0x1f] %vm6062, %v6051
      %6072 = vst.msk [vmem:[%s6059 + $0x23] sm:$0xe0] %vm6060, %v6052
      %6073 = vst.msk [vmem:[%s6059 + $0x2b] sm:$0x1f] %vm6062, %v6053
      %6074 = vst.msk [vmem:[%s6059 + $0x2b] sm:$0xe0] %vm6060, %v6054
      %6075 = vst.msk [vmem:[%s6059 + $0x33] sm:$0x1f] %vm6062, %v6055
      %6076 = vst.msk [vmem:[%s6059 + $0x33] sm:$0xe0] %vm6060, %v6056
      %6077 = vst.msk [vmem:[%s6059 + $0x3b] sm:$0x1f] %vm6062, %v6057
      %v6078 = vld [vmem:[#allocation3] sm:$0xff]
      %v6079 = vld [vmem:[#allocation3 + $0x8] sm:$0xff]
      %v6080 = vld [vmem:[#allocation3 + $0x10] sm:$0xff]
      %v6081 = vld [vmem:[#allocation3 + $0x18] sm:$0xff]
      %v6082 = vld [vmem:[#allocation3 + $0x20] sm:$0xff]
      %v6083 = vld [vmem:[#allocation3 + $0x28] sm:$0xff]
      %v6084 = vld [vmem:[#allocation3 + $0x30] sm:$0xff]
      %v6085 = vld [vmem:[#allocation3 + $0x38] sm:$0xff]
      %v6086 = vsel %vm716, %v6078, 0.0
      %v6087 = vsel %vm716, %v6079, 0.0
      %v6088 = vadd.f32 %v6086, %v6087
      %v6089 = vsel %vm716, %v6080, 0.0
      %v6090 = vadd.f32 %v6088, %v6089
      %v6091 = vsel %vm716, %v6081, 0.0
      %v6092 = vadd.f32 %v6090, %v6091
      %v6093 = vsel %vm716, %v6082, 0.0
      %v6094 = vadd.f32 %v6092, %v6093
      %v6095 = vsel %vm716, %v6083, 0.0
      %v6096 = vadd.f32 %v6094, %v6095
      %v6097 = vsel %vm716, %v6084, 0.0
      %v6098 = vadd.f32 %v6096, %v6097
      %v6099 = vsel %vm716, %v6085, 0.0
      %v6100 = vadd.f32 %v6098, %v6099
      %v6101 = vrot.slane %v6100, 4
      %v6102 = vadd.f32 %v6100, %v6101
      %v6103 = vrot.slane %v6102, 2
      %v6104 = vadd.f32 %v6102, %v6103
      %v6105 = vrot.slane %v6104, 1
      %v6106 = vadd.f32 %v6104, %v6105
      %v6107 = vmul.f32 %v6078, %v6078
      %v6108 = vmul.f32 %v6079, %v6079
      %v6109 = vmul.f32 %v6080, %v6080
      %v6110 = vmul.f32 %v6081, %v6081
      %v6111 = vmul.f32 %v6082, %v6082
      %v6112 = vmul.f32 %v6083, %v6083
      %v6113 = vmul.f32 %v6084, %v6084
      %v6114 = vmul.f32 %v6085, %v6085
      %v6115 = vsel %vm716, %v6107, 0.0
      %v6116 = vsel %vm716, %v6108, 0.0
      %v6117 = vadd.f32 %v6115, %v6116
      %v6118 = vsel %vm716, %v6109, 0.0
      %v6119 = vadd.f32 %v6117, %v6118
      %v6120 = vsel %vm716, %v6110, 0.0
      %v6121 = vadd.f32 %v6119, %v6120
      %v6122 = vsel %vm716, %v6111, 0.0
      %v6123 = vadd.f32 %v6121, %v6122
      %v6124 = vsel %vm716, %v6112, 0.0
      %v6125 = vadd.f32 %v6123, %v6124
      %v6126 = vsel %vm716, %v6113, 0.0
      %v6127 = vadd.f32 %v6125, %v6126
      %v6128 = vsel %vm716, %v6114, 0.0
      %v6129 = vadd.f32 %v6127, %v6128
      %v6130 = vrot.slane %v6129, 4
      %v6131 = vadd.f32 %v6129, %v6130
      %v6132 = vrot.slane %v6131, 2
      %v6133 = vadd.f32 %v6131, %v6132
      %v6134 = vrot.slane %v6133, 1
      %v6135 = vadd.f32 %v6133, %v6134
      %v6136 = vmul.f32 %v6106, 0.015625
      %v6137 = vmul.f32 %v6135, 0.015625
      %v6138 = vmul.f32 %v6136, %v6136
      %v6139 = vsub.f32 %v6137, %v6138
      %v6140 = vmax.f32 %v6139, 0.0
      %v6141 = vsub.f32 %v6078, %v6136
      %v6142 = vsub.f32 %v6079, %v6136
      %v6143 = vsub.f32 %v6080, %v6136
      %v6144 = vsub.f32 %v6081, %v6136
      %v6145 = vsub.f32 %v6082, %v6136
      %v6146 = vsub.f32 %v6083, %v6136
      %v6147 = vsub.f32 %v6084, %v6136
      %v6148 = vsub.f32 %v6085, %v6136
      %v6149 = vadd.f32 %v6140, 1e-05
      %v6150 = vrsqrt.pop %v6149
      %v6151 = vmul.f32 %v6141, %v6150
      %v6152 = vmul.f32 %v6142, %v6150
      %v6153 = vmul.f32 %v6143, %v6150
      %v6154 = vmul.f32 %v6144, %v6150
      %v6155 = vmul.f32 %v6145, %v6150
      %v6156 = vmul.f32 %v6146, %v6150
      %v6157 = vmul.f32 %v6147, %v6150
      %v6158 = vmul.f32 %v6148, %v6150
      %v6159 = vmax.f32 %v6151, 0.0
      %v6160 = vmax.f32 %v6152, 0.0
      %v6161 = vmax.f32 %v6153, 0.0
      %v6162 = vmax.f32 %v6154, 0.0
      %v6163 = vmax.f32 %v6155, 0.0
      %v6164 = vmax.f32 %v6156, 0.0
      %v6165 = vmax.f32 %v6157, 0.0
      %v6166 = vmax.f32 %v6158, 0.0
      %v6167 = vpack.c.bf16 %v6160, %v6159
      %v6168 = vpack.c.bf16 %v6162, %v6161
      %v6169 = vpack.c.bf16 %v6164, %v6163
      %v6170 = vpack.c.bf16 %v6166, %v6165
      %v6171 = vld [vmem:[%s397] sm:$0xf]
      %v6172 = vld [vmem:[%s397 + $0x4] sm:$0xf]
      %v6173 = vld [vmem:[%s397 + $0x8] sm:$0xf]
      %v6174 = vld [vmem:[%s397 + $0xc] sm:$0xf]
      %v6179 = vunpack.c.l.b16 %v6171
      %v6180 = vunpack.c.l.b16 %v6172
      %v6181 = vunpack.c.l.b16 %v6173
      %v6182 = vunpack.c.l.b16 %v6174
      %v6183 = vpack.c.b16 %v6180, %v6179
      %v6184 = vpack.c.b16 %v6182, %v6181
      %v6188 = vsel %vm716, %v6167, 0
      %v6191 = vsel %vm716, %v6168, 0
      %v6194 = vsel %vm716, %v6169, 0
      %v6197 = vsel %vm716, %v6170, 0
      %6199 = vmatprep.subr.bf16.mxu0 0
      %6200 = vmatpush1.bf16.msra.mxu0 %v6183
      %6201 = vmatprep.subr.bf16.mxu0 0
      %6202 = vmatpush1.bf16.msra.mxu0 %v6184
      %6203 = vmatprep.subr.bf16.mxu0 0
      %6204 = vmatpush1.bf16.msra.mxu0 0
      %6205 = vmatprep.subr.bf16.mxu0 0
      %6206 = vmatpush1.bf16.msra.mxu0 0
      %6207 = vmatprep.subr.bf16.mxu0 0
      %6208 = vmatpush1.bf16.msra.mxu0 0
      %6209 = vmatprep.subr.bf16.mxu0 0
      %6210 = vmatpush1.bf16.msra.mxu0 0
      %6211 = vmatprep.subr.bf16.mxu0 0
      %6212 = vmatpush1.bf16.msra.mxu0 0
      %6213 = vmatprep.subr.bf16.mxu0 0
      %6214 = vmatpush1.bf16.msra.mxu0 0
      %6215 = vmatprep.subr.bf16.mxu0 0
      %6216 = vmatpush1.bf16.msra.mxu0 0
      %6217 = vmatprep.subr.bf16.mxu0 0
      %6218 = vmatpush1.bf16.msra.mxu0 0
      %6219 = vmatprep.subr.bf16.mxu0 0
      %6220 = vmatpush1.bf16.msra.mxu0 0
      %6221 = vmatprep.subr.bf16.mxu0 0
      %6222 = vmatpush1.bf16.msra.mxu0 0
      %6223 = vmatprep.subr.bf16.mxu0 0
      %6224 = vmatpush1.bf16.msra.mxu0 0
      %6225 = vmatprep.subr.bf16.mxu0 0
      %6226 = vmatpush1.bf16.msra.mxu0 0
      %6227 = vmatprep.subr.bf16.mxu0 0
      %6228 = vmatpush1.bf16.msra.mxu0 0
      %6229 = vmatprep.subr.bf16.mxu0 0
      %6230 = vmatpush1.bf16.msra.mxu0 0
      %6231 = vmatprep.mubr.bf16.mxu0 0
      %6232 = vmatmul.mubr.bf16.gmra.mrb[0].mxu0 %v6188
      %v6233 = vpop.f32.mrb[0].mxu0
      %v6234 = vadd.f32 0.0, %v6233
      %v6235 = vpop.f32.mrb[0].mxu0
      %v6236 = vpop.f32.mrb[0].mxu0
      %v6237 = vadd.f32 0.0, %v6236
      %v6238 = vpop.f32.mrb[0].mxu0
      %6239 = vmatprep.mubr.bf16.mxu0 0
      %6240 = vmatmul.mubr.bf16.gmra.mrb[0].mxu0 %v6191
      %v6241 = vpop.f32.mrb[0].mxu0
      %v6242 = vadd.f32 0.0, %v6241
      %v6243 = vpop.f32.mrb[0].mxu0
      %v6244 = vpop.f32.mrb[0].mxu0
      %v6245 = vadd.f32 0.0, %v6244
      %v6246 = vpop.f32.mrb[0].mxu0
      %6247 = vmatprep.mubr.bf16.mxu0 0
      %6248 = vmatmul.mubr.bf16.gmra.mrb[0].mxu0 %v6194
      %v6249 = vpop.f32.mrb[0].mxu0
      %v6250 = vadd.f32 0.0, %v6249
      %v6251 = vpop.f32.mrb[0].mxu0
      %v6252 = vpop.f32.mrb[0].mxu0
      %v6253 = vadd.f32 0.0, %v6252
      %v6254 = vpop.f32.mrb[0].mxu0
      %6255 = vmatprep.mubr.bf16.mxu0 0
      %6256 = vmatmul.mubr.bf16.gmra.mrb[0].mxu0 %v6197
      %v6257 = vpop.f32.mrb[0].mxu0
      %v6258 = vadd.f32 0.0, %v6257
      %v6259 = vpop.f32.mrb[0].mxu0
      %v6260 = vpop.f32.mrb[0].mxu0
      %v6261 = vadd.f32 0.0, %v6260
      %v6262 = vpop.f32.mrb[0].mxu0
      %6263 = vdwg.mxu0
      %v6264 = vsel %vm716, %v6234, 0.0
      %v6265 = vsel %vm716, %v6237, 0.0
      %v6266 = vadd.f32 %v6264, %v6265
      %v6267 = vsel %vm716, %v6242, 0.0
      %v6268 = vadd.f32 %v6266, %v6267
      %v6269 = vsel %vm716, %v6245, 0.0
      %v6270 = vadd.f32 %v6268, %v6269
      %v6271 = vsel %vm716, %v6250, 0.0
      %v6272 = vadd.f32 %v6270, %v6271
      %v6273 = vsel %vm716, %v6253, 0.0
      %v6274 = vadd.f32 %v6272, %v6273
      %v6275 = vsel %vm716, %v6258, 0.0
      %v6276 = vadd.f32 %v6274, %v6275
      %v6277 = vsel %vm716, %v6261, 0.0
      %v6278 = vadd.f32 %v6276, %v6277
      %v6279 = vrot.slane %v6278, 4
      %v6280 = vadd.f32 %v6278, %v6279
      %v6281 = vrot.slane %v6280, 2
      %v6282 = vadd.f32 %v6280, %v6281
      %v6283 = vrot.slane %v6282, 1
      %v6284 = vadd.f32 %v6282, %v6283
      %v6285 = vmul.f32 %v6234, %v6234
      %v6286 = vmul.f32 %v6237, %v6237
      %v6287 = vmul.f32 %v6242, %v6242
      %v6288 = vmul.f32 %v6245, %v6245
      %v6289 = vmul.f32 %v6250, %v6250
      %v6290 = vmul.f32 %v6253, %v6253
      %v6291 = vmul.f32 %v6258, %v6258
      %v6292 = vmul.f32 %v6261, %v6261
      %v6293 = vsel %vm716, %v6285, 0.0
      %v6294 = vsel %vm716, %v6286, 0.0
      %v6295 = vadd.f32 %v6293, %v6294
      %v6296 = vsel %vm716, %v6287, 0.0
      %v6297 = vadd.f32 %v6295, %v6296
      %v6298 = vsel %vm716, %v6288, 0.0
      %v6299 = vadd.f32 %v6297, %v6298
      %v6300 = vsel %vm716, %v6289, 0.0
      %v6301 = vadd.f32 %v6299, %v6300
      %v6302 = vsel %vm716, %v6290, 0.0
      %v6303 = vadd.f32 %v6301, %v6302
      %v6304 = vsel %vm716, %v6291, 0.0
      %v6305 = vadd.f32 %v6303, %v6304
      %v6306 = vsel %vm716, %v6292, 0.0
      %v6307 = vadd.f32 %v6305, %v6306
      %v6308 = vrot.slane %v6307, 4
      %v6309 = vadd.f32 %v6307, %v6308
      %v6310 = vrot.slane %v6309, 2
      %v6311 = vadd.f32 %v6309, %v6310
      %v6312 = vrot.slane %v6311, 1
      %v6313 = vadd.f32 %v6311, %v6312
      %v6314 = vmul.f32 %v6284, 0.015625
      %v6315 = vmul.f32 %v6313, 0.015625
      %v6316 = vmul.f32 %v6314, %v6314
      %v6317 = vsub.f32 %v6315, %v6316
      %v6318 = vmax.f32 %v6317, 0.0
      %v6319 = vsub.f32 %v6234, %v6314
      %v6320 = vsub.f32 %v6237, %v6314
      %v6321 = vsub.f32 %v6242, %v6314
      %v6322 = vsub.f32 %v6245, %v6314
      %v6323 = vsub.f32 %v6250, %v6314
      %v6324 = vsub.f32 %v6253, %v6314
      %v6325 = vsub.f32 %v6258, %v6314
      %v6326 = vsub.f32 %v6261, %v6314
      %v6327 = vadd.f32 %v6318, 1e-05
      %v6328 = vrsqrt.pop %v6327
      %v6329 = vmul.f32 %v6319, %v6328
      %v6330 = vmul.f32 %v6320, %v6328
      %v6331 = vmul.f32 %v6321, %v6328
      %v6332 = vmul.f32 %v6322, %v6328
      %v6333 = vmul.f32 %v6323, %v6328
      %v6334 = vmul.f32 %v6324, %v6328
      %v6335 = vmul.f32 %v6325, %v6328
      %v6336 = vmul.f32 %v6326, %v6328
      %v6337 = vmax.f32 %v6329, 0.0
      %v6338 = vmax.f32 %v6330, 0.0
      %v6339 = vmax.f32 %v6331, 0.0
      %v6340 = vmax.f32 %v6332, 0.0
      %v6341 = vmax.f32 %v6333, 0.0
      %v6342 = vmax.f32 %v6334, 0.0
      %v6343 = vmax.f32 %v6335, 0.0
      %v6344 = vmax.f32 %v6336, 0.0
      %v6345 = vld [vmem:[#allocation2] sm:$0xff]
      %v6346 = vld [vmem:[#allocation2 + $0x8] sm:$0xff]
      %v6347 = vld [vmem:[#allocation2 + $0x10] sm:$0xff]
      %v6348 = vld [vmem:[#allocation2 + $0x18] sm:$0xff]
      %v6349 = vld [vmem:[#allocation2 + $0x20] sm:$0xff]
      %v6350 = vld [vmem:[#allocation2 + $0x28] sm:$0xff]
      %v6351 = vld [vmem:[#allocation2 + $0x30] sm:$0xff]
      %v6352 = vld [vmem:[#allocation2 + $0x38] sm:$0xff]
      %v6353 = vadd.f32 %v6345, %v6337
      %v6354 = vadd.f32 %v6346, %v6338
      %v6355 = vadd.f32 %v6347, %v6339
      %v6356 = vadd.f32 %v6348, %v6340
      %v6357 = vadd.f32 %v6349, %v6341
      %v6358 = vadd.f32 %v6350, %v6342
      %v6359 = vadd.f32 %v6351, %v6343
      %v6360 = vadd.f32 %v6352, %v6344
      %6361 = vst.msk [vmem:[#allocation2] sm:$0xff] %vm716, %v6353
      %6362 = vst.msk [vmem:[#allocation2 + $0x8] sm:$0xff] %vm716, %v6354
      %6363 = vst.msk [vmem:[#allocation2 + $0x10] sm:$0xff] %vm716, %v6355
      %6364 = vst.msk [vmem:[#allocation2 + $0x18] sm:$0xff] %vm716, %v6356
      %6365 = vst.msk [vmem:[#allocation2 + $0x20] sm:$0xff] %vm716, %v6357
      %6366 = vst.msk [vmem:[#allocation2 + $0x28] sm:$0xff] %vm716, %v6358
      %6367 = vst.msk [vmem:[#allocation2 + $0x30] sm:$0xff] %vm716, %v6359
      %6368 = vst.msk [vmem:[#allocation2 + $0x38] sm:$0xff] %vm716, %v6360
      %p6369 = scmp.eq.s32.totalorder %s27, 1
      // Predicated region
      $region61: #{forward.1} parent=55 // pred_check
        %p6370 = pneg %p6369
      $region62: #{forward.1} parent=55 // pred_check_branch
        %6372 = sbr.rel (%p6370) target = $region64
      $region63: #{forward.1} parent=55 // pred_region
        %v6373 = vld [vmem:[#allocation2] sm:$0xff]
        %v6374 = vld [vmem:[#allocation2 + $0x8] sm:$0xff]
        %v6375 = vld [vmem:[#allocation2 + $0x10] sm:$0xff]
        %v6376 = vld [vmem:[#allocation2 + $0x18] sm:$0xff]
        %v6377 = vld [vmem:[#allocation2 + $0x20] sm:$0xff]
        %v6378 = vld [vmem:[#allocation2 + $0x28] sm:$0xff]
        %v6379 = vld [vmem:[#allocation2 + $0x30] sm:$0xff]
        %v6380 = vld [vmem:[#allocation2 + $0x38] sm:$0xff]
        %6381 = vst.msk [vmem:[%s875 + $0x8] sm:$0xff] %vm716, %v6373
        %6382 = vst.msk [vmem:[%s875 + $0x20] sm:$0xff] %vm716, %v6374
        %6383 = vst.msk [vmem:[%s875 + $0x38] sm:$0xff] %vm716, %v6375
        %6384 = vst.msk [vmem:[%s875 + $0x50] sm:$0xff] %vm716, %v6376
        %6385 = vst.msk [vmem:[%s875 + $0x68] sm:$0xff] %vm716, %v6377
        %6386 = vst.msk [vmem:[%s875 + $0x80] sm:$0xff] %vm716, %v6378
        %6387 = vst.msk [vmem:[%s875 + $0x98] sm:$0xff] %vm716, %v6379
        %6388 = vst.msk [vmem:[%s875 + $0xb0] sm:$0xff] %vm716, %v6380
        %v6389 = vld [vmem:[%s7] sm:$0x1]
        %v6390 = vld [vmem:[#allocation4 + $0x5] sm:$0xff]
        %v6391 = vld [vmem:[#allocation4 + $0x1d] sm:$0xff]
        %v6392 = vld [vmem:[#allocation4 + $0x35] sm:$0xff]
        %v6393 = vld [vmem:[#allocation4 + $0x4d] sm:$0xff]
        %v6394 = vld [vmem:[#allocation4 + $0x65] sm:$0xff]
        %v6395 = vld [vmem:[#allocation4 + $0x7d] sm:$0xff]
        %v6396 = vld [vmem:[#allocation4 + $0x95] sm:$0xff]
        %v6397 = vld [vmem:[#allocation4 + $0xad] sm:$0xff]
        %v6398 = vlaneseq
        %v6399 = vshrl.u32 %v6398, 7
        %v6400 = vsub.s32 0, %v6399
        %v6401 = vrot.slane %v6389, %v6400
        %v6402 = vmul.f32 %v6390, %v6401
        %v6403 = vmul.f32 %v6391, %v6401
        %v6404 = vmul.f32 %v6392, %v6401
        %v6405 = vmul.f32 %v6393, %v6401
        %v6406 = vmul.f32 %v6394, %v6401
        %v6407 = vmul.f32 %v6395, %v6401
        %v6408 = vmul.f32 %v6396, %v6401
        %v6409 = vmul.f32 %v6397, %v6401
        %v6410 = vld [vmem:[%s7 + $0x1] sm:$0x1]
        %v6411 = vld [vmem:[#allocation4 + $0x6] sm:$0xff]
        %v6412 = vld [vmem:[#allocation4 + $0x1e] sm:$0xff]
        %v6413 = vld [vmem:[#allocation4 + $0x36] sm:$0xff]
        %v6414 = vld [vmem:[#allocation4 + $0x4e] sm:$0xff]
        %v6415 = vld [vmem:[#allocation4 + $0x66] sm:$0xff]
        %v6416 = vld [vmem:[#allocation4 + $0x7e] sm:$0xff]
        %v6417 = vld [vmem:[#allocation4 + $0x96] sm:$0xff]
        %v6418 = vld [vmem:[#allocation4 + $0xae] sm:$0xff]
        %v6419 = vlaneseq
        %v6420 = vshrl.u32 %v6419, 7
        %v6421 = vsub.s32 0, %v6420
        %v6422 = vrot.slane %v6410, %v6421
        %v6423 = vmul.f32 %v6411, %v6422
        %v6424 = vmul.f32 %v6412, %v6422
        %v6425 = vmul.f32 %v6413, %v6422
        %v6426 = vmul.f32 %v6414, %v6422
        %v6427 = vmul.f32 %v6415, %v6422
        %v6428 = vmul.f32 %v6416, %v6422
        %v6429 = vmul.f32 %v6417, %v6422
        %v6430 = vmul.f32 %v6418, %v6422
        %v6431 = vadd.f32 %v6402, %v6423
        %v6432 = vadd.f32 %v6403, %v6424
        %v6433 = vadd.f32 %v6404, %v6425
        %v6434 = vadd.f32 %v6405, %v6426
        %v6435 = vadd.f32 %v6406, %v6427
        %v6436 = vadd.f32 %v6407, %v6428
        %v6437 = vadd.f32 %v6408, %v6429
        %v6438 = vadd.f32 %v6409, %v6430
        %v6439 = vld [vmem:[%s7 + $0x2] sm:$0x1]
        %v6440 = vld [vmem:[#allocation4 + $0x7] sm:$0xff]
        %v6441 = vld [vmem:[#allocation4 + $0x1f] sm:$0xff]
        %v6442 = vld [vmem:[#allocation4 + $0x37] sm:$0xff]
        %v6443 = vld [vmem:[#allocation4 + $0x4f] sm:$0xff]
        %v6444 = vld [vmem:[#allocation4 + $0x67] sm:$0xff]
        %v6445 = vld [vmem:[#allocation4 + $0x7f] sm:$0xff]
        %v6446 = vld [vmem:[#allocation4 + $0x97] sm:$0xff]
        %v6447 = vld [vmem:[#allocation4 + $0xaf] sm:$0xff]
        %v6448 = vlaneseq
        %v6449 = vshrl.u32 %v6448, 7
        %v6450 = vsub.s32 0, %v6449
        %v6451 = vrot.slane %v6439, %v6450
        %v6452 = vmul.f32 %v6440, %v6451
        %v6453 = vmul.f32 %v6441, %v6451
        %v6454 = vmul.f32 %v6442, %v6451
        %v6455 = vmul.f32 %v6443, %v6451
        %v6456 = vmul.f32 %v6444, %v6451
        %v6457 = vmul.f32 %v6445, %v6451
        %v6458 = vmul.f32 %v6446, %v6451
        %v6459 = vmul.f32 %v6447, %v6451
        %v6460 = vadd.f32 %v6431, %v6452
        %v6461 = vadd.f32 %v6432, %v6453
        %v6462 = vadd.f32 %v6433, %v6454
        %v6463 = vadd.f32 %v6434, %v6455
        %v6464 = vadd.f32 %v6435, %v6456
        %v6465 = vadd.f32 %v6436, %v6457
        %v6466 = vadd.f32 %v6437, %v6458
        %v6467 = vadd.f32 %v6438, %v6459
        %v6468 = vld [vmem:[%s7 + $0x3] sm:$0x1]
        %v6469 = vld [vmem:[#allocation4 + $0x8] sm:$0xff]
        %v6470 = vld [vmem:[#allocation4 + $0x20] sm:$0xff]
        %v6471 = vld [vmem:[#allocation4 + $0x38] sm:$0xff]
        %v6472 = vld [vmem:[#allocation4 + $0x50] sm:$0xff]
        %v6473 = vld [vmem:[#allocation4 + $0x68] sm:$0xff]
        %v6474 = vld [vmem:[#allocation4 + $0x80] sm:$0xff]
        %v6475 = vld [vmem:[#allocation4 + $0x98] sm:$0xff]
        %v6476 = vld [vmem:[#allocation4 + $0xb0] sm:$0xff]
        %v6477 = vlaneseq
        %v6478 = vshrl.u32 %v6477, 7
        %v6479 = vsub.s32 0, %v6478
        %v6480 = vrot.slane %v6468, %v6479
        %v6481 = vmul.f32 %v6469, %v6480
        %v6482 = vmul.f32 %v6470, %v6480
        %v6483 = vmul.f32 %v6471, %v6480
        %v6484 = vmul.f32 %v6472, %v6480
        %v6485 = vmul.f32 %v6473, %v6480
        %v6486 = vmul.f32 %v6474, %v6480
        %v6487 = vmul.f32 %v6475, %v6480
        %v6488 = vmul.f32 %v6476, %v6480
        %v6489 = vadd.f32 %v6460, %v6481
        %v6490 = vadd.f32 %v6461, %v6482
        %v6491 = vadd.f32 %v6462, %v6483
        %v6492 = vadd.f32 %v6463, %v6484
        %v6493 = vadd.f32 %v6464, %v6485
        %v6494 = vadd.f32 %v6465, %v6486
        %v6495 = vadd.f32 %v6466, %v6487
        %v6496 = vadd.f32 %v6467, %v6488
        %v6497 = vld [vmem:[%s7 + $0x4] sm:$0x1]
        %v6498 = vld [vmem:[#allocation4 + $0x9] sm:$0xff]
        %v6499 = vld [vmem:[#allocation4 + $0x21] sm:$0xff]
        %v6500 = vld [vmem:[#allocation4 + $0x39] sm:$0xff]
        %v6501 = vld [vmem:[#allocation4 + $0x51] sm:$0xff]
        %v6502 = vld [vmem:[#allocation4 + $0x69] sm:$0xff]
        %v6503 = vld [vmem:[#allocation4 + $0x81] sm:$0xff]
        %v6504 = vld [vmem:[#allocation4 + $0x99] sm:$0xff]
        %v6505 = vld [vmem:[#allocation4 + $0xb1] sm:$0xff]
        %v6506 = vlaneseq
        %v6507 = vshrl.u32 %v6506, 7
        %v6508 = vsub.s32 0, %v6507
        %v6509 = vrot.slane %v6497, %v6508
        %v6510 = vmul.f32 %v6498, %v6509
        %v6511 = vmul.f32 %v6499, %v6509
        %v6512 = vmul.f32 %v6500, %v6509
        %v6513 = vmul.f32 %v6501, %v6509
        %v6514 = vmul.f32 %v6502, %v6509
        %v6515 = vmul.f32 %v6503, %v6509
        %v6516 = vmul.f32 %v6504, %v6509
        %v6517 = vmul.f32 %v6505, %v6509
        %v6518 = vadd.f32 %v6489, %v6510
        %v6519 = vadd.f32 %v6490, %v6511
        %v6520 = vadd.f32 %v6491, %v6512
        %v6521 = vadd.f32 %v6492, %v6513
        %v6522 = vadd.f32 %v6493, %v6514
        %v6523 = vadd.f32 %v6494, %v6515
        %v6524 = vadd.f32 %v6495, %v6516
        %v6525 = vadd.f32 %v6496, %v6517
        %v6526 = vld [vmem:[%s7 + $0x5] sm:$0x1]
        %v6527 = vld [vmem:[#allocation4 + $0xa] sm:$0xff]
        %v6528 = vld [vmem:[#allocation4 + $0x22] sm:$0xff]
        %v6529 = vld [vmem:[#allocation4 + $0x3a] sm:$0xff]
        %v6530 = vld [vmem:[#allocation4 + $0x52] sm:$0xff]
        %v6531 = vld [vmem:[#allocation4 + $0x6a] sm:$0xff]
        %v6532 = vld [vmem:[#allocation4 + $0x82] sm:$0xff]
        %v6533 = vld [vmem:[#allocation4 + $0x9a] sm:$0xff]
        %v6534 = vld [vmem:[#allocation4 + $0xb2] sm:$0xff]
        %v6535 = vlaneseq
        %v6536 = vshrl.u32 %v6535, 7
        %v6537 = vsub.s32 0, %v6536
        %v6538 = vrot.slane %v6526, %v6537
        %v6539 = vmul.f32 %v6527, %v6538
        %v6540 = vmul.f32 %v6528, %v6538
        %v6541 = vmul.f32 %v6529, %v6538
        %v6542 = vmul.f32 %v6530, %v6538
        %v6543 = vmul.f32 %v6531, %v6538
        %v6544 = vmul.f32 %v6532, %v6538
        %v6545 = vmul.f32 %v6533, %v6538
        %v6546 = vmul.f32 %v6534, %v6538
        %v6547 = vadd.f32 %v6518, %v6539
        %v6548 = vadd.f32 %v6519, %v6540
        %v6549 = vadd.f32 %v6520, %v6541
        %v6550 = vadd.f32 %v6521, %v6542
        %v6551 = vadd.f32 %v6522, %v6543
        %v6552 = vadd.f32 %v6523, %v6544
        %v6553 = vadd.f32 %v6524, %v6545
        %v6554 = vadd.f32 %v6525, %v6546
        %v6555 = vld [vmem:[%s7 + $0x6] sm:$0x1]
        %v6556 = vld [vmem:[#allocation4 + $0xb] sm:$0xff]
        %v6557 = vld [vmem:[#allocation4 + $0x23] sm:$0xff]
        %v6558 = vld [vmem:[#allocation4 + $0x3b] sm:$0xff]
        %v6559 = vld [vmem:[#allocation4 + $0x53] sm:$0xff]
        %v6560 = vld [vmem:[#allocation4 + $0x6b] sm:$0xff]
        %v6561 = vld [vmem:[#allocation4 + $0x83] sm:$0xff]
        %v6562 = vld [vmem:[#allocation4 + $0x9b] sm:$0xff]
        %v6563 = vld [vmem:[#allocation4 + $0xb3] sm:$0xff]
        %v6564 = vlaneseq
        %v6565 = vshrl.u32 %v6564, 7
        %v6566 = vsub.s32 0, %v6565
        %v6567 = vrot.slane %v6555, %v6566
        %v6568 = vmul.f32 %v6556, %v6567
        %v6569 = vmul.f32 %v6557, %v6567
        %v6570 = vmul.f32 %v6558, %v6567
        %v6571 = vmul.f32 %v6559, %v6567
        %v6572 = vmul.f32 %v6560, %v6567
        %v6573 = vmul.f32 %v6561, %v6567
        %v6574 = vmul.f32 %v6562, %v6567
        %v6575 = vmul.f32 %v6563, %v6567
        %v6576 = vadd.f32 %v6547, %v6568
        %v6577 = vadd.f32 %v6548, %v6569
        %v6578 = vadd.f32 %v6549, %v6570
        %v6579 = vadd.f32 %v6550, %v6571
        %v6580 = vadd.f32 %v6551, %v6572
        %v6581 = vadd.f32 %v6552, %v6573
        %v6582 = vadd.f32 %v6553, %v6574
        %v6583 = vadd.f32 %v6554, %v6575
        %6584 = vst.msk [vmem:[#allocation3] sm:$0xff] %vm716, %v6576
        %6585 = vst.msk [vmem:[#allocation3 + $0x8] sm:$0xff] %vm716, %v6577
        %6586 = vst.msk [vmem:[#allocation3 + $0x10] sm:$0xff] %vm716, %v6578
        %6587 = vst.msk [vmem:[#allocation3 + $0x18] sm:$0xff] %vm716, %v6579
        %6588 = vst.msk [vmem:[#allocation3 + $0x20] sm:$0xff] %vm716, %v6580
        %6589 = vst.msk [vmem:[#allocation3 + $0x28] sm:$0xff] %vm716, %v6581
        %6590 = vst.msk [vmem:[#allocation3 + $0x30] sm:$0xff] %vm716, %v6582
        %6591 = vst.msk [vmem:[#allocation3 + $0x38] sm:$0xff] %vm716, %v6583
        %s6592 = scalar_lea.vmem %s7, 8
        %v6593 = vld [vmem:[%s6592] sm:$0x1]
        %s6594 = scalar_lea.vmem [#allocation4], 24
        %v6595 = vld [vmem:[%s6594 + $0x5] sm:$0xff]
        %v6596 = vld [vmem:[%s6594 + $0x1d] sm:$0xff]
        %v6597 = vld [vmem:[%s6594 + $0x35] sm:$0xff]
        %v6598 = vld [vmem:[%s6594 + $0x4d] sm:$0xff]
        %v6599 = vld [vmem:[%s6594 + $0x65] sm:$0xff]
        %v6600 = vld [vmem:[%s6594 + $0x7d] sm:$0xff]
        %v6601 = vld [vmem:[%s6594 + $0x95] sm:$0xff]
        %v6602 = vld [vmem:[%s6594 + $0xad] sm:$0xff]
        %v6603 = vlaneseq
        %v6604 = vshrl.u32 %v6603, 7
        %v6605 = vsub.s32 0, %v6604
        %v6606 = vrot.slane %v6593, %v6605
        %v6607 = vmul.f32 %v6595, %v6606
        %v6608 = vmul.f32 %v6596, %v6606
        %v6609 = vmul.f32 %v6597, %v6606
        %v6610 = vmul.f32 %v6598, %v6606
        %v6611 = vmul.f32 %v6599, %v6606
        %v6612 = vmul.f32 %v6600, %v6606
        %v6613 = vmul.f32 %v6601, %v6606
        %v6614 = vmul.f32 %v6602, %v6606
        %v6615 = vld [vmem:[%s6592 + $0x1] sm:$0x1]
        %v6616 = vld [vmem:[%s6594 + $0x6] sm:$0xff]
        %v6617 = vld [vmem:[%s6594 + $0x1e] sm:$0xff]
        %v6618 = vld [vmem:[%s6594 + $0x36] sm:$0xff]
        %v6619 = vld [vmem:[%s6594 + $0x4e] sm:$0xff]
        %v6620 = vld [vmem:[%s6594 + $0x66] sm:$0xff]
        %v6621 = vld [vmem:[%s6594 + $0x7e] sm:$0xff]
        %v6622 = vld [vmem:[%s6594 + $0x96] sm:$0xff]
        %v6623 = vld [vmem:[%s6594 + $0xae] sm:$0xff]
        %v6624 = vlaneseq
        %v6625 = vshrl.u32 %v6624, 7
        %v6626 = vsub.s32 0, %v6625
        %v6627 = vrot.slane %v6615, %v6626
        %v6628 = vmul.f32 %v6616, %v6627
        %v6629 = vmul.f32 %v6617, %v6627
        %v6630 = vmul.f32 %v6618, %v6627
        %v6631 = vmul.f32 %v6619, %v6627
        %v6632 = vmul.f32 %v6620, %v6627
        %v6633 = vmul.f32 %v6621, %v6627
        %v6634 = vmul.f32 %v6622, %v6627
        %v6635 = vmul.f32 %v6623, %v6627
        %v6636 = vadd.f32 %v6607, %v6628
        %v6637 = vadd.f32 %v6608, %v6629
        %v6638 = vadd.f32 %v6609, %v6630
        %v6639 = vadd.f32 %v6610, %v6631
        %v6640 = vadd.f32 %v6611, %v6632
        %v6641 = vadd.f32 %v6612, %v6633
        %v6642 = vadd.f32 %v6613, %v6634
        %v6643 = vadd.f32 %v6614, %v6635
        %v6644 = vld [vmem:[%s6592 + $0x2] sm:$0x1]
        %v6645 = vld [vmem:[%s6594 + $0x7] sm:$0xff]
        %v6646 = vld [vmem:[%s6594 + $0x1f] sm:$0xff]
        %v6647 = vld [vmem:[%s6594 + $0x37] sm:$0xff]
        %v6648 = vld [vmem:[%s6594 + $0x4f] sm:$0xff]
        %v6649 = vld [vmem:[%s6594 + $0x67] sm:$0xff]
        %v6650 = vld [vmem:[%s6594 + $0x7f] sm:$0xff]
        %v6651 = vld [vmem:[%s6594 + $0x97] sm:$0xff]
        %v6652 = vld [vmem:[%s6594 + $0xaf] sm:$0xff]
        %v6653 = vlaneseq
        %v6654 = vshrl.u32 %v6653, 7
        %v6655 = vsub.s32 0, %v6654
        %v6656 = vrot.slane %v6644, %v6655
        %v6657 = vmul.f32 %v6645, %v6656
        %v6658 = vmul.f32 %v6646, %v6656
        %v6659 = vmul.f32 %v6647, %v6656
        %v6660 = vmul.f32 %v6648, %v6656
        %v6661 = vmul.f32 %v6649, %v6656
        %v6662 = vmul.f32 %v6650, %v6656
        %v6663 = vmul.f32 %v6651, %v6656
        %v6664 = vmul.f32 %v6652, %v6656
        %v6665 = vadd.f32 %v6636, %v6657
        %v6666 = vadd.f32 %v6637, %v6658
        %v6667 = vadd.f32 %v6638, %v6659
        %v6668 = vadd.f32 %v6639, %v6660
        %v6669 = vadd.f32 %v6640, %v6661
        %v6670 = vadd.f32 %v6641, %v6662
        %v6671 = vadd.f32 %v6642, %v6663
        %v6672 = vadd.f32 %v6643, %v6664
        %v6673 = vld [vmem:[%s6592 + $0x3] sm:$0x1]
        %v6674 = vld [vmem:[%s6594 + $0x8] sm:$0xff]
        %v6675 = vld [vmem:[%s6594 + $0x20] sm:$0xff]
        %v6676 = vld [vmem:[%s6594 + $0x38] sm:$0xff]
        %v6677 = vld [vmem:[%s6594 + $0x50] sm:$0xff]
        %v6678 = vld [vmem:[%s6594 + $0x68] sm:$0xff]
        %v6679 = vld [vmem:[%s6594 + $0x80] sm:$0xff]
        %v6680 = vld [vmem:[%s6594 + $0x98] sm:$0xff]
        %v6681 = vld [vmem:[%s6594 + $0xb0] sm:$0xff]
        %v6682 = vlaneseq
        %v6683 = vshrl.u32 %v6682, 7
        %v6684 = vsub.s32 0, %v6683
        %v6685 = vrot.slane %v6673, %v6684
        %v6686 = vmul.f32 %v6674, %v6685
        %v6687 = vmul.f32 %v6675, %v6685
        %v6688 = vmul.f32 %v6676, %v6685
        %v6689 = vmul.f32 %v6677, %v6685
        %v6690 = vmul.f32 %v6678, %v6685
        %v6691 = vmul.f32 %v6679, %v6685
        %v6692 = vmul.f32 %v6680, %v6685
        %v6693 = vmul.f32 %v6681, %v6685
        %v6694 = vadd.f32 %v6665, %v6686
        %v6695 = vadd.f32 %v6666, %v6687
        %v6696 = vadd.f32 %v6667, %v6688
        %v6697 = vadd.f32 %v6668, %v6689
        %v6698 = vadd.f32 %v6669, %v6690
        %v6699 = vadd.f32 %v6670, %v6691
        %v6700 = vadd.f32 %v6671, %v6692
        %v6701 = vadd.f32 %v6672, %v6693
        %v6702 = vld [vmem:[%s6592 + $0x4] sm:$0x1]
        %v6703 = vld [vmem:[%s6594 + $0x9] sm:$0xff]
        %v6704 = vld [vmem:[%s6594 + $0x21] sm:$0xff]
        %v6705 = vld [vmem:[%s6594 + $0x39] sm:$0xff]
        %v6706 = vld [vmem:[%s6594 + $0x51] sm:$0xff]
        %v6707 = vld [vmem:[%s6594 + $0x69] sm:$0xff]
        %v6708 = vld [vmem:[%s6594 + $0x81] sm:$0xff]
        %v6709 = vld [vmem:[%s6594 + $0x99] sm:$0xff]
        %v6710 = vld [vmem:[%s6594 + $0xb1] sm:$0xff]
        %v6711 = vlaneseq
        %v6712 = vshrl.u32 %v6711, 7
        %v6713 = vsub.s32 0, %v6712
        %v6714 = vrot.slane %v6702, %v6713
        %v6715 = vmul.f32 %v6703, %v6714
        %v6716 = vmul.f32 %v6704, %v6714
        %v6717 = vmul.f32 %v6705, %v6714
        %v6718 = vmul.f32 %v6706, %v6714
        %v6719 = vmul.f32 %v6707, %v6714
        %v6720 = vmul.f32 %v6708, %v6714
        %v6721 = vmul.f32 %v6709, %v6714
        %v6722 = vmul.f32 %v6710, %v6714
        %v6723 = vadd.f32 %v6694, %v6715
        %v6724 = vadd.f32 %v6695, %v6716
        %v6725 = vadd.f32 %v6696, %v6717
        %v6726 = vadd.f32 %v6697, %v6718
        %v6727 = vadd.f32 %v6698, %v6719
        %v6728 = vadd.f32 %v6699, %v6720
        %v6729 = vadd.f32 %v6700, %v6721
        %v6730 = vadd.f32 %v6701, %v6722
        %v6731 = vld [vmem:[%s6592 + $0x5] sm:$0x1]
        %v6732 = vld [vmem:[%s6594 + $0xa] sm:$0xff]
        %v6733 = vld [vmem:[%s6594 + $0x22] sm:$0xff]
        %v6734 = vld [vmem:[%s6594 + $0x3a] sm:$0xff]
        %v6735 = vld [vmem:[%s6594 + $0x52] sm:$0xff]
        %v6736 = vld [vmem:[%s6594 + $0x6a] sm:$0xff]
        %v6737 = vld [vmem:[%s6594 + $0x82] sm:$0xff]
        %v6738 = vld [vmem:[%s6594 + $0x9a] sm:$0xff]
        %v6739 = vld [vmem:[%s6594 + $0xb2] sm:$0xff]
        %v6740 = vlaneseq
        %v6741 = vshrl.u32 %v6740, 7
        %v6742 = vsub.s32 0, %v6741
        %v6743 = vrot.slane %v6731, %v6742
        %v6744 = vmul.f32 %v6732, %v6743
        %v6745 = vmul.f32 %v6733, %v6743
        %v6746 = vmul.f32 %v6734, %v6743
        %v6747 = vmul.f32 %v6735, %v6743
        %v6748 = vmul.f32 %v6736, %v6743
        %v6749 = vmul.f32 %v6737, %v6743
        %v6750 = vmul.f32 %v6738, %v6743
        %v6751 = vmul.f32 %v6739, %v6743
        %v6752 = vadd.f32 %v6723, %v6744
        %v6753 = vadd.f32 %v6724, %v6745
        %v6754 = vadd.f32 %v6725, %v6746
        %v6755 = vadd.f32 %v6726, %v6747
        %v6756 = vadd.f32 %v6727, %v6748
        %v6757 = vadd.f32 %v6728, %v6749
        %v6758 = vadd.f32 %v6729, %v6750
        %v6759 = vadd.f32 %v6730, %v6751
        %v6760 = vld [vmem:[%s6592 + $0x6] sm:$0x1]
        %v6761 = vld [vmem:[%s6594 + $0xb] sm:$0xff]
        %v6762 = vld [vmem:[%s6594 + $0x23] sm:$0xff]
        %v6763 = vld [vmem:[%s6594 + $0x3b] sm:$0xff]
        %v6764 = vld [vmem:[%s6594 + $0x53] sm:$0xff]
        %v6765 = vld [vmem:[%s6594 + $0x6b] sm:$0xff]
        %v6766 = vld [vmem:[%s6594 + $0x83] sm:$0xff]
        %v6767 = vld [vmem:[%s6594 + $0x9b] sm:$0xff]
        %v6768 = vld [vmem:[%s6594 + $0xb3] sm:$0xff]
        %v6769 = vlaneseq
        %v6770 = vshrl.u32 %v6769, 7
        %v6771 = vsub.s32 0, %v6770
        %v6772 = vrot.slane %v6760, %v6771
        %v6773 = vmul.f32 %v6761, %v6772
        %v6774 = vmul.f32 %v6762, %v6772
        %v6775 = vmul.f32 %v6763, %v6772
        %v6776 = vmul.f32 %v6764, %v6772
        %v6777 = vmul.f32 %v6765, %v6772
        %v6778 = vmul.f32 %v6766, %v6772
        %v6779 = vmul.f32 %v6767, %v6772
        %v6780 = vmul.f32 %v6768, %v6772
        %v6781 = vadd.f32 %v6752, %v6773
        %v6782 = vadd.f32 %v6753, %v6774
        %v6783 = vadd.f32 %v6754, %v6775
        %v6784 = vadd.f32 %v6755, %v6776
        %v6785 = vadd.f32 %v6756, %v6777
        %v6786 = vadd.f32 %v6757, %v6778
        %v6787 = vadd.f32 %v6758, %v6779
        %v6788 = vadd.f32 %v6759, %v6780
        %v6789 = vld [vmem:[#allocation3] sm:$0xff]
        %v6790 = vld [vmem:[#allocation3 + $0x8] sm:$0xff]
        %v6791 = vld [vmem:[#allocation3 + $0x10] sm:$0xff]
        %v6792 = vld [vmem:[#allocation3 + $0x18] sm:$0xff]
        %v6793 = vld [vmem:[#allocation3 + $0x20] sm:$0xff]
        %v6794 = vld [vmem:[#allocation3 + $0x28] sm:$0xff]
        %v6795 = vld [vmem:[#allocation3 + $0x30] sm:$0xff]
        %v6796 = vld [vmem:[#allocation3 + $0x38] sm:$0xff]
        %v6797 = vadd.f32 %v6789, %v6781
        %v6798 = vadd.f32 %v6790, %v6782
        %v6799 = vadd.f32 %v6791, %v6783
        %v6800 = vadd.f32 %v6792, %v6784
        %v6801 = vadd.f32 %v6793, %v6785
        %v6802 = vadd.f32 %v6794, %v6786
        %v6803 = vadd.f32 %v6795, %v6787
        %v6804 = vadd.f32 %v6796, %v6788
        %6805 = vst.msk [vmem:[#allocation3] sm:$0xff] %vm716, %v6797
        %6806 = vst.msk [vmem:[#allocation3 + $0x8] sm:$0xff] %vm716, %v6798
        %6807 = vst.msk [vmem:[#allocation3 + $0x10] sm:$0xff] %vm716, %v6799
        %6808 = vst.msk [vmem:[#allocation3 + $0x18] sm:$0xff] %vm716, %v6800
        %6809 = vst.msk [vmem:[#allocation3 + $0x20] sm:$0xff] %vm716, %v6801
        %6810 = vst.msk [vmem:[#allocation3 + $0x28] sm:$0xff] %vm716, %v6802
        %6811 = vst.msk [vmem:[#allocation3 + $0x30] sm:$0xff] %vm716, %v6803
        %6812 = vst.msk [vmem:[#allocation3 + $0x38] sm:$0xff] %vm716, %v6804
        %s6813 = scalar_lea.vmem %s7, 16
        %v6814 = vld [vmem:[%s6813] sm:$0x1]
        %s6815 = scalar_lea.vmem [#allocation4], 48
        %v6816 = vld [vmem:[%s6815 + $0x5] sm:$0xff]
        %v6817 = vld [vmem:[%s6815 + $0x1d] sm:$0xff]
        %v6818 = vld [vmem:[%s6815 + $0x35] sm:$0xff]
        %v6819 = vld [vmem:[%s6815 + $0x4d] sm:$0xff]
        %v6820 = vld [vmem:[%s6815 + $0x65] sm:$0xff]
        %v6821 = vld [vmem:[%s6815 + $0x7d] sm:$0xff]
        %v6822 = vld [vmem:[%s6815 + $0x95] sm:$0xff]
        %v6823 = vld [vmem:[%s6815 + $0xad] sm:$0xff]
        %v6824 = vlaneseq
        %v6825 = vshrl.u32 %v6824, 7
        %v6826 = vsub.s32 0, %v6825
        %v6827 = vrot.slane %v6814, %v6826
        %v6828 = vmul.f32 %v6816, %v6827
        %v6829 = vmul.f32 %v6817, %v6827
        %v6830 = vmul.f32 %v6818, %v6827
        %v6831 = vmul.f32 %v6819, %v6827
        %v6832 = vmul.f32 %v6820, %v6827
        %v6833 = vmul.f32 %v6821, %v6827
        %v6834 = vmul.f32 %v6822, %v6827
        %v6835 = vmul.f32 %v6823, %v6827
        %v6836 = vld [vmem:[%s6813 + $0x1] sm:$0x1]
        %v6837 = vld [vmem:[%s6815 + $0x6] sm:$0xff]
        %v6838 = vld [vmem:[%s6815 + $0x1e] sm:$0xff]
        %v6839 = vld [vmem:[%s6815 + $0x36] sm:$0xff]
        %v6840 = vld [vmem:[%s6815 + $0x4e] sm:$0xff]
        %v6841 = vld [vmem:[%s6815 + $0x66] sm:$0xff]
        %v6842 = vld [vmem:[%s6815 + $0x7e] sm:$0xff]
        %v6843 = vld [vmem:[%s6815 + $0x96] sm:$0xff]
        %v6844 = vld [vmem:[%s6815 + $0xae] sm:$0xff]
        %v6845 = vlaneseq
        %v6846 = vshrl.u32 %v6845, 7
        %v6847 = vsub.s32 0, %v6846
        %v6848 = vrot.slane %v6836, %v6847
        %v6849 = vmul.f32 %v6837, %v6848
        %v6850 = vmul.f32 %v6838, %v6848
        %v6851 = vmul.f32 %v6839, %v6848
        %v6852 = vmul.f32 %v6840, %v6848
        %v6853 = vmul.f32 %v6841, %v6848
        %v6854 = vmul.f32 %v6842, %v6848
        %v6855 = vmul.f32 %v6843, %v6848
        %v6856 = vmul.f32 %v6844, %v6848
        %v6857 = vadd.f32 %v6828, %v6849
        %v6858 = vadd.f32 %v6829, %v6850
        %v6859 = vadd.f32 %v6830, %v6851
        %v6860 = vadd.f32 %v6831, %v6852
        %v6861 = vadd.f32 %v6832, %v6853
        %v6862 = vadd.f32 %v6833, %v6854
        %v6863 = vadd.f32 %v6834, %v6855
        %v6864 = vadd.f32 %v6835, %v6856
        %v6865 = vld [vmem:[%s6813 + $0x2] sm:$0x1]
        %v6866 = vld [vmem:[%s6815 + $0x7] sm:$0xff]
        %v6867 = vld [vmem:[%s6815 + $0x1f] sm:$0xff]
        %v6868 = vld [vmem:[%s6815 + $0x37] sm:$0xff]
        %v6869 = vld [vmem:[%s6815 + $0x4f] sm:$0xff]
        %v6870 = vld [vmem:[%s6815 + $0x67] sm:$0xff]
        %v6871 = vld [vmem:[%s6815 + $0x7f] sm:$0xff]
        %v6872 = vld [vmem:[%s6815 + $0x97] sm:$0xff]
        %v6873 = vld [vmem:[%s6815 + $0xaf] sm:$0xff]
        %v6874 = vlaneseq
        %v6875 = vshrl.u32 %v6874, 7
        %v6876 = vsub.s32 0, %v6875
        %v6877 = vrot.slane %v6865, %v6876
        %v6878 = vmul.f32 %v6866, %v6877
        %v6879 = vmul.f32 %v6867, %v6877
        %v6880 = vmul.f32 %v6868, %v6877
        %v6881 = vmul.f32 %v6869, %v6877
        %v6882 = vmul.f32 %v6870, %v6877
        %v6883 = vmul.f32 %v6871, %v6877
        %v6884 = vmul.f32 %v6872, %v6877
        %v6885 = vmul.f32 %v6873, %v6877
        %v6886 = vadd.f32 %v6857, %v6878
        %v6887 = vadd.f32 %v6858, %v6879
        %v6888 = vadd.f32 %v6859, %v6880
        %v6889 = vadd.f32 %v6860, %v6881
        %v6890 = vadd.f32 %v6861, %v6882
        %v6891 = vadd.f32 %v6862, %v6883
        %v6892 = vadd.f32 %v6863, %v6884
        %v6893 = vadd.f32 %v6864, %v6885
        %v6894 = vld [vmem:[%s6813 + $0x3] sm:$0x1]
        %v6895 = vld [vmem:[%s6815 + $0x8] sm:$0xff]
        %v6896 = vld [vmem:[%s6815 + $0x20] sm:$0xff]
        %v6897 = vld [vmem:[%s6815 + $0x38] sm:$0xff]
        %v6898 = vld [vmem:[%s6815 + $0x50] sm:$0xff]
        %v6899 = vld [vmem:[%s6815 + $0x68] sm:$0xff]
        %v6900 = vld [vmem:[%s6815 + $0x80] sm:$0xff]
        %v6901 = vld [vmem:[%s6815 + $0x98] sm:$0xff]
        %v6902 = vld [vmem:[%s6815 + $0xb0] sm:$0xff]
        %v6903 = vlaneseq
        %v6904 = vshrl.u32 %v6903, 7
        %v6905 = vsub.s32 0, %v6904
        %v6906 = vrot.slane %v6894, %v6905
        %v6907 = vmul.f32 %v6895, %v6906
        %v6908 = vmul.f32 %v6896, %v6906
        %v6909 = vmul.f32 %v6897, %v6906
        %v6910 = vmul.f32 %v6898, %v6906
        %v6911 = vmul.f32 %v6899, %v6906
        %v6912 = vmul.f32 %v6900, %v6906
        %v6913 = vmul.f32 %v6901, %v6906
        %v6914 = vmul.f32 %v6902, %v6906
        %v6915 = vadd.f32 %v6886, %v6907
        %v6916 = vadd.f32 %v6887, %v6908
        %v6917 = vadd.f32 %v6888, %v6909
        %v6918 = vadd.f32 %v6889, %v6910
        %v6919 = vadd.f32 %v6890, %v6911
        %v6920 = vadd.f32 %v6891, %v6912
        %v6921 = vadd.f32 %v6892, %v6913
        %v6922 = vadd.f32 %v6893, %v6914
        %v6923 = vld [vmem:[%s6813 + $0x4] sm:$0x1]
        %v6924 = vld [vmem:[%s6815 + $0x9] sm:$0xff]
        %v6925 = vld [vmem:[%s6815 + $0x21] sm:$0xff]
        %v6926 = vld [vmem:[%s6815 + $0x39] sm:$0xff]
        %v6927 = vld [vmem:[%s6815 + $0x51] sm:$0xff]
        %v6928 = vld [vmem:[%s6815 + $0x69] sm:$0xff]
        %v6929 = vld [vmem:[%s6815 + $0x81] sm:$0xff]
        %v6930 = vld [vmem:[%s6815 + $0x99] sm:$0xff]
        %v6931 = vld [vmem:[%s6815 + $0xb1] sm:$0xff]
        %v6932 = vlaneseq
        %v6933 = vshrl.u32 %v6932, 7
        %v6934 = vsub.s32 0, %v6933
        %v6935 = vrot.slane %v6923, %v6934
        %v6936 = vmul.f32 %v6924, %v6935
        %v6937 = vmul.f32 %v6925, %v6935
        %v6938 = vmul.f32 %v6926, %v6935
        %v6939 = vmul.f32 %v6927, %v6935
        %v6940 = vmul.f32 %v6928, %v6935
        %v6941 = vmul.f32 %v6929, %v6935
        %v6942 = vmul.f32 %v6930, %v6935
        %v6943 = vmul.f32 %v6931, %v6935
        %v6944 = vadd.f32 %v6915, %v6936
        %v6945 = vadd.f32 %v6916, %v6937
        %v6946 = vadd.f32 %v6917, %v6938
        %v6947 = vadd.f32 %v6918, %v6939
        %v6948 = vadd.f32 %v6919, %v6940
        %v6949 = vadd.f32 %v6920, %v6941
        %v6950 = vadd.f32 %v6921, %v6942
        %v6951 = vadd.f32 %v6922, %v6943
        %v6952 = vld [vmem:[%s6813 + $0x5] sm:$0x1]
        %v6953 = vld [vmem:[%s6815 + $0xa] sm:$0xff]
        %v6954 = vld [vmem:[%s6815 + $0x22] sm:$0xff]
        %v6955 = vld [vmem:[%s6815 + $0x3a] sm:$0xff]
        %v6956 = vld [vmem:[%s6815 + $0x52] sm:$0xff]
        %v6957 = vld [vmem:[%s6815 + $0x6a] sm:$0xff]
        %v6958 = vld [vmem:[%s6815 + $0x82] sm:$0xff]
        %v6959 = vld [vmem:[%s6815 + $0x9a] sm:$0xff]
        %v6960 = vld [vmem:[%s6815 + $0xb2] sm:$0xff]
        %v6961 = vlaneseq
        %v6962 = vshrl.u32 %v6961, 7
        %v6963 = vsub.s32 0, %v6962
        %v6964 = vrot.slane %v6952, %v6963
        %v6965 = vmul.f32 %v6953, %v6964
        %v6966 = vmul.f32 %v6954, %v6964
        %v6967 = vmul.f32 %v6955, %v6964
        %v6968 = vmul.f32 %v6956, %v6964
        %v6969 = vmul.f32 %v6957, %v6964
        %v6970 = vmul.f32 %v6958, %v6964
        %v6971 = vmul.f32 %v6959, %v6964
        %v6972 = vmul.f32 %v6960, %v6964
        %v6973 = vadd.f32 %v6944, %v6965
        %v6974 = vadd.f32 %v6945, %v6966
        %v6975 = vadd.f32 %v6946, %v6967
        %v6976 = vadd.f32 %v6947, %v6968
        %v6977 = vadd.f32 %v6948, %v6969
        %v6978 = vadd.f32 %v6949, %v6970
        %v6979 = vadd.f32 %v6950, %v6971
        %v6980 = vadd.f32 %v6951, %v6972
        %v6981 = vld [vmem:[%s6813 + $0x6] sm:$0x1]
        %v6982 = vld [vmem:[%s6815 + $0xb] sm:$0xff]
        %v6983 = vld [vmem:[%s6815 + $0x23] sm:$0xff]
        %v6984 = vld [vmem:[%s6815 + $0x3b] sm:$0xff]
        %v6985 = vld [vmem:[%s6815 + $0x53] sm:$0xff]
        %v6986 = vld [vmem:[%s6815 + $0x6b] sm:$0xff]
        %v6987 = vld [vmem:[%s6815 + $0x83] sm:$0xff]
        %v6988 = vld [vmem:[%s6815 + $0x9b] sm:$0xff]
        %v6989 = vld [vmem:[%s6815 + $0xb3] sm:$0xff]
        %v6990 = vlaneseq
        %v6991 = vshrl.u32 %v6990, 7
        %v6992 = vsub.s32 0, %v6991
        %v6993 = vrot.slane %v6981, %v6992
        %v6994 = vmul.f32 %v6982, %v6993
        %v6995 = vmul.f32 %v6983, %v6993
        %v6996 = vmul.f32 %v6984, %v6993
        %v6997 = vmul.f32 %v6985, %v6993
        %v6998 = vmul.f32 %v6986, %v6993
        %v6999 = vmul.f32 %v6987, %v6993
        %v7000 = vmul.f32 %v6988, %v6993
        %v7001 = vmul.f32 %v6989, %v6993
        %v7002 = vadd.f32 %v6973, %v6994
        %v7003 = vadd.f32 %v6974, %v6995
        %v7004 = vadd.f32 %v6975, %v6996
        %v7005 = vadd.f32 %v6976, %v6997
        %v7006 = vadd.f32 %v6977, %v6998
        %v7007 = vadd.f32 %v6978, %v6999
        %v7008 = vadd.f32 %v6979, %v7000
        %v7009 = vadd.f32 %v6980, %v7001
        %v7010 = vld [vmem:[#allocation3] sm:$0xff]
        %v7011 = vld [vmem:[#allocation3 + $0x8] sm:$0xff]
        %v7012 = vld [vmem:[#allocation3 + $0x10] sm:$0xff]
        %v7013 = vld [vmem:[#allocation3 + $0x18] sm:$0xff]
        %v7014 = vld [vmem:[#allocation3 + $0x20] sm:$0xff]
        %v7015 = vld [vmem:[#allocation3 + $0x28] sm:$0xff]
        %v7016 = vld [vmem:[#allocation3 + $0x30] sm:$0xff]
        %v7017 = vld [vmem:[#allocation3 + $0x38] sm:$0xff]
        %v7018 = vadd.f32 %v7010, %v7002
        %v7019 = vadd.f32 %v7011, %v7003
        %v7020 = vadd.f32 %v7012, %v7004
        %v7021 = vadd.f32 %v7013, %v7005
        %v7022 = vadd.f32 %v7014, %v7006
        %v7023 = vadd.f32 %v7015, %v7007
        %v7024 = vadd.f32 %v7016, %v7008
        %v7025 = vadd.f32 %v7017, %v7009
        %7026 = vst.msk [vmem:[#allocation3] sm:$0xff] %vm716, %v7018
        %7027 = vst.msk [vmem:[#allocation3 + $0x8] sm:$0xff] %vm716, %v7019
        %7028 = vst.msk [vmem:[#allocation3 + $0x10] sm:$0xff] %vm716, %v7020
        %7029 = vst.msk [vmem:[#allocation3 + $0x18] sm:$0xff] %vm716, %v7021
        %7030 = vst.msk [vmem:[#allocation3 + $0x20] sm:$0xff] %vm716, %v7022
        %7031 = vst.msk [vmem:[#allocation3 + $0x28] sm:$0xff] %vm716, %v7023
        %7032 = vst.msk [vmem:[#allocation3 + $0x30] sm:$0xff] %vm716, %v7024
        %7033 = vst.msk [vmem:[#allocation3 + $0x38] sm:$0xff] %vm716, %v7025
        %s7034 = scalar_lea.vmem %s7, 24
        %v7035 = vld [vmem:[%s7034] sm:$0x1]
        %v7036 = vld [vmem:[%s875 + $0x5] sm:$0xff]
        %v7037 = vld [vmem:[%s875 + $0x1d] sm:$0xff]
        %v7038 = vld [vmem:[%s875 + $0x35] sm:$0xff]
        %v7039 = vld [vmem:[%s875 + $0x4d] sm:$0xff]
        %v7040 = vld [vmem:[%s875 + $0x65] sm:$0xff]
        %v7041 = vld [vmem:[%s875 + $0x7d] sm:$0xff]
        %v7042 = vld [vmem:[%s875 + $0x95] sm:$0xff]
        %v7043 = vld [vmem:[%s875 + $0xad] sm:$0xff]
        %v7044 = vlaneseq
        %v7045 = vshrl.u32 %v7044, 7
        %v7046 = vsub.s32 0, %v7045
        %v7047 = vrot.slane %v7035, %v7046
        %v7048 = vmul.f32 %v7036, %v7047
        %v7049 = vmul.f32 %v7037, %v7047
        %v7050 = vmul.f32 %v7038, %v7047
        %v7051 = vmul.f32 %v7039, %v7047
        %v7052 = vmul.f32 %v7040, %v7047
        %v7053 = vmul.f32 %v7041, %v7047
        %v7054 = vmul.f32 %v7042, %v7047
        %v7055 = vmul.f32 %v7043, %v7047
        %v7056 = vld [vmem:[%s7034 + $0x1] sm:$0x1]
        %v7057 = vld [vmem:[%s875 + $0x6] sm:$0xff]
        %v7058 = vld [vmem:[%s875 + $0x1e] sm:$0xff]
        %v7059 = vld [vmem:[%s875 + $0x36] sm:$0xff]
        %v7060 = vld [vmem:[%s875 + $0x4e] sm:$0xff]
        %v7061 = vld [vmem:[%s875 + $0x66] sm:$0xff]
        %v7062 = vld [vmem:[%s875 + $0x7e] sm:$0xff]
        %v7063 = vld [vmem:[%s875 + $0x96] sm:$0xff]
        %v7064 = vld [vmem:[%s875 + $0xae] sm:$0xff]
        %v7065 = vlaneseq
        %v7066 = vshrl.u32 %v7065, 7
        %v7067 = vsub.s32 0, %v7066
        %v7068 = vrot.slane %v7056, %v7067
        %v7069 = vmul.f32 %v7057, %v7068
        %v7070 = vmul.f32 %v7058, %v7068
        %v7071 = vmul.f32 %v7059, %v7068
        %v7072 = vmul.f32 %v7060, %v7068
        %v7073 = vmul.f32 %v7061, %v7068
        %v7074 = vmul.f32 %v7062, %v7068
        %v7075 = vmul.f32 %v7063, %v7068
        %v7076 = vmul.f32 %v7064, %v7068
        %v7077 = vadd.f32 %v7048, %v7069
        %v7078 = vadd.f32 %v7049, %v7070
        %v7079 = vadd.f32 %v7050, %v7071
        %v7080 = vadd.f32 %v7051, %v7072
        %v7081 = vadd.f32 %v7052, %v7073
        %v7082 = vadd.f32 %v7053, %v7074
        %v7083 = vadd.f32 %v7054, %v7075
        %v7084 = vadd.f32 %v7055, %v7076
        %v7085 = vld [vmem:[%s7034 + $0x2] sm:$0x1]
        %v7086 = vld [vmem:[%s875 + $0x7] sm:$0xff]
        %v7087 = vld [vmem:[%s875 + $0x1f] sm:$0xff]
        %v7088 = vld [vmem:[%s875 + $0x37] sm:$0xff]
        %v7089 = vld [vmem:[%s875 + $0x4f] sm:$0xff]
        %v7090 = vld [vmem:[%s875 + $0x67] sm:$0xff]
        %v7091 = vld [vmem:[%s875 + $0x7f] sm:$0xff]
        %v7092 = vld [vmem:[%s875 + $0x97] sm:$0xff]
        %v7093 = vld [vmem:[%s875 + $0xaf] sm:$0xff]
        %v7094 = vlaneseq
        %v7095 = vshrl.u32 %v7094, 7
        %v7096 = vsub.s32 0, %v7095
        %v7097 = vrot.slane %v7085, %v7096
        %v7098 = vmul.f32 %v7086, %v7097
        %v7099 = vmul.f32 %v7087, %v7097
        %v7100 = vmul.f32 %v7088, %v7097
        %v7101 = vmul.f32 %v7089, %v7097
        %v7102 = vmul.f32 %v7090, %v7097
        %v7103 = vmul.f32 %v7091, %v7097
        %v7104 = vmul.f32 %v7092, %v7097
        %v7105 = vmul.f32 %v7093, %v7097
        %v7106 = vadd.f32 %v7077, %v7098
        %v7107 = vadd.f32 %v7078, %v7099
        %v7108 = vadd.f32 %v7079, %v7100
        %v7109 = vadd.f32 %v7080, %v7101
        %v7110 = vadd.f32 %v7081, %v7102
        %v7111 = vadd.f32 %v7082, %v7103
        %v7112 = vadd.f32 %v7083, %v7104
        %v7113 = vadd.f32 %v7084, %v7105
        %v7114 = vld [vmem:[%s7034 + $0x3] sm:$0x1]
        %v7115 = vld [vmem:[%s875 + $0x8] sm:$0xff]
        %v7116 = vld [vmem:[%s875 + $0x20] sm:$0xff]
        %v7117 = vld [vmem:[%s875 + $0x38] sm:$0xff]
        %v7118 = vld [vmem:[%s875 + $0x50] sm:$0xff]
        %v7119 = vld [vmem:[%s875 + $0x68] sm:$0xff]
        %v7120 = vld [vmem:[%s875 + $0x80] sm:$0xff]
        %v7121 = vld [vmem:[%s875 + $0x98] sm:$0xff]
        %v7122 = vld [vmem:[%s875 + $0xb0] sm:$0xff]
        %v7123 = vlaneseq
        %v7124 = vshrl.u32 %v7123, 7
        %v7125 = vsub.s32 0, %v7124
        %v7126 = vrot.slane %v7114, %v7125
        %v7127 = vmul.f32 %v7115, %v7126
        %v7128 = vmul.f32 %v7116, %v7126
        %v7129 = vmul.f32 %v7117, %v7126
        %v7130 = vmul.f32 %v7118, %v7126
        %v7131 = vmul.f32 %v7119, %v7126
        %v7132 = vmul.f32 %v7120, %v7126
        %v7133 = vmul.f32 %v7121, %v7126
        %v7134 = vmul.f32 %v7122, %v7126
        %v7135 = vadd.f32 %v7106, %v7127
        %v7136 = vadd.f32 %v7107, %v7128
        %v7137 = vadd.f32 %v7108, %v7129
        %v7138 = vadd.f32 %v7109, %v7130
        %v7139 = vadd.f32 %v7110, %v7131
        %v7140 = vadd.f32 %v7111, %v7132
        %v7141 = vadd.f32 %v7112, %v7133
        %v7142 = vadd.f32 %v7113, %v7134
        %v7143 = vld [vmem:[%s7034 + $0x4] sm:$0x1]
        %v7144 = vld [vmem:[%s875 + $0x9] sm:$0xff]
        %v7145 = vld [vmem:[%s875 + $0x21] sm:$0xff]
        %v7146 = vld [vmem:[%s875 + $0x39] sm:$0xff]
        %v7147 = vld [vmem:[%s875 + $0x51] sm:$0xff]
        %v7148 = vld [vmem:[%s875 + $0x69] sm:$0xff]
        %v7149 = vld [vmem:[%s875 + $0x81] sm:$0xff]
        %v7150 = vld [vmem:[%s875 + $0x99] sm:$0xff]
        %v7151 = vld [vmem:[%s875 + $0xb1] sm:$0xff]
        %v7152 = vlaneseq
        %v7153 = vshrl.u32 %v7152, 7
        %v7154 = vsub.s32 0, %v7153
        %v7155 = vrot.slane %v7143, %v7154
        %v7156 = vmul.f32 %v7144, %v7155
        %v7157 = vmul.f32 %v7145, %v7155
        %v7158 = vmul.f32 %v7146, %v7155
        %v7159 = vmul.f32 %v7147, %v7155
        %v7160 = vmul.f32 %v7148, %v7155
        %v7161 = vmul.f32 %v7149, %v7155
        %v7162 = vmul.f32 %v7150, %v7155
        %v7163 = vmul.f32 %v7151, %v7155
        %v7164 = vadd.f32 %v7135, %v7156
        %v7165 = vadd.f32 %v7136, %v7157
        %v7166 = vadd.f32 %v7137, %v7158
        %v7167 = vadd.f32 %v7138, %v7159
        %v7168 = vadd.f32 %v7139, %v7160
        %v7169 = vadd.f32 %v7140, %v7161
        %v7170 = vadd.f32 %v7141, %v7162
        %v7171 = vadd.f32 %v7142, %v7163
        %v7172 = vld [vmem:[%s7034 + $0x5] sm:$0x1]
        %v7173 = vld [vmem:[%s875 + $0xa] sm:$0xff]
        %v7174 = vld [vmem:[%s875 + $0x22] sm:$0xff]
        %v7175 = vld [vmem:[%s875 + $0x3a] sm:$0xff]
        %v7176 = vld [vmem:[%s875 + $0x52] sm:$0xff]
        %v7177 = vld [vmem:[%s875 + $0x6a] sm:$0xff]
        %v7178 = vld [vmem:[%s875 + $0x82] sm:$0xff]
        %v7179 = vld [vmem:[%s875 + $0x9a] sm:$0xff]
        %v7180 = vld [vmem:[%s875 + $0xb2] sm:$0xff]
        %v7181 = vlaneseq
        %v7182 = vshrl.u32 %v7181, 7
        %v7183 = vsub.s32 0, %v7182
        %v7184 = vrot.slane %v7172, %v7183
        %v7185 = vmul.f32 %v7173, %v7184
        %v7186 = vmul.f32 %v7174, %v7184
        %v7187 = vmul.f32 %v7175, %v7184
        %v7188 = vmul.f32 %v7176, %v7184
        %v7189 = vmul.f32 %v7177, %v7184
        %v7190 = vmul.f32 %v7178, %v7184
        %v7191 = vmul.f32 %v7179, %v7184
        %v7192 = vmul.f32 %v7180, %v7184
        %v7193 = vadd.f32 %v7164, %v7185
        %v7194 = vadd.f32 %v7165, %v7186
        %v7195 = vadd.f32 %v7166, %v7187
        %v7196 = vadd.f32 %v7167, %v7188
        %v7197 = vadd.f32 %v7168, %v7189
        %v7198 = vadd.f32 %v7169, %v7190
        %v7199 = vadd.f32 %v7170, %v7191
        %v7200 = vadd.f32 %v7171, %v7192
        %v7201 = vld [vmem:[%s7034 + $0x6] sm:$0x1]
        %v7202 = vld [vmem:[%s875 + $0xb] sm:$0xff]
        %v7203 = vld [vmem:[%s875 + $0x23] sm:$0xff]
        %v7204 = vld [vmem:[%s875 + $0x3b] sm:$0xff]
        %v7205 = vld [vmem:[%s875 + $0x53] sm:$0xff]
        %v7206 = vld [vmem:[%s875 + $0x6b] sm:$0xff]
        %v7207 = vld [vmem:[%s875 + $0x83] sm:$0xff]
        %v7208 = vld [vmem:[%s875 + $0x9b] sm:$0xff]
        %v7209 = vld [vmem:[%s875 + $0xb3] sm:$0xff]
        %v7210 = vlaneseq
        %v7211 = vshrl.u32 %v7210, 7
        %v7212 = vsub.s32 0, %v7211
        %v7213 = vrot.slane %v7201, %v7212
        %v7214 = vmul.f32 %v7202, %v7213
        %v7215 = vmul.f32 %v7203, %v7213
        %v7216 = vmul.f32 %v7204, %v7213
        %v7217 = vmul.f32 %v7205, %v7213
        %v7218 = vmul.f32 %v7206, %v7213
        %v7219 = vmul.f32 %v7207, %v7213
        %v7220 = vmul.f32 %v7208, %v7213
        %v7221 = vmul.f32 %v7209, %v7213
        %v7222 = vadd.f32 %v7193, %v7214
        %v7223 = vadd.f32 %v7194, %v7215
        %v7224 = vadd.f32 %v7195, %v7216
        %v7225 = vadd.f32 %v7196, %v7217
        %v7226 = vadd.f32 %v7197, %v7218
        %v7227 = vadd.f32 %v7198, %v7219
        %v7228 = vadd.f32 %v7199, %v7220
        %v7229 = vadd.f32 %v7200, %v7221
        %v7230 = vld [vmem:[#allocation3] sm:$0xff]
        %v7231 = vld [vmem:[#allocation3 + $0x8] sm:$0xff]
        %v7232 = vld [vmem:[#allocation3 + $0x10] sm:$0xff]
        %v7233 = vld [vmem:[#allocation3 + $0x18] sm:$0xff]
        %v7234 = vld [vmem:[#allocation3 + $0x20] sm:$0xff]
        %v7235 = vld [vmem:[#allocation3 + $0x28] sm:$0xff]
        %v7236 = vld [vmem:[#allocation3 + $0x30] sm:$0xff]
        %v7237 = vld [vmem:[#allocation3 + $0x38] sm:$0xff]
        %v7238 = vadd.f32 %v7230, %v7222
        %v7239 = vadd.f32 %v7231, %v7223
        %v7240 = vadd.f32 %v7232, %v7224
        %v7241 = vadd.f32 %v7233, %v7225
        %v7242 = vadd.f32 %v7234, %v7226
        %v7243 = vadd.f32 %v7235, %v7227
        %v7244 = vadd.f32 %v7236, %v7228
        %v7245 = vadd.f32 %v7237, %v7229
        %7246 = vst.msk [vmem:[#allocation3] sm:$0xff] %vm716, %v7238
        %7247 = vst.msk [vmem:[#allocation3 + $0x8] sm:$0xff] %vm716, %v7239
        %7248 = vst.msk [vmem:[#allocation3 + $0x10] sm:$0xff] %vm716, %v7240
        %7249 = vst.msk [vmem:[#allocation3 + $0x18] sm:$0xff] %vm716, %v7241
        %7250 = vst.msk [vmem:[#allocation3 + $0x20] sm:$0xff] %vm716, %v7242
        %7251 = vst.msk [vmem:[#allocation3 + $0x28] sm:$0xff] %vm716, %v7243
        %7252 = vst.msk [vmem:[#allocation3 + $0x30] sm:$0xff] %vm716, %v7244
        %7253 = vst.msk [vmem:[#allocation3 + $0x38] sm:$0xff] %vm716, %v7245
        %s7254 = scalar_lea.vmem %s7, 32
        %v7255 = vld [vmem:[%s7254] sm:$0x1]
        %s7256 = scalar_lea.vmem [#allocation4], 96
        %v7257 = vld [vmem:[%s7256 + $0x5] sm:$0xff]
        %v7258 = vld [vmem:[%s7256 + $0x1d] sm:$0xff]
        %v7259 = vld [vmem:[%s7256 + $0x35] sm:$0xff]
        %v7260 = vld [vmem:[%s7256 + $0x4d] sm:$0xff]
        %v7261 = vld [vmem:[%s7256 + $0x65] sm:$0xff]
        %v7262 = vld [vmem:[%s7256 + $0x7d] sm:$0xff]
        %v7263 = vld [vmem:[%s7256 + $0x95] sm:$0xff]
        %v7264 = vld [vmem:[%s7256 + $0xad] sm:$0xff]
        %v7265 = vlaneseq
        %v7266 = vshrl.u32 %v7265, 7
        %v7267 = vsub.s32 0, %v7266
        %v7268 = vrot.slane %v7255, %v7267
        %v7269 = vmul.f32 %v7257, %v7268
        %v7270 = vmul.f32 %v7258, %v7268
        %v7271 = vmul.f32 %v7259, %v7268
        %v7272 = vmul.f32 %v7260, %v7268
        %v7273 = vmul.f32 %v7261, %v7268
        %v7274 = vmul.f32 %v7262, %v7268
        %v7275 = vmul.f32 %v7263, %v7268
        %v7276 = vmul.f32 %v7264, %v7268
        %v7277 = vld [vmem:[%s7254 + $0x1] sm:$0x1]
        %v7278 = vld [vmem:[%s7256 + $0x6] sm:$0xff]
        %v7279 = vld [vmem:[%s7256 + $0x1e] sm:$0xff]
        %v7280 = vld [vmem:[%s7256 + $0x36] sm:$0xff]
        %v7281 = vld [vmem:[%s7256 + $0x4e] sm:$0xff]
        %v7282 = vld [vmem:[%s7256 + $0x66] sm:$0xff]
        %v7283 = vld [vmem:[%s7256 + $0x7e] sm:$0xff]
        %v7284 = vld [vmem:[%s7256 + $0x96] sm:$0xff]
        %v7285 = vld [vmem:[%s7256 + $0xae] sm:$0xff]
        %v7286 = vlaneseq
        %v7287 = vshrl.u32 %v7286, 7
        %v7288 = vsub.s32 0, %v7287
        %v7289 = vrot.slane %v7277, %v7288
        %v7290 = vmul.f32 %v7278, %v7289
        %v7291 = vmul.f32 %v7279, %v7289
        %v7292 = vmul.f32 %v7280, %v7289
        %v7293 = vmul.f32 %v7281, %v7289
        %v7294 = vmul.f32 %v7282, %v7289
        %v7295 = vmul.f32 %v7283, %v7289
        %v7296 = vmul.f32 %v7284, %v7289
        %v7297 = vmul.f32 %v7285, %v7289
        %v7298 = vadd.f32 %v7269, %v7290
        %v7299 = vadd.f32 %v7270, %v7291
        %v7300 = vadd.f32 %v7271, %v7292
        %v7301 = vadd.f32 %v7272, %v7293
        %v7302 = vadd.f32 %v7273, %v7294
        %v7303 = vadd.f32 %v7274, %v7295
        %v7304 = vadd.f32 %v7275, %v7296
        %v7305 = vadd.f32 %v7276, %v7297
        %v7306 = vld [vmem:[%s7254 + $0x2] sm:$0x1]
        %v7307 = vld [vmem:[%s7256 + $0x7] sm:$0xff]
        %v7308 = vld [vmem:[%s7256 + $0x1f] sm:$0xff]
        %v7309 = vld [vmem:[%s7256 + $0x37] sm:$0xff]
        %v7310 = vld [vmem:[%s7256 + $0x4f] sm:$0xff]
        %v7311 = vld [vmem:[%s7256 + $0x67] sm:$0xff]
        %v7312 = vld [vmem:[%s7256 + $0x7f] sm:$0xff]
        %v7313 = vld [vmem:[%s7256 + $0x97] sm:$0xff]
        %v7314 = vld [vmem:[%s7256 + $0xaf] sm:$0xff]
        %v7315 = vlaneseq
        %v7316 = vshrl.u32 %v7315, 7
        %v7317 = vsub.s32 0, %v7316
        %v7318 = vrot.slane %v7306, %v7317
        %v7319 = vmul.f32 %v7307, %v7318
        %v7320 = vmul.f32 %v7308, %v7318
        %v7321 = vmul.f32 %v7309, %v7318
        %v7322 = vmul.f32 %v7310, %v7318
        %v7323 = vmul.f32 %v7311, %v7318
        %v7324 = vmul.f32 %v7312, %v7318
        %v7325 = vmul.f32 %v7313, %v7318
        %v7326 = vmul.f32 %v7314, %v7318
        %v7327 = vadd.f32 %v7298, %v7319
        %v7328 = vadd.f32 %v7299, %v7320
        %v7329 = vadd.f32 %v7300, %v7321
        %v7330 = vadd.f32 %v7301, %v7322
        %v7331 = vadd.f32 %v7302, %v7323
        %v7332 = vadd.f32 %v7303, %v7324
        %v7333 = vadd.f32 %v7304, %v7325
        %v7334 = vadd.f32 %v7305, %v7326
        %v7335 = vld [vmem:[%s7254 + $0x3] sm:$0x1]
        %v7336 = vld [vmem:[%s7256 + $0x8] sm:$0xff]
        %v7337 = vld [vmem:[%s7256 + $0x20] sm:$0xff]
        %v7338 = vld [vmem:[%s7256 + $0x38] sm:$0xff]
        %v7339 = vld [vmem:[%s7256 + $0x50] sm:$0xff]
        %v7340 = vld [vmem:[%s7256 + $0x68] sm:$0xff]
        %v7341 = vld [vmem:[%s7256 + $0x80] sm:$0xff]
        %v7342 = vld [vmem:[%s7256 + $0x98] sm:$0xff]
        %v7343 = vld [vmem:[%s7256 + $0xb0] sm:$0xff]
        %v7344 = vlaneseq
        %v7345 = vshrl.u32 %v7344, 7
        %v7346 = vsub.s32 0, %v7345
        %v7347 = vrot.slane %v7335, %v7346
        %v7348 = vmul.f32 %v7336, %v7347
        %v7349 = vmul.f32 %v7337, %v7347
        %v7350 = vmul.f32 %v7338, %v7347
        %v7351 = vmul.f32 %v7339, %v7347
        %v7352 = vmul.f32 %v7340, %v7347
        %v7353 = vmul.f32 %v7341, %v7347
        %v7354 = vmul.f32 %v7342, %v7347
        %v7355 = vmul.f32 %v7343, %v7347
        %v7356 = vadd.f32 %v7327, %v7348
        %v7357 = vadd.f32 %v7328, %v7349
        %v7358 = vadd.f32 %v7329, %v7350
        %v7359 = vadd.f32 %v7330, %v7351
        %v7360 = vadd.f32 %v7331, %v7352
        %v7361 = vadd.f32 %v7332, %v7353
        %v7362 = vadd.f32 %v7333, %v7354
        %v7363 = vadd.f32 %v7334, %v7355
        %v7364 = vld [vmem:[%s7254 + $0x4] sm:$0x1]
        %v7365 = vld [vmem:[%s7256 + $0x9] sm:$0xff]
        %v7366 = vld [vmem:[%s7256 + $0x21] sm:$0xff]
        %v7367 = vld [vmem:[%s7256 + $0x39] sm:$0xff]
        %v7368 = vld [vmem:[%s7256 + $0x51] sm:$0xff]
        %v7369 = vld [vmem:[%s7256 + $0x69] sm:$0xff]
        %v7370 = vld [vmem:[%s7256 + $0x81] sm:$0xff]
        %v7371 = vld [vmem:[%s7256 + $0x99] sm:$0xff]
        %v7372 = vld [vmem:[%s7256 + $0xb1] sm:$0xff]
        %v7373 = vlaneseq
        %v7374 = vshrl.u32 %v7373, 7
        %v7375 = vsub.s32 0, %v7374
        %v7376 = vrot.slane %v7364, %v7375
        %v7377 = vmul.f32 %v7365, %v7376
        %v7378 = vmul.f32 %v7366, %v7376
        %v7379 = vmul.f32 %v7367, %v7376
        %v7380 = vmul.f32 %v7368, %v7376
        %v7381 = vmul.f32 %v7369, %v7376
        %v7382 = vmul.f32 %v7370, %v7376
        %v7383 = vmul.f32 %v7371, %v7376
        %v7384 = vmul.f32 %v7372, %v7376
        %v7385 = vadd.f32 %v7356, %v7377
        %v7386 = vadd.f32 %v7357, %v7378
        %v7387 = vadd.f32 %v7358, %v7379
        %v7388 = vadd.f32 %v7359, %v7380
        %v7389 = vadd.f32 %v7360, %v7381
        %v7390 = vadd.f32 %v7361, %v7382
        %v7391 = vadd.f32 %v7362, %v7383
        %v7392 = vadd.f32 %v7363, %v7384
        %v7393 = vld [vmem:[%s7254 + $0x5] sm:$0x1]
        %v7394 = vld [vmem:[%s7256 + $0xa] sm:$0xff]
        %v7395 = vld [vmem:[%s7256 + $0x22] sm:$0xff]
        %v7396 = vld [vmem:[%s7256 + $0x3a] sm:$0xff]
        %v7397 = vld [vmem:[%s7256 + $0x52] sm:$0xff]
        %v7398 = vld [vmem:[%s7256 + $0x6a] sm:$0xff]
        %v7399 = vld [vmem:[%s7256 + $0x82] sm:$0xff]
        %v7400 = vld [vmem:[%s7256 + $0x9a] sm:$0xff]
        %v7401 = vld [vmem:[%s7256 + $0xb2] sm:$0xff]
        %v7402 = vlaneseq
        %v7403 = vshrl.u32 %v7402, 7
        %v7404 = vsub.s32 0, %v7403
        %v7405 = vrot.slane %v7393, %v7404
        %v7406 = vmul.f32 %v7394, %v7405
        %v7407 = vmul.f32 %v7395, %v7405
        %v7408 = vmul.f32 %v7396, %v7405
        %v7409 = vmul.f32 %v7397, %v7405
        %v7410 = vmul.f32 %v7398, %v7405
        %v7411 = vmul.f32 %v7399, %v7405
        %v7412 = vmul.f32 %v7400, %v7405
        %v7413 = vmul.f32 %v7401, %v7405
        %v7414 = vadd.f32 %v7385, %v7406
        %v7415 = vadd.f32 %v7386, %v7407
        %v7416 = vadd.f32 %v7387, %v7408
        %v7417 = vadd.f32 %v7388, %v7409
        %v7418 = vadd.f32 %v7389, %v7410
        %v7419 = vadd.f32 %v7390, %v7411
        %v7420 = vadd.f32 %v7391, %v7412
        %v7421 = vadd.f32 %v7392, %v7413
        %v7422 = vld [vmem:[%s7254 + $0x6] sm:$0x1]
        %v7423 = vld [vmem:[%s7256 + $0xb] sm:$0xff]
        %v7424 = vld [vmem:[%s7256 + $0x23] sm:$0xff]
        %v7425 = vld [vmem:[%s7256 + $0x3b] sm:$0xff]
        %v7426 = vld [vmem:[%s7256 + $0x53] sm:$0xff]
        %v7427 = vld [vmem:[%s7256 + $0x6b] sm:$0xff]
        %v7428 = vld [vmem:[%s7256 + $0x83] sm:$0xff]
        %v7429 = vld [vmem:[%s7256 + $0x9b] sm:$0xff]
        %v7430 = vld [vmem:[%s7256 + $0xb3] sm:$0xff]
        %v7431 = vlaneseq
        %v7432 = vshrl.u32 %v7431, 7
        %v7433 = vsub.s32 0, %v7432
        %v7434 = vrot.slane %v7422, %v7433
        %v7435 = vmul.f32 %v7423, %v7434
        %v7436 = vmul.f32 %v7424, %v7434
        %v7437 = vmul.f32 %v7425, %v7434
        %v7438 = vmul.f32 %v7426, %v7434
        %v7439 = vmul.f32 %v7427, %v7434
        %v7440 = vmul.f32 %v7428, %v7434
        %v7441 = vmul.f32 %v7429, %v7434
        %v7442 = vmul.f32 %v7430, %v7434
        %v7443 = vadd.f32 %v7414, %v7435
        %v7444 = vadd.f32 %v7415, %v7436
        %v7445 = vadd.f32 %v7416, %v7437
        %v7446 = vadd.f32 %v7417, %v7438
        %v7447 = vadd.f32 %v7418, %v7439
        %v7448 = vadd.f32 %v7419, %v7440
        %v7449 = vadd.f32 %v7420, %v7441
        %v7450 = vadd.f32 %v7421, %v7442
        %v7451 = vld [vmem:[#allocation3] sm:$0xff]
        %v7452 = vld [vmem:[#allocation3 + $0x8] sm:$0xff]
        %v7453 = vld [vmem:[#allocation3 + $0x10] sm:$0xff]
        %v7454 = vld [vmem:[#allocation3 + $0x18] sm:$0xff]
        %v7455 = vld [vmem:[#allocation3 + $0x20] sm:$0xff]
        %v7456 = vld [vmem:[#allocation3 + $0x28] sm:$0xff]
        %v7457 = vld [vmem:[#allocation3 + $0x30] sm:$0xff]
        %v7458 = vld [vmem:[#allocation3 + $0x38] sm:$0xff]
        %v7459 = vadd.f32 %v7451, %v7443
        %v7460 = vadd.f32 %v7452, %v7444
        %v7461 = vadd.f32 %v7453, %v7445
        %v7462 = vadd.f32 %v7454, %v7446
        %v7463 = vadd.f32 %v7455, %v7447
        %v7464 = vadd.f32 %v7456, %v7448
        %v7465 = vadd.f32 %v7457, %v7449
        %v7466 = vadd.f32 %v7458, %v7450
        %7467 = vst.msk [vmem:[#allocation3] sm:$0xff] %vm716, %v7459
        %7468 = vst.msk [vmem:[#allocation3 + $0x8] sm:$0xff] %vm716, %v7460
        %7469 = vst.msk [vmem:[#allocation3 + $0x10] sm:$0xff] %vm716, %v7461
        %7470 = vst.msk [vmem:[#allocation3 + $0x18] sm:$0xff] %vm716, %v7462
        %7471 = vst.msk [vmem:[#allocation3 + $0x20] sm:$0xff] %vm716, %v7463
        %7472 = vst.msk [vmem:[#allocation3 + $0x28] sm:$0xff] %vm716, %v7464
        %7473 = vst.msk [vmem:[#allocation3 + $0x30] sm:$0xff] %vm716, %v7465
        %7474 = vst.msk [vmem:[#allocation3 + $0x38] sm:$0xff] %vm716, %v7466
        %s7475 = scalar_lea.vmem %s7, 40
        %v7476 = vld [vmem:[%s7475] sm:$0x1]
        %s7477 = scalar_lea.vmem [#allocation4], 120
        %v7478 = vld [vmem:[%s7477 + $0x5] sm:$0xff]
        %v7479 = vld [vmem:[%s7477 + $0x1d] sm:$0xff]
        %v7480 = vld [vmem:[%s7477 + $0x35] sm:$0xff]
        %v7481 = vld [vmem:[%s7477 + $0x4d] sm:$0xff]
        %v7482 = vld [vmem:[%s7477 + $0x65] sm:$0xff]
        %v7483 = vld [vmem:[%s7477 + $0x7d] sm:$0xff]
        %v7484 = vld [vmem:[%s7477 + $0x95] sm:$0xff]
        %v7485 = vld [vmem:[%s7477 + $0xad] sm:$0xff]
        %v7486 = vlaneseq
        %v7487 = vshrl.u32 %v7486, 7
        %v7488 = vsub.s32 0, %v7487
        %v7489 = vrot.slane %v7476, %v7488
        %v7490 = vmul.f32 %v7478, %v7489
        %v7491 = vmul.f32 %v7479, %v7489
        %v7492 = vmul.f32 %v7480, %v7489
        %v7493 = vmul.f32 %v7481, %v7489
        %v7494 = vmul.f32 %v7482, %v7489
        %v7495 = vmul.f32 %v7483, %v7489
        %v7496 = vmul.f32 %v7484, %v7489
        %v7497 = vmul.f32 %v7485, %v7489
        %v7498 = vld [vmem:[%s7475 + $0x1] sm:$0x1]
        %v7499 = vld [vmem:[%s7477 + $0x6] sm:$0xff]
        %v7500 = vld [vmem:[%s7477 + $0x1e] sm:$0xff]
        %v7501 = vld [vmem:[%s7477 + $0x36] sm:$0xff]
        %v7502 = vld [vmem:[%s7477 + $0x4e] sm:$0xff]
        %v7503 = vld [vmem:[%s7477 + $0x66] sm:$0xff]
        %v7504 = vld [vmem:[%s7477 + $0x7e] sm:$0xff]
        %v7505 = vld [vmem:[%s7477 + $0x96] sm:$0xff]
        %v7506 = vld [vmem:[%s7477 + $0xae] sm:$0xff]
        %v7507 = vlaneseq
        %v7508 = vshrl.u32 %v7507, 7
        %v7509 = vsub.s32 0, %v7508
        %v7510 = vrot.slane %v7498, %v7509
        %v7511 = vmul.f32 %v7499, %v7510
        %v7512 = vmul.f32 %v7500, %v7510
        %v7513 = vmul.f32 %v7501, %v7510
        %v7514 = vmul.f32 %v7502, %v7510
        %v7515 = vmul.f32 %v7503, %v7510
        %v7516 = vmul.f32 %v7504, %v7510
        %v7517 = vmul.f32 %v7505, %v7510
        %v7518 = vmul.f32 %v7506, %v7510
        %v7519 = vadd.f32 %v7490, %v7511
        %v7520 = vadd.f32 %v7491, %v7512
        %v7521 = vadd.f32 %v7492, %v7513
        %v7522 = vadd.f32 %v7493, %v7514
        %v7523 = vadd.f32 %v7494, %v7515
        %v7524 = vadd.f32 %v7495, %v7516
        %v7525 = vadd.f32 %v7496, %v7517
        %v7526 = vadd.f32 %v7497, %v7518
        %v7527 = vld [vmem:[%s7475 + $0x2] sm:$0x1]
        %v7528 = vld [vmem:[%s7477 + $0x7] sm:$0xff]
        %v7529 = vld [vmem:[%s7477 + $0x1f] sm:$0xff]
        %v7530 = vld [vmem:[%s7477 + $0x37] sm:$0xff]
        %v7531 = vld [vmem:[%s7477 + $0x4f] sm:$0xff]
        %v7532 = vld [vmem:[%s7477 + $0x67] sm:$0xff]
        %v7533 = vld [vmem:[%s7477 + $0x7f] sm:$0xff]
        %v7534 = vld [vmem:[%s7477 + $0x97] sm:$0xff]
        %v7535 = vld [vmem:[%s7477 + $0xaf] sm:$0xff]
        %v7536 = vlaneseq
        %v7537 = vshrl.u32 %v7536, 7
        %v7538 = vsub.s32 0, %v7537
        %v7539 = vrot.slane %v7527, %v7538
        %v7540 = vmul.f32 %v7528, %v7539
        %v7541 = vmul.f32 %v7529, %v7539
        %v7542 = vmul.f32 %v7530, %v7539
        %v7543 = vmul.f32 %v7531, %v7539
        %v7544 = vmul.f32 %v7532, %v7539
        %v7545 = vmul.f32 %v7533, %v7539
        %v7546 = vmul.f32 %v7534, %v7539
        %v7547 = vmul.f32 %v7535, %v7539
        %v7548 = vadd.f32 %v7519, %v7540
        %v7549 = vadd.f32 %v7520, %v7541
        %v7550 = vadd.f32 %v7521, %v7542
        %v7551 = vadd.f32 %v7522, %v7543
        %v7552 = vadd.f32 %v7523, %v7544
        %v7553 = vadd.f32 %v7524, %v7545
        %v7554 = vadd.f32 %v7525, %v7546
        %v7555 = vadd.f32 %v7526, %v7547
        %v7556 = vld [vmem:[%s7475 + $0x3] sm:$0x1]
        %v7557 = vld [vmem:[%s7477 + $0x8] sm:$0xff]
        %v7558 = vld [vmem:[%s7477 + $0x20] sm:$0xff]
        %v7559 = vld [vmem:[%s7477 + $0x38] sm:$0xff]
        %v7560 = vld [vmem:[%s7477 + $0x50] sm:$0xff]
        %v7561 = vld [vmem:[%s7477 + $0x68] sm:$0xff]
        %v7562 = vld [vmem:[%s7477 + $0x80] sm:$0xff]
        %v7563 = vld [vmem:[%s7477 + $0x98] sm:$0xff]
        %v7564 = vld [vmem:[%s7477 + $0xb0] sm:$0xff]
        %v7565 = vlaneseq
        %v7566 = vshrl.u32 %v7565, 7
        %v7567 = vsub.s32 0, %v7566
        %v7568 = vrot.slane %v7556, %v7567
        %v7569 = vmul.f32 %v7557, %v7568
        %v7570 = vmul.f32 %v7558, %v7568
        %v7571 = vmul.f32 %v7559, %v7568
        %v7572 = vmul.f32 %v7560, %v7568
        %v7573 = vmul.f32 %v7561, %v7568
        %v7574 = vmul.f32 %v7562, %v7568
        %v7575 = vmul.f32 %v7563, %v7568
        %v7576 = vmul.f32 %v7564, %v7568
        %v7577 = vadd.f32 %v7548, %v7569
        %v7578 = vadd.f32 %v7549, %v7570
        %v7579 = vadd.f32 %v7550, %v7571
        %v7580 = vadd.f32 %v7551, %v7572
        %v7581 = vadd.f32 %v7552, %v7573
        %v7582 = vadd.f32 %v7553, %v7574
        %v7583 = vadd.f32 %v7554, %v7575
        %v7584 = vadd.f32 %v7555, %v7576
        %v7585 = vld [vmem:[%s7475 + $0x4] sm:$0x1]
        %v7586 = vld [vmem:[%s7477 + $0x9] sm:$0xff]
        %v7587 = vld [vmem:[%s7477 + $0x21] sm:$0xff]
        %v7588 = vld [vmem:[%s7477 + $0x39] sm:$0xff]
        %v7589 = vld [vmem:[%s7477 + $0x51] sm:$0xff]
        %v7590 = vld [vmem:[%s7477 + $0x69] sm:$0xff]
        %v7591 = vld [vmem:[%s7477 + $0x81] sm:$0xff]
        %v7592 = vld [vmem:[%s7477 + $0x99] sm:$0xff]
        %v7593 = vld [vmem:[%s7477 + $0xb1] sm:$0xff]
        %v7594 = vlaneseq
        %v7595 = vshrl.u32 %v7594, 7
        %v7596 = vsub.s32 0, %v7595
        %v7597 = vrot.slane %v7585, %v7596
        %v7598 = vmul.f32 %v7586, %v7597
        %v7599 = vmul.f32 %v7587, %v7597
        %v7600 = vmul.f32 %v7588, %v7597
        %v7601 = vmul.f32 %v7589, %v7597
        %v7602 = vmul.f32 %v7590, %v7597
        %v7603 = vmul.f32 %v7591, %v7597
        %v7604 = vmul.f32 %v7592, %v7597
        %v7605 = vmul.f32 %v7593, %v7597
        %v7606 = vadd.f32 %v7577, %v7598
        %v7607 = vadd.f32 %v7578, %v7599
        %v7608 = vadd.f32 %v7579, %v7600
        %v7609 = vadd.f32 %v7580, %v7601
        %v7610 = vadd.f32 %v7581, %v7602
        %v7611 = vadd.f32 %v7582, %v7603
        %v7612 = vadd.f32 %v7583, %v7604
        %v7613 = vadd.f32 %v7584, %v7605
        %v7614 = vld [vmem:[%s7475 + $0x5] sm:$0x1]
        %v7615 = vld [vmem:[%s7477 + $0xa] sm:$0xff]
        %v7616 = vld [vmem:[%s7477 + $0x22] sm:$0xff]
        %v7617 = vld [vmem:[%s7477 + $0x3a] sm:$0xff]
        %v7618 = vld [vmem:[%s7477 + $0x52] sm:$0xff]
        %v7619 = vld [vmem:[%s7477 + $0x6a] sm:$0xff]
        %v7620 = vld [vmem:[%s7477 + $0x82] sm:$0xff]
        %v7621 = vld [vmem:[%s7477 + $0x9a] sm:$0xff]
        %v7622 = vld [vmem:[%s7477 + $0xb2] sm:$0xff]
        %v7623 = vlaneseq
        %v7624 = vshrl.u32 %v7623, 7
        %v7625 = vsub.s32 0, %v7624
        %v7626 = vrot.slane %v7614, %v7625
        %v7627 = vmul.f32 %v7615, %v7626
        %v7628 = vmul.f32 %v7616, %v7626
        %v7629 = vmul.f32 %v7617, %v7626
        %v7630 = vmul.f32 %v7618, %v7626
        %v7631 = vmul.f32 %v7619, %v7626
        %v7632 = vmul.f32 %v7620, %v7626
        %v7633 = vmul.f32 %v7621, %v7626
        %v7634 = vmul.f32 %v7622, %v7626
        %v7635 = vadd.f32 %v7606, %v7627
        %v7636 = vadd.f32 %v7607, %v7628
        %v7637 = vadd.f32 %v7608, %v7629
        %v7638 = vadd.f32 %v7609, %v7630
        %v7639 = vadd.f32 %v7610, %v7631
        %v7640 = vadd.f32 %v7611, %v7632
        %v7641 = vadd.f32 %v7612, %v7633
        %v7642 = vadd.f32 %v7613, %v7634
        %v7643 = vld [vmem:[%s7475 + $0x6] sm:$0x1]
        %v7644 = vld [vmem:[%s7477 + $0xb] sm:$0xff]
        %v7645 = vld [vmem:[%s7477 + $0x23] sm:$0xff]
        %v7646 = vld [vmem:[%s7477 + $0x3b] sm:$0xff]
        %v7647 = vld [vmem:[%s7477 + $0x53] sm:$0xff]
        %v7648 = vld [vmem:[%s7477 + $0x6b] sm:$0xff]
        %v7649 = vld [vmem:[%s7477 + $0x83] sm:$0xff]
        %v7650 = vld [vmem:[%s7477 + $0x9b] sm:$0xff]
        %v7651 = vld [vmem:[%s7477 + $0xb3] sm:$0xff]
        %v7652 = vlaneseq
        %v7653 = vshrl.u32 %v7652, 7
        %v7654 = vsub.s32 0, %v7653
        %v7655 = vrot.slane %v7643, %v7654
        %v7656 = vmul.f32 %v7644, %v7655
        %v7657 = vmul.f32 %v7645, %v7655
        %v7658 = vmul.f32 %v7646, %v7655
        %v7659 = vmul.f32 %v7647, %v7655
        %v7660 = vmul.f32 %v7648, %v7655
        %v7661 = vmul.f32 %v7649, %v7655
        %v7662 = vmul.f32 %v7650, %v7655
        %v7663 = vmul.f32 %v7651, %v7655
        %v7664 = vadd.f32 %v7635, %v7656
        %v7665 = vadd.f32 %v7636, %v7657
        %v7666 = vadd.f32 %v7637, %v7658
        %v7667 = vadd.f32 %v7638, %v7659
        %v7668 = vadd.f32 %v7639, %v7660
        %v7669 = vadd.f32 %v7640, %v7661
        %v7670 = vadd.f32 %v7641, %v7662
        %v7671 = vadd.f32 %v7642, %v7663
        %v7672 = vld [vmem:[#allocation3] sm:$0xff]
        %v7673 = vld [vmem:[#allocation3 + $0x8] sm:$0xff]
        %v7674 = vld [vmem:[#allocation3 + $0x10] sm:$0xff]
        %v7675 = vld [vmem:[#allocation3 + $0x18] sm:$0xff]
        %v7676 = vld [vmem:[#allocation3 + $0x20] sm:$0xff]
        %v7677 = vld [vmem:[#allocation3 + $0x28] sm:$0xff]
        %v7678 = vld [vmem:[#allocation3 + $0x30] sm:$0xff]
        %v7679 = vld [vmem:[#allocation3 + $0x38] sm:$0xff]
        %v7680 = vadd.f32 %v7672, %v7664
        %v7681 = vadd.f32 %v7673, %v7665
        %v7682 = vadd.f32 %v7674, %v7666
        %v7683 = vadd.f32 %v7675, %v7667
        %v7684 = vadd.f32 %v7676, %v7668
        %v7685 = vadd.f32 %v7677, %v7669
        %v7686 = vadd.f32 %v7678, %v7670
        %v7687 = vadd.f32 %v7679, %v7671
        %7688 = vst.msk [vmem:[#allocation3] sm:$0xff] %vm716, %v7680
        %7689 = vst.msk [vmem:[#allocation3 + $0x8] sm:$0xff] %vm716, %v7681
        %7690 = vst.msk [vmem:[#allocation3 + $0x10] sm:$0xff] %vm716, %v7682
        %7691 = vst.msk [vmem:[#allocation3 + $0x18] sm:$0xff] %vm716, %v7683
        %7692 = vst.msk [vmem:[#allocation3 + $0x20] sm:$0xff] %vm716, %v7684
        %7693 = vst.msk [vmem:[#allocation3 + $0x28] sm:$0xff] %vm716, %v7685
        %7694 = vst.msk [vmem:[#allocation3 + $0x30] sm:$0xff] %vm716, %v7686
        %7695 = vst.msk [vmem:[#allocation3 + $0x38] sm:$0xff] %vm716, %v7687
        %s7696 = scalar_lea.vmem %s7, 48
        %v7697 = vld [vmem:[%s7696] sm:$0x1]
        %s7698 = scalar_lea.vmem [#allocation4], 144
        %v7699 = vld [vmem:[%s7698 + $0x5] sm:$0xff]
        %v7700 = vld [vmem:[%s7698 + $0x1d] sm:$0xff]
        %v7701 = vld [vmem:[%s7698 + $0x35] sm:$0xff]
        %v7702 = vld [vmem:[%s7698 + $0x4d] sm:$0xff]
        %v7703 = vld [vmem:[%s7698 + $0x65] sm:$0xff]
        %v7704 = vld [vmem:[%s7698 + $0x7d] sm:$0xff]
        %v7705 = vld [vmem:[%s7698 + $0x95] sm:$0xff]
        %v7706 = vld [vmem:[%s7698 + $0xad] sm:$0xff]
        %v7707 = vlaneseq
        %v7708 = vshrl.u32 %v7707, 7
        %v7709 = vsub.s32 0, %v7708
        %v7710 = vrot.slane %v7697, %v7709
        %v7711 = vmul.f32 %v7699, %v7710
        %v7712 = vmul.f32 %v7700, %v7710
        %v7713 = vmul.f32 %v7701, %v7710
        %v7714 = vmul.f32 %v7702, %v7710
        %v7715 = vmul.f32 %v7703, %v7710
        %v7716 = vmul.f32 %v7704, %v7710
        %v7717 = vmul.f32 %v7705, %v7710
        %v7718 = vmul.f32 %v7706, %v7710
        %v7719 = vld [vmem:[%s7696 + $0x1] sm:$0x1]
        %v7720 = vld [vmem:[%s7698 + $0x6] sm:$0xff]
        %v7721 = vld [vmem:[%s7698 + $0x1e] sm:$0xff]
        %v7722 = vld [vmem:[%s7698 + $0x36] sm:$0xff]
        %v7723 = vld [vmem:[%s7698 + $0x4e] sm:$0xff]
        %v7724 = vld [vmem:[%s7698 + $0x66] sm:$0xff]
        %v7725 = vld [vmem:[%s7698 + $0x7e] sm:$0xff]
        %v7726 = vld [vmem:[%s7698 + $0x96] sm:$0xff]
        %v7727 = vld [vmem:[%s7698 + $0xae] sm:$0xff]
        %v7728 = vlaneseq
        %v7729 = vshrl.u32 %v7728, 7
        %v7730 = vsub.s32 0, %v7729
        %v7731 = vrot.slane %v7719, %v7730
        %v7732 = vmul.f32 %v7720, %v7731
        %v7733 = vmul.f32 %v7721, %v7731
        %v7734 = vmul.f32 %v7722, %v7731
        %v7735 = vmul.f32 %v7723, %v7731
        %v7736 = vmul.f32 %v7724, %v7731
        %v7737 = vmul.f32 %v7725, %v7731
        %v7738 = vmul.f32 %v7726, %v7731
        %v7739 = vmul.f32 %v7727, %v7731
        %v7740 = vadd.f32 %v7711, %v7732
        %v7741 = vadd.f32 %v7712, %v7733
        %v7742 = vadd.f32 %v7713, %v7734
        %v7743 = vadd.f32 %v7714, %v7735
        %v7744 = vadd.f32 %v7715, %v7736
        %v7745 = vadd.f32 %v7716, %v7737
        %v7746 = vadd.f32 %v7717, %v7738
        %v7747 = vadd.f32 %v7718, %v7739
        %v7748 = vld [vmem:[%s7696 + $0x2] sm:$0x1]
        %v7749 = vld [vmem:[%s7698 + $0x7] sm:$0xff]
        %v7750 = vld [vmem:[%s7698 + $0x1f] sm:$0xff]
        %v7751 = vld [vmem:[%s7698 + $0x37] sm:$0xff]
        %v7752 = vld [vmem:[%s7698 + $0x4f] sm:$0xff]
        %v7753 = vld [vmem:[%s7698 + $0x67] sm:$0xff]
        %v7754 = vld [vmem:[%s7698 + $0x7f] sm:$0xff]
        %v7755 = vld [vmem:[%s7698 + $0x97] sm:$0xff]
        %v7756 = vld [vmem:[%s7698 + $0xaf] sm:$0xff]
        %v7757 = vlaneseq
        %v7758 = vshrl.u32 %v7757, 7
        %v7759 = vsub.s32 0, %v7758
        %v7760 = vrot.slane %v7748, %v7759
        %v7761 = vmul.f32 %v7749, %v7760
        %v7762 = vmul.f32 %v7750, %v7760
        %v7763 = vmul.f32 %v7751, %v7760
        %v7764 = vmul.f32 %v7752, %v7760
        %v7765 = vmul.f32 %v7753, %v7760
        %v7766 = vmul.f32 %v7754, %v7760
        %v7767 = vmul.f32 %v7755, %v7760
        %v7768 = vmul.f32 %v7756, %v7760
        %v7769 = vadd.f32 %v7740, %v7761
        %v7770 = vadd.f32 %v7741, %v7762
        %v7771 = vadd.f32 %v7742, %v7763
        %v7772 = vadd.f32 %v7743, %v7764
        %v7773 = vadd.f32 %v7744, %v7765
        %v7774 = vadd.f32 %v7745, %v7766
        %v7775 = vadd.f32 %v7746, %v7767
        %v7776 = vadd.f32 %v7747, %v7768
        %v7777 = vld [vmem:[%s7696 + $0x3] sm:$0x1]
        %v7778 = vld [vmem:[%s7698 + $0x8] sm:$0xff]
        %v7779 = vld [vmem:[%s7698 + $0x20] sm:$0xff]
        %v7780 = vld [vmem:[%s7698 + $0x38] sm:$0xff]
        %v7781 = vld [vmem:[%s7698 + $0x50] sm:$0xff]
        %v7782 = vld [vmem:[%s7698 + $0x68] sm:$0xff]
        %v7783 = vld [vmem:[%s7698 + $0x80] sm:$0xff]
        %v7784 = vld [vmem:[%s7698 + $0x98] sm:$0xff]
        %v7785 = vld [vmem:[%s7698 + $0xb0] sm:$0xff]
        %v7786 = vlaneseq
        %v7787 = vshrl.u32 %v7786, 7
        %v7788 = vsub.s32 0, %v7787
        %v7789 = vrot.slane %v7777, %v7788
        %v7790 = vmul.f32 %v7778, %v7789
        %v7791 = vmul.f32 %v7779, %v7789
        %v7792 = vmul.f32 %v7780, %v7789
        %v7793 = vmul.f32 %v7781, %v7789
        %v7794 = vmul.f32 %v7782, %v7789
        %v7795 = vmul.f32 %v7783, %v7789
        %v7796 = vmul.f32 %v7784, %v7789
        %v7797 = vmul.f32 %v7785, %v7789
        %v7798 = vadd.f32 %v7769, %v7790
        %v7799 = vadd.f32 %v7770, %v7791
        %v7800 = vadd.f32 %v7771, %v7792
        %v7801 = vadd.f32 %v7772, %v7793
        %v7802 = vadd.f32 %v7773, %v7794
        %v7803 = vadd.f32 %v7774, %v7795
        %v7804 = vadd.f32 %v7775, %v7796
        %v7805 = vadd.f32 %v7776, %v7797
        %v7806 = vld [vmem:[%s7696 + $0x4] sm:$0x1]
        %v7807 = vld [vmem:[%s7698 + $0x9] sm:$0xff]
        %v7808 = vld [vmem:[%s7698 + $0x21] sm:$0xff]
        %v7809 = vld [vmem:[%s7698 + $0x39] sm:$0xff]
        %v7810 = vld [vmem:[%s7698 + $0x51] sm:$0xff]
        %v7811 = vld [vmem:[%s7698 + $0x69] sm:$0xff]
        %v7812 = vld [vmem:[%s7698 + $0x81] sm:$0xff]
        %v7813 = vld [vmem:[%s7698 + $0x99] sm:$0xff]
        %v7814 = vld [vmem:[%s7698 + $0xb1] sm:$0xff]
        %v7815 = vlaneseq
        %v7816 = vshrl.u32 %v7815, 7
        %v7817 = vsub.s32 0, %v7816
        %v7818 = vrot.slane %v7806, %v7817
        %v7819 = vmul.f32 %v7807, %v7818
        %v7820 = vmul.f32 %v7808, %v7818
        %v7821 = vmul.f32 %v7809, %v7818
        %v7822 = vmul.f32 %v7810, %v7818
        %v7823 = vmul.f32 %v7811, %v7818
        %v7824 = vmul.f32 %v7812, %v7818
        %v7825 = vmul.f32 %v7813, %v7818
        %v7826 = vmul.f32 %v7814, %v7818
        %v7827 = vadd.f32 %v7798, %v7819
        %v7828 = vadd.f32 %v7799, %v7820
        %v7829 = vadd.f32 %v7800, %v7821
        %v7830 = vadd.f32 %v7801, %v7822
        %v7831 = vadd.f32 %v7802, %v7823
        %v7832 = vadd.f32 %v7803, %v7824
        %v7833 = vadd.f32 %v7804, %v7825
        %v7834 = vadd.f32 %v7805, %v7826
        %v7835 = vld [vmem:[%s7696 + $0x5] sm:$0x1]
        %v7836 = vld [vmem:[%s7698 + $0xa] sm:$0xff]
        %v7837 = vld [vmem:[%s7698 + $0x22] sm:$0xff]
        %v7838 = vld [vmem:[%s7698 + $0x3a] sm:$0xff]
        %v7839 = vld [vmem:[%s7698 + $0x52] sm:$0xff]
        %v7840 = vld [vmem:[%s7698 + $0x6a] sm:$0xff]
        %v7841 = vld [vmem:[%s7698 + $0x82] sm:$0xff]
        %v7842 = vld [vmem:[%s7698 + $0x9a] sm:$0xff]
        %v7843 = vld [vmem:[%s7698 + $0xb2] sm:$0xff]
        %v7844 = vlaneseq
        %v7845 = vshrl.u32 %v7844, 7
        %v7846 = vsub.s32 0, %v7845
        %v7847 = vrot.slane %v7835, %v7846
        %v7848 = vmul.f32 %v7836, %v7847
        %v7849 = vmul.f32 %v7837, %v7847
        %v7850 = vmul.f32 %v7838, %v7847
        %v7851 = vmul.f32 %v7839, %v7847
        %v7852 = vmul.f32 %v7840, %v7847
        %v7853 = vmul.f32 %v7841, %v7847
        %v7854 = vmul.f32 %v7842, %v7847
        %v7855 = vmul.f32 %v7843, %v7847
        %v7856 = vadd.f32 %v7827, %v7848
        %v7857 = vadd.f32 %v7828, %v7849
        %v7858 = vadd.f32 %v7829, %v7850
        %v7859 = vadd.f32 %v7830, %v7851
        %v7860 = vadd.f32 %v7831, %v7852
        %v7861 = vadd.f32 %v7832, %v7853
        %v7862 = vadd.f32 %v7833, %v7854
        %v7863 = vadd.f32 %v7834, %v7855
        %v7864 = vld [vmem:[%s7696 + $0x6] sm:$0x1]
        %v7865 = vld [vmem:[%s7698 + $0xb] sm:$0xff]
        %v7866 = vld [vmem:[%s7698 + $0x23] sm:$0xff]
        %v7867 = vld [vmem:[%s7698 + $0x3b] sm:$0xff]
        %v7868 = vld [vmem:[%s7698 + $0x53] sm:$0xff]
        %v7869 = vld [vmem:[%s7698 + $0x6b] sm:$0xff]
        %v7870 = vld [vmem:[%s7698 + $0x83] sm:$0xff]
        %v7871 = vld [vmem:[%s7698 + $0x9b] sm:$0xff]
        %v7872 = vld [vmem:[%s7698 + $0xb3] sm:$0xff]
        %v7873 = vlaneseq
        %v7874 = vshrl.u32 %v7873, 7
        %v7875 = vsub.s32 0, %v7874
        %v7876 = vrot.slane %v7864, %v7875
        %v7877 = vmul.f32 %v7865, %v7876
        %v7878 = vmul.f32 %v7866, %v7876
        %v7879 = vmul.f32 %v7867, %v7876
        %v7880 = vmul.f32 %v7868, %v7876
        %v7881 = vmul.f32 %v7869, %v7876
        %v7882 = vmul.f32 %v7870, %v7876
        %v7883 = vmul.f32 %v7871, %v7876
        %v7884 = vmul.f32 %v7872, %v7876
        %v7885 = vadd.f32 %v7856, %v7877
        %v7886 = vadd.f32 %v7857, %v7878
        %v7887 = vadd.f32 %v7858, %v7879
        %v7888 = vadd.f32 %v7859, %v7880
        %v7889 = vadd.f32 %v7860, %v7881
        %v7890 = vadd.f32 %v7861, %v7882
        %v7891 = vadd.f32 %v7862, %v7883
        %v7892 = vadd.f32 %v7863, %v7884
        %v7893 = vld [vmem:[#allocation3] sm:$0xff]
        %v7894 = vld [vmem:[#allocation3 + $0x8] sm:$0xff]
        %v7895 = vld [vmem:[#allocation3 + $0x10] sm:$0xff]
        %v7896 = vld [vmem:[#allocation3 + $0x18] sm:$0xff]
        %v7897 = vld [vmem:[#allocation3 + $0x20] sm:$0xff]
        %v7898 = vld [vmem:[#allocation3 + $0x28] sm:$0xff]
        %v7899 = vld [vmem:[#allocation3 + $0x30] sm:$0xff]
        %v7900 = vld [vmem:[#allocation3 + $0x38] sm:$0xff]
        %v7901 = vadd.f32 %v7893, %v7885
        %v7902 = vadd.f32 %v7894, %v7886
        %v7903 = vadd.f32 %v7895, %v7887
        %v7904 = vadd.f32 %v7896, %v7888
        %v7905 = vadd.f32 %v7897, %v7889
        %v7906 = vadd.f32 %v7898, %v7890
        %v7907 = vadd.f32 %v7899, %v7891
        %v7908 = vadd.f32 %v7900, %v7892
        %7909 = vst.msk [vmem:[#allocation3] sm:$0xff] %vm716, %v7901
        %7910 = vst.msk [vmem:[#allocation3 + $0x8] sm:$0xff] %vm716, %v7902
        %7911 = vst.msk [vmem:[#allocation3 + $0x10] sm:$0xff] %vm716, %v7903
        %7912 = vst.msk [vmem:[#allocation3 + $0x18] sm:$0xff] %vm716, %v7904
        %7913 = vst.msk [vmem:[#allocation3 + $0x20] sm:$0xff] %vm716, %v7905
        %7914 = vst.msk [vmem:[#allocation3 + $0x28] sm:$0xff] %vm716, %v7906
        %7915 = vst.msk [vmem:[#allocation3 + $0x30] sm:$0xff] %vm716, %v7907
        %7916 = vst.msk [vmem:[#allocation3 + $0x38] sm:$0xff] %vm716, %v7908
        %v7917 = vld [vmem:[#allocation3] sm:$0xff]
        %v7918 = vld [vmem:[#allocation3 + $0x8] sm:$0xff]
        %v7919 = vld [vmem:[#allocation3 + $0x10] sm:$0xff]
        %v7920 = vld [vmem:[#allocation3 + $0x18] sm:$0xff]
        %v7921 = vld [vmem:[#allocation3 + $0x20] sm:$0xff]
        %v7922 = vld [vmem:[#allocation3 + $0x28] sm:$0xff]
        %v7923 = vld [vmem:[#allocation3 + $0x30] sm:$0xff]
        %v7924 = vld [vmem:[#allocation3 + $0x38] sm:$0xff]
        %v7925 = vsel %vm716, %v7917, 0.0
        %7926 = vadd.xlane.f32.xlu0 %v7925
        %v7927 = vpop.xlane.xlu0 %7926
        %v7928 = vsel %vm716, %v7918, 0.0
        %7929 = vadd.xlane.f32.xlu0 %v7928
        %v7930 = vpop.xlane.xlu0 %7929
        %v7931 = vsel %vm716, %v7919, 0.0
        %7932 = vadd.xlane.f32.xlu0 %v7931
        %v7933 = vpop.xlane.xlu0 %7932
        %v7934 = vsel %vm716, %v7920, 0.0
        %7935 = vadd.xlane.f32.xlu0 %v7934
        %v7936 = vpop.xlane.xlu0 %7935
        %v7937 = vsel %vm716, %v7921, 0.0
        %7938 = vadd.xlane.f32.xlu0 %v7937
        %v7939 = vpop.xlane.xlu0 %7938
        %v7940 = vsel %vm716, %v7922, 0.0
        %7941 = vadd.xlane.f32.xlu0 %v7940
        %v7942 = vpop.xlane.xlu0 %7941
        %v7943 = vsel %vm716, %v7923, 0.0
        %7944 = vadd.xlane.f32.xlu0 %v7943
        %v7945 = vpop.xlane.xlu0 %7944
        %v7946 = vsel %vm716, %v7924, 0.0
        %7947 = vadd.xlane.f32.xlu0 %v7946
        %v7948 = vpop.xlane.xlu0 %7947
        %v7949 = vld [vmem:[#allocation5] sm:$0x1]
        %v7951 = vlaneseq
        %v7952 = vshrl.u32 %v7951, 7
        %v7953 = vsub.s32 0, %v7952
        %v7954 = vrot.slane %v7949, %v7953
        %7955 = vset.pattern.permute.xlu0 0
        %7956 = vperm.xlu0 %7955, %v7954
        %v7957 = vpop.permute.xlu0 %7956
        %v7959 = vadd.f32 %v7927, %v7957
        %v7960 = vadd.f32 %v7930, %v7957
        %v7961 = vadd.f32 %v7933, %v7957
        %v7962 = vadd.f32 %v7936, %v7957
        %v7963 = vadd.f32 %v7939, %v7957
        %v7964 = vadd.f32 %v7942, %v7957
        %v7965 = vadd.f32 %v7945, %v7957
        %v7966 = vadd.f32 %v7948, %v7957
        %v7967 = vlaneseq
        %v7968 = vshrl.u32 %v7967, 7
        %v7969 = vlaneseq
        %v7970 = vand.u32 %v7969, 127
        %vm7971 = vcmp.gt.s32.totalorder %v7970, %v7968
        %v7980 = vlaneseq
        %v7981 = vshrl.u32 %v7980, 7
        %v7982 = vsub.s32 %v7970, %v7981
        %v7983 = vrot.slane %v7959, %v7982
        %v7984 = vlaneseq
        %v7985 = vshrl.u32 %v7984, 7
        %v7986 = vsub.s32 %v7970, %v7985
        %v7987 = vrot.slane %v7960, %v7986
        %v7988 = vlaneseq
        %v7989 = vshrl.u32 %v7988, 7
        %v7990 = vsub.s32 %v7970, %v7989
        %v7991 = vrot.slane %v7961, %v7990
        %v7992 = vlaneseq
        %v7993 = vshrl.u32 %v7992, 7
        %v7994 = vsub.s32 %v7970, %v7993
        %v7995 = vrot.slane %v7962, %v7994
        %v7996 = vlaneseq
        %v7997 = vshrl.u32 %v7996, 7
        %v7998 = vsub.s32 %v7970, %v7997
        %v7999 = vrot.slane %v7963, %v7998
        %v8000 = vlaneseq
        %v8001 = vshrl.u32 %v8000, 7
        %v8002 = vsub.s32 %v7970, %v8001
        %v8003 = vrot.slane %v7964, %v8002
        %v8004 = vlaneseq
        %v8005 = vshrl.u32 %v8004, 7
        %v8006 = vsub.s32 %v7970, %v8005
        %v8007 = vrot.slane %v7965, %v8006
        %v8008 = vlaneseq
        %v8009 = vshrl.u32 %v8008, 7
        %v8010 = vsub.s32 %v7970, %v8009
        %v8011 = vrot.slane %v7966, %v8010
        %vm8012 = vcmask 1041409
        %v8013 = vsel %vm8012, %v7987, %v7983
        %vm8014 = vcmask 1042434
        %v8015 = vsel %vm8014, %v7991, %v8013
        %vm8016 = vcmask 1043459
        %v8017 = vsel %vm8016, %v7995, %v8015
        %vm8018 = vcmask 1044484
        %v8019 = vsel %vm8018, %v7999, %v8017
        %vm8020 = vcmask 1045509
        %v8021 = vsel %vm8020, %v8003, %v8019
        %vm8022 = vcmask 1046534
        %v8023 = vsel %vm8022, %v8007, %v8021
        %vm8024 = vcmask 1047559
        %v8025 = vsel %vm8024, %v8011, %v8023
        %v8027 = vsel %vm7971, %v8025, 0.0
        %vm8028 = vcmask 64512
        %8029 = vst.msk [vmem:[%s401] sm:$0xff] %vm8028, %v8027
      $region64: #{forward.1} parent=55 // pred_fallthru
        _
      %p8030 = scmp.lt.s32.totalorder %s26, 1
      %s8031 = scalar_select %p8030, %s26, 1
      %s8032 = smul.addr %s8031, 8
      %s8033 = scalar_lea.vmem %s9, %s8032
      // Predicated region
      $region65: #{forward.1} parent=55 // pred_check
        %p8034 = pneg %p261
      $region66: #{forward.1} parent=55 // pred_check_branch
        %8036 = sbr.rel (%p8034) target = $region68
      $region67: #{forward.1} parent=55 // pred_region
        _
      $region68: #{forward.1} parent=55 // pred_fallthru
        _
    $region56: #{forward.1} parent=5 // pred_fallthru
      _
    %p8037 = scmp.le.s32.totalorder 2, %s17
    // Predicated region
    $region69: #{forward.1} parent=5 // pred_check
      %p8038 = pneg %p8037
    $region70: #{forward.1} parent=5 // pred_check_branch
      %8040 = sbr.rel (%p8038) target = $region72
    $region71: #{forward.1} parent=5 // pred_region
      %s8041 = ssub.s32 %s17, 2
      // Predicated region
      $region73: #{forward.1} parent=71 // pred_check
        %p8042 = pneg %p267
      $region74: #{forward.1} parent=71 // pred_check_branch
        %8044 = sbr.rel (%p8042) target = $region76
      $region75: #{forward.1} parent=71 // pred_region
        %p8045 = scmp.lt.s32.totalorder %s28, 1
        %s8046 = scalar_select %p8045, %s28, 1
        %s8047 = smul.addr %s8046, 8
        %s8048 = scalar_lea.vmem %s9, %s8047
      $region76: #{forward.1} parent=71 // pred_fallthru
        _
    $region72: #{forward.1} parent=5 // pred_fallthru
      _
  $region6: #{forward.1} parent=0 // loop_footer
    %s21 = sadd.s32 1, %s17
  $region7: #{forward.1} parent=0 // loop_footer_branch
    %16 = sbr.rel target = $region3
  $region8: #{forward.1} parent=0 // loop_exit
    _

</llo_original>
